<compile_context>
chip_gen: v6e
topology: v6e:2x2x1
jax: 0.10.0
libtpu: 0.0.40
codegen_flags: <defaults>
</compile_context>

<pallas_src>
import jax
import jax.numpy as jnp
from jax.experimental import pallas as pl
from jax.experimental.pallas import tpu as pltpu


_VMEM_LIMIT = 32 * 1024 * 1024  # fits v5e/v6e (128 MiB) and v7x (64 MiB) VMEM


# ---------------------- fused conv + ReLU + maxpool ------------------------- #

def _make_conv_relu_pool_kernel(ow, pw):
    """Per grid step (b, p): compute conv rows 2p, 2p+1, ReLU, 2x2-max-pool.

    Refs:
      x0..x3 : (1, 1, W, Cin)   input rows 2p .. 2p+3        (bf16)
      w_ref  : (9, Cin, Cout)   tap-major (kh*kw, Cin, Cout) (bf16)
      o_ref  : (1, 1, PW, Cout) pooled output row p          (bf16)
    """

    def kernel(x0_ref, x1_ref, x2_ref, x3_ref, w_ref, o_ref):
        cout = w_ref.shape[-1]
        rows = [x0_ref[0, 0], x1_ref[0, 0], x2_ref[0, 0], x3_ref[0, 0]]

        conv_rows = []
        for r in range(2):                        # two conv rows -> one pooled row
            acc = jnp.zeros((ow, cout), jnp.float32)
            for di in range(3):
                row = rows[r + di]                # (W, Cin) bf16
                for dj in range(3):
                    patch = row[dj:dj + ow, :]    # (OW, Cin) static VMEM slice
                    acc = acc + jnp.dot(patch, w_ref[3 * di + dj],
                                        preferred_element_type=jnp.float32)
            conv_rows.append(jnp.maximum(acc, 0.0))       # fused ReLU (f32)

        rmax = jnp.maximum(conv_rows[0], conv_rows[1])    # row-pair max (OW, Cout)
        for j in range(pw):                               # column-pair max
            v = jnp.maximum(rmax[2 * j:2 * j + 1, :],
                            rmax[2 * j + 1:2 * j + 2, :])
            o_ref[0, 0, j:j + 1, :] = v.astype(o_ref.dtype)

    return kernel


def conv3x3_relu_pool(x, w):
    """x: (B, H, W, Cin) bf16 NHWC, Cin % 128 == 0; w: (9, Cin, Cout) bf16.

    Returns MaxPool2d(2)(ReLU(Conv2d(k=3, s=1, VALID, no bias)(x))) in NHWC:
    (B, (H-2)//2, (W-2)//2, Cout).
    """
    B, H, W, Cin = x.shape
    Cout = w.shape[-1]
    OH, OW = H - 2, W - 2
    PH, PW = OH // 2, OW // 2

    def row_spec(k):
        # H block size 1 => block index == element row index (overlapping reads
        # of rows 2p+k are expressed by passing x four times with shifted maps).
        return pl.BlockSpec((1, 1, W, Cin), lambda b, p: (b, 2 * p + k, 0, 0))

    return pl.pallas_call(
        _make_conv_relu_pool_kernel(OW, PW),
        out_shape=jax.ShapeDtypeStruct((B, PH, PW, Cout), jnp.bfloat16),
        grid=(B, PH),
        in_specs=[row_spec(0), row_spec(1), row_spec(2), row_spec(3),
                  pl.BlockSpec((9, Cin, Cout), lambda b, p: (0, 0, 0))],
        out_specs=pl.BlockSpec((1, 1, PW, Cout), lambda b, p: (b, p, 0, 0)),
        compiler_params=pltpu.CompilerParams(
            dimension_semantics=("parallel", "parallel"),
            vmem_limit_bytes=_VMEM_LIMIT),
    )(x, x, x, x, w)


# ------------------------------ FC matmuls ---------------------------------- #

def _fc_relu_kernel(a_ref, b_ref, o_ref):
    acc = jnp.dot(a_ref[...], b_ref[...], preferred_element_type=jnp.float32)
    o_ref[...] = jnp.maximum(acc, 0.0).astype(o_ref.dtype)


def _fc_bias_kernel(a_ref, b_ref, bias_ref, o_ref):
    acc = jnp.dot(a_ref[...], b_ref[...], preferred_element_type=jnp.float32)
    o_ref[...] = (acc + bias_ref[...]).astype(o_ref.dtype)


def fc_matmul(a, b, bias=None, relu=False, tile_n=256, out_dtype=jnp.bfloat16):
    """a: (M, K) bf16, b: (K, N) bf16 with N % 128 == 0.

    M (= batch) is tiny, so it stays a single block; N is tiled by the grid so
    the weight DMA pipelines against the MXU.  a (and bias) use constant
    index_maps along the grid axis and stay resident in VMEM.
    """
    M, K = a.shape
    K2, N = b.shape
    assert K == K2 and N % 128 == 0
    tn = min(tile_n, N)
    while N % tn:
        tn -= 128
    grid = (N // tn,)

    in_specs = [pl.BlockSpec((M, K), lambda j: (0, 0)),        # resident
                pl.BlockSpec((K, tn), lambda j: (0, j))]
    operands = [a, b]
    if bias is not None:
        assert not relu
        in_specs.append(pl.BlockSpec((1, tn), lambda j: (0, j)))
        operands.append(bias.reshape(1, N).astype(jnp.float32))
        kernel = _fc_bias_kernel
    else:
        assert relu
        kernel = _fc_relu_kernel

    return pl.pallas_call(
        kernel,
        out_shape=jax.ShapeDtypeStruct((M, N), out_dtype),
        grid=grid,
        in_specs=in_specs,
        out_specs=pl.BlockSpec((M, tn), lambda j: (0, j)),
        compiler_params=pltpu.CompilerParams(
            dimension_semantics=("parallel",),
            vmem_limit_bytes=_VMEM_LIMIT),
    )(*operands)


# ------------------------------- parameters --------------------------------- #

def init_params(key, out_dim=10, in_channel=3):
    """Random parameters in the reference PyTorch layouts."""
    ks = jax.random.split(key, 6)

    def normal(k, shape, scale):
        return scale * jax.random.normal(k, shape, jnp.float32)

    return {
        "conv1": normal(ks[0], (64, in_channel, 3, 3), 0.08),
        "conv2": normal(ks[1], (128, 64, 3, 3), 0.04),
        "conv3": normal(ks[2], (256, 128, 3, 3), 0.03),
        "fc1": normal(ks[3], (1000, 1024), 0.03),      # nn.Linear(1024, 1000)
        "fc2": normal(ks[4], (1000, 1000), 0.03),      # nn.Linear(1000, 1000)
        "last_w": normal(ks[5], (out_dim, 1000), 0.03),
        "last_b": jnp.zeros((out_dim,), jnp.float32),
    }


def prepare_params(p, cin_pad=128):
    """One-time conversion to kernel layouts: pre-transposed, zero-padded to
    lane-dense (multiple-of-128) dims, cast to bf16 for the MXU."""

    def conv_w(w, cin_to, cout_to):
        cout, cin, kh, kw = w.shape
        w = jnp.transpose(w, (2, 3, 1, 0)).reshape(kh * kw, cin, cout)
        w = jnp.pad(w, ((0, 0), (0, cin_to - cin), (0, cout_to - cout)))
        return w.astype(jnp.bfloat16)

    def pad_to(a, rows, cols):
        return jnp.pad(a, ((0, rows - a.shape[0]), (0, cols - a.shape[1])))

    out_dim = p["last_w"].shape[0]

    # fc1 consumes the flattened conv features.  PyTorch flattens NCHW
    # (C=256, H=2, W=2); our conv output is NHWC, so permute fc1's input rows
    # once here instead of transposing activations every forward pass.
    w1 = p["fc1"].reshape(1000, 256, 2, 2)
    w1 = jnp.transpose(w1, (2, 3, 1, 0)).reshape(2 * 2 * 256, 1000)

    return {
        "conv1": conv_w(p["conv1"], cin_pad, 128),   # Cout 64 -> 128 (lane-dense)
        "conv2": conv_w(p["conv2"], 128, 128),       # Cin 64 -> 128 (matches pad)
        "conv3": conv_w(p["conv3"], 128, 256),
        "fc1": pad_to(w1, 1024, 1024).astype(jnp.bfloat16),
        "fc2": pad_to(p["fc2"].T, 1024, 1024).astype(jnp.bfloat16),
        "last_w": pad_to(p["last_w"].T, 1024, 128).astype(jnp.bfloat16),
        "last_b": jnp.pad(p["last_b"], (0, 128 - out_dim)).astype(jnp.float32),
    }


# --------------------------------- forward ---------------------------------- #

def cnn_forward(x_nchw, kp, out_dim=10):
    """Forward pass matching the PyTorch CNN.  x_nchw: (B, 3, 32, 32) -> (B, out_dim)."""
    cin_pad = kp["conv1"].shape[1]
    x = jnp.transpose(x_nchw, (0, 2, 3, 1)).astype(jnp.bfloat16)   # NCHW -> NHWC
    x = jnp.pad(x, ((0, 0), (0, 0), (0, 0), (0, cin_pad - x.shape[-1])))

    x = conv3x3_relu_pool(x, kp["conv1"])   # (B, 15, 15, 128)  [64 real + 64 zero ch]
    x = conv3x3_relu_pool(x, kp["conv2"])   # (B,  6,  6, 128)
    x = conv3x3_relu_pool(x, kp["conv3"])   # (B,  2,  2, 256)

    x = x.reshape(x.shape[0], -1)           # NHWC flatten; fc1 rows pre-permuted
    x = fc_matmul(x, kp["fc1"], relu=True)                           # (B, 1024)
    x = fc_matmul(x, kp["fc2"], relu=True)                           # (B, 1024)
    x = fc_matmul(x, kp["last_w"], bias=kp["last_b"],
                  out_dtype=jnp.float32)                             # (B, 128)
    return x[:, :out_dim]                    # drop lane padding of the logits


if __name__ == "__main__":
    key = jax.random.PRNGKey(0)
    k_x, k_p = jax.random.split(key)
    # Spatial size must be 32x32 so the flattened conv features are 1024
    # (= 256 * 2 * 2), matching nn.Linear(1024, 1000) in the reference model.
    x = jax.random.normal(k_x, (2, 3, 32, 32), jnp.float32)

    params = init_params(k_p, out_dim=10, in_channel=3)
    kparams = prepare_params(params)

    fwd = jax.jit(cnn_forward, static_argnames=("out_dim",))
    out = fwd(x, kparams, out_dim=10)
    out = jax.block_until_ready(out)

    assert out.shape == (2, 10) and out.dtype == jnp.float32
    assert bool(jnp.all(jnp.isfinite(out)))
    print("KERNEL_OK")
</pallas_src>

<mosaic_0001>
module attributes {stable_mosaic.version = 11 : i64} {
  func.func @kernel(%arg0: i32, %arg1: i32, %arg2: memref<1x1x32x128xbf16, #tpu.memory_space<vmem>>, %arg3: memref<1x1x32x128xbf16, #tpu.memory_space<vmem>>, %arg4: memref<1x1x32x128xbf16, #tpu.memory_space<vmem>>, %arg5: memref<1x1x32x128xbf16, #tpu.memory_space<vmem>>, %arg6: memref<9x128x128xbf16, #tpu.memory_space<vmem>>, %arg7: memref<1x1x15x128xbf16, #tpu.memory_space<vmem>>) attributes {dimension_semantics = [#tpu.dimension_semantics<parallel>, #tpu.dimension_semantics<parallel>], iteration_bounds = array<i64: 2, 15>, scalar_prefetch = 0 : i64, scratch_operands = 0 : i64, tpu.core_type = #tpu.core_type<tc>, window_params = [{transform_indices = @transform_0, window_bounds = array<i64: 1, 1, 32, 128>}, {transform_indices = @transform_1, window_bounds = array<i64: 1, 1, 32, 128>}, {transform_indices = @transform_2, window_bounds = array<i64: 1, 1, 32, 128>}, {transform_indices = @transform_3, window_bounds = array<i64: 1, 1, 32, 128>}, {pipeline_mode = #tpu.pipeline_mode<synchronous>, transform_indices = @transform_4, window_bounds = array<i64: 9, 128, 128>}, {transform_indices = @transform_5, window_bounds = array<i64: 1, 1, 15, 128>}]} {
    %c0 = arith.constant 0 : index
    %c0_0 = arith.constant 0 : index
    %c0_1 = arith.constant 0 : index
    %c0_2 = arith.constant 0 : index
    %0 = vector.load %arg2[%c0, %c0_0, %c0_1, %c0_2] : memref<1x1x32x128xbf16, #tpu.memory_space<vmem>>, vector<1x1x32x128xbf16>
    %1 = vector.shape_cast %0 : vector<1x1x32x128xbf16> to vector<32x128xbf16>
    %c0_3 = arith.constant 0 : index
    %c0_4 = arith.constant 0 : index
    %c0_5 = arith.constant 0 : index
    %c0_6 = arith.constant 0 : index
    %2 = vector.load %arg3[%c0_3, %c0_4, %c0_5, %c0_6] : memref<1x1x32x128xbf16, #tpu.memory_space<vmem>>, vector<1x1x32x128xbf16>
    %3 = vector.shape_cast %2 : vector<1x1x32x128xbf16> to vector<32x128xbf16>
    %c0_7 = arith.constant 0 : index
    %c0_8 = arith.constant 0 : index
    %c0_9 = arith.constant 0 : index
    %c0_10 = arith.constant 0 : index
    %4 = vector.load %arg4[%c0_7, %c0_8, %c0_9, %c0_10] : memref<1x1x32x128xbf16, #tpu.memory_space<vmem>>, vector<1x1x32x128xbf16>
    %5 = vector.shape_cast %4 : vector<1x1x32x128xbf16> to vector<32x128xbf16>
    %c0_11 = arith.constant 0 : index
    %c0_12 = arith.constant 0 : index
    %c0_13 = arith.constant 0 : index
    %c0_14 = arith.constant 0 : index
    %6 = vector.load %arg5[%c0_11, %c0_12, %c0_13, %c0_14] : memref<1x1x32x128xbf16, #tpu.memory_space<vmem>>, vector<1x1x32x128xbf16>
    %7 = vector.shape_cast %6 : vector<1x1x32x128xbf16> to vector<32x128xbf16>
    %cst = arith.constant 0.000000e+00 : f32
    %8 = vector.broadcast %cst : f32 to vector<30x128xf32>
    %9 = vector.extract_strided_slice %1 {offsets = [0, 0], sizes = [30, 128], strides = [1, 1]} : vector<32x128xbf16> to vector<30x128xbf16>
    %c0_15 = arith.constant 0 : index
    %c0_16 = arith.constant 0 : index
    %c0_17 = arith.constant 0 : index
    %10 = vector.load %arg6[%c0_15, %c0_16, %c0_17] : memref<9x128x128xbf16, #tpu.memory_space<vmem>>, vector<1x128x128xbf16>
    %11 = vector.shape_cast %10 : vector<1x128x128xbf16> to vector<128x128xbf16>
    %cst_18 = arith.constant dense<0.000000e+00> : vector<30x128xf32>
    %12 = tpu.matmul %9, %11, %cst_18 {dimension_numbers = #tpu.dot_dimension_numbers<[1], [0], [0], [1], [0, 0, 1, 1], [], []>} : vector<30x128xbf16>, vector<128x128xbf16>, vector<30x128xf32> -> vector<30x128xf32>
    %13 = arith.addf %8, %12 : vector<30x128xf32>
    %14 = vector.extract_strided_slice %1 {offsets = [1, 0], sizes = [30, 128], strides = [1, 1]} : vector<32x128xbf16> to vector<30x128xbf16>
    %c1 = arith.constant 1 : index
    %c0_19 = arith.constant 0 : index
    %c0_20 = arith.constant 0 : index
    %15 = vector.load %arg6[%c1, %c0_19, %c0_20] : memref<9x128x128xbf16, #tpu.memory_space<vmem>>, vector<1x128x128xbf16>
    %16 = vector.shape_cast %15 : vector<1x128x128xbf16> to vector<128x128xbf16>
    %cst_21 = arith.constant dense<0.000000e+00> : vector<30x128xf32>
    %17 = tpu.matmul %14, %16, %cst_21 {dimension_numbers = #tpu.dot_dimension_numbers<[1], [0], [0], [1], [0, 0, 1, 1], [], []>} : vector<30x128xbf16>, vector<128x128xbf16>, vector<30x128xf32> -> vector<30x128xf32>
    %18 = arith.addf %13, %17 : vector<30x128xf32>
    %19 = vector.extract_strided_slice %1 {offsets = [2, 0], sizes = [30, 128], strides = [1, 1]} : vector<32x128xbf16> to vector<30x128xbf16>
    %c2 = arith.constant 2 : index
    %c0_22 = arith.constant 0 : index
    %c0_23 = arith.constant 0 : index
    %20 = vector.load %arg6[%c2, %c0_22, %c0_23] : memref<9x128x128xbf16, #tpu.memory_space<vmem>>, vector<1x128x128xbf16>
    %21 = vector.shape_cast %20 : vector<1x128x128xbf16> to vector<128x128xbf16>
    %cst_24 = arith.constant dense<0.000000e+00> : vector<30x128xf32>
    %22 = tpu.matmul %19, %21, %cst_24 {dimension_numbers = #tpu.dot_dimension_numbers<[1], [0], [0], [1], [0, 0, 1, 1], [], []>} : vector<30x128xbf16>, vector<128x128xbf16>, vector<30x128xf32> -> vector<30x128xf32>
    %23 = arith.addf %18, %22 : vector<30x128xf32>
    %24 = vector.extract_strided_slice %3 {offsets = [0, 0], sizes = [30, 128], strides = [1, 1]} : vector<32x128xbf16> to vector<30x128xbf16>
    %c3 = arith.constant 3 : index
    %c0_25 = arith.constant 0 : index
    %c0_26 = arith.constant 0 : index
    %25 = vector.load %arg6[%c3, %c0_25, %c0_26] : memref<9x128x128xbf16, #tpu.memory_space<vmem>>, vector<1x128x128xbf16>
    %26 = vector.shape_cast %25 : vector<1x128x128xbf16> to vector<128x128xbf16>
    %cst_27 = arith.constant dense<0.000000e+00> : vector<30x128xf32>
    %27 = tpu.matmul %24, %26, %cst_27 {dimension_numbers = #tpu.dot_dimension_numbers<[1], [0], [0], [1], [0, 0, 1, 1], [], []>} : vector<30x128xbf16>, vector<128x128xbf16>, vector<30x128xf32> -> vector<30x128xf32>
    %28 = arith.addf %23, %27 : vector<30x128xf32>
    %29 = vector.extract_strided_slice %3 {offsets = [1, 0], sizes = [30, 128], strides = [1, 1]} : vector<32x128xbf16> to vector<30x128xbf16>
    %c4 = arith.constant 4 : index
    %c0_28 = arith.constant 0 : index
    %c0_29 = arith.constant 0 : index
    %30 = vector.load %arg6[%c4, %c0_28, %c0_29] : memref<9x128x128xbf16, #tpu.memory_space<vmem>>, vector<1x128x128xbf16>
    %31 = vector.shape_cast %30 : vector<1x128x128xbf16> to vector<128x128xbf16>
    %cst_30 = arith.constant dense<0.000000e+00> : vector<30x128xf32>
    %32 = tpu.matmul %29, %31, %cst_30 {dimension_numbers = #tpu.dot_dimension_numbers<[1], [0], [0], [1], [0, 0, 1, 1], [], []>} : vector<30x128xbf16>, vector<128x128xbf16>, vector<30x128xf32> -> vector<30x128xf32>
    %33 = arith.addf %28, %32 : vector<30x128xf32>
    %34 = vector.extract_strided_slice %3 {offsets = [2, 0], sizes = [30, 128], strides = [1, 1]} : vector<32x128xbf16> to vector<30x128xbf16>
    %c5 = arith.constant 5 : index
    %c0_31 = arith.constant 0 : index
    %c0_32 = arith.constant 0 : index
    %35 = vector.load %arg6[%c5, %c0_31, %c0_32] : memref<9x128x128xbf16, #tpu.memory_space<vmem>>, vector<1x128x128xbf16>
    %36 = vector.shape_cast %35 : vector<1x128x128xbf16> to vector<128x128xbf16>
    %cst_33 = arith.constant dense<0.000000e+00> : vector<30x128xf32>
    %37 = tpu.matmul %34, %36, %cst_33 {dimension_numbers = #tpu.dot_dimension_numbers<[1], [0], [0], [1], [0, 0, 1, 1], [], []>} : vector<30x128xbf16>, vector<128x128xbf16>, vector<30x128xf32> -> vector<30x128xf32>
    %38 = arith.addf %33, %37 : vector<30x128xf32>
    %39 = vector.extract_strided_slice %5 {offsets = [0, 0], sizes = [30, 128], strides = [1, 1]} : vector<32x128xbf16> to vector<30x128xbf16>
    %c6 = arith.constant 6 : index
    %c0_34 = arith.constant 0 : index
    %c0_35 = arith.constant 0 : index
    %40 = vector.load %arg6[%c6, %c0_34, %c0_35] : memref<9x128x128xbf16, #tpu.memory_space<vmem>>, vector<1x128x128xbf16>
    %41 = vector.shape_cast %40 : vector<1x128x128xbf16> to vector<128x128xbf16>
    %cst_36 = arith.constant dense<0.000000e+00> : vector<30x128xf32>
    %42 = tpu.matmul %39, %41, %cst_36 {dimension_numbers = #tpu.dot_dimension_numbers<[1], [0], [0], [1], [0, 0, 1, 1], [], []>} : vector<30x128xbf16>, vector<128x128xbf16>, vector<30x128xf32> -> vector<30x128xf32>
    %43 = arith.addf %38, %42 : vector<30x128xf32>
    %44 = vector.extract_strided_slice %5 {offsets = [1, 0], sizes = [30, 128], strides = [1, 1]} : vector<32x128xbf16> to vector<30x128xbf16>
    %c7 = arith.constant 7 : index
    %c0_37 = arith.constant 0 : index
    %c0_38 = arith.constant 0 : index
    %45 = vector.load %arg6[%c7, %c0_37, %c0_38] : memref<9x128x128xbf16, #tpu.memory_space<vmem>>, vector<1x128x128xbf16>
    %46 = vector.shape_cast %45 : vector<1x128x128xbf16> to vector<128x128xbf16>
    %cst_39 = arith.constant dense<0.000000e+00> : vector<30x128xf32>
    %47 = tpu.matmul %44, %46, %cst_39 {dimension_numbers = #tpu.dot_dimension_numbers<[1], [0], [0], [1], [0, 0, 1, 1], [], []>} : vector<30x128xbf16>, vector<128x128xbf16>, vector<30x128xf32> -> vector<30x128xf32>
    %48 = arith.addf %43, %47 : vector<30x128xf32>
    %49 = vector.extract_strided_slice %5 {offsets = [2, 0], sizes = [30, 128], strides = [1, 1]} : vector<32x128xbf16> to vector<30x128xbf16>
    %c8 = arith.constant 8 : index
    %c0_40 = arith.constant 0 : index
    %c0_41 = arith.constant 0 : index
    %50 = vector.load %arg6[%c8, %c0_40, %c0_41] : memref<9x128x128xbf16, #tpu.memory_space<vmem>>, vector<1x128x128xbf16>
    %51 = vector.shape_cast %50 : vector<1x128x128xbf16> to vector<128x128xbf16>
    %cst_42 = arith.constant dense<0.000000e+00> : vector<30x128xf32>
    %52 = tpu.matmul %49, %51, %cst_42 {dimension_numbers = #tpu.dot_dimension_numbers<[1], [0], [0], [1], [0, 0, 1, 1], [], []>} : vector<30x128xbf16>, vector<128x128xbf16>, vector<30x128xf32> -> vector<30x128xf32>
    %53 = arith.addf %48, %52 : vector<30x128xf32>
    %cst_43 = arith.constant 0.000000e+00 : f32
    %54 = vector.broadcast %cst_43 : f32 to vector<30x128xf32>
    %55 = arith.maximumf %53, %54 : vector<30x128xf32>
    %cst_44 = arith.constant 0.000000e+00 : f32
    %56 = vector.broadcast %cst_44 : f32 to vector<30x128xf32>
    %57 = vector.extract_strided_slice %3 {offsets = [0, 0], sizes = [30, 128], strides = [1, 1]} : vector<32x128xbf16> to vector<30x128xbf16>
    %c0_45 = arith.constant 0 : index
    %c0_46 = arith.constant 0 : index
    %c0_47 = arith.constant 0 : index
    %58 = vector.load %arg6[%c0_45, %c0_46, %c0_47] : memref<9x128x128xbf16, #tpu.memory_space<vmem>>, vector<1x128x128xbf16>
    %59 = vector.shape_cast %58 : vector<1x128x128xbf16> to vector<128x128xbf16>
    %cst_48 = arith.constant dense<0.000000e+00> : vector<30x128xf32>
    %60 = tpu.matmul %57, %59, %cst_48 {dimension_numbers = #tpu.dot_dimension_numbers<[1], [0], [0], [1], [0, 0, 1, 1], [], []>} : vector<30x128xbf16>, vector<128x128xbf16>, vector<30x128xf32> -> vector<30x128xf32>
    %61 = arith.addf %56, %60 : vector<30x128xf32>
    %62 = vector.extract_strided_slice %3 {offsets = [1, 0], sizes = [30, 128], strides = [1, 1]} : vector<32x128xbf16> to vector<30x128xbf16>
    %c1_49 = arith.constant 1 : index
    %c0_50 = arith.constant 0 : index
    %c0_51 = arith.constant 0 : index
    %63 = vector.load %arg6[%c1_49, %c0_50, %c0_51] : memref<9x128x128xbf16, #tpu.memory_space<vmem>>, vector<1x128x128xbf16>
    %64 = vector.shape_cast %63 : vector<1x128x128xbf16> to vector<128x128xbf16>
    %cst_52 = arith.constant dense<0.000000e+00> : vector<30x128xf32>
    %65 = tpu.matmul %62, %64, %cst_52 {dimension_numbers = #tpu.dot_dimension_numbers<[1], [0], [0], [1], [0, 0, 1, 1], [], []>} : vector<30x128xbf16>, vector<128x128xbf16>, vector<30x128xf32> -> vector<30x128xf32>
    %66 = arith.addf %61, %65 : vector<30x128xf32>
    %67 = vector.extract_strided_slice %3 {offsets = [2, 0], sizes = [30, 128], strides = [1, 1]} : vector<32x128xbf16> to vector<30x128xbf16>
    %c2_53 = arith.constant 2 : index
    %c0_54 = arith.constant 0 : index
    %c0_55 = arith.constant 0 : index
    %68 = vector.load %arg6[%c2_53, %c0_54, %c0_55] : memref<9x128x128xbf16, #tpu.memory_space<vmem>>, vector<1x128x128xbf16>
    %69 = vector.shape_cast %68 : vector<1x128x128xbf16> to vector<128x128xbf16>
    %cst_56 = arith.constant dense<0.000000e+00> : vector<30x128xf32>
    %70 = tpu.matmul %67, %69, %cst_56 {dimension_numbers = #tpu.dot_dimension_numbers<[1], [0], [0], [1], [0, 0, 1, 1], [], []>} : vector<30x128xbf16>, vector<128x128xbf16>, vector<30x128xf32> -> vector<30x128xf32>
    %71 = arith.addf %66, %70 : vector<30x128xf32>
    %72 = vector.extract_strided_slice %5 {offsets = [0, 0], sizes = [30, 128], strides = [1, 1]} : vector<32x128xbf16> to vector<30x128xbf16>
    %c3_57 = arith.constant 3 : index
    %c0_58 = arith.constant 0 : index
    %c0_59 = arith.constant 0 : index
    %73 = vector.load %arg6[%c3_57, %c0_58, %c0_59] : memref<9x128x128xbf16, #tpu.memory_space<vmem>>, vector<1x128x128xbf16>
    %74 = vector.shape_cast %73 : vector<1x128x128xbf16> to vector<128x128xbf16>
    %cst_60 = arith.constant dense<0.000000e+00> : vector<30x128xf32>
    %75 = tpu.matmul %72, %74, %cst_60 {dimension_numbers = #tpu.dot_dimension_numbers<[1], [0], [0], [1], [0, 0, 1, 1], [], []>} : vector<30x128xbf16>, vector<128x128xbf16>, vector<30x128xf32> -> vector<30x128xf32>
    %76 = arith.addf %71, %75 : vector<30x128xf32>
    %77 = vector.extract_strided_slice %5 {offsets = [1, 0], sizes = [30, 128], strides = [1, 1]} : vector<32x128xbf16> to vector<30x128xbf16>
    %c4_61 = arith.constant 4 : index
    %c0_62 = arith.constant 0 : index
    %c0_63 = arith.constant 0 : index
    %78 = vector.load %arg6[%c4_61, %c0_62, %c0_63] : memref<9x128x128xbf16, #tpu.memory_space<vmem>>, vector<1x128x128xbf16>
    %79 = vector.shape_cast %78 : vector<1x128x128xbf16> to vector<128x128xbf16>
    %cst_64 = arith.constant dense<0.000000e+00> : vector<30x128xf32>
    %80 = tpu.matmul %77, %79, %cst_64 {dimension_numbers = #tpu.dot_dimension_numbers<[1], [0], [0], [1], [0, 0, 1, 1], [], []>} : vector<30x128xbf16>, vector<128x128xbf16>, vector<30x128xf32> -> vector<30x128xf32>
    %81 = arith.addf %76, %80 : vector<30x128xf32>
    %82 = vector.extract_strided_slice %5 {offsets = [2, 0], sizes = [30, 128], strides = [1, 1]} : vector<32x128xbf16> to vector<30x128xbf16>
    %c5_65 = arith.constant 5 : index
    %c0_66 = arith.constant 0 : index
    %c0_67 = arith.constant 0 : index
    %83 = vector.load %arg6[%c5_65, %c0_66, %c0_67] : memref<9x128x128xbf16, #tpu.memory_space<vmem>>, vector<1x128x128xbf16>
    %84 = vector.shape_cast %83 : vector<1x128x128xbf16> to vector<128x128xbf16>
    %cst_68 = arith.constant dense<0.000000e+00> : vector<30x128xf32>
    %85 = tpu.matmul %82, %84, %cst_68 {dimension_numbers = #tpu.dot_dimension_numbers<[1], [0], [0], [1], [0, 0, 1, 1], [], []>} : vector<30x128xbf16>, vector<128x128xbf16>, vector<30x128xf32> -> vector<30x128xf32>
    %86 = arith.addf %81, %85 : vector<30x128xf32>
    %87 = vector.extract_strided_slice %7 {offsets = [0, 0], sizes = [30, 128], strides = [1, 1]} : vector<32x128xbf16> to vector<30x128xbf16>
    %c6_69 = arith.constant 6 : index
    %c0_70 = arith.constant 0 : index
    %c0_71 = arith.constant 0 : index
    %88 = vector.load %arg6[%c6_69, %c0_70, %c0_71] : memref<9x128x128xbf16, #tpu.memory_space<vmem>>, vector<1x128x128xbf16>
    %89 = vector.shape_cast %88 : vector<1x128x128xbf16> to vector<128x128xbf16>
    %cst_72 = arith.constant dense<0.000000e+00> : vector<30x128xf32>
    %90 = tpu.matmul %87, %89, %cst_72 {dimension_numbers = #tpu.dot_dimension_numbers<[1], [0], [0], [1], [0, 0, 1, 1], [], []>} : vector<30x128xbf16>, vector<128x128xbf16>, vector<30x128xf32> -> vector<30x128xf32>
    %91 = arith.addf %86, %90 : vector<30x128xf32>
    %92 = vector.extract_strided_slice %7 {offsets = [1, 0], sizes = [30, 128], strides = [1, 1]} : vector<32x128xbf16> to vector<30x128xbf16>
    %c7_73 = arith.constant 7 : index
    %c0_74 = arith.constant 0 : index
    %c0_75 = arith.constant 0 : index
    %93 = vector.load %arg6[%c7_73, %c0_74, %c0_75] : memref<9x128x128xbf16, #tpu.memory_space<vmem>>, vector<1x128x128xbf16>
    %94 = vector.shape_cast %93 : vector<1x128x128xbf16> to vector<128x128xbf16>
    %cst_76 = arith.constant dense<0.000000e+00> : vector<30x128xf32>
    %95 = tpu.matmul %92, %94, %cst_76 {dimension_numbers = #tpu.dot_dimension_numbers<[1], [0], [0], [1], [0, 0, 1, 1], [], []>} : vector<30x128xbf16>, vector<128x128xbf16>, vector<30x128xf32> -> vector<30x128xf32>
    %96 = arith.addf %91, %95 : vector<30x128xf32>
    %97 = vector.extract_strided_slice %7 {offsets = [2, 0], sizes = [30, 128], strides = [1, 1]} : vector<32x128xbf16> to vector<30x128xbf16>
    %c8_77 = arith.constant 8 : index
    %c0_78 = arith.constant 0 : index
    %c0_79 = arith.constant 0 : index
    %98 = vector.load %arg6[%c8_77, %c0_78, %c0_79] : memref<9x128x128xbf16, #tpu.memory_space<vmem>>, vector<1x128x128xbf16>
    %99 = vector.shape_cast %98 : vector<1x128x128xbf16> to vector<128x128xbf16>
    %cst_80 = arith.constant dense<0.000000e+00> : vector<30x128xf32>
    %100 = tpu.matmul %97, %99, %cst_80 {dimension_numbers = #tpu.dot_dimension_numbers<[1], [0], [0], [1], [0, 0, 1, 1], [], []>} : vector<30x128xbf16>, vector<128x128xbf16>, vector<30x128xf32> -> vector<30x128xf32>
    %101 = arith.addf %96, %100 : vector<30x128xf32>
    %cst_81 = arith.constant 0.000000e+00 : f32
    %102 = vector.broadcast %cst_81 : f32 to vector<30x128xf32>
    %103 = arith.maximumf %101, %102 : vector<30x128xf32>
    %104 = arith.maximumf %55, %103 : vector<30x128xf32>
    %105 = vector.extract_strided_slice %104 {offsets = [0, 0], sizes = [1, 128], strides = [1, 1]} : vector<30x128xf32> to vector<1x128xf32>
    %106 = vector.extract_strided_slice %104 {offsets = [1, 0], sizes = [1, 128], strides = [1, 1]} : vector<30x128xf32> to vector<1x128xf32>
    %107 = arith.maximumf %105, %106 : vector<1x128xf32>
    %108 = arith.truncf %107 : vector<1x128xf32> to vector<1x128xbf16>
    %c0_82 = arith.constant 0 : index
    %c0_83 = arith.constant 0 : index
    %c0_84 = arith.constant 0 : index
    %c0_85 = arith.constant 0 : index
    %109 = vector.load %arg7[%c0_82, %c0_83, %c0_84, %c0_85] : memref<1x1x15x128xbf16, #tpu.memory_space<vmem>>, vector<1x1x1x128xbf16>
    %110 = vector.shape_cast %109 : vector<1x1x1x128xbf16> to vector<1x128xbf16>
    %111 = vector.shape_cast %108 : vector<1x128xbf16> to vector<1x1x1x128xbf16>
    tpu.vector_store %arg7[%c0_82, %c0_83, %c0_84, %c0_85], %111 {strides = array<i32>} : memref<1x1x15x128xbf16, #tpu.memory_space<vmem>>, vector<1x1x1x128xbf16>,
    %112 = vector.extract_strided_slice %104 {offsets = [2, 0], sizes = [1, 128], strides = [1, 1]} : vector<30x128xf32> to vector<1x128xf32>
    %113 = vector.extract_strided_slice %104 {offsets = [3, 0], sizes = [1, 128], strides = [1, 1]} : vector<30x128xf32> to vector<1x128xf32>
    %114 = arith.maximumf %112, %113 : vector<1x128xf32>
    %115 = arith.truncf %114 : vector<1x128xf32> to vector<1x128xbf16>
    %c0_86 = arith.constant 0 : index
    %c0_87 = arith.constant 0 : index
    %c1_88 = arith.constant 1 : index
    %c0_89 = arith.constant 0 : index
    %116 = vector.load %arg7[%c0_86, %c0_87, %c1_88, %c0_89] : memref<1x1x15x128xbf16, #tpu.memory_space<vmem>>, vector<1x1x1x128xbf16>
    %117 = vector.shape_cast %116 : vector<1x1x1x128xbf16> to vector<1x128xbf16>
    %118 = vector.shape_cast %115 : vector<1x128xbf16> to vector<1x1x1x128xbf16>
    tpu.vector_store %arg7[%c0_86, %c0_87, %c1_88, %c0_89], %118 {strides = array<i32>} : memref<1x1x15x128xbf16, #tpu.memory_space<vmem>>, vector<1x1x1x128xbf16>,
    %119 = vector.extract_strided_slice %104 {offsets = [4, 0], sizes = [1, 128], strides = [1, 1]} : vector<30x128xf32> to vector<1x128xf32>
    %120 = vector.extract_strided_slice %104 {offsets = [5, 0], sizes = [1, 128], strides = [1, 1]} : vector<30x128xf32> to vector<1x128xf32>
    %121 = arith.maximumf %119, %120 : vector<1x128xf32>
    %122 = arith.truncf %121 : vector<1x128xf32> to vector<1x128xbf16>
    %c0_90 = arith.constant 0 : index
    %c0_91 = arith.constant 0 : index
    %c2_92 = arith.constant 2 : index
    %c0_93 = arith.constant 0 : index
    %123 = vector.load %arg7[%c0_90, %c0_91, %c2_92, %c0_93] : memref<1x1x15x128xbf16, #tpu.memory_space<vmem>>, vector<1x1x1x128xbf16>
    %124 = vector.shape_cast %123 : vector<1x1x1x128xbf16> to vector<1x128xbf16>
    %125 = vector.shape_cast %122 : vector<1x128xbf16> to vector<1x1x1x128xbf16>
    tpu.vector_store %arg7[%c0_90, %c0_91, %c2_92, %c0_93], %125 {strides = array<i32>} : memref<1x1x15x128xbf16, #tpu.memory_space<vmem>>, vector<1x1x1x128xbf16>,
    %126 = vector.extract_strided_slice %104 {offsets = [6, 0], sizes = [1, 128], strides = [1, 1]} : vector<30x128xf32> to vector<1x128xf32>
    %127 = vector.extract_strided_slice %104 {offsets = [7, 0], sizes = [1, 128], strides = [1, 1]} : vector<30x128xf32> to vector<1x128xf32>
    %128 = arith.maximumf %126, %127 : vector<1x128xf32>
    %129 = arith.truncf %128 : vector<1x128xf32> to vector<1x128xbf16>
    %c0_94 = arith.constant 0 : index
    %c0_95 = arith.constant 0 : index
    %c3_96 = arith.constant 3 : index
    %c0_97 = arith.constant 0 : index
    %130 = vector.load %arg7[%c0_94, %c0_95, %c3_96, %c0_97] : memref<1x1x15x128xbf16, #tpu.memory_space<vmem>>, vector<1x1x1x128xbf16>
    %131 = vector.shape_cast %130 : vector<1x1x1x128xbf16> to vector<1x128xbf16>
    %132 = vector.shape_cast %129 : vector<1x128xbf16> to vector<1x1x1x128xbf16>
    tpu.vector_store %arg7[%c0_94, %c0_95, %c3_96, %c0_97], %132 {strides = array<i32>} : memref<1x1x15x128xbf16, #tpu.memory_space<vmem>>, vector<1x1x1x128xbf16>,
    %133 = vector.extract_strided_slice %104 {offsets = [8, 0], sizes = [1, 128], strides = [1, 1]} : vector<30x128xf32> to vector<1x128xf32>
    %134 = vector.extract_strided_slice %104 {offsets = [9, 0], sizes = [1, 128], strides = [1, 1]} : vector<30x128xf32> to vector<1x128xf32>
    %135 = arith.maximumf %133, %134 : vector<1x128xf32>
    %136 = arith.truncf %135 : vector<1x128xf32> to vector<1x128xbf16>
    %c0_98 = arith.constant 0 : index
    %c0_99 = arith.constant 0 : index
    %c4_100 = arith.constant 4 : index
    %c0_101 = arith.constant 0 : index
    %137 = vector.load %arg7[%c0_98, %c0_99, %c4_100, %c0_101] : memref<1x1x15x128xbf16, #tpu.memory_space<vmem>>, vector<1x1x1x128xbf16>
    %138 = vector.shape_cast %137 : vector<1x1x1x128xbf16> to vector<1x128xbf16>
    %139 = vector.shape_cast %136 : vector<1x128xbf16> to vector<1x1x1x128xbf16>
    tpu.vector_store %arg7[%c0_98, %c0_99, %c4_100, %c0_101], %139 {strides = array<i32>} : memref<1x1x15x128xbf16, #tpu.memory_space<vmem>>, vector<1x1x1x128xbf16>,
    %140 = vector.extract_strided_slice %104 {offsets = [10, 0], sizes = [1, 128], strides = [1, 1]} : vector<30x128xf32> to vector<1x128xf32>
    %141 = vector.extract_strided_slice %104 {offsets = [11, 0], sizes = [1, 128], strides = [1, 1]} : vector<30x128xf32> to vector<1x128xf32>
    %142 = arith.maximumf %140, %141 : vector<1x128xf32>
    %143 = arith.truncf %142 : vector<1x128xf32> to vector<1x128xbf16>
    %c0_102 = arith.constant 0 : index
    %c0_103 = arith.constant 0 : index
    %c5_104 = arith.constant 5 : index
    %c0_105 = arith.constant 0 : index
    %144 = vector.load %arg7[%c0_102, %c0_103, %c5_104, %c0_105] : memref<1x1x15x128xbf16, #tpu.memory_space<vmem>>, vector<1x1x1x128xbf16>
    %145 = vector.shape_cast %144 : vector<1x1x1x128xbf16> to vector<1x128xbf16>
    %146 = vector.shape_cast %143 : vector<1x128xbf16> to vector<1x1x1x128xbf16>
    tpu.vector_store %arg7[%c0_102, %c0_103, %c5_104, %c0_105], %146 {strides = array<i32>} : memref<1x1x15x128xbf16, #tpu.memory_space<vmem>>, vector<1x1x1x128xbf16>,
    %147 = vector.extract_strided_slice %104 {offsets = [12, 0], sizes = [1, 128], strides = [1, 1]} : vector<30x128xf32> to vector<1x128xf32>
    %148 = vector.extract_strided_slice %104 {offsets = [13, 0], sizes = [1, 128], strides = [1, 1]} : vector<30x128xf32> to vector<1x128xf32>
    %149 = arith.maximumf %147, %148 : vector<1x128xf32>
    %150 = arith.truncf %149 : vector<1x128xf32> to vector<1x128xbf16>
    %c0_106 = arith.constant 0 : index
    %c0_107 = arith.constant 0 : index
    %c6_108 = arith.constant 6 : index
    %c0_109 = arith.constant 0 : index
    %151 = vector.load %arg7[%c0_106, %c0_107, %c6_108, %c0_109] : memref<1x1x15x128xbf16, #tpu.memory_space<vmem>>, vector<1x1x1x128xbf16>
    %152 = vector.shape_cast %151 : vector<1x1x1x128xbf16> to vector<1x128xbf16>
    %153 = vector.shape_cast %150 : vector<1x128xbf16> to vector<1x1x1x128xbf16>
    tpu.vector_store %arg7[%c0_106, %c0_107, %c6_108, %c0_109], %153 {strides = array<i32>} : memref<1x1x15x128xbf16, #tpu.memory_space<vmem>>, vector<1x1x1x128xbf16>,
    %154 = vector.extract_strided_slice %104 {offsets = [14, 0], sizes = [1, 128], strides = [1, 1]} : vector<30x128xf32> to vector<1x128xf32>
    %155 = vector.extract_strided_slice %104 {offsets = [15, 0], sizes = [1, 128], strides = [1, 1]} : vector<30x128xf32> to vector<1x128xf32>
    %156 = arith.maximumf %154, %155 : vector<1x128xf32>
    %157 = arith.truncf %156 : vector<1x128xf32> to vector<1x128xbf16>
    %c0_110 = arith.constant 0 : index
    %c0_111 = arith.constant 0 : index
    %c7_112 = arith.constant 7 : index
    %c0_113 = arith.constant 0 : index
    %158 = vector.load %arg7[%c0_110, %c0_111, %c7_112, %c0_113] : memref<1x1x15x128xbf16, #tpu.memory_space<vmem>>, vector<1x1x1x128xbf16>
    %159 = vector.shape_cast %158 : vector<1x1x1x128xbf16> to vector<1x128xbf16>
    %160 = vector.shape_cast %157 : vector<1x128xbf16> to vector<1x1x1x128xbf16>
    tpu.vector_store %arg7[%c0_110, %c0_111, %c7_112, %c0_113], %160 {strides = array<i32>} : memref<1x1x15x128xbf16, #tpu.memory_space<vmem>>, vector<1x1x1x128xbf16>,
    %161 = vector.extract_strided_slice %104 {offsets = [16, 0], sizes = [1, 128], strides = [1, 1]} : vector<30x128xf32> to vector<1x128xf32>
    %162 = vector.extract_strided_slice %104 {offsets = [17, 0], sizes = [1, 128], strides = [1, 1]} : vector<30x128xf32> to vector<1x128xf32>
    %163 = arith.maximumf %161, %162 : vector<1x128xf32>
    %164 = arith.truncf %163 : vector<1x128xf32> to vector<1x128xbf16>
    %c0_114 = arith.constant 0 : index
    %c0_115 = arith.constant 0 : index
    %c8_116 = arith.constant 8 : index
    %c0_117 = arith.constant 0 : index
    %165 = vector.load %arg7[%c0_114, %c0_115, %c8_116, %c0_117] : memref<1x1x15x128xbf16, #tpu.memory_space<vmem>>, vector<1x1x1x128xbf16>
    %166 = vector.shape_cast %165 : vector<1x1x1x128xbf16> to vector<1x128xbf16>
    %167 = vector.shape_cast %164 : vector<1x128xbf16> to vector<1x1x1x128xbf16>
    tpu.vector_store %arg7[%c0_114, %c0_115, %c8_116, %c0_117], %167 {strides = array<i32>} : memref<1x1x15x128xbf16, #tpu.memory_space<vmem>>, vector<1x1x1x128xbf16>,
    %168 = vector.extract_strided_slice %104 {offsets = [18, 0], sizes = [1, 128], strides = [1, 1]} : vector<30x128xf32> to vector<1x128xf32>
    %169 = vector.extract_strided_slice %104 {offsets = [19, 0], sizes = [1, 128], strides = [1, 1]} : vector<30x128xf32> to vector<1x128xf32>
    %170 = arith.maximumf %168, %169 : vector<1x128xf32>
    %171 = arith.truncf %170 : vector<1x128xf32> to vector<1x128xbf16>
    %c0_118 = arith.constant 0 : index
    %c0_119 = arith.constant 0 : index
    %c9 = arith.constant 9 : index
    %c0_120 = arith.constant 0 : index
    %172 = vector.load %arg7[%c0_118, %c0_119, %c9, %c0_120] : memref<1x1x15x128xbf16, #tpu.memory_space<vmem>>, vector<1x1x1x128xbf16>
    %173 = vector.shape_cast %172 : vector<1x1x1x128xbf16> to vector<1x128xbf16>
    %174 = vector.shape_cast %171 : vector<1x128xbf16> to vector<1x1x1x128xbf16>
    tpu.vector_store %arg7[%c0_118, %c0_119, %c9, %c0_120], %174 {strides = array<i32>} : memref<1x1x15x128xbf16, #tpu.memory_space<vmem>>, vector<1x1x1x128xbf16>,
    %175 = vector.extract_strided_slice %104 {offsets = [20, 0], sizes = [1, 128], strides = [1, 1]} : vector<30x128xf32> to vector<1x128xf32>
    %176 = vector.extract_strided_slice %104 {offsets = [21, 0], sizes = [1, 128], strides = [1, 1]} : vector<30x128xf32> to vector<1x128xf32>
    %177 = arith.maximumf %175, %176 : vector<1x128xf32>
    %178 = arith.truncf %177 : vector<1x128xf32> to vector<1x128xbf16>
    %c0_121 = arith.constant 0 : index
    %c0_122 = arith.constant 0 : index
    %c10 = arith.constant 10 : index
    %c0_123 = arith.constant 0 : index
    %179 = vector.load %arg7[%c0_121, %c0_122, %c10, %c0_123] : memref<1x1x15x128xbf16, #tpu.memory_space<vmem>>, vector<1x1x1x128xbf16>
    %180 = vector.shape_cast %179 : vector<1x1x1x128xbf16> to vector<1x128xbf16>
    %181 = vector.shape_cast %178 : vector<1x128xbf16> to vector<1x1x1x128xbf16>
    tpu.vector_store %arg7[%c0_121, %c0_122, %c10, %c0_123], %181 {strides = array<i32>} : memref<1x1x15x128xbf16, #tpu.memory_space<vmem>>, vector<1x1x1x128xbf16>,
    %182 = vector.extract_strided_slice %104 {offsets = [22, 0], sizes = [1, 128], strides = [1, 1]} : vector<30x128xf32> to vector<1x128xf32>
    %183 = vector.extract_strided_slice %104 {offsets = [23, 0], sizes = [1, 128], strides = [1, 1]} : vector<30x128xf32> to vector<1x128xf32>
    %184 = arith.maximumf %182, %183 : vector<1x128xf32>
    %185 = arith.truncf %184 : vector<1x128xf32> to vector<1x128xbf16>
    %c0_124 = arith.constant 0 : index
    %c0_125 = arith.constant 0 : index
    %c11 = arith.constant 11 : index
    %c0_126 = arith.constant 0 : index
    %186 = vector.load %arg7[%c0_124, %c0_125, %c11, %c0_126] : memref<1x1x15x128xbf16, #tpu.memory_space<vmem>>, vector<1x1x1x128xbf16>
    %187 = vector.shape_cast %186 : vector<1x1x1x128xbf16> to vector<1x128xbf16>
    %188 = vector.shape_cast %185 : vector<1x128xbf16> to vector<1x1x1x128xbf16>
    tpu.vector_store %arg7[%c0_124, %c0_125, %c11, %c0_126], %188 {strides = array<i32>} : memref<1x1x15x128xbf16, #tpu.memory_space<vmem>>, vector<1x1x1x128xbf16>,
    %189 = vector.extract_strided_slice %104 {offsets = [24, 0], sizes = [1, 128], strides = [1, 1]} : vector<30x128xf32> to vector<1x128xf32>
    %190 = vector.extract_strided_slice %104 {offsets = [25, 0], sizes = [1, 128], strides = [1, 1]} : vector<30x128xf32> to vector<1x128xf32>
    %191 = arith.maximumf %189, %190 : vector<1x128xf32>
    %192 = arith.truncf %191 : vector<1x128xf32> to vector<1x128xbf16>
    %c0_127 = arith.constant 0 : index
    %c0_128 = arith.constant 0 : index
    %c12 = arith.constant 12 : index
    %c0_129 = arith.constant 0 : index
    %193 = vector.load %arg7[%c0_127, %c0_128, %c12, %c0_129] : memref<1x1x15x128xbf16, #tpu.memory_space<vmem>>, vector<1x1x1x128xbf16>
    %194 = vector.shape_cast %193 : vector<1x1x1x128xbf16> to vector<1x128xbf16>
    %195 = vector.shape_cast %192 : vector<1x128xbf16> to vector<1x1x1x128xbf16>
    tpu.vector_store %arg7[%c0_127, %c0_128, %c12, %c0_129], %195 {strides = array<i32>} : memref<1x1x15x128xbf16, #tpu.memory_space<vmem>>, vector<1x1x1x128xbf16>,
    %196 = vector.extract_strided_slice %104 {offsets = [26, 0], sizes = [1, 128], strides = [1, 1]} : vector<30x128xf32> to vector<1x128xf32>
    %197 = vector.extract_strided_slice %104 {offsets = [27, 0], sizes = [1, 128], strides = [1, 1]} : vector<30x128xf32> to vector<1x128xf32>
    %198 = arith.maximumf %196, %197 : vector<1x128xf32>
    %199 = arith.truncf %198 : vector<1x128xf32> to vector<1x128xbf16>
    %c0_130 = arith.constant 0 : index
    %c0_131 = arith.constant 0 : index
    %c13 = arith.constant 13 : index
    %c0_132 = arith.constant 0 : index
    %200 = vector.load %arg7[%c0_130, %c0_131, %c13, %c0_132] : memref<1x1x15x128xbf16, #tpu.memory_space<vmem>>, vector<1x1x1x128xbf16>
    %201 = vector.shape_cast %200 : vector<1x1x1x128xbf16> to vector<1x128xbf16>
    %202 = vector.shape_cast %199 : vector<1x128xbf16> to vector<1x1x1x128xbf16>
    tpu.vector_store %arg7[%c0_130, %c0_131, %c13, %c0_132], %202 {strides = array<i32>} : memref<1x1x15x128xbf16, #tpu.memory_space<vmem>>, vector<1x1x1x128xbf16>,
    %203 = vector.extract_strided_slice %104 {offsets = [28, 0], sizes = [1, 128], strides = [1, 1]} : vector<30x128xf32> to vector<1x128xf32>
    %204 = vector.extract_strided_slice %104 {offsets = [29, 0], sizes = [1, 128], strides = [1, 1]} : vector<30x128xf32> to vector<1x128xf32>
    %205 = arith.maximumf %203, %204 : vector<1x128xf32>
    %206 = arith.truncf %205 : vector<1x128xf32> to vector<1x128xbf16>
    %c0_133 = arith.constant 0 : index
    %c0_134 = arith.constant 0 : index
    %c14 = arith.constant 14 : index
    %c0_135 = arith.constant 0 : index
    %207 = vector.load %arg7[%c0_133, %c0_134, %c14, %c0_135] : memref<1x1x15x128xbf16, #tpu.memory_space<vmem>>, vector<1x1x1x128xbf16>
    %208 = vector.shape_cast %207 : vector<1x1x1x128xbf16> to vector<1x128xbf16>
    %209 = vector.shape_cast %206 : vector<1x128xbf16> to vector<1x1x1x128xbf16>
    tpu.vector_store %arg7[%c0_133, %c0_134, %c14, %c0_135], %209 {strides = array<i32>} : memref<1x1x15x128xbf16, #tpu.memory_space<vmem>>, vector<1x1x1x128xbf16>,
    return
  }
  func.func @transform_0(%arg0: i32, %arg1: i32) -> (i32, i32, i32, i32) {
    %c2_i32 = arith.constant 2 : i32
    %0 = arith.muli %c2_i32, %arg1 : i32
    %c0_i32 = arith.constant 0 : i32
    %1 = arith.addi %0, %c0_i32 : i32
    %c0_i32_0 = arith.constant 0 : i32
    %c0_i32_1 = arith.constant 0 : i32
    %c0_i32_2 = arith.constant 0 : i32
    return %arg0, %1, %c0_i32_0, %c0_i32_1 : i32, i32, i32, i32
  }
  func.func @transform_1(%arg0: i32, %arg1: i32) -> (i32, i32, i32, i32) {
    %c2_i32 = arith.constant 2 : i32
    %0 = arith.muli %c2_i32, %arg1 : i32
    %c1_i32 = arith.constant 1 : i32
    %1 = arith.addi %0, %c1_i32 : i32
    %c0_i32 = arith.constant 0 : i32
    %c0_i32_0 = arith.constant 0 : i32
    %c0_i32_1 = arith.constant 0 : i32
    return %arg0, %1, %c0_i32, %c0_i32_0 : i32, i32, i32, i32
  }
  func.func @transform_2(%arg0: i32, %arg1: i32) -> (i32, i32, i32, i32) {
    %c2_i32 = arith.constant 2 : i32
    %0 = arith.muli %c2_i32, %arg1 : i32
    %c2_i32_0 = arith.constant 2 : i32
    %1 = arith.addi %0, %c2_i32_0 : i32
    %c0_i32 = arith.constant 0 : i32
    %c0_i32_1 = arith.constant 0 : i32
    %c0_i32_2 = arith.constant 0 : i32
    return %arg0, %1, %c0_i32, %c0_i32_1 : i32, i32, i32, i32
  }
  func.func @transform_3(%arg0: i32, %arg1: i32) -> (i32, i32, i32, i32) {
    %c2_i32 = arith.constant 2 : i32
    %0 = arith.muli %c2_i32, %arg1 : i32
    %c3_i32 = arith.constant 3 : i32
    %1 = arith.addi %0, %c3_i32 : i32
    %c0_i32 = arith.constant 0 : i32
    %c0_i32_0 = arith.constant 0 : i32
    %c0_i32_1 = arith.constant 0 : i32
    return %arg0, %1, %c0_i32, %c0_i32_0 : i32, i32, i32, i32
  }
  func.func @transform_4(%arg0: i32, %arg1: i32) -> (i32, i32, i32) {
    %c0_i32 = arith.constant 0 : i32
    %c0_i32_0 = arith.constant 0 : i32
    %c0_i32_1 = arith.constant 0 : i32
    %c0_i32_2 = arith.constant 0 : i32
    return %c0_i32, %c0_i32_0, %c0_i32_1 : i32, i32, i32
  }
  func.func @transform_5(%arg0: i32, %arg1: i32) -> (i32, i32, i32, i32) {
    %c0_i32 = arith.constant 0 : i32
    %c0_i32_0 = arith.constant 0 : i32
    %c0_i32_1 = arith.constant 0 : i32
    return %arg0, %arg1, %c0_i32, %c0_i32_0 : i32, i32, i32, i32
  }
}

module attributes {stable_mosaic.version = 11 : i64} {
  func.func @kernel(%arg0: i32, %arg1: i32, %arg2: memref<1x1x15x128xbf16, #tpu.memory_space<vmem>>, %arg3: memref<1x1x15x128xbf16, #tpu.memory_space<vmem>>, %arg4: memref<1x1x15x128xbf16, #tpu.memory_space<vmem>>, %arg5: memref<1x1x15x128xbf16, #tpu.memory_space<vmem>>, %arg6: memref<9x128x128xbf16, #tpu.memory_space<vmem>>, %arg7: memref<1x1x6x128xbf16, #tpu.memory_space<vmem>>) attributes {dimension_semantics = [#tpu.dimension_semantics<parallel>, #tpu.dimension_semantics<parallel>], iteration_bounds = array<i64: 2, 6>, scalar_prefetch = 0 : i64, scratch_operands = 0 : i64, tpu.core_type = #tpu.core_type<tc>, window_params = [{transform_indices = @transform_0, window_bounds = array<i64: 1, 1, 15, 128>}, {transform_indices = @transform_1, window_bounds = array<i64: 1, 1, 15, 128>}, {transform_indices = @transform_2, window_bounds = array<i64: 1, 1, 15, 128>}, {transform_indices = @transform_3, window_bounds = array<i64: 1, 1, 15, 128>}, {pipeline_mode = #tpu.pipeline_mode<synchronous>, transform_indices = @transform_4, window_bounds = array<i64: 9, 128, 128>}, {transform_indices = @transform_5, window_bounds = array<i64: 1, 1, 6, 128>}]} {
    %c0 = arith.constant 0 : index
    %c0_0 = arith.constant 0 : index
    %c0_1 = arith.constant 0 : index
    %c0_2 = arith.constant 0 : index
    %0 = vector.load %arg2[%c0, %c0_0, %c0_1, %c0_2] : memref<1x1x15x128xbf16, #tpu.memory_space<vmem>>, vector<1x1x15x128xbf16>
    %1 = vector.shape_cast %0 : vector<1x1x15x128xbf16> to vector<15x128xbf16>
    %c0_3 = arith.constant 0 : index
    %c0_4 = arith.constant 0 : index
    %c0_5 = arith.constant 0 : index
    %c0_6 = arith.constant 0 : index
    %2 = vector.load %arg3[%c0_3, %c0_4, %c0_5, %c0_6] : memref<1x1x15x128xbf16, #tpu.memory_space<vmem>>, vector<1x1x15x128xbf16>
    %3 = vector.shape_cast %2 : vector<1x1x15x128xbf16> to vector<15x128xbf16>
    %c0_7 = arith.constant 0 : index
    %c0_8 = arith.constant 0 : index
    %c0_9 = arith.constant 0 : index
    %c0_10 = arith.constant 0 : index
    %4 = vector.load %arg4[%c0_7, %c0_8, %c0_9, %c0_10] : memref<1x1x15x128xbf16, #tpu.memory_space<vmem>>, vector<1x1x15x128xbf16>
    %5 = vector.shape_cast %4 : vector<1x1x15x128xbf16> to vector<15x128xbf16>
    %c0_11 = arith.constant 0 : index
    %c0_12 = arith.constant 0 : index
    %c0_13 = arith.constant 0 : index
    %c0_14 = arith.constant 0 : index
    %6 = vector.load %arg5[%c0_11, %c0_12, %c0_13, %c0_14] : memref<1x1x15x128xbf16, #tpu.memory_space<vmem>>, vector<1x1x15x128xbf16>
    %7 = vector.shape_cast %6 : vector<1x1x15x128xbf16> to vector<15x128xbf16>
    %cst = arith.constant 0.000000e+00 : f32
    %8 = vector.broadcast %cst : f32 to vector<13x128xf32>
    %9 = vector.extract_strided_slice %1 {offsets = [0, 0], sizes = [13, 128], strides = [1, 1]} : vector<15x128xbf16> to vector<13x128xbf16>
    %c0_15 = arith.constant 0 : index
    %c0_16 = arith.constant 0 : index
    %c0_17 = arith.constant 0 : index
    %10 = vector.load %arg6[%c0_15, %c0_16, %c0_17] : memref<9x128x128xbf16, #tpu.memory_space<vmem>>, vector<1x128x128xbf16>
    %11 = vector.shape_cast %10 : vector<1x128x128xbf16> to vector<128x128xbf16>
    %cst_18 = arith.constant dense<0.000000e+00> : vector<13x128xf32>
    %12 = tpu.matmul %9, %11, %cst_18 {dimension_numbers = #tpu.dot_dimension_numbers<[1], [0], [0], [1], [0, 0, 1, 1], [], []>} : vector<13x128xbf16>, vector<128x128xbf16>, vector<13x128xf32> -> vector<13x128xf32>
    %13 = arith.addf %8, %12 : vector<13x128xf32>
    %14 = vector.extract_strided_slice %1 {offsets = [1, 0], sizes = [13, 128], strides = [1, 1]} : vector<15x128xbf16> to vector<13x128xbf16>
    %c1 = arith.constant 1 : index
    %c0_19 = arith.constant 0 : index
    %c0_20 = arith.constant 0 : index
    %15 = vector.load %arg6[%c1, %c0_19, %c0_20] : memref<9x128x128xbf16, #tpu.memory_space<vmem>>, vector<1x128x128xbf16>
    %16 = vector.shape_cast %15 : vector<1x128x128xbf16> to vector<128x128xbf16>
    %cst_21 = arith.constant dense<0.000000e+00> : vector<13x128xf32>
    %17 = tpu.matmul %14, %16, %cst_21 {dimension_numbers = #tpu.dot_dimension_numbers<[1], [0], [0], [1], [0, 0, 1, 1], [], []>} : vector<13x128xbf16>, vector<128x128xbf16>, vector<13x128xf32> -> vector<13x128xf32>
    %18 = arith.addf %13, %17 : vector<13x128xf32>
    %19 = vector.extract_strided_slice %1 {offsets = [2, 0], sizes = [13, 128], strides = [1, 1]} : vector<15x128xbf16> to vector<13x128xbf16>
    %c2 = arith.constant 2 : index
    %c0_22 = arith.constant 0 : index
    %c0_23 = arith.constant 0 : index
    %20 = vector.load %arg6[%c2, %c0_22, %c0_23] : memref<9x128x128xbf16, #tpu.memory_space<vmem>>, vector<1x128x128xbf16>
    %21 = vector.shape_cast %20 : vector<1x128x128xbf16> to vector<128x128xbf16>
    %cst_24 = arith.constant dense<0.000000e+00> : vector<13x128xf32>
    %22 = tpu.matmul %19, %21, %cst_24 {dimension_numbers = #tpu.dot_dimension_numbers<[1], [0], [0], [1], [0, 0, 1, 1], [], []>} : vector<13x128xbf16>, vector<128x128xbf16>, vector<13x128xf32> -> vector<13x128xf32>
    %23 = arith.addf %18, %22 : vector<13x128xf32>
    %24 = vector.extract_strided_slice %3 {offsets = [0, 0], sizes = [13, 128], strides = [1, 1]} : vector<15x128xbf16> to vector<13x128xbf16>
    %c3 = arith.constant 3 : index
    %c0_25 = arith.constant 0 : index
    %c0_26 = arith.constant 0 : index
    %25 = vector.load %arg6[%c3, %c0_25, %c0_26] : memref<9x128x128xbf16, #tpu.memory_space<vmem>>, vector<1x128x128xbf16>
    %26 = vector.shape_cast %25 : vector<1x128x128xbf16> to vector<128x128xbf16>
    %cst_27 = arith.constant dense<0.000000e+00> : vector<13x128xf32>
    %27 = tpu.matmul %24, %26, %cst_27 {dimension_numbers = #tpu.dot_dimension_numbers<[1], [0], [0], [1], [0, 0, 1, 1], [], []>} : vector<13x128xbf16>, vector<128x128xbf16>, vector<13x128xf32> -> vector<13x128xf32>
    %28 = arith.addf %23, %27 : vector<13x128xf32>
    %29 = vector.extract_strided_slice %3 {offsets = [1, 0], sizes = [13, 128], strides = [1, 1]} : vector<15x128xbf16> to vector<13x128xbf16>
    %c4 = arith.constant 4 : index
    %c0_28 = arith.constant 0 : index
    %c0_29 = arith.constant 0 : index
    %30 = vector.load %arg6[%c4, %c0_28, %c0_29] : memref<9x128x128xbf16, #tpu.memory_space<vmem>>, vector<1x128x128xbf16>
    %31 = vector.shape_cast %30 : vector<1x128x128xbf16> to vector<128x128xbf16>
    %cst_30 = arith.constant dense<0.000000e+00> : vector<13x128xf32>
    %32 = tpu.matmul %29, %31, %cst_30 {dimension_numbers = #tpu.dot_dimension_numbers<[1], [0], [0], [1], [0, 0, 1, 1], [], []>} : vector<13x128xbf16>, vector<128x128xbf16>, vector<13x128xf32> -> vector<13x128xf32>
    %33 = arith.addf %28, %32 : vector<13x128xf32>
    %34 = vector.extract_strided_slice %3 {offsets = [2, 0], sizes = [13, 128], strides = [1, 1]} : vector<15x128xbf16> to vector<13x128xbf16>
    %c5 = arith.constant 5 : index
    %c0_31 = arith.constant 0 : index
    %c0_32 = arith.constant 0 : index
    %35 = vector.load %arg6[%c5, %c0_31, %c0_32] : memref<9x128x128xbf16, #tpu.memory_space<vmem>>, vector<1x128x128xbf16>
    %36 = vector.shape_cast %35 : vector<1x128x128xbf16> to vector<128x128xbf16>
    %cst_33 = arith.constant dense<0.000000e+00> : vector<13x128xf32>
    %37 = tpu.matmul %34, %36, %cst_33 {dimension_numbers = #tpu.dot_dimension_numbers<[1], [0], [0], [1], [0, 0, 1, 1], [], []>} : vector<13x128xbf16>, vector<128x128xbf16>, vector<13x128xf32> -> vector<13x128xf32>
    %38 = arith.addf %33, %37 : vector<13x128xf32>
    %39 = vector.extract_strided_slice %5 {offsets = [0, 0], sizes = [13, 128], strides = [1, 1]} : vector<15x128xbf16> to vector<13x128xbf16>
    %c6 = arith.constant 6 : index
    %c0_34 = arith.constant 0 : index
    %c0_35 = arith.constant 0 : index
    %40 = vector.load %arg6[%c6, %c0_34, %c0_35] : memref<9x128x128xbf16, #tpu.memory_space<vmem>>, vector<1x128x128xbf16>
    %41 = vector.shape_cast %40 : vector<1x128x128xbf16> to vector<128x128xbf16>
    %cst_36 = arith.constant dense<0.000000e+00> : vector<13x128xf32>
    %42 = tpu.matmul %39, %41, %cst_36 {dimension_numbers = #tpu.dot_dimension_numbers<[1], [0], [0], [1], [0, 0, 1, 1], [], []>} : vector<13x128xbf16>, vector<128x128xbf16>, vector<13x128xf32> -> vector<13x128xf32>
    %43 = arith.addf %38, %42 : vector<13x128xf32>
    %44 = vector.extract_strided_slice %5 {offsets = [1, 0], sizes = [13, 128], strides = [1, 1]} : vector<15x128xbf16> to vector<13x128xbf16>
    %c7 = arith.constant 7 : index
    %c0_37 = arith.constant 0 : index
    %c0_38 = arith.constant 0 : index
    %45 = vector.load %arg6[%c7, %c0_37, %c0_38] : memref<9x128x128xbf16, #tpu.memory_space<vmem>>, vector<1x128x128xbf16>
    %46 = vector.shape_cast %45 : vector<1x128x128xbf16> to vector<128x128xbf16>
    %cst_39 = arith.constant dense<0.000000e+00> : vector<13x128xf32>
    %47 = tpu.matmul %44, %46, %cst_39 {dimension_numbers = #tpu.dot_dimension_numbers<[1], [0], [0], [1], [0, 0, 1, 1], [], []>} : vector<13x128xbf16>, vector<128x128xbf16>, vector<13x128xf32> -> vector<13x128xf32>
    %48 = arith.addf %43, %47 : vector<13x128xf32>
    %49 = vector.extract_strided_slice %5 {offsets = [2, 0], sizes = [13, 128], strides = [1, 1]} : vector<15x128xbf16> to vector<13x128xbf16>
    %c8 = arith.constant 8 : index
    %c0_40 = arith.constant 0 : index
    %c0_41 = arith.constant 0 : index
    %50 = vector.load %arg6[%c8, %c0_40, %c0_41] : memref<9x128x128xbf16, #tpu.memory_space<vmem>>, vector<1x128x128xbf16>
    %51 = vector.shape_cast %50 : vector<1x128x128xbf16> to vector<128x128xbf16>
    %cst_42 = arith.constant dense<0.000000e+00> : vector<13x128xf32>
    %52 = tpu.matmul %49, %51, %cst_42 {dimension_numbers = #tpu.dot_dimension_numbers<[1], [0], [0], [1], [0, 0, 1, 1], [], []>} : vector<13x128xbf16>, vector<128x128xbf16>, vector<13x128xf32> -> vector<13x128xf32>
    %53 = arith.addf %48, %52 : vector<13x128xf32>
    %cst_43 = arith.constant 0.000000e+00 : f32
    %54 = vector.broadcast %cst_43 : f32 to vector<13x128xf32>
    %55 = arith.maximumf %53, %54 : vector<13x128xf32>
    %cst_44 = arith.constant 0.000000e+00 : f32
    %56 = vector.broadcast %cst_44 : f32 to vector<13x128xf32>
    %57 = vector.extract_strided_slice %3 {offsets = [0, 0], sizes = [13, 128], strides = [1, 1]} : vector<15x128xbf16> to vector<13x128xbf16>
    %c0_45 = arith.constant 0 : index
    %c0_46 = arith.constant 0 : index
    %c0_47 = arith.constant 0 : index
    %58 = vector.load %arg6[%c0_45, %c0_46, %c0_47] : memref<9x128x128xbf16, #tpu.memory_space<vmem>>, vector<1x128x128xbf16>
    %59 = vector.shape_cast %58 : vector<1x128x128xbf16> to vector<128x128xbf16>
    %cst_48 = arith.constant dense<0.000000e+00> : vector<13x128xf32>
    %60 = tpu.matmul %57, %59, %cst_48 {dimension_numbers = #tpu.dot_dimension_numbers<[1], [0], [0], [1], [0, 0, 1, 1], [], []>} : vector<13x128xbf16>, vector<128x128xbf16>, vector<13x128xf32> -> vector<13x128xf32>
    %61 = arith.addf %56, %60 : vector<13x128xf32>
    %62 = vector.extract_strided_slice %3 {offsets = [1, 0], sizes = [13, 128], strides = [1, 1]} : vector<15x128xbf16> to vector<13x128xbf16>
    %c1_49 = arith.constant 1 : index
    %c0_50 = arith.constant 0 : index
    %c0_51 = arith.constant 0 : index
    %63 = vector.load %arg6[%c1_49, %c0_50, %c0_51] : memref<9x128x128xbf16, #tpu.memory_space<vmem>>, vector<1x128x128xbf16>
    %64 = vector.shape_cast %63 : vector<1x128x128xbf16> to vector<128x128xbf16>
    %cst_52 = arith.constant dense<0.000000e+00> : vector<13x128xf32>
    %65 = tpu.matmul %62, %64, %cst_52 {dimension_numbers = #tpu.dot_dimension_numbers<[1], [0], [0], [1], [0, 0, 1, 1], [], []>} : vector<13x128xbf16>, vector<128x128xbf16>, vector<13x128xf32> -> vector<13x128xf32>
    %66 = arith.addf %61, %65 : vector<13x128xf32>
    %67 = vector.extract_strided_slice %3 {offsets = [2, 0], sizes = [13, 128], strides = [1, 1]} : vector<15x128xbf16> to vector<13x128xbf16>
    %c2_53 = arith.constant 2 : index
    %c0_54 = arith.constant 0 : index
    %c0_55 = arith.constant 0 : index
    %68 = vector.load %arg6[%c2_53, %c0_54, %c0_55] : memref<9x128x128xbf16, #tpu.memory_space<vmem>>, vector<1x128x128xbf16>
    %69 = vector.shape_cast %68 : vector<1x128x128xbf16> to vector<128x128xbf16>
    %cst_56 = arith.constant dense<0.000000e+00> : vector<13x128xf32>
    %70 = tpu.matmul %67, %69, %cst_56 {dimension_numbers = #tpu.dot_dimension_numbers<[1], [0], [0], [1], [0, 0, 1, 1], [], []>} : vector<13x128xbf16>, vector<128x128xbf16>, vector<13x128xf32> -> vector<13x128xf32>
    %71 = arith.addf %66, %70 : vector<13x128xf32>
    %72 = vector.extract_strided_slice %5 {offsets = [0, 0], sizes = [13, 128], strides = [1, 1]} : vector<15x128xbf16> to vector<13x128xbf16>
    %c3_57 = arith.constant 3 : index
    %c0_58 = arith.constant 0 : index
    %c0_59 = arith.constant 0 : index
    %73 = vector.load %arg6[%c3_57, %c0_58, %c0_59] : memref<9x128x128xbf16, #tpu.memory_space<vmem>>, vector<1x128x128xbf16>
    %74 = vector.shape_cast %73 : vector<1x128x128xbf16> to vector<128x128xbf16>
    %cst_60 = arith.constant dense<0.000000e+00> : vector<13x128xf32>
    %75 = tpu.matmul %72, %74, %cst_60 {dimension_numbers = #tpu.dot_dimension_numbers<[1], [0], [0], [1], [0, 0, 1, 1], [], []>} : vector<13x128xbf16>, vector<128x128xbf16>, vector<13x128xf32> -> vector<13x128xf32>
    %76 = arith.addf %71, %75 : vector<13x128xf32>
    %77 = vector.extract_strided_slice %5 {offsets = [1, 0], sizes = [13, 128], strides = [1, 1]} : vector<15x128xbf16> to vector<13x128xbf16>
    %c4_61 = arith.constant 4 : index
    %c0_62 = arith.constant 0 : index
    %c0_63 = arith.constant 0 : index
    %78 = vector.load %arg6[%c4_61, %c0_62, %c0_63] : memref<9x128x128xbf16, #tpu.memory_space<vmem>>, vector<1x128x128xbf16>
    %79 = vector.shape_cast %78 : vector<1x128x128xbf16> to vector<128x128xbf16>
    %cst_64 = arith.constant dense<0.000000e+00> : vector<13x128xf32>
    %80 = tpu.matmul %77, %79, %cst_64 {dimension_numbers = #tpu.dot_dimension_numbers<[1], [0], [0], [1], [0, 0, 1, 1], [], []>} : vector<13x128xbf16>, vector<128x128xbf16>, vector<13x128xf32> -> vector<13x128xf32>
    %81 = arith.addf %76, %80 : vector<13x128xf32>
    %82 = vector.extract_strided_slice %5 {offsets = [2, 0], sizes = [13, 128], strides = [1, 1]} : vector<15x128xbf16> to vector<13x128xbf16>
    %c5_65 = arith.constant 5 : index
    %c0_66 = arith.constant 0 : index
    %c0_67 = arith.constant 0 : index
    %83 = vector.load %arg6[%c5_65, %c0_66, %c0_67] : memref<9x128x128xbf16, #tpu.memory_space<vmem>>, vector<1x128x128xbf16>
    %84 = vector.shape_cast %83 : vector<1x128x128xbf16> to vector<128x128xbf16>
    %cst_68 = arith.constant dense<0.000000e+00> : vector<13x128xf32>
    %85 = tpu.matmul %82, %84, %cst_68 {dimension_numbers = #tpu.dot_dimension_numbers<[1], [0], [0], [1], [0, 0, 1, 1], [], []>} : vector<13x128xbf16>, vector<128x128xbf16>, vector<13x128xf32> -> vector<13x128xf32>
    %86 = arith.addf %81, %85 : vector<13x128xf32>
    %87 = vector.extract_strided_slice %7 {offsets = [0, 0], sizes = [13, 128], strides = [1, 1]} : vector<15x128xbf16> to vector<13x128xbf16>
    %c6_69 = arith.constant 6 : index
    %c0_70 = arith.constant 0 : index
    %c0_71 = arith.constant 0 : index
    %88 = vector.load %arg6[%c6_69, %c0_70, %c0_71] : memref<9x128x128xbf16, #tpu.memory_space<vmem>>, vector<1x128x128xbf16>
    %89 = vector.shape_cast %88 : vector<1x128x128xbf16> to vector<128x128xbf16>
    %cst_72 = arith.constant dense<0.000000e+00> : vector<13x128xf32>
    %90 = tpu.matmul %87, %89, %cst_72 {dimension_numbers = #tpu.dot_dimension_numbers<[1], [0], [0], [1], [0, 0, 1, 1], [], []>} : vector<13x128xbf16>, vector<128x128xbf16>, vector<13x128xf32> -> vector<13x128xf32>
    %91 = arith.addf %86, %90 : vector<13x128xf32>
    %92 = vector.extract_strided_slice %7 {offsets = [1, 0], sizes = [13, 128], strides = [1, 1]} : vector<15x128xbf16> to vector<13x128xbf16>
    %c7_73 = arith.constant 7 : index
    %c0_74 = arith.constant 0 : index
    %c0_75 = arith.constant 0 : index
    %93 = vector.load %arg6[%c7_73, %c0_74, %c0_75] : memref<9x128x128xbf16, #tpu.memory_space<vmem>>, vector<1x128x128xbf16>
    %94 = vector.shape_cast %93 : vector<1x128x128xbf16> to vector<128x128xbf16>
    %cst_76 = arith.constant dense<0.000000e+00> : vector<13x128xf32>
    %95 = tpu.matmul %92, %94, %cst_76 {dimension_numbers = #tpu.dot_dimension_numbers<[1], [0], [0], [1], [0, 0, 1, 1], [], []>} : vector<13x128xbf16>, vector<128x128xbf16>, vector<13x128xf32> -> vector<13x128xf32>
    %96 = arith.addf %91, %95 : vector<13x128xf32>
    %97 = vector.extract_strided_slice %7 {offsets = [2, 0], sizes = [13, 128], strides = [1, 1]} : vector<15x128xbf16> to vector<13x128xbf16>
    %c8_77 = arith.constant 8 : index
    %c0_78 = arith.constant 0 : index
    %c0_79 = arith.constant 0 : index
    %98 = vector.load %arg6[%c8_77, %c0_78, %c0_79] : memref<9x128x128xbf16, #tpu.memory_space<vmem>>, vector<1x128x128xbf16>
    %99 = vector.shape_cast %98 : vector<1x128x128xbf16> to vector<128x128xbf16>
    %cst_80 = arith.constant dense<0.000000e+00> : vector<13x128xf32>
    %100 = tpu.matmul %97, %99, %cst_80 {dimension_numbers = #tpu.dot_dimension_numbers<[1], [0], [0], [1], [0, 0, 1, 1], [], []>} : vector<13x128xbf16>, vector<128x128xbf16>, vector<13x128xf32> -> vector<13x128xf32>
    %101 = arith.addf %96, %100 : vector<13x128xf32>
    %cst_81 = arith.constant 0.000000e+00 : f32
    %102 = vector.broadcast %cst_81 : f32 to vector<13x128xf32>
    %103 = arith.maximumf %101, %102 : vector<13x128xf32>
    %104 = arith.maximumf %55, %103 : vector<13x128xf32>
    %105 = vector.extract_strided_slice %104 {offsets = [0, 0], sizes = [1, 128], strides = [1, 1]} : vector<13x128xf32> to vector<1x128xf32>
    %106 = vector.extract_strided_slice %104 {offsets = [1, 0], sizes = [1, 128], strides = [1, 1]} : vector<13x128xf32> to vector<1x128xf32>
    %107 = arith.maximumf %105, %106 : vector<1x128xf32>
    %108 = arith.truncf %107 : vector<1x128xf32> to vector<1x128xbf16>
    %c0_82 = arith.constant 0 : index
    %c0_83 = arith.constant 0 : index
    %c0_84 = arith.constant 0 : index
    %c0_85 = arith.constant 0 : index
    %109 = vector.load %arg7[%c0_82, %c0_83, %c0_84, %c0_85] : memref<1x1x6x128xbf16, #tpu.memory_space<vmem>>, vector<1x1x1x128xbf16>
    %110 = vector.shape_cast %109 : vector<1x1x1x128xbf16> to vector<1x128xbf16>
    %111 = vector.shape_cast %108 : vector<1x128xbf16> to vector<1x1x1x128xbf16>
    tpu.vector_store %arg7[%c0_82, %c0_83, %c0_84, %c0_85], %111 {strides = array<i32>} : memref<1x1x6x128xbf16, #tpu.memory_space<vmem>>, vector<1x1x1x128xbf16>,
    %112 = vector.extract_strided_slice %104 {offsets = [2, 0], sizes = [1, 128], strides = [1, 1]} : vector<13x128xf32> to vector<1x128xf32>
    %113 = vector.extract_strided_slice %104 {offsets = [3, 0], sizes = [1, 128], strides = [1, 1]} : vector<13x128xf32> to vector<1x128xf32>
    %114 = arith.maximumf %112, %113 : vector<1x128xf32>
    %115 = arith.truncf %114 : vector<1x128xf32> to vector<1x128xbf16>
    %c0_86 = arith.constant 0 : index
    %c0_87 = arith.constant 0 : index
    %c1_88 = arith.constant 1 : index
    %c0_89 = arith.constant 0 : index
    %116 = vector.load %arg7[%c0_86, %c0_87, %c1_88, %c0_89] : memref<1x1x6x128xbf16, #tpu.memory_space<vmem>>, vector<1x1x1x128xbf16>
    %117 = vector.shape_cast %116 : vector<1x1x1x128xbf16> to vector<1x128xbf16>
    %118 = vector.shape_cast %115 : vector<1x128xbf16> to vector<1x1x1x128xbf16>
    tpu.vector_store %arg7[%c0_86, %c0_87, %c1_88, %c0_89], %118 {strides = array<i32>} : memref<1x1x6x128xbf16, #tpu.memory_space<vmem>>, vector<1x1x1x128xbf16>,
    %119 = vector.extract_strided_slice %104 {offsets = [4, 0], sizes = [1, 128], strides = [1, 1]} : vector<13x128xf32> to vector<1x128xf32>
    %120 = vector.extract_strided_slice %104 {offsets = [5, 0], sizes = [1, 128], strides = [1, 1]} : vector<13x128xf32> to vector<1x128xf32>
    %121 = arith.maximumf %119, %120 : vector<1x128xf32>
    %122 = arith.truncf %121 : vector<1x128xf32> to vector<1x128xbf16>
    %c0_90 = arith.constant 0 : index
    %c0_91 = arith.constant 0 : index
    %c2_92 = arith.constant 2 : index
    %c0_93 = arith.constant 0 : index
    %123 = vector.load %arg7[%c0_90, %c0_91, %c2_92, %c0_93] : memref<1x1x6x128xbf16, #tpu.memory_space<vmem>>, vector<1x1x1x128xbf16>
    %124 = vector.shape_cast %123 : vector<1x1x1x128xbf16> to vector<1x128xbf16>
    %125 = vector.shape_cast %122 : vector<1x128xbf16> to vector<1x1x1x128xbf16>
    tpu.vector_store %arg7[%c0_90, %c0_91, %c2_92, %c0_93], %125 {strides = array<i32>} : memref<1x1x6x128xbf16, #tpu.memory_space<vmem>>, vector<1x1x1x128xbf16>,
    %126 = vector.extract_strided_slice %104 {offsets = [6, 0], sizes = [1, 128], strides = [1, 1]} : vector<13x128xf32> to vector<1x128xf32>
    %127 = vector.extract_strided_slice %104 {offsets = [7, 0], sizes = [1, 128], strides = [1, 1]} : vector<13x128xf32> to vector<1x128xf32>
    %128 = arith.maximumf %126, %127 : vector<1x128xf32>
    %129 = arith.truncf %128 : vector<1x128xf32> to vector<1x128xbf16>
    %c0_94 = arith.constant 0 : index
    %c0_95 = arith.constant 0 : index
    %c3_96 = arith.constant 3 : index
    %c0_97 = arith.constant 0 : index
    %130 = vector.load %arg7[%c0_94, %c0_95, %c3_96, %c0_97] : memref<1x1x6x128xbf16, #tpu.memory_space<vmem>>, vector<1x1x1x128xbf16>
    %131 = vector.shape_cast %130 : vector<1x1x1x128xbf16> to vector<1x128xbf16>
    %132 = vector.shape_cast %129 : vector<1x128xbf16> to vector<1x1x1x128xbf16>
    tpu.vector_store %arg7[%c0_94, %c0_95, %c3_96, %c0_97], %132 {strides = array<i32>} : memref<1x1x6x128xbf16, #tpu.memory_space<vmem>>, vector<1x1x1x128xbf16>,
    %133 = vector.extract_strided_slice %104 {offsets = [8, 0], sizes = [1, 128], strides = [1, 1]} : vector<13x128xf32> to vector<1x128xf32>
    %134 = vector.extract_strided_slice %104 {offsets = [9, 0], sizes = [1, 128], strides = [1, 1]} : vector<13x128xf32> to vector<1x128xf32>
    %135 = arith.maximumf %133, %134 : vector<1x128xf32>
    %136 = arith.truncf %135 : vector<1x128xf32> to vector<1x128xbf16>
    %c0_98 = arith.constant 0 : index
    %c0_99 = arith.constant 0 : index
    %c4_100 = arith.constant 4 : index
    %c0_101 = arith.constant 0 : index
    %137 = vector.load %arg7[%c0_98, %c0_99, %c4_100, %c0_101] : memref<1x1x6x128xbf16, #tpu.memory_space<vmem>>, vector<1x1x1x128xbf16>
    %138 = vector.shape_cast %137 : vector<1x1x1x128xbf16> to vector<1x128xbf16>
    %139 = vector.shape_cast %136 : vector<1x128xbf16> to vector<1x1x1x128xbf16>
    tpu.vector_store %arg7[%c0_98, %c0_99, %c4_100, %c0_101], %139 {strides = array<i32>} : memref<1x1x6x128xbf16, #tpu.memory_space<vmem>>, vector<1x1x1x128xbf16>,
    %140 = vector.extract_strided_slice %104 {offsets = [10, 0], sizes = [1, 128], strides = [1, 1]} : vector<13x128xf32> to vector<1x128xf32>
    %141 = vector.extract_strided_slice %104 {offsets = [11, 0], sizes = [1, 128], strides = [1, 1]} : vector<13x128xf32> to vector<1x128xf32>
    %142 = arith.maximumf %140, %141 : vector<1x128xf32>
    %143 = arith.truncf %142 : vector<1x128xf32> to vector<1x128xbf16>
    %c0_102 = arith.constant 0 : index
    %c0_103 = arith.constant 0 : index
    %c5_104 = arith.constant 5 : index
    %c0_105 = arith.constant 0 : index
    %144 = vector.load %arg7[%c0_102, %c0_103, %c5_104, %c0_105] : memref<1x1x6x128xbf16, #tpu.memory_space<vmem>>, vector<1x1x1x128xbf16>
    %145 = vector.shape_cast %144 : vector<1x1x1x128xbf16> to vector<1x128xbf16>
    %146 = vector.shape_cast %143 : vector<1x128xbf16> to vector<1x1x1x128xbf16>
    tpu.vector_store %arg7[%c0_102, %c0_103, %c5_104, %c0_105], %146 {strides = array<i32>} : memref<1x1x6x128xbf16, #tpu.memory_space<vmem>>, vector<1x1x1x128xbf16>,
    return
  }
  func.func @transform_0(%arg0: i32, %arg1: i32) -> (i32, i32, i32, i32) {
    %c2_i32 = arith.constant 2 : i32
    %0 = arith.muli %c2_i32, %arg1 : i32
    %c0_i32 = arith.constant 0 : i32
    %1 = arith.addi %0, %c0_i32 : i32
    %c0_i32_0 = arith.constant 0 : i32
    %c0_i32_1 = arith.constant 0 : i32
    %c0_i32_2 = arith.constant 0 : i32
    return %arg0, %1, %c0_i32_0, %c0_i32_1 : i32, i32, i32, i32
  }
  func.func @transform_1(%arg0: i32, %arg1: i32) -> (i32, i32, i32, i32) {
    %c2_i32 = arith.constant 2 : i32
    %0 = arith.muli %c2_i32, %arg1 : i32
    %c1_i32 = arith.constant 1 : i32
    %1 = arith.addi %0, %c1_i32 : i32
    %c0_i32 = arith.constant 0 : i32
    %c0_i32_0 = arith.constant 0 : i32
    %c0_i32_1 = arith.constant 0 : i32
    return %arg0, %1, %c0_i32, %c0_i32_0 : i32, i32, i32, i32
  }
  func.func @transform_2(%arg0: i32, %arg1: i32) -> (i32, i32, i32, i32) {
    %c2_i32 = arith.constant 2 : i32
    %0 = arith.muli %c2_i32, %arg1 : i32
    %c2_i32_0 = arith.constant 2 : i32
    %1 = arith.addi %0, %c2_i32_0 : i32
    %c0_i32 = arith.constant 0 : i32
    %c0_i32_1 = arith.constant 0 : i32
    %c0_i32_2 = arith.constant 0 : i32
    return %arg0, %1, %c0_i32, %c0_i32_1 : i32, i32, i32, i32
  }
  func.func @transform_3(%arg0: i32, %arg1: i32) -> (i32, i32, i32, i32) {
    %c2_i32 = arith.constant 2 : i32
    %0 = arith.muli %c2_i32, %arg1 : i32
    %c3_i32 = arith.constant 3 : i32
    %1 = arith.addi %0, %c3_i32 : i32
    %c0_i32 = arith.constant 0 : i32
    %c0_i32_0 = arith.constant 0 : i32
    %c0_i32_1 = arith.constant 0 : i32
    return %arg0, %1, %c0_i32, %c0_i32_0 : i32, i32, i32, i32
  }
  func.func @transform_4(%arg0: i32, %arg1: i32) -> (i32, i32, i32) {
    %c0_i32 = arith.constant 0 : i32
    %c0_i32_0 = arith.constant 0 : i32
    %c0_i32_1 = arith.constant 0 : i32
    %c0_i32_2 = arith.constant 0 : i32
    return %c0_i32, %c0_i32_0, %c0_i32_1 : i32, i32, i32
  }
  func.func @transform_5(%arg0: i32, %arg1: i32) -> (i32, i32, i32, i32) {
    %c0_i32 = arith.constant 0 : i32
    %c0_i32_0 = arith.constant 0 : i32
    %c0_i32_1 = arith.constant 0 : i32
    return %arg0, %arg1, %c0_i32, %c0_i32_0 : i32, i32, i32, i32
  }
}

module attributes {stable_mosaic.version = 11 : i64} {
  func.func @kernel(%arg0: i32, %arg1: i32, %arg2: memref<1x1x6x128xbf16, #tpu.memory_space<vmem>>, %arg3: memref<1x1x6x128xbf16, #tpu.memory_space<vmem>>, %arg4: memref<1x1x6x128xbf16, #tpu.memory_space<vmem>>, %arg5: memref<1x1x6x128xbf16, #tpu.memory_space<vmem>>, %arg6: memref<9x128x256xbf16, #tpu.memory_space<vmem>>, %arg7: memref<1x1x2x256xbf16, #tpu.memory_space<vmem>>) attributes {dimension_semantics = [#tpu.dimension_semantics<parallel>, #tpu.dimension_semantics<parallel>], iteration_bounds = array<i64: 2, 2>, scalar_prefetch = 0 : i64, scratch_operands = 0 : i64, tpu.core_type = #tpu.core_type<tc>, window_params = [{transform_indices = @transform_0, window_bounds = array<i64: 1, 1, 6, 128>}, {transform_indices = @transform_1, window_bounds = array<i64: 1, 1, 6, 128>}, {transform_indices = @transform_2, window_bounds = array<i64: 1, 1, 6, 128>}, {transform_indices = @transform_3, window_bounds = array<i64: 1, 1, 6, 128>}, {pipeline_mode = #tpu.pipeline_mode<synchronous>, transform_indices = @transform_4, window_bounds = array<i64: 9, 128, 256>}, {transform_indices = @transform_5, window_bounds = array<i64: 1, 1, 2, 256>}]} {
    %c0 = arith.constant 0 : index
    %c0_0 = arith.constant 0 : index
    %c0_1 = arith.constant 0 : index
    %c0_2 = arith.constant 0 : index
    %0 = vector.load %arg2[%c0, %c0_0, %c0_1, %c0_2] : memref<1x1x6x128xbf16, #tpu.memory_space<vmem>>, vector<1x1x6x128xbf16>
    %1 = vector.shape_cast %0 : vector<1x1x6x128xbf16> to vector<6x128xbf16>
    %c0_3 = arith.constant 0 : index
    %c0_4 = arith.constant 0 : index
    %c0_5 = arith.constant 0 : index
    %c0_6 = arith.constant 0 : index
    %2 = vector.load %arg3[%c0_3, %c0_4, %c0_5, %c0_6] : memref<1x1x6x128xbf16, #tpu.memory_space<vmem>>, vector<1x1x6x128xbf16>
    %3 = vector.shape_cast %2 : vector<1x1x6x128xbf16> to vector<6x128xbf16>
    %c0_7 = arith.constant 0 : index
    %c0_8 = arith.constant 0 : index
    %c0_9 = arith.constant 0 : index
    %c0_10 = arith.constant 0 : index
    %4 = vector.load %arg4[%c0_7, %c0_8, %c0_9, %c0_10] : memref<1x1x6x128xbf16, #tpu.memory_space<vmem>>, vector<1x1x6x128xbf16>
    %5 = vector.shape_cast %4 : vector<1x1x6x128xbf16> to vector<6x128xbf16>
    %c0_11 = arith.constant 0 : index
    %c0_12 = arith.constant 0 : index
    %c0_13 = arith.constant 0 : index
    %c0_14 = arith.constant 0 : index
    %6 = vector.load %arg5[%c0_11, %c0_12, %c0_13, %c0_14] : memref<1x1x6x128xbf16, #tpu.memory_space<vmem>>, vector<1x1x6x128xbf16>
    %7 = vector.shape_cast %6 : vector<1x1x6x128xbf16> to vector<6x128xbf16>
    %cst = arith.constant 0.000000e+00 : f32
    %8 = vector.broadcast %cst : f32 to vector<4x256xf32>
    %9 = vector.extract_strided_slice %1 {offsets = [0, 0], sizes = [4, 128], strides = [1, 1]} : vector<6x128xbf16> to vector<4x128xbf16>
    %c0_15 = arith.constant 0 : index
    %c0_16 = arith.constant 0 : index
    %c0_17 = arith.constant 0 : index
    %10 = vector.load %arg6[%c0_15, %c0_16, %c0_17] : memref<9x128x256xbf16, #tpu.memory_space<vmem>>, vector<1x128x256xbf16>
    %11 = vector.shape_cast %10 : vector<1x128x256xbf16> to vector<128x256xbf16>
    %cst_18 = arith.constant dense<0.000000e+00> : vector<4x256xf32>
    %12 = tpu.matmul %9, %11, %cst_18 {dimension_numbers = #tpu.dot_dimension_numbers<[1], [0], [0], [1], [0, 0, 1, 1], [], []>} : vector<4x128xbf16>, vector<128x256xbf16>, vector<4x256xf32> -> vector<4x256xf32>
    %13 = arith.addf %8, %12 : vector<4x256xf32>
    %14 = vector.extract_strided_slice %1 {offsets = [1, 0], sizes = [4, 128], strides = [1, 1]} : vector<6x128xbf16> to vector<4x128xbf16>
    %c1 = arith.constant 1 : index
    %c0_19 = arith.constant 0 : index
    %c0_20 = arith.constant 0 : index
    %15 = vector.load %arg6[%c1, %c0_19, %c0_20] : memref<9x128x256xbf16, #tpu.memory_space<vmem>>, vector<1x128x256xbf16>
    %16 = vector.shape_cast %15 : vector<1x128x256xbf16> to vector<128x256xbf16>
    %cst_21 = arith.constant dense<0.000000e+00> : vector<4x256xf32>
    %17 = tpu.matmul %14, %16, %cst_21 {dimension_numbers = #tpu.dot_dimension_numbers<[1], [0], [0], [1], [0, 0, 1, 1], [], []>} : vector<4x128xbf16>, vector<128x256xbf16>, vector<4x256xf32> -> vector<4x256xf32>
    %18 = arith.addf %13, %17 : vector<4x256xf32>
    %19 = vector.extract_strided_slice %1 {offsets = [2, 0], sizes = [4, 128], strides = [1, 1]} : vector<6x128xbf16> to vector<4x128xbf16>
    %c2 = arith.constant 2 : index
    %c0_22 = arith.constant 0 : index
    %c0_23 = arith.constant 0 : index
    %20 = vector.load %arg6[%c2, %c0_22, %c0_23] : memref<9x128x256xbf16, #tpu.memory_space<vmem>>, vector<1x128x256xbf16>
    %21 = vector.shape_cast %20 : vector<1x128x256xbf16> to vector<128x256xbf16>
    %cst_24 = arith.constant dense<0.000000e+00> : vector<4x256xf32>
    %22 = tpu.matmul %19, %21, %cst_24 {dimension_numbers = #tpu.dot_dimension_numbers<[1], [0], [0], [1], [0, 0, 1, 1], [], []>} : vector<4x128xbf16>, vector<128x256xbf16>, vector<4x256xf32> -> vector<4x256xf32>
    %23 = arith.addf %18, %22 : vector<4x256xf32>
    %24 = vector.extract_strided_slice %3 {offsets = [0, 0], sizes = [4, 128], strides = [1, 1]} : vector<6x128xbf16> to vector<4x128xbf16>
    %c3 = arith.constant 3 : index
    %c0_25 = arith.constant 0 : index
    %c0_26 = arith.constant 0 : index
    %25 = vector.load %arg6[%c3, %c0_25, %c0_26] : memref<9x128x256xbf16, #tpu.memory_space<vmem>>, vector<1x128x256xbf16>
    %26 = vector.shape_cast %25 : vector<1x128x256xbf16> to vector<128x256xbf16>
    %cst_27 = arith.constant dense<0.000000e+00> : vector<4x256xf32>
    %27 = tpu.matmul %24, %26, %cst_27 {dimension_numbers = #tpu.dot_dimension_numbers<[1], [0], [0], [1], [0, 0, 1, 1], [], []>} : vector<4x128xbf16>, vector<128x256xbf16>, vector<4x256xf32> -> vector<4x256xf32>
    %28 = arith.addf %23, %27 : vector<4x256xf32>
    %29 = vector.extract_strided_slice %3 {offsets = [1, 0], sizes = [4, 128], strides = [1, 1]} : vector<6x128xbf16> to vector<4x128xbf16>
    %c4 = arith.constant 4 : index
    %c0_28 = arith.constant 0 : index
    %c0_29 = arith.constant 0 : index
    %30 = vector.load %arg6[%c4, %c0_28, %c0_29] : memref<9x128x256xbf16, #tpu.memory_space<vmem>>, vector<1x128x256xbf16>
    %31 = vector.shape_cast %30 : vector<1x128x256xbf16> to vector<128x256xbf16>
    %cst_30 = arith.constant dense<0.000000e+00> : vector<4x256xf32>
    %32 = tpu.matmul %29, %31, %cst_30 {dimension_numbers = #tpu.dot_dimension_numbers<[1], [0], [0], [1], [0, 0, 1, 1], [], []>} : vector<4x128xbf16>, vector<128x256xbf16>, vector<4x256xf32> -> vector<4x256xf32>
    %33 = arith.addf %28, %32 : vector<4x256xf32>
    %34 = vector.extract_strided_slice %3 {offsets = [2, 0], sizes = [4, 128], strides = [1, 1]} : vector<6x128xbf16> to vector<4x128xbf16>
    %c5 = arith.constant 5 : index
    %c0_31 = arith.constant 0 : index
    %c0_32 = arith.constant 0 : index
    %35 = vector.load %arg6[%c5, %c0_31, %c0_32] : memref<9x128x256xbf16, #tpu.memory_space<vmem>>, vector<1x128x256xbf16>
    %36 = vector.shape_cast %35 : vector<1x128x256xbf16> to vector<128x256xbf16>
    %cst_33 = arith.constant dense<0.000000e+00> : vector<4x256xf32>
    %37 = tpu.matmul %34, %36, %cst_33 {dimension_numbers = #tpu.dot_dimension_numbers<[1], [0], [0], [1], [0, 0, 1, 1], [], []>} : vector<4x128xbf16>, vector<128x256xbf16>, vector<4x256xf32> -> vector<4x256xf32>
    %38 = arith.addf %33, %37 : vector<4x256xf32>
    %39 = vector.extract_strided_slice %5 {offsets = [0, 0], sizes = [4, 128], strides = [1, 1]} : vector<6x128xbf16> to vector<4x128xbf16>
    %c6 = arith.constant 6 : index
    %c0_34 = arith.constant 0 : index
    %c0_35 = arith.constant 0 : index
    %40 = vector.load %arg6[%c6, %c0_34, %c0_35] : memref<9x128x256xbf16, #tpu.memory_space<vmem>>, vector<1x128x256xbf16>
    %41 = vector.shape_cast %40 : vector<1x128x256xbf16> to vector<128x256xbf16>
    %cst_36 = arith.constant dense<0.000000e+00> : vector<4x256xf32>
    %42 = tpu.matmul %39, %41, %cst_36 {dimension_numbers = #tpu.dot_dimension_numbers<[1], [0], [0], [1], [0, 0, 1, 1], [], []>} : vector<4x128xbf16>, vector<128x256xbf16>, vector<4x256xf32> -> vector<4x256xf32>
    %43 = arith.addf %38, %42 : vector<4x256xf32>
    %44 = vector.extract_strided_slice %5 {offsets = [1, 0], sizes = [4, 128], strides = [1, 1]} : vector<6x128xbf16> to vector<4x128xbf16>
    %c7 = arith.constant 7 : index
    %c0_37 = arith.constant 0 : index
    %c0_38 = arith.constant 0 : index
    %45 = vector.load %arg6[%c7, %c0_37, %c0_38] : memref<9x128x256xbf16, #tpu.memory_space<vmem>>, vector<1x128x256xbf16>
    %46 = vector.shape_cast %45 : vector<1x128x256xbf16> to vector<128x256xbf16>
    %cst_39 = arith.constant dense<0.000000e+00> : vector<4x256xf32>
    %47 = tpu.matmul %44, %46, %cst_39 {dimension_numbers = #tpu.dot_dimension_numbers<[1], [0], [0], [1], [0, 0, 1, 1], [], []>} : vector<4x128xbf16>, vector<128x256xbf16>, vector<4x256xf32> -> vector<4x256xf32>
    %48 = arith.addf %43, %47 : vector<4x256xf32>
    %49 = vector.extract_strided_slice %5 {offsets = [2, 0], sizes = [4, 128], strides = [1, 1]} : vector<6x128xbf16> to vector<4x128xbf16>
    %c8 = arith.constant 8 : index
    %c0_40 = arith.constant 0 : index
    %c0_41 = arith.constant 0 : index
    %50 = vector.load %arg6[%c8, %c0_40, %c0_41] : memref<9x128x256xbf16, #tpu.memory_space<vmem>>, vector<1x128x256xbf16>
    %51 = vector.shape_cast %50 : vector<1x128x256xbf16> to vector<128x256xbf16>
    %cst_42 = arith.constant dense<0.000000e+00> : vector<4x256xf32>
    %52 = tpu.matmul %49, %51, %cst_42 {dimension_numbers = #tpu.dot_dimension_numbers<[1], [0], [0], [1], [0, 0, 1, 1], [], []>} : vector<4x128xbf16>, vector<128x256xbf16>, vector<4x256xf32> -> vector<4x256xf32>
    %53 = arith.addf %48, %52 : vector<4x256xf32>
    %cst_43 = arith.constant 0.000000e+00 : f32
    %54 = vector.broadcast %cst_43 : f32 to vector<4x256xf32>
    %55 = arith.maximumf %53, %54 : vector<4x256xf32>
    %cst_44 = arith.constant 0.000000e+00 : f32
    %56 = vector.broadcast %cst_44 : f32 to vector<4x256xf32>
    %57 = vector.extract_strided_slice %3 {offsets = [0, 0], sizes = [4, 128], strides = [1, 1]} : vector<6x128xbf16> to vector<4x128xbf16>
    %c0_45 = arith.constant 0 : index
    %c0_46 = arith.constant 0 : index
    %c0_47 = arith.constant 0 : index
    %58 = vector.load %arg6[%c0_45, %c0_46, %c0_47] : memref<9x128x256xbf16, #tpu.memory_space<vmem>>, vector<1x128x256xbf16>
    %59 = vector.shape_cast %58 : vector<1x128x256xbf16> to vector<128x256xbf16>
    %cst_48 = arith.constant dense<0.000000e+00> : vector<4x256xf32>
    %60 = tpu.matmul %57, %59, %cst_48 {dimension_numbers = #tpu.dot_dimension_numbers<[1], [0], [0], [1], [0, 0, 1, 1], [], []>} : vector<4x128xbf16>, vector<128x256xbf16>, vector<4x256xf32> -> vector<4x256xf32>
    %61 = arith.addf %56, %60 : vector<4x256xf32>
    %62 = vector.extract_strided_slice %3 {offsets = [1, 0], sizes = [4, 128], strides = [1, 1]} : vector<6x128xbf16> to vector<4x128xbf16>
    %c1_49 = arith.constant 1 : index
    %c0_50 = arith.constant 0 : index
    %c0_51 = arith.constant 0 : index
    %63 = vector.load %arg6[%c1_49, %c0_50, %c0_51] : memref<9x128x256xbf16, #tpu.memory_space<vmem>>, vector<1x128x256xbf16>
    %64 = vector.shape_cast %63 : vector<1x128x256xbf16> to vector<128x256xbf16>
    %cst_52 = arith.constant dense<0.000000e+00> : vector<4x256xf32>
    %65 = tpu.matmul %62, %64, %cst_52 {dimension_numbers = #tpu.dot_dimension_numbers<[1], [0], [0], [1], [0, 0, 1, 1], [], []>} : vector<4x128xbf16>, vector<128x256xbf16>, vector<4x256xf32> -> vector<4x256xf32>
    %66 = arith.addf %61, %65 : vector<4x256xf32>
    %67 = vector.extract_strided_slice %3 {offsets = [2, 0], sizes = [4, 128], strides = [1, 1]} : vector<6x128xbf16> to vector<4x128xbf16>
    %c2_53 = arith.constant 2 : index
    %c0_54 = arith.constant 0 : index
    %c0_55 = arith.constant 0 : index
    %68 = vector.load %arg6[%c2_53, %c0_54, %c0_55] : memref<9x128x256xbf16, #tpu.memory_space<vmem>>, vector<1x128x256xbf16>
    %69 = vector.shape_cast %68 : vector<1x128x256xbf16> to vector<128x256xbf16>
    %cst_56 = arith.constant dense<0.000000e+00> : vector<4x256xf32>
    %70 = tpu.matmul %67, %69, %cst_56 {dimension_numbers = #tpu.dot_dimension_numbers<[1], [0], [0], [1], [0, 0, 1, 1], [], []>} : vector<4x128xbf16>, vector<128x256xbf16>, vector<4x256xf32> -> vector<4x256xf32>
    %71 = arith.addf %66, %70 : vector<4x256xf32>
    %72 = vector.extract_strided_slice %5 {offsets = [0, 0], sizes = [4, 128], strides = [1, 1]} : vector<6x128xbf16> to vector<4x128xbf16>
    %c3_57 = arith.constant 3 : index
    %c0_58 = arith.constant 0 : index
    %c0_59 = arith.constant 0 : index
    %73 = vector.load %arg6[%c3_57, %c0_58, %c0_59] : memref<9x128x256xbf16, #tpu.memory_space<vmem>>, vector<1x128x256xbf16>
    %74 = vector.shape_cast %73 : vector<1x128x256xbf16> to vector<128x256xbf16>
    %cst_60 = arith.constant dense<0.000000e+00> : vector<4x256xf32>
    %75 = tpu.matmul %72, %74, %cst_60 {dimension_numbers = #tpu.dot_dimension_numbers<[1], [0], [0], [1], [0, 0, 1, 1], [], []>} : vector<4x128xbf16>, vector<128x256xbf16>, vector<4x256xf32> -> vector<4x256xf32>
    %76 = arith.addf %71, %75 : vector<4x256xf32>
    %77 = vector.extract_strided_slice %5 {offsets = [1, 0], sizes = [4, 128], strides = [1, 1]} : vector<6x128xbf16> to vector<4x128xbf16>
    %c4_61 = arith.constant 4 : index
    %c0_62 = arith.constant 0 : index
    %c0_63 = arith.constant 0 : index
    %78 = vector.load %arg6[%c4_61, %c0_62, %c0_63] : memref<9x128x256xbf16, #tpu.memory_space<vmem>>, vector<1x128x256xbf16>
    %79 = vector.shape_cast %78 : vector<1x128x256xbf16> to vector<128x256xbf16>
    %cst_64 = arith.constant dense<0.000000e+00> : vector<4x256xf32>
    %80 = tpu.matmul %77, %79, %cst_64 {dimension_numbers = #tpu.dot_dimension_numbers<[1], [0], [0], [1], [0, 0, 1, 1], [], []>} : vector<4x128xbf16>, vector<128x256xbf16>, vector<4x256xf32> -> vector<4x256xf32>
    %81 = arith.addf %76, %80 : vector<4x256xf32>
    %82 = vector.extract_strided_slice %5 {offsets = [2, 0], sizes = [4, 128], strides = [1, 1]} : vector<6x128xbf16> to vector<4x128xbf16>
    %c5_65 = arith.constant 5 : index
    %c0_66 = arith.constant 0 : index
    %c0_67 = arith.constant 0 : index
    %83 = vector.load %arg6[%c5_65, %c0_66, %c0_67] : memref<9x128x256xbf16, #tpu.memory_space<vmem>>, vector<1x128x256xbf16>
    %84 = vector.shape_cast %83 : vector<1x128x256xbf16> to vector<128x256xbf16>
    %cst_68 = arith.constant dense<0.000000e+00> : vector<4x256xf32>
    %85 = tpu.matmul %82, %84, %cst_68 {dimension_numbers = #tpu.dot_dimension_numbers<[1], [0], [0], [1], [0, 0, 1, 1], [], []>} : vector<4x128xbf16>, vector<128x256xbf16>, vector<4x256xf32> -> vector<4x256xf32>
    %86 = arith.addf %81, %85 : vector<4x256xf32>
    %87 = vector.extract_strided_slice %7 {offsets = [0, 0], sizes = [4, 128], strides = [1, 1]} : vector<6x128xbf16> to vector<4x128xbf16>
    %c6_69 = arith.constant 6 : index
    %c0_70 = arith.constant 0 : index
    %c0_71 = arith.constant 0 : index
    %88 = vector.load %arg6[%c6_69, %c0_70, %c0_71] : memref<9x128x256xbf16, #tpu.memory_space<vmem>>, vector<1x128x256xbf16>
    %89 = vector.shape_cast %88 : vector<1x128x256xbf16> to vector<128x256xbf16>
    %cst_72 = arith.constant dense<0.000000e+00> : vector<4x256xf32>
    %90 = tpu.matmul %87, %89, %cst_72 {dimension_numbers = #tpu.dot_dimension_numbers<[1], [0], [0], [1], [0, 0, 1, 1], [], []>} : vector<4x128xbf16>, vector<128x256xbf16>, vector<4x256xf32> -> vector<4x256xf32>
    %91 = arith.addf %86, %90 : vector<4x256xf32>
    %92 = vector.extract_strided_slice %7 {offsets = [1, 0], sizes = [4, 128], strides = [1, 1]} : vector<6x128xbf16> to vector<4x128xbf16>
    %c7_73 = arith.constant 7 : index
    %c0_74 = arith.constant 0 : index
    %c0_75 = arith.constant 0 : index
    %93 = vector.load %arg6[%c7_73, %c0_74, %c0_75] : memref<9x128x256xbf16, #tpu.memory_space<vmem>>, vector<1x128x256xbf16>
    %94 = vector.shape_cast %93 : vector<1x128x256xbf16> to vector<128x256xbf16>
    %cst_76 = arith.constant dense<0.000000e+00> : vector<4x256xf32>
    %95 = tpu.matmul %92, %94, %cst_76 {dimension_numbers = #tpu.dot_dimension_numbers<[1], [0], [0], [1], [0, 0, 1, 1], [], []>} : vector<4x128xbf16>, vector<128x256xbf16>, vector<4x256xf32> -> vector<4x256xf32>
    %96 = arith.addf %91, %95 : vector<4x256xf32>
    %97 = vector.extract_strided_slice %7 {offsets = [2, 0], sizes = [4, 128], strides = [1, 1]} : vector<6x128xbf16> to vector<4x128xbf16>
    %c8_77 = arith.constant 8 : index
    %c0_78 = arith.constant 0 : index
    %c0_79 = arith.constant 0 : index
    %98 = vector.load %arg6[%c8_77, %c0_78, %c0_79] : memref<9x128x256xbf16, #tpu.memory_space<vmem>>, vector<1x128x256xbf16>
    %99 = vector.shape_cast %98 : vector<1x128x256xbf16> to vector<128x256xbf16>
    %cst_80 = arith.constant dense<0.000000e+00> : vector<4x256xf32>
    %100 = tpu.matmul %97, %99, %cst_80 {dimension_numbers = #tpu.dot_dimension_numbers<[1], [0], [0], [1], [0, 0, 1, 1], [], []>} : vector<4x128xbf16>, vector<128x256xbf16>, vector<4x256xf32> -> vector<4x256xf32>
    %101 = arith.addf %96, %100 : vector<4x256xf32>
    %cst_81 = arith.constant 0.000000e+00 : f32
    %102 = vector.broadcast %cst_81 : f32 to vector<4x256xf32>
    %103 = arith.maximumf %101, %102 : vector<4x256xf32>
    %104 = arith.maximumf %55, %103 : vector<4x256xf32>
    %105 = vector.extract_strided_slice %104 {offsets = [0, 0], sizes = [1, 256], strides = [1, 1]} : vector<4x256xf32> to vector<1x256xf32>
    %106 = vector.extract_strided_slice %104 {offsets = [1, 0], sizes = [1, 256], strides = [1, 1]} : vector<4x256xf32> to vector<1x256xf32>
    %107 = arith.maximumf %105, %106 : vector<1x256xf32>
    %108 = arith.truncf %107 : vector<1x256xf32> to vector<1x256xbf16>
    %c0_82 = arith.constant 0 : index
    %c0_83 = arith.constant 0 : index
    %c0_84 = arith.constant 0 : index
    %c0_85 = arith.constant 0 : index
    %109 = vector.load %arg7[%c0_82, %c0_83, %c0_84, %c0_85] : memref<1x1x2x256xbf16, #tpu.memory_space<vmem>>, vector<1x1x1x256xbf16>
    %110 = vector.shape_cast %109 : vector<1x1x1x256xbf16> to vector<1x256xbf16>
    %111 = vector.shape_cast %108 : vector<1x256xbf16> to vector<1x1x1x256xbf16>
    tpu.vector_store %arg7[%c0_82, %c0_83, %c0_84, %c0_85], %111 {strides = array<i32>} : memref<1x1x2x256xbf16, #tpu.memory_space<vmem>>, vector<1x1x1x256xbf16>,
    %112 = vector.extract_strided_slice %104 {offsets = [2, 0], sizes = [1, 256], strides = [1, 1]} : vector<4x256xf32> to vector<1x256xf32>
    %113 = vector.extract_strided_slice %104 {offsets = [3, 0], sizes = [1, 256], strides = [1, 1]} : vector<4x256xf32> to vector<1x256xf32>
    %114 = arith.maximumf %112, %113 : vector<1x256xf32>
    %115 = arith.truncf %114 : vector<1x256xf32> to vector<1x256xbf16>
    %c0_86 = arith.constant 0 : index
    %c0_87 = arith.constant 0 : index
    %c1_88 = arith.constant 1 : index
    %c0_89 = arith.constant 0 : index
    %116 = vector.load %arg7[%c0_86, %c0_87, %c1_88, %c0_89] : memref<1x1x2x256xbf16, #tpu.memory_space<vmem>>, vector<1x1x1x256xbf16>
    %117 = vector.shape_cast %116 : vector<1x1x1x256xbf16> to vector<1x256xbf16>
    %118 = vector.shape_cast %115 : vector<1x256xbf16> to vector<1x1x1x256xbf16>
    tpu.vector_store %arg7[%c0_86, %c0_87, %c1_88, %c0_89], %118 {strides = array<i32>} : memref<1x1x2x256xbf16, #tpu.memory_space<vmem>>, vector<1x1x1x256xbf16>,
    return
  }
  func.func @transform_0(%arg0: i32, %arg1: i32) -> (i32, i32, i32, i32) {
    %c2_i32 = arith.constant 2 : i32
    %0 = arith.muli %c2_i32, %arg1 : i32
    %c0_i32 = arith.constant 0 : i32
    %1 = arith.addi %0, %c0_i32 : i32
    %c0_i32_0 = arith.constant 0 : i32
    %c0_i32_1 = arith.constant 0 : i32
    %c0_i32_2 = arith.constant 0 : i32
    return %arg0, %1, %c0_i32_0, %c0_i32_1 : i32, i32, i32, i32
  }
  func.func @transform_1(%arg0: i32, %arg1: i32) -> (i32, i32, i32, i32) {
    %c2_i32 = arith.constant 2 : i32
    %0 = arith.muli %c2_i32, %arg1 : i32
    %c1_i32 = arith.constant 1 : i32
    %1 = arith.addi %0, %c1_i32 : i32
    %c0_i32 = arith.constant 0 : i32
    %c0_i32_0 = arith.constant 0 : i32
    %c0_i32_1 = arith.constant 0 : i32
    return %arg0, %1, %c0_i32, %c0_i32_0 : i32, i32, i32, i32
  }
  func.func @transform_2(%arg0: i32, %arg1: i32) -> (i32, i32, i32, i32) {
    %c2_i32 = arith.constant 2 : i32
    %0 = arith.muli %c2_i32, %arg1 : i32
    %c2_i32_0 = arith.constant 2 : i32
    %1 = arith.addi %0, %c2_i32_0 : i32
    %c0_i32 = arith.constant 0 : i32
    %c0_i32_1 = arith.constant 0 : i32
    %c0_i32_2 = arith.constant 0 : i32
    return %arg0, %1, %c0_i32, %c0_i32_1 : i32, i32, i32, i32
  }
  func.func @transform_3(%arg0: i32, %arg1: i32) -> (i32, i32, i32, i32) {
    %c2_i32 = arith.constant 2 : i32
    %0 = arith.muli %c2_i32, %arg1 : i32
    %c3_i32 = arith.constant 3 : i32
    %1 = arith.addi %0, %c3_i32 : i32
    %c0_i32 = arith.constant 0 : i32
    %c0_i32_0 = arith.constant 0 : i32
    %c0_i32_1 = arith.constant 0 : i32
    return %arg0, %1, %c0_i32, %c0_i32_0 : i32, i32, i32, i32
  }
  func.func @transform_4(%arg0: i32, %arg1: i32) -> (i32, i32, i32) {
    %c0_i32 = arith.constant 0 : i32
    %c0_i32_0 = arith.constant 0 : i32
    %c0_i32_1 = arith.constant 0 : i32
    %c0_i32_2 = arith.constant 0 : i32
    return %c0_i32, %c0_i32_0, %c0_i32_1 : i32, i32, i32
  }
  func.func @transform_5(%arg0: i32, %arg1: i32) -> (i32, i32, i32, i32) {
    %c0_i32 = arith.constant 0 : i32
    %c0_i32_0 = arith.constant 0 : i32
    %c0_i32_1 = arith.constant 0 : i32
    return %arg0, %arg1, %c0_i32, %c0_i32_0 : i32, i32, i32, i32
  }
}

module attributes {stable_mosaic.version = 11 : i64} {
  func.func @_fc_relu_kernel(%arg0: i32, %arg1: memref<2x1024xbf16, #tpu.memory_space<vmem>>, %arg2: memref<1024x256xbf16, #tpu.memory_space<vmem>>, %arg3: memref<2x256xbf16, #tpu.memory_space<vmem>>) attributes {dimension_semantics = [#tpu.dimension_semantics<parallel>], iteration_bounds = array<i64: 4>, scalar_prefetch = 0 : i64, scratch_operands = 0 : i64, tpu.core_type = #tpu.core_type<tc>, window_params = [{pipeline_mode = #tpu.pipeline_mode<synchronous>, transform_indices = @transform_0, window_bounds = array<i64: 2, 1024>}, {transform_indices = @transform_1, window_bounds = array<i64: 1024, 256>}, {transform_indices = @transform_2, window_bounds = array<i64: 2, 256>}]} {
    %c0 = arith.constant 0 : index
    %c0_0 = arith.constant 0 : index
    %0 = vector.load %arg1[%c0, %c0_0] : memref<2x1024xbf16, #tpu.memory_space<vmem>>, vector<2x1024xbf16>
    %c0_1 = arith.constant 0 : index
    %c0_2 = arith.constant 0 : index
    %1 = vector.load %arg2[%c0_1, %c0_2] : memref<1024x256xbf16, #tpu.memory_space<vmem>>, vector<1024x256xbf16>
    %cst = arith.constant dense<0.000000e+00> : vector<2x256xf32>
    %2 = tpu.matmul %0, %1, %cst {dimension_numbers = #tpu.dot_dimension_numbers<[1], [0], [0], [1], [0, 0, 1, 1], [], []>} : vector<2x1024xbf16>, vector<1024x256xbf16>, vector<2x256xf32> -> vector<2x256xf32>
    %cst_3 = arith.constant 0.000000e+00 : f32
    %3 = vector.broadcast %cst_3 : f32 to vector<2x256xf32>
    %4 = arith.maximumf %2, %3 : vector<2x256xf32>
    %5 = arith.truncf %4 : vector<2x256xf32> to vector<2x256xbf16>
    %c0_4 = arith.constant 0 : index
    %c0_5 = arith.constant 0 : index
    %6 = vector.load %arg3[%c0_4, %c0_5] : memref<2x256xbf16, #tpu.memory_space<vmem>>, vector<2x256xbf16>
    tpu.vector_store %arg3[%c0_4, %c0_5], %5 {strides = array<i32>} : memref<2x256xbf16, #tpu.memory_space<vmem>>, vector<2x256xbf16>,
    return
  }
  func.func @transform_0(%arg0: i32) -> (i32, i32) {
    %c0_i32 = arith.constant 0 : i32
    %c0_i32_0 = arith.constant 0 : i32
    %c0_i32_1 = arith.constant 0 : i32
    return %c0_i32, %c0_i32_0 : i32, i32
  }
  func.func @transform_1(%arg0: i32) -> (i32, i32) {
    %c0_i32 = arith.constant 0 : i32
    %c0_i32_0 = arith.constant 0 : i32
    return %c0_i32, %arg0 : i32, i32
  }
  func.func @transform_2(%arg0: i32) -> (i32, i32) {
    %c0_i32 = arith.constant 0 : i32
    %c0_i32_0 = arith.constant 0 : i32
    return %c0_i32, %arg0 : i32, i32
  }
}

module attributes {stable_mosaic.version = 11 : i64} {
  func.func @_fc_bias_kernel(%arg0: i32, %arg1: memref<2x1024xbf16, #tpu.memory_space<vmem>>, %arg2: memref<1024x128xbf16, #tpu.memory_space<vmem>>, %arg3: memref<1x128xf32, #tpu.memory_space<vmem>>, %arg4: memref<2x128xf32, #tpu.memory_space<vmem>>) attributes {dimension_semantics = [#tpu.dimension_semantics<parallel>], iteration_bounds = array<i64: 1>, scalar_prefetch = 0 : i64, scratch_operands = 0 : i64, tpu.core_type = #tpu.core_type<tc>, window_params = [{pipeline_mode = #tpu.pipeline_mode<synchronous>, transform_indices = @transform_0, window_bounds = array<i64: 2, 1024>}, {transform_indices = @transform_1, window_bounds = array<i64: 1024, 128>}, {transform_indices = @transform_2, window_bounds = array<i64: 1, 128>}, {transform_indices = @transform_3, window_bounds = array<i64: 2, 128>}]} {
    %c0 = arith.constant 0 : index
    %c0_0 = arith.constant 0 : index
    %0 = vector.load %arg1[%c0, %c0_0] : memref<2x1024xbf16, #tpu.memory_space<vmem>>, vector<2x1024xbf16>
    %c0_1 = arith.constant 0 : index
    %c0_2 = arith.constant 0 : index
    %1 = vector.load %arg2[%c0_1, %c0_2] : memref<1024x128xbf16, #tpu.memory_space<vmem>>, vector<1024x128xbf16>
    %cst = arith.constant dense<0.000000e+00> : vector<2x128xf32>
    %2 = tpu.matmul %0, %1, %cst {dimension_numbers = #tpu.dot_dimension_numbers<[1], [0], [0], [1], [0, 0, 1, 1], [], []>} : vector<2x1024xbf16>, vector<1024x128xbf16>, vector<2x128xf32> -> vector<2x128xf32>
    %c0_3 = arith.constant 0 : index
    %c0_4 = arith.constant 0 : index
    %3 = vector.load %arg3[%c0_3, %c0_4] : memref<1x128xf32, #tpu.memory_space<vmem>>, vector<1x128xf32>
    %4 = vector.broadcast %3 : vector<1x128xf32> to vector<2x128xf32>
    %5 = arith.addf %2, %4 : vector<2x128xf32>
    %c0_5 = arith.constant 0 : index
    %c0_6 = arith.constant 0 : index
    %6 = vector.load %arg4[%c0_5, %c0_6] : memref<2x128xf32, #tpu.memory_space<vmem>>, vector<2x128xf32>
    tpu.vector_store %arg4[%c0_5, %c0_6], %5 {strides = array<i32>} : memref<2x128xf32, #tpu.memory_space<vmem>>, vector<2x128xf32>,
    return
  }
  func.func @transform_0(%arg0: i32) -> (i32, i32) {
    %c0_i32 = arith.constant 0 : i32
    %c0_i32_0 = arith.constant 0 : i32
    %c0_i32_1 = arith.constant 0 : i32
    return %c0_i32, %c0_i32_0 : i32, i32
  }
  func.func @transform_1(%arg0: i32) -> (i32, i32) {
    %c0_i32 = arith.constant 0 : i32
    %c0_i32_0 = arith.constant 0 : i32
    return %c0_i32, %arg0 : i32, i32
  }
  func.func @transform_2(%arg0: i32) -> (i32, i32) {
    %c0_i32 = arith.constant 0 : i32
    %c0_i32_0 = arith.constant 0 : i32
    return %c0_i32, %arg0 : i32, i32
  }
  func.func @transform_3(%arg0: i32) -> (i32, i32) {
    %c0_i32 = arith.constant 0 : i32
    %c0_i32_0 = arith.constant 0 : i32
    return %c0_i32, %arg0 : i32, i32
  }
}

</mosaic_0001>

<llo_original>
// kernel: cnn_forward.6
$region0: #{cnn_forward.6}
  #allocation0 [shape = 'u32[]', space=smem, size = 0x4, offset = 0x4, fixed_abs, tag = 'smem constant byte address 0x4 - core index']
  #allocation1 [shape = 'u32[144,128]{1,0:T(1,128)}', space=vmem, size = 0x12000, scoped, tag = 'internal scratch']
  %s0 = inlined_call_operand.vmem [shape: bf16[2,32,32,128], index: 0, kind: input, shape index: {}, may-alias: {0,1,2,3}]
  %s1 = inlined_call_operand.vmem [shape: bf16[2,32,32,128], index: 1, kind: input, shape index: {}, may-alias: {0,1,2,3}]
  %s2 = inlined_call_operand.vmem [shape: bf16[2,32,32,128], index: 2, kind: input, shape index: {}, may-alias: {0,1,2,3}]
  %s3 = inlined_call_operand.vmem [shape: bf16[2,32,32,128], index: 3, kind: input, shape index: {}, may-alias: {0,1,2,3}]
  %s4 = inlined_call_operand.hbm [shape: bf16[9,128,128], index: 4, kind: input, shape index: {}]
  %s5 = inlined_call_operand.vmem [shape: bf16[2,15,15,128], index: 5, kind: output, shape index: {}]
  %s6 = sld [smem:[#allocation0]]
  $region57: #{cnn_forward.6} parent=0
    _
  %s8 = ssub.s32 1, %s6
  %s9 = scalar_select 0, %s8, %s6
  $region1: #{cnn_forward.6} parent=0
    #allocation2 [shape = 'u8[294912]{0}', space=vmem, size = 0x48000, scoped, tag = 'input window, operand 4, single buffered']
    #allocation3 [shape = 's32[2]{0}', space=sflag, size = 0x8, scoped, tag = 'scoped memory for cnn_forward.6']
    %10 = vsyncpa [#allocation3], 0
    loop: start=0, step=1, limit=32
    $region2: #{cnn_forward.6} parent=1 // loop_pre_header
      _
    $region3: #{cnn_forward.6} parent=1 // loop_header
      %s12 = sphi 0, %s16
      %p13 = scmp.ge.s32.totalorder %s12, 32
      %s19 = sphi 0, %s31
      %s20 = sphi 0, %s27
      %s21 = sphi 0, %s19
      %s22 = sphi 0, %s20
      %s23 = sphi 0, %s21
      %s24 = sphi 0, %s22
      %s38 = sphi 0, %s40
      %s41 = sphi 0, %s38
      %s42 = sphi 0, %s41
      %s58 = sphi 0, %s42
      %s70 = sphi 0, %s72
      %s73 = sphi 0, %s70
      %s74 = sphi 0, %s73
      %s90 = sphi 0, %s74
      %s102 = sphi 0, %s104
      %s105 = sphi 0, %s102
      %s106 = sphi 0, %s105
      %s122 = sphi 0, %s106
      %s134 = sphi 0, %s136
      %s137 = sphi 0, %s134
      %s138 = sphi 0, %s137
      %s154 = sphi 0, %s138
      %s158 = sphi 0, %s158
      %s160 = sphi 0, %s158
      %s161 = sphi 0, %s160
      %s175 = sphi 0, %s161
      %s183 = sphi 0, %s185
      %s186 = sphi 0, %s183
      %s187 = sphi 0, %s186
      %s203 = sphi 0, %s187
    $region4: #{cnn_forward.6} parent=1 // loop_header_branch
      %15 = sbr.rel (%p13) target = $region8
    $region5: #{cnn_forward.6} parent=1 // loop_body
      %s17 = ssub.s32 %s12, 1
      %s18 = ssub.s32 %s12, 2
      %s25 = sadd.s32 1, %s20
      %p26 = scmp.ge.s32.totalorder %s25, 15
      %s27 = scalar_select %p26, 0, %s25
      %s28 = sadd.s32 1, %s19
      %s29 = scalar_select %p26, %s28, %s19
      %p30 = scmp.ge.s32.totalorder %s29, 2
      %s31 = scalar_select %p30, 0, %s29
      %s32 = smul.u32 %s20, 2
      %s33 = smul.u32 %s27, 2
      %s34 = ssub.s32 %s19, %s31
      %s35 = ssub.s32 %s32, %s33
      %s36 = sor.u32 %s34, %s35
      %p37 = scmp.eq.s32.totalorder %s36, 0
      %s39 = sadd.s32 %s38, 1
      %s40 = scalar_select %p37, %s38, %s39
      %p43 = pneg %p37
      %p44 = scmp.eq.s32.totalorder %s12, 29
      %p45 = por %p43, %p44
      %p46 = scmp.ne.s32.totalorder %s38, %s41
      %p47 = scmp.eq.s32.totalorder %s12, 0
      %p48 = por %p46, %p47
      %p49 = scmp.ne.s32.totalorder %s38, %s41
      %p50 = scmp.eq.s32.totalorder %s17, 29
      %p51 = por %p49, %p50
      %p52 = scmp.ne.s32.totalorder %s41, %s42
      %p53 = scmp.eq.s32.totalorder %s17, 0
      %p54 = por %p52, %p53
      %p55 = scmp.ne.s32.totalorder %s41, %s42
      %p56 = scmp.eq.s32.totalorder %s18, 29
      %p57 = por %p55, %p56
      %p59 = scmp.ne.s32.totalorder %s42, %s58
      %p60 = scmp.eq.s32.totalorder %s18, 0
      %p61 = por %p59, %p60
      %s62 = smul.u32 %s20, 2
      %s63 = sadd.s32 %s62, 1
      %s64 = smul.u32 %s27, 2
      %s65 = sadd.s32 %s64, 1
      %s66 = ssub.s32 %s19, %s31
      %s67 = ssub.s32 %s63, %s65
      %s68 = sor.u32 %s66, %s67
      %p69 = scmp.eq.s32.totalorder %s68, 0
      %s71 = sadd.s32 %s70, 1
      %s72 = scalar_select %p69, %s70, %s71
      %p75 = pneg %p69
      %p76 = scmp.eq.s32.totalorder %s12, 29
      %p77 = por %p75, %p76
      %p78 = scmp.ne.s32.totalorder %s70, %s73
      %p79 = scmp.eq.s32.totalorder %s12, 0
      %p80 = por %p78, %p79
      %p81 = scmp.ne.s32.totalorder %s70, %s73
      %p82 = scmp.eq.s32.totalorder %s17, 29
      %p83 = por %p81, %p82
      %p84 = scmp.ne.s32.totalorder %s73, %s74
      %p85 = scmp.eq.s32.totalorder %s17, 0
      %p86 = por %p84, %p85
      %p87 = scmp.ne.s32.totalorder %s73, %s74
      %p88 = scmp.eq.s32.totalorder %s18, 29
      %p89 = por %p87, %p88
      %p91 = scmp.ne.s32.totalorder %s74, %s90
      %p92 = scmp.eq.s32.totalorder %s18, 0
      %p93 = por %p91, %p92
      %s94 = smul.u32 %s20, 2
      %s95 = sadd.s32 %s94, 2
      %s96 = smul.u32 %s27, 2
      %s97 = sadd.s32 %s96, 2
      %s98 = ssub.s32 %s19, %s31
      %s99 = ssub.s32 %s95, %s97
      %s100 = sor.u32 %s98, %s99
      %p101 = scmp.eq.s32.totalorder %s100, 0
      %s103 = sadd.s32 %s102, 1
      %s104 = scalar_select %p101, %s102, %s103
      %p107 = pneg %p101
      %p108 = scmp.eq.s32.totalorder %s12, 29
      %p109 = por %p107, %p108
      %p110 = scmp.ne.s32.totalorder %s102, %s105
      %p111 = scmp.eq.s32.totalorder %s12, 0
      %p112 = por %p110, %p111
      %p113 = scmp.ne.s32.totalorder %s102, %s105
      %p114 = scmp.eq.s32.totalorder %s17, 29
      %p115 = por %p113, %p114
      %p116 = scmp.ne.s32.totalorder %s105, %s106
      %p117 = scmp.eq.s32.totalorder %s17, 0
      %p118 = por %p116, %p117
      %p119 = scmp.ne.s32.totalorder %s105, %s106
      %p120 = scmp.eq.s32.totalorder %s18, 29
      %p121 = por %p119, %p120
      %p123 = scmp.ne.s32.totalorder %s106, %s122
      %p124 = scmp.eq.s32.totalorder %s18, 0
      %p125 = por %p123, %p124
      %s126 = smul.u32 %s20, 2
      %s127 = sadd.s32 %s126, 3
      %s128 = smul.u32 %s27, 2
      %s129 = sadd.s32 %s128, 3
      %s130 = ssub.s32 %s19, %s31
      %s131 = ssub.s32 %s127, %s129
      %s132 = sor.u32 %s130, %s131
      %p133 = scmp.eq.s32.totalorder %s132, 0
      %s135 = sadd.s32 %s134, 1
      %s136 = scalar_select %p133, %s134, %s135
      %p139 = pneg %p133
      %p140 = scmp.eq.s32.totalorder %s12, 29
      %p141 = por %p139, %p140
      %p142 = scmp.ne.s32.totalorder %s134, %s137
      %p143 = scmp.eq.s32.totalorder %s12, 0
      %p144 = por %p142, %p143
      %p145 = scmp.ne.s32.totalorder %s134, %s137
      %p146 = scmp.eq.s32.totalorder %s17, 29
      %p147 = por %p145, %p146
      %p148 = scmp.ne.s32.totalorder %s137, %s138
      %p149 = scmp.eq.s32.totalorder %s17, 0
      %p150 = por %p148, %p149
      %p151 = scmp.ne.s32.totalorder %s137, %s138
      %p152 = scmp.eq.s32.totalorder %s18, 29
      %p153 = por %p151, %p152
      %p155 = scmp.ne.s32.totalorder %s138, %s154
      %p156 = scmp.eq.s32.totalorder %s18, 0
      %p157 = por %p155, %p156
      %s159 = sadd.s32 %s158, 1
      %p162 = scmp.eq.s32.totalorder %s12, 29
      %p163 = scmp.ne.s32.totalorder %s158, %s160
      %p164 = scmp.eq.s32.totalorder %s12, 0
      %p165 = por %p163, %p164
      %p166 = scmp.ne.s32.totalorder %s158, %s160
      %p167 = scmp.eq.s32.totalorder %s17, 29
      %p168 = por %p166, %p167
      %p169 = scmp.ne.s32.totalorder %s160, %s161
      %p170 = scmp.eq.s32.totalorder %s17, 0
      %p171 = por %p169, %p170
      %p172 = scmp.ne.s32.totalorder %s160, %s161
      %p173 = scmp.eq.s32.totalorder %s18, 29
      %p174 = por %p172, %p173
      %p176 = scmp.ne.s32.totalorder %s161, %s175
      %p177 = scmp.eq.s32.totalorder %s18, 0
      %p178 = por %p176, %p177
      %s179 = ssub.s32 %s19, %s31
      %s180 = ssub.s32 %s20, %s27
      %s181 = sor.u32 %s179, %s180
      %p182 = scmp.eq.s32.totalorder %s181, 0
      %s184 = sadd.s32 %s183, 1
      %s185 = scalar_select %p182, %s183, %s184
      %p188 = pneg %p182
      %p189 = scmp.eq.s32.totalorder %s12, 29
      %p190 = por %p188, %p189
      %p191 = scmp.ne.s32.totalorder %s183, %s186
      %p192 = scmp.eq.s32.totalorder %s12, 0
      %p193 = por %p191, %p192
      %p194 = scmp.ne.s32.totalorder %s183, %s186
      %p195 = scmp.eq.s32.totalorder %s17, 29
      %p196 = por %p194, %p195
      %p197 = scmp.ne.s32.totalorder %s186, %s187
      %p198 = scmp.eq.s32.totalorder %s17, 0
      %p199 = por %p197, %p198
      %p200 = scmp.ne.s32.totalorder %s186, %s187
      %p201 = scmp.eq.s32.totalorder %s18, 29
      %p202 = por %p200, %p201
      %p204 = scmp.ne.s32.totalorder %s187, %s203
      %p205 = scmp.eq.s32.totalorder %s18, 0
      %p206 = por %p204, %p205
      %p207 = scmp.le.s32.totalorder 1, %s12
      %p208 = scmp.lt.s32.totalorder %s12, 31
      %p209 = pnand %p207, %p208
      %p210 = pneg %p209
      // Predicated region
      $region9: #{cnn_forward.6} parent=5 // pred_check
        _
      $region10: #{cnn_forward.6} parent=5 // pred_check_branch
        %212 = sbr.rel (%p209) target = $region12
      $region11: #{cnn_forward.6} parent=5 // pred_region
        %s213 = ssub.s32 %s12, 1
        // Predicated region
        $region13: #{cnn_forward.6} parent=11 // pred_check
          %p214 = pneg %p171
        $region14: #{cnn_forward.6} parent=11 // pred_check_branch
          %216 = sbr.rel (%p214) target = $region16
        $region15: #{cnn_forward.6} parent=11 // pred_region
          %s218 = ssub.s32 9216, 9216
          %219 = vsyncadd [#allocation3], %s218
          %s220 = sshll.u32 [#allocation2], 4
          %s221 = int_to_ptr.vmem [resolvable:$true] %s220
          %226 = dma.hbm_to_vmem [thread:$0]  %s4, 9216, %s221, [#allocation3], 64, 64, 4
        $region16: #{cnn_forward.6} parent=11 // pred_fallthru
          _
      $region12: #{cnn_forward.6} parent=5 // pred_fallthru
        _
      %p227 = scmp.lt.s32.totalorder %s12, 30
      // Predicated region
      $region17: #{cnn_forward.6} parent=5 // pred_check
        %p228 = pneg %p227
      $region18: #{cnn_forward.6} parent=5 // pred_check_branch
        %230 = sbr.rel (%p228) target = $region20
      $region19: #{cnn_forward.6} parent=5 // pred_region
        // Predicated region
        $region21: #{cnn_forward.6} parent=19 // pred_check
          %p231 = pneg %p48
        $region22: #{cnn_forward.6} parent=19 // pred_check_branch
          %233 = sbr.rel (%p231) target = $region24
        $region23: #{cnn_forward.6} parent=19 // pred_region
          %s234 = smul.u32 %s20, 2
          %p235 = scmp.lt.s32.totalorder %s19, 1
          %s236 = scalar_select %p235, %s19, 1
          %p237 = scmp.lt.s32.totalorder %s234, 31
          %s238 = scalar_select %p237, %s234, 31
          %s239 = smul.addr %s238, 4
          %s240 = smul.addr %s236, 128
          %s241 = sadd.s32 %s239, %s240
          %s242 = smul.addr %s241, 4
          %s243 = scalar_lea.vmem %s0, %s242
          %s244 = smul.u32 %s20, 2
        $region24: #{cnn_forward.6} parent=19 // pred_fallthru
          _
        // Predicated region
        $region25: #{cnn_forward.6} parent=19 // pred_check
          %p245 = pneg %p80
        $region26: #{cnn_forward.6} parent=19 // pred_check_branch
          %247 = sbr.rel (%p245) target = $region28
        $region27: #{cnn_forward.6} parent=19 // pred_region
          %s248 = smul.u32 %s20, 2
          %s249 = sadd.s32 %s248, 1
          %p250 = scmp.lt.s32.totalorder %s19, 1
          %s251 = scalar_select %p250, %s19, 1
          %p252 = scmp.lt.s32.totalorder %s249, 31
          %s253 = scalar_select %p252, %s249, 31
          %s254 = smul.addr %s253, 4
          %s255 = smul.addr %s251, 128
          %s256 = sadd.s32 %s254, %s255
          %s257 = smul.addr %s256, 4
          %s258 = scalar_lea.vmem %s1, %s257
          %s259 = smul.u32 %s20, 2
          %s260 = sadd.s32 %s259, 1
        $region28: #{cnn_forward.6} parent=19 // pred_fallthru
          _
        // Predicated region
        $region29: #{cnn_forward.6} parent=19 // pred_check
          %p261 = pneg %p112
        $region30: #{cnn_forward.6} parent=19 // pred_check_branch
          %263 = sbr.rel (%p261) target = $region32
        $region31: #{cnn_forward.6} parent=19 // pred_region
          %s264 = smul.u32 %s20, 2
          %s265 = sadd.s32 %s264, 2
          %p266 = scmp.lt.s32.totalorder %s19, 1
          %s267 = scalar_select %p266, %s19, 1
          %p268 = scmp.lt.s32.totalorder %s265, 31
          %s269 = scalar_select %p268, %s265, 31
          %s270 = smul.addr %s269, 4
          %s271 = smul.addr %s267, 128
          %s272 = sadd.s32 %s270, %s271
          %s273 = smul.addr %s272, 4
          %s274 = scalar_lea.vmem %s2, %s273
          %s275 = smul.u32 %s20, 2
          %s276 = sadd.s32 %s275, 2
        $region32: #{cnn_forward.6} parent=19 // pred_fallthru
          _
        // Predicated region
        $region33: #{cnn_forward.6} parent=19 // pred_check
          %p277 = pneg %p144
        $region34: #{cnn_forward.6} parent=19 // pred_check_branch
          %279 = sbr.rel (%p277) target = $region36
        $region35: #{cnn_forward.6} parent=19 // pred_region
          %s280 = smul.u32 %s20, 2
          %s281 = sadd.s32 %s280, 3
          %p282 = scmp.lt.s32.totalorder %s19, 1
          %s283 = scalar_select %p282, %s19, 1
          %p284 = scmp.lt.s32.totalorder %s281, 31
          %s285 = scalar_select %p284, %s281, 31
          %s286 = smul.addr %s285, 4
          %s287 = smul.addr %s283, 128
          %s288 = sadd.s32 %s286, %s287
          %s289 = smul.addr %s288, 4
          %s290 = scalar_lea.vmem %s3, %s289
          %s291 = smul.u32 %s20, 2
          %s292 = sadd.s32 %s291, 3
        $region36: #{cnn_forward.6} parent=19 // pred_fallthru
          _
      $region20: #{cnn_forward.6} parent=5 // pred_fallthru
        _
      %p293 = scmp.le.s32.totalorder 1, %s12
      %p294 = scmp.lt.s32.totalorder %s12, 31
      %p295 = pnand %p293, %p294
      %p296 = pneg %p295
      // Predicated region
      $region37: #{cnn_forward.6} parent=5 // pred_check
        _
      $region38: #{cnn_forward.6} parent=5 // pred_check_branch
        %298 = sbr.rel (%p295) target = $region40
      $region39: #{cnn_forward.6} parent=5 // pred_region
        %s299 = ssub.s32 %s12, 1
        // Predicated region
        $region41: #{cnn_forward.6} parent=39 // pred_check
          %p300 = pneg %p171
        $region42: #{cnn_forward.6} parent=39 // pred_check_branch
          %302 = sbr.rel (%p300) target = $region44
        $region43: #{cnn_forward.6} parent=39 // pred_region
          %303 = dma.done [#allocation3], 9216
        $region44: #{cnn_forward.6} parent=39 // pred_fallthru
          _
        %s304 = smul.u32 %s22, 2
        %p305 = scmp.lt.s32.totalorder %s21, 1
        %s306 = scalar_select %p305, %s21, 1
        %p307 = scmp.lt.s32.totalorder %s304, 31
        %s308 = scalar_select %p307, %s304, 31
        %s309 = smul.addr %s308, 4
        %s310 = smul.addr %s306, 128
        %s311 = sadd.s32 %s309, %s310
        %s312 = smul.addr %s311, 4
        %s313 = scalar_lea.vmem %s0, %s312
        %p314 = pneg %p54
        %p315 = pneg %p51
        %s316 = smul.u32 %s22, 2
        %s317 = sadd.s32 %s316, 1
        %p318 = scmp.lt.s32.totalorder %s21, 1
        %s319 = scalar_select %p318, %s21, 1
        %p320 = scmp.lt.s32.totalorder %s317, 31
        %s321 = scalar_select %p320, %s317, 31
        %s322 = smul.addr %s321, 4
        %s323 = smul.addr %s319, 128
        %s324 = sadd.s32 %s322, %s323
        %s325 = smul.addr %s324, 4
        %s326 = scalar_lea.vmem %s1, %s325
        %p327 = pneg %p86
        %p328 = pneg %p83
        %s329 = smul.u32 %s22, 2
        %s330 = sadd.s32 %s329, 2
        %p331 = scmp.lt.s32.totalorder %s21, 1
        %s332 = scalar_select %p331, %s21, 1
        %p333 = scmp.lt.s32.totalorder %s330, 31
        %s334 = scalar_select %p333, %s330, 31
        %s335 = smul.addr %s334, 4
        %s336 = smul.addr %s332, 128
        %s337 = sadd.s32 %s335, %s336
        %s338 = smul.addr %s337, 4
        %s339 = scalar_lea.vmem %s2, %s338
        %p340 = pneg %p118
        %p341 = pneg %p115
        %s342 = smul.u32 %s22, 2
        %s343 = sadd.s32 %s342, 3
        %p344 = scmp.lt.s32.totalorder %s21, 1
        %s345 = scalar_select %p344, %s21, 1
        %p346 = scmp.lt.s32.totalorder %s343, 31
        %s347 = scalar_select %p346, %s343, 31
        %s348 = smul.addr %s347, 4
        %s349 = smul.addr %s345, 128
        %s350 = sadd.s32 %s348, %s349
        %s351 = smul.addr %s350, 4
        %s352 = scalar_lea.vmem %s3, %s351
        %p353 = pneg %p150
        %p354 = pneg %p147
        %p355 = pneg %p171
        %p356 = pneg %p168
        %p357 = pneg %p199
        %p358 = pneg %p196
        %p359 = scmp.lt.s32.totalorder %s21, 1
        %s360 = scalar_select %p359, %s21, 1
        %p361 = scmp.lt.s32.totalorder %s22, 14
        %s362 = scalar_select %p361, %s22, 14
        %s363 = smul.addr %s362, 2
        %s364 = smul.addr %s360, 30
        %s365 = sadd.s32 %s363, %s364
        %s366 = smul.addr %s365, 4
        %s367 = scalar_lea.vmem %s5, %s366
        %s368 = smul.u32 %s22, 2
        %p369 = scmp.lt.s32.totalorder %s21, 1
        %s370 = scalar_select %p369, %s21, 1
        %p371 = scmp.lt.s32.totalorder %s368, 31
        %s372 = scalar_select %p371, %s368, 31
        %s373 = smul.addr %s372, 4
        %s374 = smul.addr %s370, 128
        %s375 = sadd.s32 %s373, %s374
        %s376 = smul.addr %s375, 4
        %s377 = scalar_lea.vmem %s0, %s376
        %s378 = smul.u32 %s22, 2
        %s379 = smul.u32 %s22, 2
        %s380 = sadd.s32 %s379, 1
        %p381 = scmp.lt.s32.totalorder %s21, 1
        %s382 = scalar_select %p381, %s21, 1
        %p383 = scmp.lt.s32.totalorder %s380, 31
        %s384 = scalar_select %p383, %s380, 31
        %s385 = smul.addr %s384, 4
        %s386 = smul.addr %s382, 128
        %s387 = sadd.s32 %s385, %s386
        %s388 = smul.addr %s387, 4
        %s389 = scalar_lea.vmem %s1, %s388
        %s390 = smul.u32 %s22, 2
        %s391 = sadd.s32 %s390, 1
        %s392 = smul.u32 %s22, 2
        %s393 = sadd.s32 %s392, 2
        %p394 = scmp.lt.s32.totalorder %s21, 1
        %s395 = scalar_select %p394, %s21, 1
        %p396 = scmp.lt.s32.totalorder %s393, 31
        %s397 = scalar_select %p396, %s393, 31
        %s398 = smul.addr %s397, 4
        %s399 = smul.addr %s395, 128
        %s400 = sadd.s32 %s398, %s399
        %s401 = smul.addr %s400, 4
        %s402 = scalar_lea.vmem %s2, %s401
        %s403 = smul.u32 %s22, 2
        %s404 = sadd.s32 %s403, 2
        %s405 = smul.u32 %s22, 2
        %s406 = sadd.s32 %s405, 3
        %p407 = scmp.lt.s32.totalorder %s21, 1
        %s408 = scalar_select %p407, %s21, 1
        %p409 = scmp.lt.s32.totalorder %s406, 31
        %s410 = scalar_select %p409, %s406, 31
        %s411 = smul.addr %s410, 4
        %s412 = smul.addr %s408, 128
        %s413 = sadd.s32 %s411, %s412
        %s414 = smul.addr %s413, 4
        %s415 = scalar_lea.vmem %s3, %s414
        %s416 = smul.u32 %s22, 2
        %s417 = sadd.s32 %s416, 3
        %p418 = scmp.lt.s32.totalorder %s21, 1
        %s419 = scalar_select %p418, %s21, 1
        %p420 = scmp.lt.s32.totalorder %s22, 14
        %s421 = scalar_select %p420, %s22, 14
        %s422 = smul.addr %s421, 2
        %s423 = smul.addr %s419, 30
        %s424 = sadd.s32 %s422, %s423
        %s425 = smul.addr %s424, 4
        %s426 = scalar_lea.vmem %s5, %s425
        %v428 = vld [vmem:[%s377] sm:$0xf]
        %v429 = vld [vmem:[%s377 + $0x4] sm:$0xf]
        %v430 = vld [vmem:[%s377 + $0x8] sm:$0xf]
        %v431 = vld [vmem:[%s377 + $0xc] sm:$0xf]
        %v432 = vld [vmem:[%s389] sm:$0xf]
        %v433 = vld [vmem:[%s389 + $0x4] sm:$0xf]
        %v434 = vld [vmem:[%s389 + $0x8] sm:$0xf]
        %v435 = vld [vmem:[%s389 + $0xc] sm:$0xf]
        %v436 = vld [vmem:[%s402] sm:$0xf]
        %v437 = vld [vmem:[%s402 + $0x4] sm:$0xf]
        %v438 = vld [vmem:[%s402 + $0x8] sm:$0xf]
        %v439 = vld [vmem:[%s402 + $0xc] sm:$0xf]
        %v440 = vld [vmem:[%s415] sm:$0xf]
        %v441 = vld [vmem:[%s415 + $0x4] sm:$0xf]
        %v442 = vld [vmem:[%s415 + $0x8] sm:$0xf]
        %v443 = vld [vmem:[%s415 + $0xc] sm:$0xf]
        %v444 = vld [vmem:[#allocation2] sm:$0xf]
        %v445 = vld [vmem:[#allocation2 + $0x4] sm:$0xf]
        %v446 = vld [vmem:[#allocation2 + $0x8] sm:$0xf]
        %v447 = vld [vmem:[#allocation2 + $0xc] sm:$0xf]
        %v448 = vld [vmem:[#allocation2 + $0x10] sm:$0xf]
        %v449 = vld [vmem:[#allocation2 + $0x14] sm:$0xf]
        %v450 = vld [vmem:[#allocation2 + $0x18] sm:$0xf]
        %v451 = vld [vmem:[#allocation2 + $0x1c] sm:$0xf]
        %v452 = vld [vmem:[#allocation2 + $0x20] sm:$0xf]
        %v453 = vld [vmem:[#allocation2 + $0x24] sm:$0xf]
        %v454 = vld [vmem:[#allocation2 + $0x28] sm:$0xf]
        %v455 = vld [vmem:[#allocation2 + $0x2c] sm:$0xf]
        %v456 = vld [vmem:[#allocation2 + $0x30] sm:$0xf]
        %v457 = vld [vmem:[#allocation2 + $0x34] sm:$0xf]
        %v458 = vld [vmem:[#allocation2 + $0x38] sm:$0xf]
        %v459 = vld [vmem:[#allocation2 + $0x3c] sm:$0xf]
        %s460 = scalar_lea.vmem [#allocation2], 64
        %v461 = vld [vmem:[%s460] sm:$0xf]
        %v462 = vld [vmem:[%s460 + $0x4] sm:$0xf]
        %v463 = vld [vmem:[%s460 + $0x8] sm:$0xf]
        %v464 = vld [vmem:[%s460 + $0xc] sm:$0xf]
        %v465 = vld [vmem:[%s460 + $0x10] sm:$0xf]
        %v466 = vld [vmem:[%s460 + $0x14] sm:$0xf]
        %v467 = vld [vmem:[%s460 + $0x18] sm:$0xf]
        %v468 = vld [vmem:[%s460 + $0x1c] sm:$0xf]
        %v469 = vld [vmem:[%s460 + $0x20] sm:$0xf]
        %v470 = vld [vmem:[%s460 + $0x24] sm:$0xf]
        %v471 = vld [vmem:[%s460 + $0x28] sm:$0xf]
        %v472 = vld [vmem:[%s460 + $0x2c] sm:$0xf]
        %v473 = vld [vmem:[%s460 + $0x30] sm:$0xf]
        %v474 = vld [vmem:[%s460 + $0x34] sm:$0xf]
        %v475 = vld [vmem:[%s460 + $0x38] sm:$0xf]
        %v476 = vld [vmem:[%s460 + $0x3c] sm:$0xf]
        %v481 = vunpack.c.l.b16 %v428
        %v482 = vunpack.c.l.b16 %v429
        %v483 = vunpack.c.l.b16 %v430
        %v484 = vunpack.c.l.b16 %v431
        %v485 = vpack.c.b16 %v482, %v481
        %v486 = vpack.c.b16 %v484, %v483
        %vm487 = vsmask.f32 7424
        %v489 = vshrl.u32 %v485, 16
        %v491 = vshll.u32 %v485, 16
        %v493 = vrot.slane %v491, 1
        %v494 = vor.u32 %v489, %v493
        %v496 = vshll.u32 %v486, 16
        %v498 = vrot.slane %v496, 1
        %v499 = vsel %vm487, %v494, %v498
        %v500 = vshrl.u32 %v486, 16
        %v502 = vor.u32 %v500, %v498
        %v521 = vunpack.c.l.b16 %v461
        %v522 = vunpack.c.l.b16 %v462
        %v523 = vunpack.c.l.b16 %v463
        %v524 = vunpack.c.l.b16 %v464
        %v525 = vunpack.c.l.b16 %v465
        %v526 = vunpack.c.l.b16 %v466
        %v527 = vunpack.c.l.b16 %v467
        %v528 = vunpack.c.l.b16 %v468
        %v529 = vunpack.c.l.b16 %v469
        %v530 = vunpack.c.l.b16 %v470
        %v531 = vunpack.c.l.b16 %v471
        %v532 = vunpack.c.l.b16 %v472
        %v533 = vunpack.c.l.b16 %v473
        %v534 = vunpack.c.l.b16 %v474
        %v535 = vunpack.c.l.b16 %v475
        %v536 = vunpack.c.l.b16 %v476
        %v537 = vpack.c.b16 %v522, %v521
        %v538 = vpack.c.b16 %v524, %v523
        %v539 = vpack.c.b16 %v526, %v525
        %v540 = vpack.c.b16 %v528, %v527
        %v541 = vpack.c.b16 %v530, %v529
        %v542 = vpack.c.b16 %v532, %v531
        %v543 = vpack.c.b16 %v534, %v533
        %v544 = vpack.c.b16 %v536, %v535
        %553 = vmatprep.subr.bf16.mxu0 0
        %554 = vmatpush1.bf16.msra.mxu0 %v544
        %555 = vmatprep.subr.bf16.mxu0 0
        %556 = vmatpush1.bf16.msra.mxu0 %v543
        %557 = vmatprep.subr.bf16.mxu0 0
        %558 = vmatpush1.bf16.msra.mxu0 %v542
        %559 = vmatprep.subr.bf16.mxu0 0
        %560 = vmatpush1.bf16.msra.mxu0 %v541
        %561 = vmatprep.subr.bf16.mxu0 0
        %562 = vmatpush1.bf16.msra.mxu0 %v540
        %563 = vmatprep.subr.bf16.mxu0 0
        %564 = vmatpush1.bf16.msra.mxu0 %v539
        %565 = vmatprep.subr.bf16.mxu0 0
        %566 = vmatpush1.bf16.msra.mxu0 %v538
        %567 = vmatprep.subr.bf16.mxu0 0
        %568 = vmatpush1.bf16.msra.mxu0 %v537
        %569 = vmatprep.subr.bf16.mxu0 0
        %570 = vmatpush2.bf16.msra.mxu0 0
        %571 = vmatprep.subr.bf16.mxu0 0
        %572 = vmatpush2.bf16.msra.mxu0 0
        %573 = vmatprep.subr.bf16.mxu0 0
        %574 = vmatpush2.bf16.msra.mxu0 0
        %575 = vmatprep.subr.bf16.mxu0 0
        %576 = vmatpush2.bf16.msra.mxu0 0
        %577 = vmatprep.subr.bf16.mxu0 0
        %578 = vmatpush2.bf16.msra.mxu0 0
        %579 = vmatprep.subr.bf16.mxu0 0
        %580 = vmatpush2.bf16.msra.mxu0 0
        %581 = vmatprep.subr.bf16.mxu0 0
        %582 = vmatpush2.bf16.msra.mxu0 0
        %583 = vmatprep.subr.bf16.mxu0 0
        %584 = vmatpush2.bf16.msra.mxu0 0
        %585 = vmatprep.mubr.bf16.mxu0 0
        %586 = vmatmul.mubr.bf16.gmra.mxu0 %v499
        %v587 = vpop.f32.mrf.mxu0
        %v588 = vadd.f32 0.0, %v587
        %v589 = vpop.f32.mrf.mxu0
        %v590 = vpop.f32.mrf.mxu0
        %v591 = vadd.f32 0.0, %v590
        %v592 = vpop.f32.mrf.mxu0
        %593 = vmatprep.mubr.bf16.mxu0 0
        %594 = vmatmul.mubr.bf16.gmra.mxu0 %v502
        %v595 = vpop.f32.mrf.mxu0
        %v596 = vadd.f32 0.0, %v595
        %v597 = vpop.f32.mrf.mxu0
        %v598 = vpop.f32.mrf.mxu0
        %v599 = vadd.f32 0.0, %v598
        %v600 = vpop.f32.mrf.mxu0
        %601 = vdwg.mxu0
        %v620 = vunpack.c.l.b16 %v444
        %v621 = vunpack.c.l.b16 %v445
        %v622 = vunpack.c.l.b16 %v446
        %v623 = vunpack.c.l.b16 %v447
        %v624 = vunpack.c.l.b16 %v448
        %v625 = vunpack.c.l.b16 %v449
        %v626 = vunpack.c.l.b16 %v450
        %v627 = vunpack.c.l.b16 %v451
        %v628 = vunpack.c.l.b16 %v452
        %v629 = vunpack.c.l.b16 %v453
        %v630 = vunpack.c.l.b16 %v454
        %v631 = vunpack.c.l.b16 %v455
        %v632 = vunpack.c.l.b16 %v456
        %v633 = vunpack.c.l.b16 %v457
        %v634 = vunpack.c.l.b16 %v458
        %v635 = vunpack.c.l.b16 %v459
        %v636 = vpack.c.b16 %v621, %v620
        %v637 = vpack.c.b16 %v623, %v622
        %v638 = vpack.c.b16 %v625, %v624
        %v639 = vpack.c.b16 %v627, %v626
        %v640 = vpack.c.b16 %v629, %v628
        %v641 = vpack.c.b16 %v631, %v630
        %v642 = vpack.c.b16 %v633, %v632
        %v643 = vpack.c.b16 %v635, %v634
        %652 = vmatprep.subr.bf16.mxu0 0
        %653 = vmatpush1.bf16.msra.mxu0 %v643
        %654 = vmatprep.subr.bf16.mxu0 0
        %655 = vmatpush1.bf16.msra.mxu0 %v642
        %656 = vmatprep.subr.bf16.mxu0 0
        %657 = vmatpush1.bf16.msra.mxu0 %v641
        %658 = vmatprep.subr.bf16.mxu0 0
        %659 = vmatpush1.bf16.msra.mxu0 %v640
        %660 = vmatprep.subr.bf16.mxu0 0
        %661 = vmatpush1.bf16.msra.mxu0 %v639
        %662 = vmatprep.subr.bf16.mxu0 0
        %663 = vmatpush1.bf16.msra.mxu0 %v638
        %664 = vmatprep.subr.bf16.mxu0 0
        %665 = vmatpush1.bf16.msra.mxu0 %v637
        %666 = vmatprep.subr.bf16.mxu0 0
        %667 = vmatpush1.bf16.msra.mxu0 %v636
        %668 = vmatprep.subr.bf16.mxu0 0
        %669 = vmatpush2.bf16.msra.mxu0 0
        %670 = vmatprep.subr.bf16.mxu0 0
        %671 = vmatpush2.bf16.msra.mxu0 0
        %672 = vmatprep.subr.bf16.mxu0 0
        %673 = vmatpush2.bf16.msra.mxu0 0
        %674 = vmatprep.subr.bf16.mxu0 0
        %675 = vmatpush2.bf16.msra.mxu0 0
        %676 = vmatprep.subr.bf16.mxu0 0
        %677 = vmatpush2.bf16.msra.mxu0 0
        %678 = vmatprep.subr.bf16.mxu0 0
        %679 = vmatpush2.bf16.msra.mxu0 0
        %680 = vmatprep.subr.bf16.mxu0 0
        %681 = vmatpush2.bf16.msra.mxu0 0
        %682 = vmatprep.subr.bf16.mxu0 0
        %683 = vmatpush2.bf16.msra.mxu0 0
        %684 = vmatprep.mubr.bf16.mxu0 0
        %685 = vmatmul.mubr.bf16.gmra.mxu0 %v485
        %v686 = vpop.f32.mrf.mxu0
        %v687 = vadd.f32 %v588, %v686
        %v688 = vpop.f32.mrf.mxu0
        %v689 = vpop.f32.mrf.mxu0
        %v690 = vadd.f32 %v591, %v689
        %v691 = vpop.f32.mrf.mxu0
        %692 = vmatprep.mubr.bf16.mxu0 0
        %693 = vmatmul.mubr.bf16.gmra.mxu0 %v486
        %v694 = vpop.f32.mrf.mxu0
        %v695 = vadd.f32 %v596, %v694
        %v696 = vpop.f32.mrf.mxu0
        %v697 = vpop.f32.mrf.mxu0
        %v698 = vadd.f32 %v599, %v697
        %v699 = vpop.f32.mrf.mxu0
        %700 = vdwg.mxu0
        %s701 = scalar_lea.vmem [#allocation2], 128
        %v702 = vld [vmem:[%s701] sm:$0xf]
        %v703 = vld [vmem:[%s701 + $0x4] sm:$0xf]
        %v704 = vld [vmem:[%s701 + $0x8] sm:$0xf]
        %v705 = vld [vmem:[%s701 + $0xc] sm:$0xf]
        %v706 = vld [vmem:[%s701 + $0x10] sm:$0xf]
        %v707 = vld [vmem:[%s701 + $0x14] sm:$0xf]
        %v708 = vld [vmem:[%s701 + $0x18] sm:$0xf]
        %v709 = vld [vmem:[%s701 + $0x1c] sm:$0xf]
        %v710 = vld [vmem:[%s701 + $0x20] sm:$0xf]
        %v711 = vld [vmem:[%s701 + $0x24] sm:$0xf]
        %v712 = vld [vmem:[%s701 + $0x28] sm:$0xf]
        %v713 = vld [vmem:[%s701 + $0x2c] sm:$0xf]
        %v714 = vld [vmem:[%s701 + $0x30] sm:$0xf]
        %v715 = vld [vmem:[%s701 + $0x34] sm:$0xf]
        %v716 = vld [vmem:[%s701 + $0x38] sm:$0xf]
        %v717 = vld [vmem:[%s701 + $0x3c] sm:$0xf]
        %vm718 = vcmask 1046528
        %v719 = vrot.slane %v485, 1
        %v720 = vrot.slane %v486, 1
        %v721 = vsel %vm718, %v719, %v720
        %v740 = vunpack.c.l.b16 %v702
        %v741 = vunpack.c.l.b16 %v703
        %v742 = vunpack.c.l.b16 %v704
        %v743 = vunpack.c.l.b16 %v705
        %v744 = vunpack.c.l.b16 %v706
        %v745 = vunpack.c.l.b16 %v707
        %v746 = vunpack.c.l.b16 %v708
        %v747 = vunpack.c.l.b16 %v709
        %v748 = vunpack.c.l.b16 %v710
        %v749 = vunpack.c.l.b16 %v711
        %v750 = vunpack.c.l.b16 %v712
        %v751 = vunpack.c.l.b16 %v713
        %v752 = vunpack.c.l.b16 %v714
        %v753 = vunpack.c.l.b16 %v715
        %v754 = vunpack.c.l.b16 %v716
        %v755 = vunpack.c.l.b16 %v717
        %v756 = vpack.c.b16 %v741, %v740
        %v757 = vpack.c.b16 %v743, %v742
        %v758 = vpack.c.b16 %v745, %v744
        %v759 = vpack.c.b16 %v747, %v746
        %v760 = vpack.c.b16 %v749, %v748
        %v761 = vpack.c.b16 %v751, %v750
        %v762 = vpack.c.b16 %v753, %v752
        %v763 = vpack.c.b16 %v755, %v754
        %772 = vmatprep.subr.bf16.mxu0 0
        %773 = vmatpush1.bf16.msra.mxu0 %v763
        %774 = vmatprep.subr.bf16.mxu0 0
        %775 = vmatpush1.bf16.msra.mxu0 %v762
        %776 = vmatprep.subr.bf16.mxu0 0
        %777 = vmatpush1.bf16.msra.mxu0 %v761
        %778 = vmatprep.subr.bf16.mxu0 0
        %779 = vmatpush1.bf16.msra.mxu0 %v760
        %780 = vmatprep.subr.bf16.mxu0 0
        %781 = vmatpush1.bf16.msra.mxu0 %v759
        %782 = vmatprep.subr.bf16.mxu0 0
        %783 = vmatpush1.bf16.msra.mxu0 %v758
        %784 = vmatprep.subr.bf16.mxu0 0
        %785 = vmatpush1.bf16.msra.mxu0 %v757
        %786 = vmatprep.subr.bf16.mxu0 0
        %787 = vmatpush1.bf16.msra.mxu0 %v756
        %788 = vmatprep.subr.bf16.mxu0 0
        %789 = vmatpush2.bf16.msra.mxu0 0
        %790 = vmatprep.subr.bf16.mxu0 0
        %791 = vmatpush2.bf16.msra.mxu0 0
        %792 = vmatprep.subr.bf16.mxu0 0
        %793 = vmatpush2.bf16.msra.mxu0 0
        %794 = vmatprep.subr.bf16.mxu0 0
        %795 = vmatpush2.bf16.msra.mxu0 0
        %796 = vmatprep.subr.bf16.mxu0 0
        %797 = vmatpush2.bf16.msra.mxu0 0
        %798 = vmatprep.subr.bf16.mxu0 0
        %799 = vmatpush2.bf16.msra.mxu0 0
        %800 = vmatprep.subr.bf16.mxu0 0
        %801 = vmatpush2.bf16.msra.mxu0 0
        %802 = vmatprep.subr.bf16.mxu0 0
        %803 = vmatpush2.bf16.msra.mxu0 0
        %804 = vmatprep.mubr.bf16.mxu0 0
        %805 = vmatmul.mubr.bf16.gmra.mxu0 %v721
        %v806 = vpop.f32.mrf.mxu0
        %v807 = vadd.f32 0.0, %v806
        %v808 = vpop.f32.mrf.mxu0
        %v809 = vpop.f32.mrf.mxu0
        %v810 = vadd.f32 0.0, %v809
        %v811 = vpop.f32.mrf.mxu0
        %812 = vmatprep.mubr.bf16.mxu0 0
        %813 = vmatmul.mubr.bf16.gmra.mxu0 %v720
        %v814 = vpop.f32.mrf.mxu0
        %v815 = vadd.f32 0.0, %v814
        %v816 = vpop.f32.mrf.mxu0
        %v817 = vpop.f32.mrf.mxu0
        %v818 = vadd.f32 0.0, %v817
        %v819 = vpop.f32.mrf.mxu0
        %820 = vdwg.mxu0
        %v821 = vadd.f32 %v687, %v807
        %v822 = vadd.f32 %v690, %v810
        %v823 = vadd.f32 %v695, %v815
        %v824 = vadd.f32 %v698, %v818
        %s825 = scalar_lea.vmem [#allocation2], 192
        %v826 = vld [vmem:[%s825] sm:$0xf]
        %v827 = vld [vmem:[%s825 + $0x4] sm:$0xf]
        %v828 = vld [vmem:[%s825 + $0x8] sm:$0xf]
        %v829 = vld [vmem:[%s825 + $0xc] sm:$0xf]
        %v830 = vld [vmem:[%s825 + $0x10] sm:$0xf]
        %v831 = vld [vmem:[%s825 + $0x14] sm:$0xf]
        %v832 = vld [vmem:[%s825 + $0x18] sm:$0xf]
        %v833 = vld [vmem:[%s825 + $0x1c] sm:$0xf]
        %v834 = vld [vmem:[%s825 + $0x20] sm:$0xf]
        %v835 = vld [vmem:[%s825 + $0x24] sm:$0xf]
        %v836 = vld [vmem:[%s825 + $0x28] sm:$0xf]
        %v837 = vld [vmem:[%s825 + $0x2c] sm:$0xf]
        %v838 = vld [vmem:[%s825 + $0x30] sm:$0xf]
        %v839 = vld [vmem:[%s825 + $0x34] sm:$0xf]
        %v840 = vld [vmem:[%s825 + $0x38] sm:$0xf]
        %v841 = vld [vmem:[%s825 + $0x3c] sm:$0xf]
        %v846 = vunpack.c.l.b16 %v432
        %v847 = vunpack.c.l.b16 %v433
        %v848 = vunpack.c.l.b16 %v434
        %v849 = vunpack.c.l.b16 %v435
        %v850 = vpack.c.b16 %v847, %v846
        %v851 = vpack.c.b16 %v849, %v848
        %v870 = vunpack.c.l.b16 %v826
        %v871 = vunpack.c.l.b16 %v827
        %v872 = vunpack.c.l.b16 %v828
        %v873 = vunpack.c.l.b16 %v829
        %v874 = vunpack.c.l.b16 %v830
        %v875 = vunpack.c.l.b16 %v831
        %v876 = vunpack.c.l.b16 %v832
        %v877 = vunpack.c.l.b16 %v833
        %v878 = vunpack.c.l.b16 %v834
        %v879 = vunpack.c.l.b16 %v835
        %v880 = vunpack.c.l.b16 %v836
        %v881 = vunpack.c.l.b16 %v837
        %v882 = vunpack.c.l.b16 %v838
        %v883 = vunpack.c.l.b16 %v839
        %v884 = vunpack.c.l.b16 %v840
        %v885 = vunpack.c.l.b16 %v841
        %v886 = vpack.c.b16 %v871, %v870
        %v887 = vpack.c.b16 %v873, %v872
        %v888 = vpack.c.b16 %v875, %v874
        %v889 = vpack.c.b16 %v877, %v876
        %v890 = vpack.c.b16 %v879, %v878
        %v891 = vpack.c.b16 %v881, %v880
        %v892 = vpack.c.b16 %v883, %v882
        %v893 = vpack.c.b16 %v885, %v884
        %902 = vmatprep.subr.bf16.mxu0 0
        %903 = vmatpush1.bf16.msra.mxu0 %v893
        %904 = vmatprep.subr.bf16.mxu0 0
        %905 = vmatpush1.bf16.msra.mxu0 %v892
        %906 = vmatprep.subr.bf16.mxu0 0
        %907 = vmatpush1.bf16.msra.mxu0 %v891
        %908 = vmatprep.subr.bf16.mxu0 0
        %909 = vmatpush1.bf16.msra.mxu0 %v890
        %910 = vmatprep.subr.bf16.mxu0 0
        %911 = vmatpush1.bf16.msra.mxu0 %v889
        %912 = vmatprep.subr.bf16.mxu0 0
        %913 = vmatpush1.bf16.msra.mxu0 %v888
        %914 = vmatprep.subr.bf16.mxu0 0
        %915 = vmatpush1.bf16.msra.mxu0 %v887
        %916 = vmatprep.subr.bf16.mxu0 0
        %917 = vmatpush1.bf16.msra.mxu0 %v886
        %918 = vmatprep.subr.bf16.mxu0 0
        %919 = vmatpush2.bf16.msra.mxu0 0
        %920 = vmatprep.subr.bf16.mxu0 0
        %921 = vmatpush2.bf16.msra.mxu0 0
        %922 = vmatprep.subr.bf16.mxu0 0
        %923 = vmatpush2.bf16.msra.mxu0 0
        %924 = vmatprep.subr.bf16.mxu0 0
        %925 = vmatpush2.bf16.msra.mxu0 0
        %926 = vmatprep.subr.bf16.mxu0 0
        %927 = vmatpush2.bf16.msra.mxu0 0
        %928 = vmatprep.subr.bf16.mxu0 0
        %929 = vmatpush2.bf16.msra.mxu0 0
        %930 = vmatprep.subr.bf16.mxu0 0
        %931 = vmatpush2.bf16.msra.mxu0 0
        %932 = vmatprep.subr.bf16.mxu0 0
        %933 = vmatpush2.bf16.msra.mxu0 0
        %934 = vmatprep.mubr.bf16.mxu0 0
        %935 = vmatmul.mubr.bf16.gmra.mxu0 %v850
        %v936 = vpop.f32.mrf.mxu0
        %v937 = vadd.f32 0.0, %v936
        %v938 = vpop.f32.mrf.mxu0
        %v939 = vpop.f32.mrf.mxu0
        %v940 = vadd.f32 0.0, %v939
        %v941 = vpop.f32.mrf.mxu0
        %942 = vmatprep.mubr.bf16.mxu0 0
        %943 = vmatmul.mubr.bf16.gmra.mxu0 %v851
        %v944 = vpop.f32.mrf.mxu0
        %v945 = vadd.f32 0.0, %v944
        %v946 = vpop.f32.mrf.mxu0
        %v947 = vpop.f32.mrf.mxu0
        %v948 = vadd.f32 0.0, %v947
        %v949 = vpop.f32.mrf.mxu0
        %950 = vdwg.mxu0
        %v951 = vadd.f32 %v821, %v937
        %v952 = vadd.f32 %v822, %v940
        %v953 = vadd.f32 %v823, %v945
        %v954 = vadd.f32 %v824, %v948
        %s955 = scalar_lea.vmem [#allocation2], 256
        %v956 = vld [vmem:[%s955] sm:$0xf]
        %v957 = vld [vmem:[%s955 + $0x4] sm:$0xf]
        %v958 = vld [vmem:[%s955 + $0x8] sm:$0xf]
        %v959 = vld [vmem:[%s955 + $0xc] sm:$0xf]
        %v960 = vld [vmem:[%s955 + $0x10] sm:$0xf]
        %v961 = vld [vmem:[%s955 + $0x14] sm:$0xf]
        %v962 = vld [vmem:[%s955 + $0x18] sm:$0xf]
        %v963 = vld [vmem:[%s955 + $0x1c] sm:$0xf]
        %v964 = vld [vmem:[%s955 + $0x20] sm:$0xf]
        %v965 = vld [vmem:[%s955 + $0x24] sm:$0xf]
        %v966 = vld [vmem:[%s955 + $0x28] sm:$0xf]
        %v967 = vld [vmem:[%s955 + $0x2c] sm:$0xf]
        %v968 = vld [vmem:[%s955 + $0x30] sm:$0xf]
        %v969 = vld [vmem:[%s955 + $0x34] sm:$0xf]
        %v970 = vld [vmem:[%s955 + $0x38] sm:$0xf]
        %v971 = vld [vmem:[%s955 + $0x3c] sm:$0xf]
        %v973 = vshrl.u32 %v850, 16
        %v975 = vshll.u32 %v850, 16
        %v977 = vrot.slane %v975, 1
        %v978 = vor.u32 %v973, %v977
        %v980 = vshll.u32 %v851, 16
        %v982 = vrot.slane %v980, 1
        %v983 = vsel %vm487, %v978, %v982
        %v984 = vshrl.u32 %v851, 16
        %v986 = vor.u32 %v984, %v982
        %v1005 = vunpack.c.l.b16 %v956
        %v1006 = vunpack.c.l.b16 %v957
        %v1007 = vunpack.c.l.b16 %v958
        %v1008 = vunpack.c.l.b16 %v959
        %v1009 = vunpack.c.l.b16 %v960
        %v1010 = vunpack.c.l.b16 %v961
        %v1011 = vunpack.c.l.b16 %v962
        %v1012 = vunpack.c.l.b16 %v963
        %v1013 = vunpack.c.l.b16 %v964
        %v1014 = vunpack.c.l.b16 %v965
        %v1015 = vunpack.c.l.b16 %v966
        %v1016 = vunpack.c.l.b16 %v967
        %v1017 = vunpack.c.l.b16 %v968
        %v1018 = vunpack.c.l.b16 %v969
        %v1019 = vunpack.c.l.b16 %v970
        %v1020 = vunpack.c.l.b16 %v971
        %v1021 = vpack.c.b16 %v1006, %v1005
        %v1022 = vpack.c.b16 %v1008, %v1007
        %v1023 = vpack.c.b16 %v1010, %v1009
        %v1024 = vpack.c.b16 %v1012, %v1011
        %v1025 = vpack.c.b16 %v1014, %v1013
        %v1026 = vpack.c.b16 %v1016, %v1015
        %v1027 = vpack.c.b16 %v1018, %v1017
        %v1028 = vpack.c.b16 %v1020, %v1019
        %1037 = vmatprep.subr.bf16.mxu0 0
        %1038 = vmatpush1.bf16.msra.mxu0 %v1028
        %1039 = vmatprep.subr.bf16.mxu0 0
        %1040 = vmatpush1.bf16.msra.mxu0 %v1027
        %1041 = vmatprep.subr.bf16.mxu0 0
        %1042 = vmatpush1.bf16.msra.mxu0 %v1026
        %1043 = vmatprep.subr.bf16.mxu0 0
        %1044 = vmatpush1.bf16.msra.mxu0 %v1025
        %1045 = vmatprep.subr.bf16.mxu0 0
        %1046 = vmatpush1.bf16.msra.mxu0 %v1024
        %1047 = vmatprep.subr.bf16.mxu0 0
        %1048 = vmatpush1.bf16.msra.mxu0 %v1023
        %1049 = vmatprep.subr.bf16.mxu0 0
        %1050 = vmatpush1.bf16.msra.mxu0 %v1022
        %1051 = vmatprep.subr.bf16.mxu0 0
        %1052 = vmatpush1.bf16.msra.mxu0 %v1021
        %1053 = vmatprep.subr.bf16.mxu0 0
        %1054 = vmatpush2.bf16.msra.mxu0 0
        %1055 = vmatprep.subr.bf16.mxu0 0
        %1056 = vmatpush2.bf16.msra.mxu0 0
        %1057 = vmatprep.subr.bf16.mxu0 0
        %1058 = vmatpush2.bf16.msra.mxu0 0
        %1059 = vmatprep.subr.bf16.mxu0 0
        %1060 = vmatpush2.bf16.msra.mxu0 0
        %1061 = vmatprep.subr.bf16.mxu0 0
        %1062 = vmatpush2.bf16.msra.mxu0 0
        %1063 = vmatprep.subr.bf16.mxu0 0
        %1064 = vmatpush2.bf16.msra.mxu0 0
        %1065 = vmatprep.subr.bf16.mxu0 0
        %1066 = vmatpush2.bf16.msra.mxu0 0
        %1067 = vmatprep.subr.bf16.mxu0 0
        %1068 = vmatpush2.bf16.msra.mxu0 0
        %1069 = vmatprep.mubr.bf16.mxu0 0
        %1070 = vmatmul.mubr.bf16.gmra.mxu0 %v983
        %v1071 = vpop.f32.mrf.mxu0
        %v1072 = vadd.f32 0.0, %v1071
        %v1073 = vpop.f32.mrf.mxu0
        %v1074 = vpop.f32.mrf.mxu0
        %v1075 = vadd.f32 0.0, %v1074
        %v1076 = vpop.f32.mrf.mxu0
        %1077 = vmatprep.mubr.bf16.mxu0 0
        %1078 = vmatmul.mubr.bf16.gmra.mxu0 %v986
        %v1079 = vpop.f32.mrf.mxu0
        %v1080 = vadd.f32 0.0, %v1079
        %v1081 = vpop.f32.mrf.mxu0
        %v1082 = vpop.f32.mrf.mxu0
        %v1083 = vadd.f32 0.0, %v1082
        %v1084 = vpop.f32.mrf.mxu0
        %1085 = vdwg.mxu0
        %v1086 = vadd.f32 %v951, %v1072
        %v1087 = vadd.f32 %v952, %v1075
        %v1088 = vadd.f32 %v953, %v1080
        %v1089 = vadd.f32 %v954, %v1083
        %s1090 = scalar_lea.vmem [#allocation2], 320
        %v1091 = vld [vmem:[%s1090] sm:$0xf]
        %v1092 = vld [vmem:[%s1090 + $0x4] sm:$0xf]
        %v1093 = vld [vmem:[%s1090 + $0x8] sm:$0xf]
        %v1094 = vld [vmem:[%s1090 + $0xc] sm:$0xf]
        %v1095 = vld [vmem:[%s1090 + $0x10] sm:$0xf]
        %v1096 = vld [vmem:[%s1090 + $0x14] sm:$0xf]
        %v1097 = vld [vmem:[%s1090 + $0x18] sm:$0xf]
        %v1098 = vld [vmem:[%s1090 + $0x1c] sm:$0xf]
        %v1099 = vld [vmem:[%s1090 + $0x20] sm:$0xf]
        %v1100 = vld [vmem:[%s1090 + $0x24] sm:$0xf]
        %v1101 = vld [vmem:[%s1090 + $0x28] sm:$0xf]
        %v1102 = vld [vmem:[%s1090 + $0x2c] sm:$0xf]
        %v1103 = vld [vmem:[%s1090 + $0x30] sm:$0xf]
        %v1104 = vld [vmem:[%s1090 + $0x34] sm:$0xf]
        %v1105 = vld [vmem:[%s1090 + $0x38] sm:$0xf]
        %v1106 = vld [vmem:[%s1090 + $0x3c] sm:$0xf]
        %v1107 = vrot.slane %v850, 1
        %v1108 = vrot.slane %v851, 1
        %v1109 = vsel %vm718, %v1107, %v1108
        %v1128 = vunpack.c.l.b16 %v1091
        %v1129 = vunpack.c.l.b16 %v1092
        %v1130 = vunpack.c.l.b16 %v1093
        %v1131 = vunpack.c.l.b16 %v1094
        %v1132 = vunpack.c.l.b16 %v1095
        %v1133 = vunpack.c.l.b16 %v1096
        %v1134 = vunpack.c.l.b16 %v1097
        %v1135 = vunpack.c.l.b16 %v1098
        %v1136 = vunpack.c.l.b16 %v1099
        %v1137 = vunpack.c.l.b16 %v1100
        %v1138 = vunpack.c.l.b16 %v1101
        %v1139 = vunpack.c.l.b16 %v1102
        %v1140 = vunpack.c.l.b16 %v1103
        %v1141 = vunpack.c.l.b16 %v1104
        %v1142 = vunpack.c.l.b16 %v1105
        %v1143 = vunpack.c.l.b16 %v1106
        %v1144 = vpack.c.b16 %v1129, %v1128
        %v1145 = vpack.c.b16 %v1131, %v1130
        %v1146 = vpack.c.b16 %v1133, %v1132
        %v1147 = vpack.c.b16 %v1135, %v1134
        %v1148 = vpack.c.b16 %v1137, %v1136
        %v1149 = vpack.c.b16 %v1139, %v1138
        %v1150 = vpack.c.b16 %v1141, %v1140
        %v1151 = vpack.c.b16 %v1143, %v1142
        %1160 = vmatprep.subr.bf16.mxu0 0
        %1161 = vmatpush1.bf16.msra.mxu0 %v1151
        %1162 = vmatprep.subr.bf16.mxu0 0
        %1163 = vmatpush1.bf16.msra.mxu0 %v1150
        %1164 = vmatprep.subr.bf16.mxu0 0
        %1165 = vmatpush1.bf16.msra.mxu0 %v1149
        %1166 = vmatprep.subr.bf16.mxu0 0
        %1167 = vmatpush1.bf16.msra.mxu0 %v1148
        %1168 = vmatprep.subr.bf16.mxu0 0
        %1169 = vmatpush1.bf16.msra.mxu0 %v1147
        %1170 = vmatprep.subr.bf16.mxu0 0
        %1171 = vmatpush1.bf16.msra.mxu0 %v1146
        %1172 = vmatprep.subr.bf16.mxu0 0
        %1173 = vmatpush1.bf16.msra.mxu0 %v1145
        %1174 = vmatprep.subr.bf16.mxu0 0
        %1175 = vmatpush1.bf16.msra.mxu0 %v1144
        %1176 = vmatprep.subr.bf16.mxu0 0
        %1177 = vmatpush2.bf16.msra.mxu0 0
        %1178 = vmatprep.subr.bf16.mxu0 0
        %1179 = vmatpush2.bf16.msra.mxu0 0
        %1180 = vmatprep.subr.bf16.mxu0 0
        %1181 = vmatpush2.bf16.msra.mxu0 0
        %1182 = vmatprep.subr.bf16.mxu0 0
        %1183 = vmatpush2.bf16.msra.mxu0 0
        %1184 = vmatprep.subr.bf16.mxu0 0
        %1185 = vmatpush2.bf16.msra.mxu0 0
        %1186 = vmatprep.subr.bf16.mxu0 0
        %1187 = vmatpush2.bf16.msra.mxu0 0
        %1188 = vmatprep.subr.bf16.mxu0 0
        %1189 = vmatpush2.bf16.msra.mxu0 0
        %1190 = vmatprep.subr.bf16.mxu0 0
        %1191 = vmatpush2.bf16.msra.mxu0 0
        %1192 = vmatprep.mubr.bf16.mxu0 0
        %1193 = vmatmul.mubr.bf16.gmra.mxu0 %v1109
        %v1194 = vpop.f32.mrf.mxu0
        %v1195 = vadd.f32 0.0, %v1194
        %v1196 = vpop.f32.mrf.mxu0
        %v1197 = vpop.f32.mrf.mxu0
        %v1198 = vadd.f32 0.0, %v1197
        %v1199 = vpop.f32.mrf.mxu0
        %1200 = vmatprep.mubr.bf16.mxu0 0
        %1201 = vmatmul.mubr.bf16.gmra.mxu0 %v1108
        %v1202 = vpop.f32.mrf.mxu0
        %v1203 = vadd.f32 0.0, %v1202
        %v1204 = vpop.f32.mrf.mxu0
        %v1205 = vpop.f32.mrf.mxu0
        %v1206 = vadd.f32 0.0, %v1205
        %v1207 = vpop.f32.mrf.mxu0
        %1208 = vdwg.mxu0
        %v1209 = vadd.f32 %v1086, %v1195
        %v1210 = vadd.f32 %v1087, %v1198
        %v1211 = vadd.f32 %v1088, %v1203
        %v1212 = vadd.f32 %v1089, %v1206
        %s1213 = scalar_lea.vmem [#allocation2], 384
        %v1214 = vld [vmem:[%s1213] sm:$0xf]
        %v1215 = vld [vmem:[%s1213 + $0x4] sm:$0xf]
        %v1216 = vld [vmem:[%s1213 + $0x8] sm:$0xf]
        %v1217 = vld [vmem:[%s1213 + $0xc] sm:$0xf]
        %v1218 = vld [vmem:[%s1213 + $0x10] sm:$0xf]
        %v1219 = vld [vmem:[%s1213 + $0x14] sm:$0xf]
        %v1220 = vld [vmem:[%s1213 + $0x18] sm:$0xf]
        %v1221 = vld [vmem:[%s1213 + $0x1c] sm:$0xf]
        %v1222 = vld [vmem:[%s1213 + $0x20] sm:$0xf]
        %v1223 = vld [vmem:[%s1213 + $0x24] sm:$0xf]
        %v1224 = vld [vmem:[%s1213 + $0x28] sm:$0xf]
        %v1225 = vld [vmem:[%s1213 + $0x2c] sm:$0xf]
        %v1226 = vld [vmem:[%s1213 + $0x30] sm:$0xf]
        %v1227 = vld [vmem:[%s1213 + $0x34] sm:$0xf]
        %v1228 = vld [vmem:[%s1213 + $0x38] sm:$0xf]
        %v1229 = vld [vmem:[%s1213 + $0x3c] sm:$0xf]
        %v1234 = vunpack.c.l.b16 %v436
        %v1235 = vunpack.c.l.b16 %v437
        %v1236 = vunpack.c.l.b16 %v438
        %v1237 = vunpack.c.l.b16 %v439
        %v1238 = vpack.c.b16 %v1235, %v1234
        %v1239 = vpack.c.b16 %v1237, %v1236
        %v1258 = vunpack.c.l.b16 %v1214
        %v1259 = vunpack.c.l.b16 %v1215
        %v1260 = vunpack.c.l.b16 %v1216
        %v1261 = vunpack.c.l.b16 %v1217
        %v1262 = vunpack.c.l.b16 %v1218
        %v1263 = vunpack.c.l.b16 %v1219
        %v1264 = vunpack.c.l.b16 %v1220
        %v1265 = vunpack.c.l.b16 %v1221
        %v1266 = vunpack.c.l.b16 %v1222
        %v1267 = vunpack.c.l.b16 %v1223
        %v1268 = vunpack.c.l.b16 %v1224
        %v1269 = vunpack.c.l.b16 %v1225
        %v1270 = vunpack.c.l.b16 %v1226
        %v1271 = vunpack.c.l.b16 %v1227
        %v1272 = vunpack.c.l.b16 %v1228
        %v1273 = vunpack.c.l.b16 %v1229
        %v1274 = vpack.c.b16 %v1259, %v1258
        %v1275 = vpack.c.b16 %v1261, %v1260
        %v1276 = vpack.c.b16 %v1263, %v1262
        %v1277 = vpack.c.b16 %v1265, %v1264
        %v1278 = vpack.c.b16 %v1267, %v1266
        %v1279 = vpack.c.b16 %v1269, %v1268
        %v1280 = vpack.c.b16 %v1271, %v1270
        %v1281 = vpack.c.b16 %v1273, %v1272
        %1290 = vmatprep.subr.bf16.mxu0 0
        %1291 = vmatpush1.bf16.msra.mxu0 %v1281
        %1292 = vmatprep.subr.bf16.mxu0 0
        %1293 = vmatpush1.bf16.msra.mxu0 %v1280
        %1294 = vmatprep.subr.bf16.mxu0 0
        %1295 = vmatpush1.bf16.msra.mxu0 %v1279
        %1296 = vmatprep.subr.bf16.mxu0 0
        %1297 = vmatpush1.bf16.msra.mxu0 %v1278
        %1298 = vmatprep.subr.bf16.mxu0 0
        %1299 = vmatpush1.bf16.msra.mxu0 %v1277
        %1300 = vmatprep.subr.bf16.mxu0 0
        %1301 = vmatpush1.bf16.msra.mxu0 %v1276
        %1302 = vmatprep.subr.bf16.mxu0 0
        %1303 = vmatpush1.bf16.msra.mxu0 %v1275
        %1304 = vmatprep.subr.bf16.mxu0 0
        %1305 = vmatpush1.bf16.msra.mxu0 %v1274
        %1306 = vmatprep.subr.bf16.mxu0 0
        %1307 = vmatpush2.bf16.msra.mxu0 0
        %1308 = vmatprep.subr.bf16.mxu0 0
        %1309 = vmatpush2.bf16.msra.mxu0 0
        %1310 = vmatprep.subr.bf16.mxu0 0
        %1311 = vmatpush2.bf16.msra.mxu0 0
        %1312 = vmatprep.subr.bf16.mxu0 0
        %1313 = vmatpush2.bf16.msra.mxu0 0
        %1314 = vmatprep.subr.bf16.mxu0 0
        %1315 = vmatpush2.bf16.msra.mxu0 0
        %1316 = vmatprep.subr.bf16.mxu0 0
        %1317 = vmatpush2.bf16.msra.mxu0 0
        %1318 = vmatprep.subr.bf16.mxu0 0
        %1319 = vmatpush2.bf16.msra.mxu0 0
        %1320 = vmatprep.subr.bf16.mxu0 0
        %1321 = vmatpush2.bf16.msra.mxu0 0
        %1322 = vmatprep.mubr.bf16.mxu0 0
        %1323 = vmatmul.mubr.bf16.gmra.mxu0 %v1238
        %v1324 = vpop.f32.mrf.mxu0
        %v1325 = vadd.f32 0.0, %v1324
        %v1326 = vpop.f32.mrf.mxu0
        %v1327 = vpop.f32.mrf.mxu0
        %v1328 = vadd.f32 0.0, %v1327
        %v1329 = vpop.f32.mrf.mxu0
        %1330 = vmatprep.mubr.bf16.mxu0 0
        %1331 = vmatmul.mubr.bf16.gmra.mxu0 %v1239
        %v1332 = vpop.f32.mrf.mxu0
        %v1333 = vadd.f32 0.0, %v1332
        %v1334 = vpop.f32.mrf.mxu0
        %v1335 = vpop.f32.mrf.mxu0
        %v1336 = vadd.f32 0.0, %v1335
        %v1337 = vpop.f32.mrf.mxu0
        %1338 = vdwg.mxu0
        %v1339 = vadd.f32 %v1209, %v1325
        %v1340 = vadd.f32 %v1210, %v1328
        %v1341 = vadd.f32 %v1211, %v1333
        %v1342 = vadd.f32 %v1212, %v1336
        %s1343 = scalar_lea.vmem [#allocation2], 448
        %v1344 = vld [vmem:[%s1343] sm:$0xf]
        %v1345 = vld [vmem:[%s1343 + $0x4] sm:$0xf]
        %v1346 = vld [vmem:[%s1343 + $0x8] sm:$0xf]
        %v1347 = vld [vmem:[%s1343 + $0xc] sm:$0xf]
        %v1348 = vld [vmem:[%s1343 + $0x10] sm:$0xf]
        %v1349 = vld [vmem:[%s1343 + $0x14] sm:$0xf]
        %v1350 = vld [vmem:[%s1343 + $0x18] sm:$0xf]
        %v1351 = vld [vmem:[%s1343 + $0x1c] sm:$0xf]
        %v1352 = vld [vmem:[%s1343 + $0x20] sm:$0xf]
        %v1353 = vld [vmem:[%s1343 + $0x24] sm:$0xf]
        %v1354 = vld [vmem:[%s1343 + $0x28] sm:$0xf]
        %v1355 = vld [vmem:[%s1343 + $0x2c] sm:$0xf]
        %v1356 = vld [vmem:[%s1343 + $0x30] sm:$0xf]
        %v1357 = vld [vmem:[%s1343 + $0x34] sm:$0xf]
        %v1358 = vld [vmem:[%s1343 + $0x38] sm:$0xf]
        %v1359 = vld [vmem:[%s1343 + $0x3c] sm:$0xf]
        %v1361 = vshrl.u32 %v1238, 16
        %v1363 = vshll.u32 %v1238, 16
        %v1365 = vrot.slane %v1363, 1
        %v1366 = vor.u32 %v1361, %v1365
        %v1368 = vshll.u32 %v1239, 16
        %v1370 = vrot.slane %v1368, 1
        %v1371 = vsel %vm487, %v1366, %v1370
        %v1372 = vshrl.u32 %v1239, 16
        %v1374 = vor.u32 %v1372, %v1370
        %v1393 = vunpack.c.l.b16 %v1344
        %v1394 = vunpack.c.l.b16 %v1345
        %v1395 = vunpack.c.l.b16 %v1346
        %v1396 = vunpack.c.l.b16 %v1347
        %v1397 = vunpack.c.l.b16 %v1348
        %v1398 = vunpack.c.l.b16 %v1349
        %v1399 = vunpack.c.l.b16 %v1350
        %v1400 = vunpack.c.l.b16 %v1351
        %v1401 = vunpack.c.l.b16 %v1352
        %v1402 = vunpack.c.l.b16 %v1353
        %v1403 = vunpack.c.l.b16 %v1354
        %v1404 = vunpack.c.l.b16 %v1355
        %v1405 = vunpack.c.l.b16 %v1356
        %v1406 = vunpack.c.l.b16 %v1357
        %v1407 = vunpack.c.l.b16 %v1358
        %v1408 = vunpack.c.l.b16 %v1359
        %v1409 = vpack.c.b16 %v1394, %v1393
        %v1410 = vpack.c.b16 %v1396, %v1395
        %v1411 = vpack.c.b16 %v1398, %v1397
        %v1412 = vpack.c.b16 %v1400, %v1399
        %v1413 = vpack.c.b16 %v1402, %v1401
        %v1414 = vpack.c.b16 %v1404, %v1403
        %v1415 = vpack.c.b16 %v1406, %v1405
        %v1416 = vpack.c.b16 %v1408, %v1407
        %1425 = vmatprep.subr.bf16.mxu0 0
        %1426 = vmatpush1.bf16.msra.mxu0 %v1416
        %1427 = vmatprep.subr.bf16.mxu0 0
        %1428 = vmatpush1.bf16.msra.mxu0 %v1415
        %1429 = vmatprep.subr.bf16.mxu0 0
        %1430 = vmatpush1.bf16.msra.mxu0 %v1414
        %1431 = vmatprep.subr.bf16.mxu0 0
        %1432 = vmatpush1.bf16.msra.mxu0 %v1413
        %1433 = vmatprep.subr.bf16.mxu0 0
        %1434 = vmatpush1.bf16.msra.mxu0 %v1412
        %1435 = vmatprep.subr.bf16.mxu0 0
        %1436 = vmatpush1.bf16.msra.mxu0 %v1411
        %1437 = vmatprep.subr.bf16.mxu0 0
        %1438 = vmatpush1.bf16.msra.mxu0 %v1410
        %1439 = vmatprep.subr.bf16.mxu0 0
        %1440 = vmatpush1.bf16.msra.mxu0 %v1409
        %1441 = vmatprep.subr.bf16.mxu0 0
        %1442 = vmatpush2.bf16.msra.mxu0 0
        %1443 = vmatprep.subr.bf16.mxu0 0
        %1444 = vmatpush2.bf16.msra.mxu0 0
        %1445 = vmatprep.subr.bf16.mxu0 0
        %1446 = vmatpush2.bf16.msra.mxu0 0
        %1447 = vmatprep.subr.bf16.mxu0 0
        %1448 = vmatpush2.bf16.msra.mxu0 0
        %1449 = vmatprep.subr.bf16.mxu0 0
        %1450 = vmatpush2.bf16.msra.mxu0 0
        %1451 = vmatprep.subr.bf16.mxu0 0
        %1452 = vmatpush2.bf16.msra.mxu0 0
        %1453 = vmatprep.subr.bf16.mxu0 0
        %1454 = vmatpush2.bf16.msra.mxu0 0
        %1455 = vmatprep.subr.bf16.mxu0 0
        %1456 = vmatpush2.bf16.msra.mxu0 0
        %1457 = vmatprep.mubr.bf16.mxu0 0
        %1458 = vmatmul.mubr.bf16.gmra.mxu0 %v1371
        %v1459 = vpop.f32.mrf.mxu0
        %v1460 = vadd.f32 0.0, %v1459
        %v1461 = vpop.f32.mrf.mxu0
        %v1462 = vpop.f32.mrf.mxu0
        %v1463 = vadd.f32 0.0, %v1462
        %v1464 = vpop.f32.mrf.mxu0
        %1465 = vmatprep.mubr.bf16.mxu0 0
        %1466 = vmatmul.mubr.bf16.gmra.mxu0 %v1374
        %v1467 = vpop.f32.mrf.mxu0
        %v1468 = vadd.f32 0.0, %v1467
        %v1469 = vpop.f32.mrf.mxu0
        %v1470 = vpop.f32.mrf.mxu0
        %v1471 = vadd.f32 0.0, %v1470
        %v1472 = vpop.f32.mrf.mxu0
        %1473 = vdwg.mxu0
        %v1474 = vadd.f32 %v1339, %v1460
        %v1475 = vadd.f32 %v1340, %v1463
        %v1476 = vadd.f32 %v1341, %v1468
        %v1477 = vadd.f32 %v1342, %v1471
        %s1478 = scalar_lea.vmem [#allocation2], 512
        %v1479 = vld [vmem:[%s1478] sm:$0xf]
        %v1480 = vld [vmem:[%s1478 + $0x4] sm:$0xf]
        %v1481 = vld [vmem:[%s1478 + $0x8] sm:$0xf]
        %v1482 = vld [vmem:[%s1478 + $0xc] sm:$0xf]
        %v1483 = vld [vmem:[%s1478 + $0x10] sm:$0xf]
        %v1484 = vld [vmem:[%s1478 + $0x14] sm:$0xf]
        %v1485 = vld [vmem:[%s1478 + $0x18] sm:$0xf]
        %v1486 = vld [vmem:[%s1478 + $0x1c] sm:$0xf]
        %v1487 = vld [vmem:[%s1478 + $0x20] sm:$0xf]
        %v1488 = vld [vmem:[%s1478 + $0x24] sm:$0xf]
        %v1489 = vld [vmem:[%s1478 + $0x28] sm:$0xf]
        %v1490 = vld [vmem:[%s1478 + $0x2c] sm:$0xf]
        %v1491 = vld [vmem:[%s1478 + $0x30] sm:$0xf]
        %v1492 = vld [vmem:[%s1478 + $0x34] sm:$0xf]
        %v1493 = vld [vmem:[%s1478 + $0x38] sm:$0xf]
        %v1494 = vld [vmem:[%s1478 + $0x3c] sm:$0xf]
        %v1495 = vrot.slane %v1238, 1
        %v1496 = vrot.slane %v1239, 1
        %v1497 = vsel %vm718, %v1495, %v1496
        %v1516 = vunpack.c.l.b16 %v1479
        %v1517 = vunpack.c.l.b16 %v1480
        %v1518 = vunpack.c.l.b16 %v1481
        %v1519 = vunpack.c.l.b16 %v1482
        %v1520 = vunpack.c.l.b16 %v1483
        %v1521 = vunpack.c.l.b16 %v1484
        %v1522 = vunpack.c.l.b16 %v1485
        %v1523 = vunpack.c.l.b16 %v1486
        %v1524 = vunpack.c.l.b16 %v1487
        %v1525 = vunpack.c.l.b16 %v1488
        %v1526 = vunpack.c.l.b16 %v1489
        %v1527 = vunpack.c.l.b16 %v1490
        %v1528 = vunpack.c.l.b16 %v1491
        %v1529 = vunpack.c.l.b16 %v1492
        %v1530 = vunpack.c.l.b16 %v1493
        %v1531 = vunpack.c.l.b16 %v1494
        %v1532 = vpack.c.b16 %v1517, %v1516
        %v1533 = vpack.c.b16 %v1519, %v1518
        %v1534 = vpack.c.b16 %v1521, %v1520
        %v1535 = vpack.c.b16 %v1523, %v1522
        %v1536 = vpack.c.b16 %v1525, %v1524
        %v1537 = vpack.c.b16 %v1527, %v1526
        %v1538 = vpack.c.b16 %v1529, %v1528
        %v1539 = vpack.c.b16 %v1531, %v1530
        %1548 = vmatprep.subr.bf16.mxu0 0
        %1549 = vmatpush1.bf16.msra.mxu0 %v1539
        %1550 = vmatprep.subr.bf16.mxu0 0
        %1551 = vmatpush1.bf16.msra.mxu0 %v1538
        %1552 = vmatprep.subr.bf16.mxu0 0
        %1553 = vmatpush1.bf16.msra.mxu0 %v1537
        %1554 = vmatprep.subr.bf16.mxu0 0
        %1555 = vmatpush1.bf16.msra.mxu0 %v1536
        %1556 = vmatprep.subr.bf16.mxu0 0
        %1557 = vmatpush1.bf16.msra.mxu0 %v1535
        %1558 = vmatprep.subr.bf16.mxu0 0
        %1559 = vmatpush1.bf16.msra.mxu0 %v1534
        %1560 = vmatprep.subr.bf16.mxu0 0
        %1561 = vmatpush1.bf16.msra.mxu0 %v1533
        %1562 = vmatprep.subr.bf16.mxu0 0
        %1563 = vmatpush1.bf16.msra.mxu0 %v1532
        %1564 = vmatprep.subr.bf16.mxu0 0
        %1565 = vmatpush2.bf16.msra.mxu0 0
        %1566 = vmatprep.subr.bf16.mxu0 0
        %1567 = vmatpush2.bf16.msra.mxu0 0
        %1568 = vmatprep.subr.bf16.mxu0 0
        %1569 = vmatpush2.bf16.msra.mxu0 0
        %1570 = vmatprep.subr.bf16.mxu0 0
        %1571 = vmatpush2.bf16.msra.mxu0 0
        %1572 = vmatprep.subr.bf16.mxu0 0
        %1573 = vmatpush2.bf16.msra.mxu0 0
        %1574 = vmatprep.subr.bf16.mxu0 0
        %1575 = vmatpush2.bf16.msra.mxu0 0
        %1576 = vmatprep.subr.bf16.mxu0 0
        %1577 = vmatpush2.bf16.msra.mxu0 0
        %1578 = vmatprep.subr.bf16.mxu0 0
        %1579 = vmatpush2.bf16.msra.mxu0 0
        %1580 = vmatprep.mubr.bf16.mxu0 0
        %1581 = vmatmul.mubr.bf16.gmra.mxu0 %v1497
        %v1582 = vpop.f32.mrf.mxu0
        %v1583 = vadd.f32 0.0, %v1582
        %v1584 = vpop.f32.mrf.mxu0
        %v1585 = vpop.f32.mrf.mxu0
        %v1586 = vadd.f32 0.0, %v1585
        %v1587 = vpop.f32.mrf.mxu0
        %1588 = vmatprep.mubr.bf16.mxu0 0
        %1589 = vmatmul.mubr.bf16.gmra.mxu0 %v1496
        %v1590 = vpop.f32.mrf.mxu0
        %v1591 = vadd.f32 0.0, %v1590
        %v1592 = vpop.f32.mrf.mxu0
        %v1593 = vpop.f32.mrf.mxu0
        %v1594 = vadd.f32 0.0, %v1593
        %v1595 = vpop.f32.mrf.mxu0
        %1596 = vdwg.mxu0
        %v1597 = vadd.f32 %v1474, %v1583
        %v1598 = vadd.f32 %v1475, %v1586
        %v1599 = vadd.f32 %v1476, %v1591
        %v1600 = vadd.f32 %v1477, %v1594
        %v1601 = vmax.f32 %v1597, 0.0
        %v1602 = vmax.f32 %v1598, 0.0
        %v1603 = vmax.f32 %v1599, 0.0
        %v1604 = vmax.f32 %v1600, 0.0
        %1605 = vmatprep.subr.bf16.mxu0 0
        %1606 = vmatpush1.bf16.msra.mxu0 %v544
        %1607 = vmatprep.subr.bf16.mxu0 0
        %1608 = vmatpush1.bf16.msra.mxu0 %v543
        %1609 = vmatprep.subr.bf16.mxu0 0
        %1610 = vmatpush1.bf16.msra.mxu0 %v542
        %1611 = vmatprep.subr.bf16.mxu0 0
        %1612 = vmatpush1.bf16.msra.mxu0 %v541
        %1613 = vmatprep.subr.bf16.mxu0 0
        %1614 = vmatpush1.bf16.msra.mxu0 %v540
        %1615 = vmatprep.subr.bf16.mxu0 0
        %1616 = vmatpush1.bf16.msra.mxu0 %v539
        %1617 = vmatprep.subr.bf16.mxu0 0
        %1618 = vmatpush1.bf16.msra.mxu0 %v538
        %1619 = vmatprep.subr.bf16.mxu0 0
        %1620 = vmatpush1.bf16.msra.mxu0 %v537
        %1621 = vmatprep.subr.bf16.mxu0 0
        %1622 = vmatpush2.bf16.msra.mxu0 0
        %1623 = vmatprep.subr.bf16.mxu0 0
        %1624 = vmatpush2.bf16.msra.mxu0 0
        %1625 = vmatprep.subr.bf16.mxu0 0
        %1626 = vmatpush2.bf16.msra.mxu0 0
        %1627 = vmatprep.subr.bf16.mxu0 0
        %1628 = vmatpush2.bf16.msra.mxu0 0
        %1629 = vmatprep.subr.bf16.mxu0 0
        %1630 = vmatpush2.bf16.msra.mxu0 0
        %1631 = vmatprep.subr.bf16.mxu0 0
        %1632 = vmatpush2.bf16.msra.mxu0 0
        %1633 = vmatprep.subr.bf16.mxu0 0
        %1634 = vmatpush2.bf16.msra.mxu0 0
        %1635 = vmatprep.subr.bf16.mxu0 0
        %1636 = vmatpush2.bf16.msra.mxu0 0
        %1637 = vmatprep.mubr.bf16.mxu0 0
        %1638 = vmatmul.mubr.bf16.gmra.mxu0 %v983
        %v1639 = vpop.f32.mrf.mxu0
        %v1640 = vadd.f32 0.0, %v1639
        %v1641 = vpop.f32.mrf.mxu0
        %v1642 = vpop.f32.mrf.mxu0
        %v1643 = vadd.f32 0.0, %v1642
        %v1644 = vpop.f32.mrf.mxu0
        %1645 = vmatprep.mubr.bf16.mxu0 0
        %1646 = vmatmul.mubr.bf16.gmra.mxu0 %v986
        %v1647 = vpop.f32.mrf.mxu0
        %v1648 = vadd.f32 0.0, %v1647
        %v1649 = vpop.f32.mrf.mxu0
        %v1650 = vpop.f32.mrf.mxu0
        %v1651 = vadd.f32 0.0, %v1650
        %v1652 = vpop.f32.mrf.mxu0
        %1653 = vdwg.mxu0
        %1654 = vmatprep.subr.bf16.mxu0 0
        %1655 = vmatpush1.bf16.msra.mxu0 %v643
        %1656 = vmatprep.subr.bf16.mxu0 0
        %1657 = vmatpush1.bf16.msra.mxu0 %v642
        %1658 = vmatprep.subr.bf16.mxu0 0
        %1659 = vmatpush1.bf16.msra.mxu0 %v641
        %1660 = vmatprep.subr.bf16.mxu0 0
        %1661 = vmatpush1.bf16.msra.mxu0 %v640
        %1662 = vmatprep.subr.bf16.mxu0 0
        %1663 = vmatpush1.bf16.msra.mxu0 %v639
        %1664 = vmatprep.subr.bf16.mxu0 0
        %1665 = vmatpush1.bf16.msra.mxu0 %v638
        %1666 = vmatprep.subr.bf16.mxu0 0
        %1667 = vmatpush1.bf16.msra.mxu0 %v637
        %1668 = vmatprep.subr.bf16.mxu0 0
        %1669 = vmatpush1.bf16.msra.mxu0 %v636
        %1670 = vmatprep.subr.bf16.mxu0 0
        %1671 = vmatpush2.bf16.msra.mxu0 0
        %1672 = vmatprep.subr.bf16.mxu0 0
        %1673 = vmatpush2.bf16.msra.mxu0 0
        %1674 = vmatprep.subr.bf16.mxu0 0
        %1675 = vmatpush2.bf16.msra.mxu0 0
        %1676 = vmatprep.subr.bf16.mxu0 0
        %1677 = vmatpush2.bf16.msra.mxu0 0
        %1678 = vmatprep.subr.bf16.mxu0 0
        %1679 = vmatpush2.bf16.msra.mxu0 0
        %1680 = vmatprep.subr.bf16.mxu0 0
        %1681 = vmatpush2.bf16.msra.mxu0 0
        %1682 = vmatprep.subr.bf16.mxu0 0
        %1683 = vmatpush2.bf16.msra.mxu0 0
        %1684 = vmatprep.subr.bf16.mxu0 0
        %1685 = vmatpush2.bf16.msra.mxu0 0
        %1686 = vmatprep.mubr.bf16.mxu0 0
        %1687 = vmatmul.mubr.bf16.gmra.mxu0 %v850
        %v1688 = vpop.f32.mrf.mxu0
        %v1689 = vadd.f32 %v1640, %v1688
        %v1690 = vpop.f32.mrf.mxu0
        %v1691 = vpop.f32.mrf.mxu0
        %v1692 = vadd.f32 %v1643, %v1691
        %v1693 = vpop.f32.mrf.mxu0
        %1694 = vmatprep.mubr.bf16.mxu0 0
        %1695 = vmatmul.mubr.bf16.gmra.mxu0 %v851
        %v1696 = vpop.f32.mrf.mxu0
        %v1697 = vadd.f32 %v1648, %v1696
        %v1698 = vpop.f32.mrf.mxu0
        %v1699 = vpop.f32.mrf.mxu0
        %v1700 = vadd.f32 %v1651, %v1699
        %v1701 = vpop.f32.mrf.mxu0
        %1702 = vdwg.mxu0
        %1703 = vmatprep.subr.bf16.mxu0 0
        %1704 = vmatpush1.bf16.msra.mxu0 %v763
        %1705 = vmatprep.subr.bf16.mxu0 0
        %1706 = vmatpush1.bf16.msra.mxu0 %v762
        %1707 = vmatprep.subr.bf16.mxu0 0
        %1708 = vmatpush1.bf16.msra.mxu0 %v761
        %1709 = vmatprep.subr.bf16.mxu0 0
        %1710 = vmatpush1.bf16.msra.mxu0 %v760
        %1711 = vmatprep.subr.bf16.mxu0 0
        %1712 = vmatpush1.bf16.msra.mxu0 %v759
        %1713 = vmatprep.subr.bf16.mxu0 0
        %1714 = vmatpush1.bf16.msra.mxu0 %v758
        %1715 = vmatprep.subr.bf16.mxu0 0
        %1716 = vmatpush1.bf16.msra.mxu0 %v757
        %1717 = vmatprep.subr.bf16.mxu0 0
        %1718 = vmatpush1.bf16.msra.mxu0 %v756
        %1719 = vmatprep.subr.bf16.mxu0 0
        %1720 = vmatpush2.bf16.msra.mxu0 0
        %1721 = vmatprep.subr.bf16.mxu0 0
        %1722 = vmatpush2.bf16.msra.mxu0 0
        %1723 = vmatprep.subr.bf16.mxu0 0
        %1724 = vmatpush2.bf16.msra.mxu0 0
        %1725 = vmatprep.subr.bf16.mxu0 0
        %1726 = vmatpush2.bf16.msra.mxu0 0
        %1727 = vmatprep.subr.bf16.mxu0 0
        %1728 = vmatpush2.bf16.msra.mxu0 0
        %1729 = vmatprep.subr.bf16.mxu0 0
        %1730 = vmatpush2.bf16.msra.mxu0 0
        %1731 = vmatprep.subr.bf16.mxu0 0
        %1732 = vmatpush2.bf16.msra.mxu0 0
        %1733 = vmatprep.subr.bf16.mxu0 0
        %1734 = vmatpush2.bf16.msra.mxu0 0
        %1735 = vmatprep.mubr.bf16.mxu0 0
        %1736 = vmatmul.mubr.bf16.gmra.mxu0 %v1109
        %v1737 = vpop.f32.mrf.mxu0
        %v1738 = vadd.f32 0.0, %v1737
        %v1739 = vpop.f32.mrf.mxu0
        %v1740 = vpop.f32.mrf.mxu0
        %v1741 = vadd.f32 0.0, %v1740
        %v1742 = vpop.f32.mrf.mxu0
        %1743 = vmatprep.mubr.bf16.mxu0 0
        %1744 = vmatmul.mubr.bf16.gmra.mxu0 %v1108
        %v1745 = vpop.f32.mrf.mxu0
        %v1746 = vadd.f32 0.0, %v1745
        %v1747 = vpop.f32.mrf.mxu0
        %v1748 = vpop.f32.mrf.mxu0
        %v1749 = vadd.f32 0.0, %v1748
        %v1750 = vpop.f32.mrf.mxu0
        %1751 = vdwg.mxu0
        %v1752 = vadd.f32 %v1689, %v1738
        %v1753 = vadd.f32 %v1692, %v1741
        %v1754 = vadd.f32 %v1697, %v1746
        %v1755 = vadd.f32 %v1700, %v1749
        %1756 = vmatprep.subr.bf16.mxu0 0
        %1757 = vmatpush1.bf16.msra.mxu0 %v893
        %1758 = vmatprep.subr.bf16.mxu0 0
        %1759 = vmatpush1.bf16.msra.mxu0 %v892
        %1760 = vmatprep.subr.bf16.mxu0 0
        %1761 = vmatpush1.bf16.msra.mxu0 %v891
        %1762 = vmatprep.subr.bf16.mxu0 0
        %1763 = vmatpush1.bf16.msra.mxu0 %v890
        %1764 = vmatprep.subr.bf16.mxu0 0
        %1765 = vmatpush1.bf16.msra.mxu0 %v889
        %1766 = vmatprep.subr.bf16.mxu0 0
        %1767 = vmatpush1.bf16.msra.mxu0 %v888
        %1768 = vmatprep.subr.bf16.mxu0 0
        %1769 = vmatpush1.bf16.msra.mxu0 %v887
        %1770 = vmatprep.subr.bf16.mxu0 0
        %1771 = vmatpush1.bf16.msra.mxu0 %v886
        %1772 = vmatprep.subr.bf16.mxu0 0
        %1773 = vmatpush2.bf16.msra.mxu0 0
        %1774 = vmatprep.subr.bf16.mxu0 0
        %1775 = vmatpush2.bf16.msra.mxu0 0
        %1776 = vmatprep.subr.bf16.mxu0 0
        %1777 = vmatpush2.bf16.msra.mxu0 0
        %1778 = vmatprep.subr.bf16.mxu0 0
        %1779 = vmatpush2.bf16.msra.mxu0 0
        %1780 = vmatprep.subr.bf16.mxu0 0
        %1781 = vmatpush2.bf16.msra.mxu0 0
        %1782 = vmatprep.subr.bf16.mxu0 0
        %1783 = vmatpush2.bf16.msra.mxu0 0
        %1784 = vmatprep.subr.bf16.mxu0 0
        %1785 = vmatpush2.bf16.msra.mxu0 0
        %1786 = vmatprep.subr.bf16.mxu0 0
        %1787 = vmatpush2.bf16.msra.mxu0 0
        %1788 = vmatprep.mubr.bf16.mxu0 0
        %1789 = vmatmul.mubr.bf16.gmra.mxu0 %v1238
        %v1790 = vpop.f32.mrf.mxu0
        %v1791 = vadd.f32 0.0, %v1790
        %v1792 = vpop.f32.mrf.mxu0
        %v1793 = vpop.f32.mrf.mxu0
        %v1794 = vadd.f32 0.0, %v1793
        %v1795 = vpop.f32.mrf.mxu0
        %1796 = vmatprep.mubr.bf16.mxu0 0
        %1797 = vmatmul.mubr.bf16.gmra.mxu0 %v1239
        %v1798 = vpop.f32.mrf.mxu0
        %v1799 = vadd.f32 0.0, %v1798
        %v1800 = vpop.f32.mrf.mxu0
        %v1801 = vpop.f32.mrf.mxu0
        %v1802 = vadd.f32 0.0, %v1801
        %v1803 = vpop.f32.mrf.mxu0
        %1804 = vdwg.mxu0
        %v1805 = vadd.f32 %v1752, %v1791
        %v1806 = vadd.f32 %v1753, %v1794
        %v1807 = vadd.f32 %v1754, %v1799
        %v1808 = vadd.f32 %v1755, %v1802
        %1809 = vmatprep.subr.bf16.mxu0 0
        %1810 = vmatpush1.bf16.msra.mxu0 %v1028
        %1811 = vmatprep.subr.bf16.mxu0 0
        %1812 = vmatpush1.bf16.msra.mxu0 %v1027
        %1813 = vmatprep.subr.bf16.mxu0 0
        %1814 = vmatpush1.bf16.msra.mxu0 %v1026
        %1815 = vmatprep.subr.bf16.mxu0 0
        %1816 = vmatpush1.bf16.msra.mxu0 %v1025
        %1817 = vmatprep.subr.bf16.mxu0 0
        %1818 = vmatpush1.bf16.msra.mxu0 %v1024
        %1819 = vmatprep.subr.bf16.mxu0 0
        %1820 = vmatpush1.bf16.msra.mxu0 %v1023
        %1821 = vmatprep.subr.bf16.mxu0 0
        %1822 = vmatpush1.bf16.msra.mxu0 %v1022
        %1823 = vmatprep.subr.bf16.mxu0 0
        %1824 = vmatpush1.bf16.msra.mxu0 %v1021
        %1825 = vmatprep.subr.bf16.mxu0 0
        %1826 = vmatpush2.bf16.msra.mxu0 0
        %1827 = vmatprep.subr.bf16.mxu0 0
        %1828 = vmatpush2.bf16.msra.mxu0 0
        %1829 = vmatprep.subr.bf16.mxu0 0
        %1830 = vmatpush2.bf16.msra.mxu0 0
        %1831 = vmatprep.subr.bf16.mxu0 0
        %1832 = vmatpush2.bf16.msra.mxu0 0
        %1833 = vmatprep.subr.bf16.mxu0 0
        %1834 = vmatpush2.bf16.msra.mxu0 0
        %1835 = vmatprep.subr.bf16.mxu0 0
        %1836 = vmatpush2.bf16.msra.mxu0 0
        %1837 = vmatprep.subr.bf16.mxu0 0
        %1838 = vmatpush2.bf16.msra.mxu0 0
        %1839 = vmatprep.subr.bf16.mxu0 0
        %1840 = vmatpush2.bf16.msra.mxu0 0
        %1841 = vmatprep.mubr.bf16.mxu0 0
        %1842 = vmatmul.mubr.bf16.gmra.mxu0 %v1371
        %v1843 = vpop.f32.mrf.mxu0
        %v1844 = vadd.f32 0.0, %v1843
        %v1845 = vpop.f32.mrf.mxu0
        %v1846 = vpop.f32.mrf.mxu0
        %v1847 = vadd.f32 0.0, %v1846
        %v1848 = vpop.f32.mrf.mxu0
        %1849 = vmatprep.mubr.bf16.mxu0 0
        %1850 = vmatmul.mubr.bf16.gmra.mxu0 %v1374
        %v1851 = vpop.f32.mrf.mxu0
        %v1852 = vadd.f32 0.0, %v1851
        %v1853 = vpop.f32.mrf.mxu0
        %v1854 = vpop.f32.mrf.mxu0
        %v1855 = vadd.f32 0.0, %v1854
        %v1856 = vpop.f32.mrf.mxu0
        %1857 = vdwg.mxu0
        %v1858 = vadd.f32 %v1805, %v1844
        %v1859 = vadd.f32 %v1806, %v1847
        %v1860 = vadd.f32 %v1807, %v1852
        %v1861 = vadd.f32 %v1808, %v1855
        %1862 = vmatprep.subr.bf16.mxu0 0
        %1863 = vmatpush1.bf16.msra.mxu0 %v1151
        %1864 = vmatprep.subr.bf16.mxu0 0
        %1865 = vmatpush1.bf16.msra.mxu0 %v1150
        %1866 = vmatprep.subr.bf16.mxu0 0
        %1867 = vmatpush1.bf16.msra.mxu0 %v1149
        %1868 = vmatprep.subr.bf16.mxu0 0
        %1869 = vmatpush1.bf16.msra.mxu0 %v1148
        %1870 = vmatprep.subr.bf16.mxu0 0
        %1871 = vmatpush1.bf16.msra.mxu0 %v1147
        %1872 = vmatprep.subr.bf16.mxu0 0
        %1873 = vmatpush1.bf16.msra.mxu0 %v1146
        %1874 = vmatprep.subr.bf16.mxu0 0
        %1875 = vmatpush1.bf16.msra.mxu0 %v1145
        %1876 = vmatprep.subr.bf16.mxu0 0
        %1877 = vmatpush1.bf16.msra.mxu0 %v1144
        %1878 = vmatprep.subr.bf16.mxu0 0
        %1879 = vmatpush2.bf16.msra.mxu0 0
        %1880 = vmatprep.subr.bf16.mxu0 0
        %1881 = vmatpush2.bf16.msra.mxu0 0
        %1882 = vmatprep.subr.bf16.mxu0 0
        %1883 = vmatpush2.bf16.msra.mxu0 0
        %1884 = vmatprep.subr.bf16.mxu0 0
        %1885 = vmatpush2.bf16.msra.mxu0 0
        %1886 = vmatprep.subr.bf16.mxu0 0
        %1887 = vmatpush2.bf16.msra.mxu0 0
        %1888 = vmatprep.subr.bf16.mxu0 0
        %1889 = vmatpush2.bf16.msra.mxu0 0
        %1890 = vmatprep.subr.bf16.mxu0 0
        %1891 = vmatpush2.bf16.msra.mxu0 0
        %1892 = vmatprep.subr.bf16.mxu0 0
        %1893 = vmatpush2.bf16.msra.mxu0 0
        %1894 = vmatprep.mubr.bf16.mxu0 0
        %1895 = vmatmul.mubr.bf16.gmra.mxu0 %v1497
        %v1896 = vpop.f32.mrf.mxu0
        %v1897 = vadd.f32 0.0, %v1896
        %v1898 = vpop.f32.mrf.mxu0
        %v1899 = vpop.f32.mrf.mxu0
        %v1900 = vadd.f32 0.0, %v1899
        %v1901 = vpop.f32.mrf.mxu0
        %1902 = vmatprep.mubr.bf16.mxu0 0
        %1903 = vmatmul.mubr.bf16.gmra.mxu0 %v1496
        %v1904 = vpop.f32.mrf.mxu0
        %v1905 = vadd.f32 0.0, %v1904
        %v1906 = vpop.f32.mrf.mxu0
        %v1907 = vpop.f32.mrf.mxu0
        %v1908 = vadd.f32 0.0, %v1907
        %v1909 = vpop.f32.mrf.mxu0
        %1910 = vdwg.mxu0
        %v1911 = vadd.f32 %v1858, %v1897
        %v1912 = vadd.f32 %v1859, %v1900
        %v1913 = vadd.f32 %v1860, %v1905
        %v1914 = vadd.f32 %v1861, %v1908
        %v1919 = vunpack.c.l.b16 %v440
        %v1920 = vunpack.c.l.b16 %v441
        %v1921 = vunpack.c.l.b16 %v442
        %v1922 = vunpack.c.l.b16 %v443
        %v1923 = vpack.c.b16 %v1920, %v1919
        %v1924 = vpack.c.b16 %v1922, %v1921
        %1927 = vmatprep.subr.bf16.mxu0 0
        %1928 = vmatpush1.bf16.msra.mxu0 %v1281
        %1929 = vmatprep.subr.bf16.mxu0 0
        %1930 = vmatpush1.bf16.msra.mxu0 %v1280
        %1931 = vmatprep.subr.bf16.mxu0 0
        %1932 = vmatpush1.bf16.msra.mxu0 %v1279
        %1933 = vmatprep.subr.bf16.mxu0 0
        %1934 = vmatpush1.bf16.msra.mxu0 %v1278
        %1935 = vmatprep.subr.bf16.mxu0 0
        %1936 = vmatpush1.bf16.msra.mxu0 %v1277
        %1937 = vmatprep.subr.bf16.mxu0 0
        %1938 = vmatpush1.bf16.msra.mxu0 %v1276
        %1939 = vmatprep.subr.bf16.mxu0 0
        %1940 = vmatpush1.bf16.msra.mxu0 %v1275
        %1941 = vmatprep.subr.bf16.mxu0 0
        %1942 = vmatpush1.bf16.msra.mxu0 %v1274
        %1943 = vmatprep.subr.bf16.mxu0 0
        %1944 = vmatpush2.bf16.msra.mxu0 0
        %1945 = vmatprep.subr.bf16.mxu0 0
        %1946 = vmatpush2.bf16.msra.mxu0 0
        %1947 = vmatprep.subr.bf16.mxu0 0
        %1948 = vmatpush2.bf16.msra.mxu0 0
        %1949 = vmatprep.subr.bf16.mxu0 0
        %1950 = vmatpush2.bf16.msra.mxu0 0
        %1951 = vmatprep.subr.bf16.mxu0 0
        %1952 = vmatpush2.bf16.msra.mxu0 0
        %1953 = vmatprep.subr.bf16.mxu0 0
        %1954 = vmatpush2.bf16.msra.mxu0 0
        %1955 = vmatprep.subr.bf16.mxu0 0
        %1956 = vmatpush2.bf16.msra.mxu0 0
        %1957 = vmatprep.subr.bf16.mxu0 0
        %1958 = vmatpush2.bf16.msra.mxu0 0
        %1959 = vmatprep.mubr.bf16.mxu0 0
        %1960 = vmatmul.mubr.bf16.gmra.mxu0 %v1923
        %v1961 = vpop.f32.mrf.mxu0
        %v1962 = vadd.f32 0.0, %v1961
        %v1963 = vpop.f32.mrf.mxu0
        %v1964 = vpop.f32.mrf.mxu0
        %v1965 = vadd.f32 0.0, %v1964
        %v1966 = vpop.f32.mrf.mxu0
        %1967 = vmatprep.mubr.bf16.mxu0 0
        %1968 = vmatmul.mubr.bf16.gmra.mxu0 %v1924
        %v1969 = vpop.f32.mrf.mxu0
        %v1970 = vadd.f32 0.0, %v1969
        %v1971 = vpop.f32.mrf.mxu0
        %v1972 = vpop.f32.mrf.mxu0
        %v1973 = vadd.f32 0.0, %v1972
        %v1974 = vpop.f32.mrf.mxu0
        %1975 = vdwg.mxu0
        %v1976 = vadd.f32 %v1911, %v1962
        %v1977 = vadd.f32 %v1912, %v1965
        %v1978 = vadd.f32 %v1913, %v1970
        %v1979 = vadd.f32 %v1914, %v1973
        %v1981 = vshrl.u32 %v1923, 16
        %v1983 = vshll.u32 %v1923, 16
        %v1985 = vrot.slane %v1983, 1
        %v1986 = vor.u32 %v1981, %v1985
        %v1988 = vshll.u32 %v1924, 16
        %v1990 = vrot.slane %v1988, 1
        %v1991 = vsel %vm487, %v1986, %v1990
        %v1992 = vshrl.u32 %v1924, 16
        %v1994 = vor.u32 %v1992, %v1990
        %1997 = vmatprep.subr.bf16.mxu0 0
        %1998 = vmatpush1.bf16.msra.mxu0 %v1416
        %1999 = vmatprep.subr.bf16.mxu0 0
        %2000 = vmatpush1.bf16.msra.mxu0 %v1415
        %2001 = vmatprep.subr.bf16.mxu0 0
        %2002 = vmatpush1.bf16.msra.mxu0 %v1414
        %2003 = vmatprep.subr.bf16.mxu0 0
        %2004 = vmatpush1.bf16.msra.mxu0 %v1413
        %2005 = vmatprep.subr.bf16.mxu0 0
        %2006 = vmatpush1.bf16.msra.mxu0 %v1412
        %2007 = vmatprep.subr.bf16.mxu0 0
        %2008 = vmatpush1.bf16.msra.mxu0 %v1411
        %2009 = vmatprep.subr.bf16.mxu0 0
        %2010 = vmatpush1.bf16.msra.mxu0 %v1410
        %2011 = vmatprep.subr.bf16.mxu0 0
        %2012 = vmatpush1.bf16.msra.mxu0 %v1409
        %2013 = vmatprep.subr.bf16.mxu0 0
        %2014 = vmatpush2.bf16.msra.mxu0 0
        %2015 = vmatprep.subr.bf16.mxu0 0
        %2016 = vmatpush2.bf16.msra.mxu0 0
        %2017 = vmatprep.subr.bf16.mxu0 0
        %2018 = vmatpush2.bf16.msra.mxu0 0
        %2019 = vmatprep.subr.bf16.mxu0 0
        %2020 = vmatpush2.bf16.msra.mxu0 0
        %2021 = vmatprep.subr.bf16.mxu0 0
        %2022 = vmatpush2.bf16.msra.mxu0 0
        %2023 = vmatprep.subr.bf16.mxu0 0
        %2024 = vmatpush2.bf16.msra.mxu0 0
        %2025 = vmatprep.subr.bf16.mxu0 0
        %2026 = vmatpush2.bf16.msra.mxu0 0
        %2027 = vmatprep.subr.bf16.mxu0 0
        %2028 = vmatpush2.bf16.msra.mxu0 0
        %2029 = vmatprep.mubr.bf16.mxu0 0
        %2030 = vmatmul.mubr.bf16.gmra.mxu0 %v1991
        %v2031 = vpop.f32.mrf.mxu0
        %v2032 = vadd.f32 0.0, %v2031
        %v2033 = vpop.f32.mrf.mxu0
        %v2034 = vpop.f32.mrf.mxu0
        %v2035 = vadd.f32 0.0, %v2034
        %v2036 = vpop.f32.mrf.mxu0
        %2037 = vmatprep.mubr.bf16.mxu0 0
        %2038 = vmatmul.mubr.bf16.gmra.mxu0 %v1994
        %v2039 = vpop.f32.mrf.mxu0
        %v2040 = vadd.f32 0.0, %v2039
        %v2041 = vpop.f32.mrf.mxu0
        %v2042 = vpop.f32.mrf.mxu0
        %v2043 = vadd.f32 0.0, %v2042
        %v2044 = vpop.f32.mrf.mxu0
        %2045 = vdwg.mxu0
        %v2046 = vadd.f32 %v1976, %v2032
        %v2047 = vadd.f32 %v1977, %v2035
        %v2048 = vadd.f32 %v1978, %v2040
        %v2049 = vadd.f32 %v1979, %v2043
        %v2050 = vrot.slane %v1923, 1
        %v2051 = vrot.slane %v1924, 1
        %v2052 = vsel %vm718, %v2050, %v2051
        %2055 = vmatprep.subr.bf16.mxu0 0
        %2056 = vmatpush1.bf16.msra.mxu0 %v1539
        %2057 = vmatprep.subr.bf16.mxu0 0
        %2058 = vmatpush1.bf16.msra.mxu0 %v1538
        %2059 = vmatprep.subr.bf16.mxu0 0
        %2060 = vmatpush1.bf16.msra.mxu0 %v1537
        %2061 = vmatprep.subr.bf16.mxu0 0
        %2062 = vmatpush1.bf16.msra.mxu0 %v1536
        %2063 = vmatprep.subr.bf16.mxu0 0
        %2064 = vmatpush1.bf16.msra.mxu0 %v1535
        %2065 = vmatprep.subr.bf16.mxu0 0
        %2066 = vmatpush1.bf16.msra.mxu0 %v1534
        %2067 = vmatprep.subr.bf16.mxu0 0
        %2068 = vmatpush1.bf16.msra.mxu0 %v1533
        %2069 = vmatprep.subr.bf16.mxu0 0
        %2070 = vmatpush1.bf16.msra.mxu0 %v1532
        %2071 = vmatprep.subr.bf16.mxu0 0
        %2072 = vmatpush2.bf16.msra.mxu0 0
        %2073 = vmatprep.subr.bf16.mxu0 0
        %2074 = vmatpush2.bf16.msra.mxu0 0
        %2075 = vmatprep.subr.bf16.mxu0 0
        %2076 = vmatpush2.bf16.msra.mxu0 0
        %2077 = vmatprep.subr.bf16.mxu0 0
        %2078 = vmatpush2.bf16.msra.mxu0 0
        %2079 = vmatprep.subr.bf16.mxu0 0
        %2080 = vmatpush2.bf16.msra.mxu0 0
        %2081 = vmatprep.subr.bf16.mxu0 0
        %2082 = vmatpush2.bf16.msra.mxu0 0
        %2083 = vmatprep.subr.bf16.mxu0 0
        %2084 = vmatpush2.bf16.msra.mxu0 0
        %2085 = vmatprep.subr.bf16.mxu0 0
        %2086 = vmatpush2.bf16.msra.mxu0 0
        %2087 = vmatprep.mubr.bf16.mxu0 0
        %2088 = vmatmul.mubr.bf16.gmra.mxu0 %v2052
        %v2089 = vpop.f32.mrf.mxu0
        %v2090 = vadd.f32 0.0, %v2089
        %v2091 = vpop.f32.mrf.mxu0
        %v2092 = vpop.f32.mrf.mxu0
        %v2093 = vadd.f32 0.0, %v2092
        %v2094 = vpop.f32.mrf.mxu0
        %2095 = vmatprep.mubr.bf16.mxu0 0
        %2096 = vmatmul.mubr.bf16.gmra.mxu0 %v2051
        %v2097 = vpop.f32.mrf.mxu0
        %v2098 = vadd.f32 0.0, %v2097
        %v2099 = vpop.f32.mrf.mxu0
        %v2100 = vpop.f32.mrf.mxu0
        %v2101 = vadd.f32 0.0, %v2100
        %v2102 = vpop.f32.mrf.mxu0
        %2103 = vdwg.mxu0
        %v2104 = vadd.f32 %v2046, %v2090
        %v2105 = vadd.f32 %v2047, %v2093
        %v2106 = vadd.f32 %v2048, %v2098
        %v2107 = vadd.f32 %v2049, %v2101
        %v2108 = vmax.f32 %v2104, 0.0
        %v2109 = vmax.f32 %v2105, 0.0
        %v2110 = vmax.f32 %v2106, 0.0
        %v2111 = vmax.f32 %v2107, 0.0
        %v2112 = vmax.f32 %v1601, %v2108
        %v2113 = vmax.f32 %v1602, %v2109
        %v2114 = vmax.f32 %v1603, %v2110
        %v2115 = vmax.f32 %v1604, %v2111
        %v2117 = vrot.slane %v2112, 1
        %v2119 = vmax.f32 %v2112, %v2117
        %v2120 = vpack.c.bf16 %v2119, %v2119
        %vm2121 = vcmask 1040384
        %vm2122 = vsmask.f32 256
        %vm2123 = vmand %vm2121, %vm2122
        %v2124 = vld [vmem:[%s426] sm:$0x1]
        %v2125 = vsel %vm2123, %v2120, %v2124
        %2126 = vst [vmem:[%s426] sm:$0x1] %v2125
        %v2128 = vunpack.c.l.b16 %v2120
        %v2129 = vpack.c.b16 %v2128, %v2128
        %v2131 = vshll.u32 %v2129, 16
        %v2133 = vrot.slane %v2131, 5
        %v2134 = vrot.slane %v2133, 4
        %vm2136 = vsmask.f32 7938
        %vm2137 = vmand %vm2121, %vm2136
        %v2138 = vld [vmem:[%s426] sm:$0x1]
        %v2139 = vsel %vm2137, %v2134, %v2138
        %2140 = vst [vmem:[%s426] sm:$0x1] %v2139
        %v2141 = vrot.slane %v2129, 5
        %v2142 = vrot.slane %v2141, 4
        %vm2144 = vcmask 1041409
        %vm2145 = vsmask.f32 1280
        %vm2146 = vmand %vm2144, %vm2145
        %v2147 = vld [vmem:[%s426] sm:$0x2]
        %v2148 = vsel %vm2146, %v2142, %v2147
        %2149 = vst [vmem:[%s426] sm:$0x2] %v2148
        %v2150 = vrot.slane %v2131, 6
        %v2151 = vrot.slane %v2150, 4
        %vm2153 = vsmask.f32 7942
        %vm2154 = vmand %vm2144, %vm2153
        %v2155 = vld [vmem:[%s426] sm:$0x2]
        %v2156 = vsel %vm2154, %v2151, %v2155
        %2157 = vst [vmem:[%s426] sm:$0x2] %v2156
        %v2159 = vrot.slane %v2113, 1
        %v2161 = vmax.f32 %v2113, %v2159
        %v2162 = vpack.c.bf16 %v2161, %v2161
        %v2164 = vunpack.c.l.b16 %v2162
        %v2165 = vpack.c.b16 %v2164, %v2164
        %v2166 = vrot.slane %v2165, 6
        %vm2168 = vcmask 1042434
        %vm2169 = vsmask.f32 2304
        %vm2170 = vmand %vm2168, %vm2169
        %v2171 = vld [vmem:[%s426] sm:$0x4]
        %v2172 = vsel %vm2170, %v2166, %v2171
        %2173 = vst [vmem:[%s426] sm:$0x4] %v2172
        %v2175 = vshll.u32 %v2165, 16
        %v2177 = vrot.slane %v2175, 7
        %vm2179 = vsmask.f32 7946
        %vm2180 = vmand %vm2168, %vm2179
        %v2181 = vld [vmem:[%s426] sm:$0x4]
        %v2182 = vsel %vm2180, %v2177, %v2181
        %2183 = vst [vmem:[%s426] sm:$0x4] %v2182
        %v2184 = vrot.slane %v2165, 7
        %vm2186 = vcmask 1043459
        %vm2187 = vsmask.f32 3328
        %vm2188 = vmand %vm2186, %vm2187
        %v2189 = vld [vmem:[%s426] sm:$0x8]
        %v2190 = vsel %vm2188, %v2184, %v2189
        %2191 = vst [vmem:[%s426] sm:$0x8] %v2190
        %vm2193 = vsmask.f32 7950
        %vm2194 = vmand %vm2186, %vm2193
        %v2195 = vld [vmem:[%s426] sm:$0x8]
        %v2196 = vsel %vm2194, %v2175, %v2195
        %2197 = vst [vmem:[%s426] sm:$0x8] %v2196
        %v2199 = vrot.slane %v2114, 1
        %v2201 = vmax.f32 %v2114, %v2199
        %v2202 = vpack.c.bf16 %v2201, %v2201
        %v2203 = vld [vmem:[%s426 + $0x4] sm:$0x1]
        %v2204 = vsel %vm2123, %v2202, %v2203
        %2205 = vst [vmem:[%s426 + $0x4] sm:$0x1] %v2204
        %v2207 = vunpack.c.l.b16 %v2202
        %v2208 = vpack.c.b16 %v2207, %v2207
        %v2210 = vshll.u32 %v2208, 16
        %v2212 = vrot.slane %v2210, 5
        %v2213 = vrot.slane %v2212, 4
        %v2215 = vld [vmem:[%s426 + $0x4] sm:$0x1]
        %v2216 = vsel %vm2137, %v2213, %v2215
        %2217 = vst [vmem:[%s426 + $0x4] sm:$0x1] %v2216
        %v2218 = vrot.slane %v2208, 5
        %v2219 = vrot.slane %v2218, 4
        %v2221 = vld [vmem:[%s426 + $0x4] sm:$0x2]
        %v2222 = vsel %vm2146, %v2219, %v2221
        %2223 = vst [vmem:[%s426 + $0x4] sm:$0x2] %v2222
        %v2224 = vrot.slane %v2210, 6
        %v2225 = vrot.slane %v2224, 4
        %v2227 = vld [vmem:[%s426 + $0x4] sm:$0x2]
        %v2228 = vsel %vm2154, %v2225, %v2227
        %2229 = vst [vmem:[%s426 + $0x4] sm:$0x2] %v2228
        %v2231 = vrot.slane %v2115, 1
        %v2233 = vmax.f32 %v2115, %v2231
        %v2234 = vpack.c.bf16 %v2233, %v2233
        %v2236 = vunpack.c.l.b16 %v2234
        %v2237 = vpack.c.b16 %v2236, %v2236
        %v2238 = vrot.slane %v2237, 6
        %v2240 = vld [vmem:[%s426 + $0x4] sm:$0x4]
        %v2241 = vsel %vm2170, %v2238, %v2240
        %2242 = vst [vmem:[%s426 + $0x4] sm:$0x4] %v2241
        %v2244 = vshll.u32 %v2237, 16
        %v2246 = vrot.slane %v2244, 7
        %v2248 = vld [vmem:[%s426 + $0x4] sm:$0x4]
        %v2249 = vsel %vm2180, %v2246, %v2248
        %2250 = vst [vmem:[%s426 + $0x4] sm:$0x4] %v2249
        %v2251 = vrot.slane %v2237, 7
        %v2253 = vld [vmem:[%s426 + $0x4] sm:$0x8]
        %v2254 = vsel %vm2188, %v2251, %v2253
        %2255 = vst [vmem:[%s426 + $0x4] sm:$0x8] %v2254
        %p2256 = scmp.lt.s32.totalorder %s21, 1
        %s2257 = scalar_select %p2256, %s21, 1
        %p2258 = scmp.lt.s32.totalorder %s22, 14
        %s2259 = scalar_select %p2258, %s22, 14
        %s2260 = smul.addr %s2259, 2
        %s2261 = smul.addr %s2257, 30
        %s2262 = sadd.s32 %s2260, %s2261
        %s2263 = smul.addr %s2262, 4
        %s2264 = scalar_lea.vmem %s5, %s2263
        // Predicated region
        $region45: #{cnn_forward.6} parent=39 // pred_check
          %p2265 = pneg %p196
        $region46: #{cnn_forward.6} parent=39 // pred_check_branch
          %2267 = sbr.rel (%p2265) target = $region48
        $region47: #{cnn_forward.6} parent=39 // pred_region
          _
        $region48: #{cnn_forward.6} parent=39 // pred_fallthru
          _
      $region40: #{cnn_forward.6} parent=5 // pred_fallthru
        _
      %p2268 = scmp.le.s32.totalorder 2, %s12
      // Predicated region
      $region49: #{cnn_forward.6} parent=5 // pred_check
        %p2269 = pneg %p2268
      $region50: #{cnn_forward.6} parent=5 // pred_check_branch
        %2271 = sbr.rel (%p2269) target = $region52
      $region51: #{cnn_forward.6} parent=5 // pred_region
        %s2272 = ssub.s32 %s12, 2
        // Predicated region
        $region53: #{cnn_forward.6} parent=51 // pred_check
          %p2273 = pneg %p202
        $region54: #{cnn_forward.6} parent=51 // pred_check_branch
          %2275 = sbr.rel (%p2273) target = $region56
        $region55: #{cnn_forward.6} parent=51 // pred_region
          %p2276 = scmp.lt.s32.totalorder %s23, 1
          %s2277 = scalar_select %p2276, %s23, 1
          %p2278 = scmp.lt.s32.totalorder %s24, 14
          %s2279 = scalar_select %p2278, %s24, 14
          %s2280 = smul.addr %s2279, 2
          %s2281 = smul.addr %s2277, 30
          %s2282 = sadd.s32 %s2280, %s2281
          %s2283 = smul.addr %s2282, 4
          %s2284 = scalar_lea.vmem %s5, %s2283
        $region56: #{cnn_forward.6} parent=51 // pred_fallthru
          _
      $region52: #{cnn_forward.6} parent=5 // pred_fallthru
        _
    $region6: #{cnn_forward.6} parent=1 // loop_footer
      %s16 = sadd.s32 1, %s12
    $region7: #{cnn_forward.6} parent=1 // loop_footer_branch
      %11 = sbr.rel target = $region3
    $region8: #{cnn_forward.6} parent=1 // loop_exit
      _
    %2285 = vsyncpa [#allocation3], 1
    %s2286 = scalar_lea.sflag [#allocation3], 1
    %2287 = vsyncpa %s2286, 1

// kernel: cnn_forward.7
$region0: #{cnn_forward.7}
  #allocation0 [shape = 'u32[]', space=smem, size = 0x4, offset = 0x4, fixed_abs, tag = 'smem constant byte address 0x4 - core index']
  #allocation1 [shape = 'u32[144,128]{1,0:T(1,128)}', space=vmem, size = 0x12000, scoped, tag = 'internal scratch']
  %s0 = inlined_call_operand.vmem [shape: bf16[2,15,15,128], index: 0, kind: input, shape index: {}, may-alias: {0,1,2,3}]
  %s1 = inlined_call_operand.vmem [shape: bf16[2,15,15,128], index: 1, kind: input, shape index: {}, may-alias: {0,1,2,3}]
  %s2 = inlined_call_operand.vmem [shape: bf16[2,15,15,128], index: 2, kind: input, shape index: {}, may-alias: {0,1,2,3}]
  %s3 = inlined_call_operand.vmem [shape: bf16[2,15,15,128], index: 3, kind: input, shape index: {}, may-alias: {0,1,2,3}]
  %s4 = inlined_call_operand.vmem [shape: bf16[9,128,128], index: 4, kind: input, shape index: {}]
  %s5 = inlined_call_operand.vmem [shape: bf16[2,6,6,128], index: 5, kind: output, shape index: {}]
  %s6 = sld [smem:[#allocation0]]
  $region53: #{cnn_forward.7} parent=0
    _
  %s8 = ssub.s32 1, %s6
  %s9 = scalar_select 0, %s8, %s6
  loop: start=0, step=1, limit=14
  $region2: #{cnn_forward.7} parent=0 // loop_pre_header
    _
  $region3: #{cnn_forward.7} parent=0 // loop_header
    %s11 = sphi 0, %s15
    %p12 = scmp.ge.s32.totalorder %s11, 14
    %s18 = sphi 0, %s30
    %s19 = sphi 0, %s26
    %s20 = sphi 0, %s18
    %s21 = sphi 0, %s19
    %s22 = sphi 0, %s20
    %s23 = sphi 0, %s21
    %s37 = sphi 0, %s39
    %s40 = sphi 0, %s37
    %s41 = sphi 0, %s40
    %s57 = sphi 0, %s41
    %s69 = sphi 0, %s71
    %s72 = sphi 0, %s69
    %s73 = sphi 0, %s72
    %s89 = sphi 0, %s73
    %s101 = sphi 0, %s103
    %s104 = sphi 0, %s101
    %s105 = sphi 0, %s104
    %s121 = sphi 0, %s105
    %s133 = sphi 0, %s135
    %s136 = sphi 0, %s133
    %s137 = sphi 0, %s136
    %s153 = sphi 0, %s137
    %s157 = sphi 0, %s157
    %s159 = sphi 0, %s157
    %s160 = sphi 0, %s159
    %s174 = sphi 0, %s160
    %s182 = sphi 0, %s184
    %s185 = sphi 0, %s182
    %s186 = sphi 0, %s185
    %s202 = sphi 0, %s186
  $region4: #{cnn_forward.7} parent=0 // loop_header_branch
    %14 = sbr.rel (%p12) target = $region8
  $region5: #{cnn_forward.7} parent=0 // loop_body
    %s16 = ssub.s32 %s11, 1
    %s17 = ssub.s32 %s11, 2
    %s24 = sadd.s32 1, %s19
    %p25 = scmp.ge.s32.totalorder %s24, 6
    %s26 = scalar_select %p25, 0, %s24
    %s27 = sadd.s32 1, %s18
    %s28 = scalar_select %p25, %s27, %s18
    %p29 = scmp.ge.s32.totalorder %s28, 2
    %s30 = scalar_select %p29, 0, %s28
    %s31 = smul.u32 %s19, 2
    %s32 = smul.u32 %s26, 2
    %s33 = ssub.s32 %s18, %s30
    %s34 = ssub.s32 %s31, %s32
    %s35 = sor.u32 %s33, %s34
    %p36 = scmp.eq.s32.totalorder %s35, 0
    %s38 = sadd.s32 %s37, 1
    %s39 = scalar_select %p36, %s37, %s38
    %p42 = pneg %p36
    %p43 = scmp.eq.s32.totalorder %s11, 11
    %p44 = por %p42, %p43
    %p45 = scmp.ne.s32.totalorder %s37, %s40
    %p46 = scmp.eq.s32.totalorder %s11, 0
    %p47 = por %p45, %p46
    %p48 = scmp.ne.s32.totalorder %s37, %s40
    %p49 = scmp.eq.s32.totalorder %s16, 11
    %p50 = por %p48, %p49
    %p51 = scmp.ne.s32.totalorder %s40, %s41
    %p52 = scmp.eq.s32.totalorder %s16, 0
    %p53 = por %p51, %p52
    %p54 = scmp.ne.s32.totalorder %s40, %s41
    %p55 = scmp.eq.s32.totalorder %s17, 11
    %p56 = por %p54, %p55
    %p58 = scmp.ne.s32.totalorder %s41, %s57
    %p59 = scmp.eq.s32.totalorder %s17, 0
    %p60 = por %p58, %p59
    %s61 = smul.u32 %s19, 2
    %s62 = sadd.s32 %s61, 1
    %s63 = smul.u32 %s26, 2
    %s64 = sadd.s32 %s63, 1
    %s65 = ssub.s32 %s18, %s30
    %s66 = ssub.s32 %s62, %s64
    %s67 = sor.u32 %s65, %s66
    %p68 = scmp.eq.s32.totalorder %s67, 0
    %s70 = sadd.s32 %s69, 1
    %s71 = scalar_select %p68, %s69, %s70
    %p74 = pneg %p68
    %p75 = scmp.eq.s32.totalorder %s11, 11
    %p76 = por %p74, %p75
    %p77 = scmp.ne.s32.totalorder %s69, %s72
    %p78 = scmp.eq.s32.totalorder %s11, 0
    %p79 = por %p77, %p78
    %p80 = scmp.ne.s32.totalorder %s69, %s72
    %p81 = scmp.eq.s32.totalorder %s16, 11
    %p82 = por %p80, %p81
    %p83 = scmp.ne.s32.totalorder %s72, %s73
    %p84 = scmp.eq.s32.totalorder %s16, 0
    %p85 = por %p83, %p84
    %p86 = scmp.ne.s32.totalorder %s72, %s73
    %p87 = scmp.eq.s32.totalorder %s17, 11
    %p88 = por %p86, %p87
    %p90 = scmp.ne.s32.totalorder %s73, %s89
    %p91 = scmp.eq.s32.totalorder %s17, 0
    %p92 = por %p90, %p91
    %s93 = smul.u32 %s19, 2
    %s94 = sadd.s32 %s93, 2
    %s95 = smul.u32 %s26, 2
    %s96 = sadd.s32 %s95, 2
    %s97 = ssub.s32 %s18, %s30
    %s98 = ssub.s32 %s94, %s96
    %s99 = sor.u32 %s97, %s98
    %p100 = scmp.eq.s32.totalorder %s99, 0
    %s102 = sadd.s32 %s101, 1
    %s103 = scalar_select %p100, %s101, %s102
    %p106 = pneg %p100
    %p107 = scmp.eq.s32.totalorder %s11, 11
    %p108 = por %p106, %p107
    %p109 = scmp.ne.s32.totalorder %s101, %s104
    %p110 = scmp.eq.s32.totalorder %s11, 0
    %p111 = por %p109, %p110
    %p112 = scmp.ne.s32.totalorder %s101, %s104
    %p113 = scmp.eq.s32.totalorder %s16, 11
    %p114 = por %p112, %p113
    %p115 = scmp.ne.s32.totalorder %s104, %s105
    %p116 = scmp.eq.s32.totalorder %s16, 0
    %p117 = por %p115, %p116
    %p118 = scmp.ne.s32.totalorder %s104, %s105
    %p119 = scmp.eq.s32.totalorder %s17, 11
    %p120 = por %p118, %p119
    %p122 = scmp.ne.s32.totalorder %s105, %s121
    %p123 = scmp.eq.s32.totalorder %s17, 0
    %p124 = por %p122, %p123
    %s125 = smul.u32 %s19, 2
    %s126 = sadd.s32 %s125, 3
    %s127 = smul.u32 %s26, 2
    %s128 = sadd.s32 %s127, 3
    %s129 = ssub.s32 %s18, %s30
    %s130 = ssub.s32 %s126, %s128
    %s131 = sor.u32 %s129, %s130
    %p132 = scmp.eq.s32.totalorder %s131, 0
    %s134 = sadd.s32 %s133, 1
    %s135 = scalar_select %p132, %s133, %s134
    %p138 = pneg %p132
    %p139 = scmp.eq.s32.totalorder %s11, 11
    %p140 = por %p138, %p139
    %p141 = scmp.ne.s32.totalorder %s133, %s136
    %p142 = scmp.eq.s32.totalorder %s11, 0
    %p143 = por %p141, %p142
    %p144 = scmp.ne.s32.totalorder %s133, %s136
    %p145 = scmp.eq.s32.totalorder %s16, 11
    %p146 = por %p144, %p145
    %p147 = scmp.ne.s32.totalorder %s136, %s137
    %p148 = scmp.eq.s32.totalorder %s16, 0
    %p149 = por %p147, %p148
    %p150 = scmp.ne.s32.totalorder %s136, %s137
    %p151 = scmp.eq.s32.totalorder %s17, 11
    %p152 = por %p150, %p151
    %p154 = scmp.ne.s32.totalorder %s137, %s153
    %p155 = scmp.eq.s32.totalorder %s17, 0
    %p156 = por %p154, %p155
    %s158 = sadd.s32 %s157, 1
    %p161 = scmp.eq.s32.totalorder %s11, 11
    %p162 = scmp.ne.s32.totalorder %s157, %s159
    %p163 = scmp.eq.s32.totalorder %s11, 0
    %p164 = por %p162, %p163
    %p165 = scmp.ne.s32.totalorder %s157, %s159
    %p166 = scmp.eq.s32.totalorder %s16, 11
    %p167 = por %p165, %p166
    %p168 = scmp.ne.s32.totalorder %s159, %s160
    %p169 = scmp.eq.s32.totalorder %s16, 0
    %p170 = por %p168, %p169
    %p171 = scmp.ne.s32.totalorder %s159, %s160
    %p172 = scmp.eq.s32.totalorder %s17, 11
    %p173 = por %p171, %p172
    %p175 = scmp.ne.s32.totalorder %s160, %s174
    %p176 = scmp.eq.s32.totalorder %s17, 0
    %p177 = por %p175, %p176
    %s178 = ssub.s32 %s18, %s30
    %s179 = ssub.s32 %s19, %s26
    %s180 = sor.u32 %s178, %s179
    %p181 = scmp.eq.s32.totalorder %s180, 0
    %s183 = sadd.s32 %s182, 1
    %s184 = scalar_select %p181, %s182, %s183
    %p187 = pneg %p181
    %p188 = scmp.eq.s32.totalorder %s11, 11
    %p189 = por %p187, %p188
    %p190 = scmp.ne.s32.totalorder %s182, %s185
    %p191 = scmp.eq.s32.totalorder %s11, 0
    %p192 = por %p190, %p191
    %p193 = scmp.ne.s32.totalorder %s182, %s185
    %p194 = scmp.eq.s32.totalorder %s16, 11
    %p195 = por %p193, %p194
    %p196 = scmp.ne.s32.totalorder %s185, %s186
    %p197 = scmp.eq.s32.totalorder %s16, 0
    %p198 = por %p196, %p197
    %p199 = scmp.ne.s32.totalorder %s185, %s186
    %p200 = scmp.eq.s32.totalorder %s17, 11
    %p201 = por %p199, %p200
    %p203 = scmp.ne.s32.totalorder %s186, %s202
    %p204 = scmp.eq.s32.totalorder %s17, 0
    %p205 = por %p203, %p204
    %p206 = scmp.le.s32.totalorder 1, %s11
    %p207 = scmp.lt.s32.totalorder %s11, 13
    %p208 = pnand %p206, %p207
    %p209 = pneg %p208
    // Predicated region
    $region9: #{cnn_forward.7} parent=5 // pred_check
      _
    $region10: #{cnn_forward.7} parent=5 // pred_check_branch
      %211 = sbr.rel (%p208) target = $region12
    $region11: #{cnn_forward.7} parent=5 // pred_region
      %s212 = ssub.s32 %s11, 1
      // Predicated region
      $region13: #{cnn_forward.7} parent=11 // pred_check
        %p213 = pneg %p170
      $region14: #{cnn_forward.7} parent=11 // pred_check_branch
        %215 = sbr.rel (%p213) target = $region16
      $region15: #{cnn_forward.7} parent=11 // pred_region
        _
      $region16: #{cnn_forward.7} parent=11 // pred_fallthru
        _
    $region12: #{cnn_forward.7} parent=5 // pred_fallthru
      _
    %p216 = scmp.lt.s32.totalorder %s11, 12
    // Predicated region
    $region17: #{cnn_forward.7} parent=5 // pred_check
      %p217 = pneg %p216
    $region18: #{cnn_forward.7} parent=5 // pred_check_branch
      %219 = sbr.rel (%p217) target = $region20
    $region19: #{cnn_forward.7} parent=5 // pred_region
      // Predicated region
      $region21: #{cnn_forward.7} parent=19 // pred_check
        %p220 = pneg %p47
      $region22: #{cnn_forward.7} parent=19 // pred_check_branch
        %222 = sbr.rel (%p220) target = $region24
      $region23: #{cnn_forward.7} parent=19 // pred_region
        %s223 = smul.u32 %s19, 2
        %p224 = scmp.lt.s32.totalorder %s18, 1
        %s225 = scalar_select %p224, %s18, 1
        %p226 = scmp.lt.s32.totalorder %s223, 14
        %s227 = scalar_select %p226, %s223, 14
        %s228 = smul.addr %s227, 2
        %s229 = smul.addr %s225, 30
        %s230 = sadd.s32 %s228, %s229
        %s231 = smul.addr %s230, 4
        %s232 = scalar_lea.vmem %s0, %s231
        %s233 = smul.u32 %s19, 2
      $region24: #{cnn_forward.7} parent=19 // pred_fallthru
        _
      // Predicated region
      $region25: #{cnn_forward.7} parent=19 // pred_check
        %p234 = pneg %p79
      $region26: #{cnn_forward.7} parent=19 // pred_check_branch
        %236 = sbr.rel (%p234) target = $region28
      $region27: #{cnn_forward.7} parent=19 // pred_region
        %s237 = smul.u32 %s19, 2
        %s238 = sadd.s32 %s237, 1
        %p239 = scmp.lt.s32.totalorder %s18, 1
        %s240 = scalar_select %p239, %s18, 1
        %p241 = scmp.lt.s32.totalorder %s238, 14
        %s242 = scalar_select %p241, %s238, 14
        %s243 = smul.addr %s242, 2
        %s244 = smul.addr %s240, 30
        %s245 = sadd.s32 %s243, %s244
        %s246 = smul.addr %s245, 4
        %s247 = scalar_lea.vmem %s1, %s246
        %s248 = smul.u32 %s19, 2
        %s249 = sadd.s32 %s248, 1
      $region28: #{cnn_forward.7} parent=19 // pred_fallthru
        _
      // Predicated region
      $region29: #{cnn_forward.7} parent=19 // pred_check
        %p250 = pneg %p111
      $region30: #{cnn_forward.7} parent=19 // pred_check_branch
        %252 = sbr.rel (%p250) target = $region32
      $region31: #{cnn_forward.7} parent=19 // pred_region
        %s253 = smul.u32 %s19, 2
        %s254 = sadd.s32 %s253, 2
        %p255 = scmp.lt.s32.totalorder %s18, 1
        %s256 = scalar_select %p255, %s18, 1
        %p257 = scmp.lt.s32.totalorder %s254, 14
        %s258 = scalar_select %p257, %s254, 14
        %s259 = smul.addr %s258, 2
        %s260 = smul.addr %s256, 30
        %s261 = sadd.s32 %s259, %s260
        %s262 = smul.addr %s261, 4
        %s263 = scalar_lea.vmem %s2, %s262
        %s264 = smul.u32 %s19, 2
        %s265 = sadd.s32 %s264, 2
      $region32: #{cnn_forward.7} parent=19 // pred_fallthru
        _
      // Predicated region
      $region33: #{cnn_forward.7} parent=19 // pred_check
        %p266 = pneg %p143
      $region34: #{cnn_forward.7} parent=19 // pred_check_branch
        %268 = sbr.rel (%p266) target = $region36
      $region35: #{cnn_forward.7} parent=19 // pred_region
        %s269 = smul.u32 %s19, 2
        %s270 = sadd.s32 %s269, 3
        %p271 = scmp.lt.s32.totalorder %s18, 1
        %s272 = scalar_select %p271, %s18, 1
        %p273 = scmp.lt.s32.totalorder %s270, 14
        %s274 = scalar_select %p273, %s270, 14
        %s275 = smul.addr %s274, 2
        %s276 = smul.addr %s272, 30
        %s277 = sadd.s32 %s275, %s276
        %s278 = smul.addr %s277, 4
        %s279 = scalar_lea.vmem %s3, %s278
        %s280 = smul.u32 %s19, 2
        %s281 = sadd.s32 %s280, 3
      $region36: #{cnn_forward.7} parent=19 // pred_fallthru
        _
    $region20: #{cnn_forward.7} parent=5 // pred_fallthru
      _
    %p282 = scmp.le.s32.totalorder 1, %s11
    %p283 = scmp.lt.s32.totalorder %s11, 13
    %p284 = pnand %p282, %p283
    %p285 = pneg %p284
    // Predicated region
    $region37: #{cnn_forward.7} parent=5 // pred_check
      _
    $region38: #{cnn_forward.7} parent=5 // pred_check_branch
      %287 = sbr.rel (%p284) target = $region40
    $region39: #{cnn_forward.7} parent=5 // pred_region
      %s288 = ssub.s32 %s11, 1
      %s289 = smul.u32 %s21, 2
      %p290 = scmp.lt.s32.totalorder %s20, 1
      %s291 = scalar_select %p290, %s20, 1
      %p292 = scmp.lt.s32.totalorder %s289, 14
      %s293 = scalar_select %p292, %s289, 14
      %s294 = smul.addr %s293, 2
      %s295 = smul.addr %s291, 30
      %s296 = sadd.s32 %s294, %s295
      %s297 = smul.addr %s296, 4
      %s298 = scalar_lea.vmem %s0, %s297
      %p299 = pneg %p53
      %p300 = pneg %p50
      %s301 = smul.u32 %s21, 2
      %s302 = sadd.s32 %s301, 1
      %p303 = scmp.lt.s32.totalorder %s20, 1
      %s304 = scalar_select %p303, %s20, 1
      %p305 = scmp.lt.s32.totalorder %s302, 14
      %s306 = scalar_select %p305, %s302, 14
      %s307 = smul.addr %s306, 2
      %s308 = smul.addr %s304, 30
      %s309 = sadd.s32 %s307, %s308
      %s310 = smul.addr %s309, 4
      %s311 = scalar_lea.vmem %s1, %s310
      %p312 = pneg %p85
      %p313 = pneg %p82
      %s314 = smul.u32 %s21, 2
      %s315 = sadd.s32 %s314, 2
      %p316 = scmp.lt.s32.totalorder %s20, 1
      %s317 = scalar_select %p316, %s20, 1
      %p318 = scmp.lt.s32.totalorder %s315, 14
      %s319 = scalar_select %p318, %s315, 14
      %s320 = smul.addr %s319, 2
      %s321 = smul.addr %s317, 30
      %s322 = sadd.s32 %s320, %s321
      %s323 = smul.addr %s322, 4
      %s324 = scalar_lea.vmem %s2, %s323
      %p325 = pneg %p117
      %p326 = pneg %p114
      %s327 = smul.u32 %s21, 2
      %s328 = sadd.s32 %s327, 3
      %p329 = scmp.lt.s32.totalorder %s20, 1
      %s330 = scalar_select %p329, %s20, 1
      %p331 = scmp.lt.s32.totalorder %s328, 14
      %s332 = scalar_select %p331, %s328, 14
      %s333 = smul.addr %s332, 2
      %s334 = smul.addr %s330, 30
      %s335 = sadd.s32 %s333, %s334
      %s336 = smul.addr %s335, 4
      %s337 = scalar_lea.vmem %s3, %s336
      %p338 = pneg %p149
      %p339 = pneg %p146
      %p340 = pneg %p170
      %p341 = pneg %p167
      %p342 = pneg %p198
      %p343 = pneg %p195
      %p344 = scmp.lt.s32.totalorder %s20, 1
      %s345 = scalar_select %p344, %s20, 1
      %p346 = scmp.lt.s32.totalorder %s21, 5
      %s347 = scalar_select %p346, %s21, 5
      %s348 = smul.addr %s345, 6
      %s349 = sadd.s32 %s347, %s348
      %s350 = smul.addr %s349, 4
      %s351 = scalar_lea.vmem %s5, %s350
      %s352 = smul.u32 %s21, 2
      %p353 = scmp.lt.s32.totalorder %s20, 1
      %s354 = scalar_select %p353, %s20, 1
      %p355 = scmp.lt.s32.totalorder %s352, 14
      %s356 = scalar_select %p355, %s352, 14
      %s357 = smul.addr %s356, 2
      %s358 = smul.addr %s354, 30
      %s359 = sadd.s32 %s357, %s358
      %s360 = smul.addr %s359, 4
      %s361 = scalar_lea.vmem %s0, %s360
      %s362 = smul.u32 %s21, 2
      %s363 = smul.u32 %s21, 2
      %s364 = sadd.s32 %s363, 1
      %p365 = scmp.lt.s32.totalorder %s20, 1
      %s366 = scalar_select %p365, %s20, 1
      %p367 = scmp.lt.s32.totalorder %s364, 14
      %s368 = scalar_select %p367, %s364, 14
      %s369 = smul.addr %s368, 2
      %s370 = smul.addr %s366, 30
      %s371 = sadd.s32 %s369, %s370
      %s372 = smul.addr %s371, 4
      %s373 = scalar_lea.vmem %s1, %s372
      %s374 = smul.u32 %s21, 2
      %s375 = sadd.s32 %s374, 1
      %s376 = smul.u32 %s21, 2
      %s377 = sadd.s32 %s376, 2
      %p378 = scmp.lt.s32.totalorder %s20, 1
      %s379 = scalar_select %p378, %s20, 1
      %p380 = scmp.lt.s32.totalorder %s377, 14
      %s381 = scalar_select %p380, %s377, 14
      %s382 = smul.addr %s381, 2
      %s383 = smul.addr %s379, 30
      %s384 = sadd.s32 %s382, %s383
      %s385 = smul.addr %s384, 4
      %s386 = scalar_lea.vmem %s2, %s385
      %s387 = smul.u32 %s21, 2
      %s388 = sadd.s32 %s387, 2
      %s389 = smul.u32 %s21, 2
      %s390 = sadd.s32 %s389, 3
      %p391 = scmp.lt.s32.totalorder %s20, 1
      %s392 = scalar_select %p391, %s20, 1
      %p393 = scmp.lt.s32.totalorder %s390, 14
      %s394 = scalar_select %p393, %s390, 14
      %s395 = smul.addr %s394, 2
      %s396 = smul.addr %s392, 30
      %s397 = sadd.s32 %s395, %s396
      %s398 = smul.addr %s397, 4
      %s399 = scalar_lea.vmem %s3, %s398
      %s400 = smul.u32 %s21, 2
      %s401 = sadd.s32 %s400, 3
      %p402 = scmp.lt.s32.totalorder %s20, 1
      %s403 = scalar_select %p402, %s20, 1
      %p404 = scmp.lt.s32.totalorder %s21, 5
      %s405 = scalar_select %p404, %s21, 5
      %s406 = smul.addr %s403, 6
      %s407 = sadd.s32 %s405, %s406
      %s408 = smul.addr %s407, 4
      %s409 = scalar_lea.vmem %s5, %s408
      %v411 = vld [vmem:[%s361] sm:$0xf]
      %v412 = vld [vmem:[%s361 + $0x4] sm:$0xf]
      %v413 = vld [vmem:[%s373] sm:$0xf]
      %v414 = vld [vmem:[%s373 + $0x4] sm:$0xf]
      %v415 = vld [vmem:[%s386] sm:$0xf]
      %v416 = vld [vmem:[%s386 + $0x4] sm:$0xf]
      %v417 = vld [vmem:[%s399] sm:$0xf]
      %v418 = vld [vmem:[%s399 + $0x4] sm:$0xf]
      %v419 = vld [vmem:[%s4] sm:$0xf]
      %v420 = vld [vmem:[%s4 + $0x4] sm:$0xf]
      %v421 = vld [vmem:[%s4 + $0x8] sm:$0xf]
      %v422 = vld [vmem:[%s4 + $0xc] sm:$0xf]
      %v423 = vld [vmem:[%s4 + $0x10] sm:$0xf]
      %v424 = vld [vmem:[%s4 + $0x14] sm:$0xf]
      %v425 = vld [vmem:[%s4 + $0x18] sm:$0xf]
      %v426 = vld [vmem:[%s4 + $0x1c] sm:$0xf]
      %v427 = vld [vmem:[%s4 + $0x20] sm:$0xf]
      %v428 = vld [vmem:[%s4 + $0x24] sm:$0xf]
      %v429 = vld [vmem:[%s4 + $0x28] sm:$0xf]
      %v430 = vld [vmem:[%s4 + $0x2c] sm:$0xf]
      %v431 = vld [vmem:[%s4 + $0x30] sm:$0xf]
      %v432 = vld [vmem:[%s4 + $0x34] sm:$0xf]
      %v433 = vld [vmem:[%s4 + $0x38] sm:$0xf]
      %v434 = vld [vmem:[%s4 + $0x3c] sm:$0xf]
      %s435 = scalar_lea.vmem %s4, 64
      %v436 = vld [vmem:[%s435] sm:$0xf]
      %v437 = vld [vmem:[%s435 + $0x4] sm:$0xf]
      %v438 = vld [vmem:[%s435 + $0x8] sm:$0xf]
      %v439 = vld [vmem:[%s435 + $0xc] sm:$0xf]
      %v440 = vld [vmem:[%s435 + $0x10] sm:$0xf]
      %v441 = vld [vmem:[%s435 + $0x14] sm:$0xf]
      %v442 = vld [vmem:[%s435 + $0x18] sm:$0xf]
      %v443 = vld [vmem:[%s435 + $0x1c] sm:$0xf]
      %v444 = vld [vmem:[%s435 + $0x20] sm:$0xf]
      %v445 = vld [vmem:[%s435 + $0x24] sm:$0xf]
      %v446 = vld [vmem:[%s435 + $0x28] sm:$0xf]
      %v447 = vld [vmem:[%s435 + $0x2c] sm:$0xf]
      %v448 = vld [vmem:[%s435 + $0x30] sm:$0xf]
      %v449 = vld [vmem:[%s435 + $0x34] sm:$0xf]
      %v450 = vld [vmem:[%s435 + $0x38] sm:$0xf]
      %v451 = vld [vmem:[%s435 + $0x3c] sm:$0xf]
      %v454 = vunpack.c.l.b16 %v411
      %v455 = vunpack.c.l.b16 %v412
      %v456 = vpack.c.b16 %v455, %v454
      %v458 = vshrl.u32 %v456, 16
      %v460 = vshll.u32 %v456, 16
      %v462 = vrot.slane %v460, 1
      %v463 = vor.u32 %v458, %v462
      %v481 = vunpack.c.l.b16 %v436
      %v482 = vunpack.c.l.b16 %v437
      %v483 = vunpack.c.l.b16 %v438
      %v484 = vunpack.c.l.b16 %v439
      %v485 = vunpack.c.l.b16 %v440
      %v486 = vunpack.c.l.b16 %v441
      %v487 = vunpack.c.l.b16 %v442
      %v488 = vunpack.c.l.b16 %v443
      %v489 = vunpack.c.l.b16 %v444
      %v490 = vunpack.c.l.b16 %v445
      %v491 = vunpack.c.l.b16 %v446
      %v492 = vunpack.c.l.b16 %v447
      %v493 = vunpack.c.l.b16 %v448
      %v494 = vunpack.c.l.b16 %v449
      %v495 = vunpack.c.l.b16 %v450
      %v496 = vunpack.c.l.b16 %v451
      %v497 = vpack.c.b16 %v482, %v481
      %v498 = vpack.c.b16 %v484, %v483
      %v499 = vpack.c.b16 %v486, %v485
      %v500 = vpack.c.b16 %v488, %v487
      %v501 = vpack.c.b16 %v490, %v489
      %v502 = vpack.c.b16 %v492, %v491
      %v503 = vpack.c.b16 %v494, %v493
      %v504 = vpack.c.b16 %v496, %v495
      %513 = vmatprep.subr.bf16.mxu0 0
      %514 = vmatpush1.bf16.msra.mxu0 %v504
      %515 = vmatprep.subr.bf16.mxu0 0
      %516 = vmatpush1.bf16.msra.mxu0 %v503
      %517 = vmatprep.subr.bf16.mxu0 0
      %518 = vmatpush1.bf16.msra.mxu0 %v502
      %519 = vmatprep.subr.bf16.mxu0 0
      %520 = vmatpush1.bf16.msra.mxu0 %v501
      %521 = vmatprep.subr.bf16.mxu0 0
      %522 = vmatpush1.bf16.msra.mxu0 %v500
      %523 = vmatprep.subr.bf16.mxu0 0
      %524 = vmatpush1.bf16.msra.mxu0 %v499
      %525 = vmatprep.subr.bf16.mxu0 0
      %526 = vmatpush1.bf16.msra.mxu0 %v498
      %527 = vmatprep.subr.bf16.mxu0 0
      %528 = vmatpush1.bf16.msra.mxu0 %v497
      %529 = vmatprep.subr.bf16.mxu0 0
      %530 = vmatpush2.bf16.msra.mxu0 0
      %531 = vmatprep.subr.bf16.mxu0 0
      %532 = vmatpush2.bf16.msra.mxu0 0
      %533 = vmatprep.subr.bf16.mxu0 0
      %534 = vmatpush2.bf16.msra.mxu0 0
      %535 = vmatprep.subr.bf16.mxu0 0
      %536 = vmatpush2.bf16.msra.mxu0 0
      %537 = vmatprep.subr.bf16.mxu0 0
      %538 = vmatpush2.bf16.msra.mxu0 0
      %539 = vmatprep.subr.bf16.mxu0 0
      %540 = vmatpush2.bf16.msra.mxu0 0
      %541 = vmatprep.subr.bf16.mxu0 0
      %542 = vmatpush2.bf16.msra.mxu0 0
      %543 = vmatprep.subr.bf16.mxu0 0
      %544 = vmatpush2.bf16.msra.mxu0 0
      %545 = vmatprep.mubr.bf16.mxu0 0
      %546 = vmatmul.mubr.bf16.gmra.mxu0 %v463
      %v547 = vpop.f32.mrf.mxu0
      %v548 = vadd.f32 0.0, %v547
      %v549 = vpop.f32.mrf.mxu0
      %v550 = vpop.f32.mrf.mxu0
      %v551 = vadd.f32 0.0, %v550
      %v552 = vpop.f32.mrf.mxu0
      %553 = vdwg.mxu0
      %v571 = vunpack.c.l.b16 %v419
      %v572 = vunpack.c.l.b16 %v420
      %v573 = vunpack.c.l.b16 %v421
      %v574 = vunpack.c.l.b16 %v422
      %v575 = vunpack.c.l.b16 %v423
      %v576 = vunpack.c.l.b16 %v424
      %v577 = vunpack.c.l.b16 %v425
      %v578 = vunpack.c.l.b16 %v426
      %v579 = vunpack.c.l.b16 %v427
      %v580 = vunpack.c.l.b16 %v428
      %v581 = vunpack.c.l.b16 %v429
      %v582 = vunpack.c.l.b16 %v430
      %v583 = vunpack.c.l.b16 %v431
      %v584 = vunpack.c.l.b16 %v432
      %v585 = vunpack.c.l.b16 %v433
      %v586 = vunpack.c.l.b16 %v434
      %v587 = vpack.c.b16 %v572, %v571
      %v588 = vpack.c.b16 %v574, %v573
      %v589 = vpack.c.b16 %v576, %v575
      %v590 = vpack.c.b16 %v578, %v577
      %v591 = vpack.c.b16 %v580, %v579
      %v592 = vpack.c.b16 %v582, %v581
      %v593 = vpack.c.b16 %v584, %v583
      %v594 = vpack.c.b16 %v586, %v585
      %603 = vmatprep.subr.bf16.mxu0 0
      %604 = vmatpush1.bf16.msra.mxu0 %v594
      %605 = vmatprep.subr.bf16.mxu0 0
      %606 = vmatpush1.bf16.msra.mxu0 %v593
      %607 = vmatprep.subr.bf16.mxu0 0
      %608 = vmatpush1.bf16.msra.mxu0 %v592
      %609 = vmatprep.subr.bf16.mxu0 0
      %610 = vmatpush1.bf16.msra.mxu0 %v591
      %611 = vmatprep.subr.bf16.mxu0 0
      %612 = vmatpush1.bf16.msra.mxu0 %v590
      %613 = vmatprep.subr.bf16.mxu0 0
      %614 = vmatpush1.bf16.msra.mxu0 %v589
      %615 = vmatprep.subr.bf16.mxu0 0
      %616 = vmatpush1.bf16.msra.mxu0 %v588
      %617 = vmatprep.subr.bf16.mxu0 0
      %618 = vmatpush1.bf16.msra.mxu0 %v587
      %619 = vmatprep.subr.bf16.mxu0 0
      %620 = vmatpush2.bf16.msra.mxu0 0
      %621 = vmatprep.subr.bf16.mxu0 0
      %622 = vmatpush2.bf16.msra.mxu0 0
      %623 = vmatprep.subr.bf16.mxu0 0
      %624 = vmatpush2.bf16.msra.mxu0 0
      %625 = vmatprep.subr.bf16.mxu0 0
      %626 = vmatpush2.bf16.msra.mxu0 0
      %627 = vmatprep.subr.bf16.mxu0 0
      %628 = vmatpush2.bf16.msra.mxu0 0
      %629 = vmatprep.subr.bf16.mxu0 0
      %630 = vmatpush2.bf16.msra.mxu0 0
      %631 = vmatprep.subr.bf16.mxu0 0
      %632 = vmatpush2.bf16.msra.mxu0 0
      %633 = vmatprep.subr.bf16.mxu0 0
      %634 = vmatpush2.bf16.msra.mxu0 0
      %635 = vmatprep.mubr.bf16.mxu0 0
      %636 = vmatmul.mubr.bf16.gmra.mxu0 %v456
      %v637 = vpop.f32.mrf.mxu0
      %v638 = vadd.f32 %v548, %v637
      %v639 = vpop.f32.mrf.mxu0
      %v640 = vpop.f32.mrf.mxu0
      %v641 = vadd.f32 %v551, %v640
      %v642 = vpop.f32.mrf.mxu0
      %643 = vdwg.mxu0
      %s644 = scalar_lea.vmem %s4, 128
      %v645 = vld [vmem:[%s644] sm:$0xf]
      %v646 = vld [vmem:[%s644 + $0x4] sm:$0xf]
      %v647 = vld [vmem:[%s644 + $0x8] sm:$0xf]
      %v648 = vld [vmem:[%s644 + $0xc] sm:$0xf]
      %v649 = vld [vmem:[%s644 + $0x10] sm:$0xf]
      %v650 = vld [vmem:[%s644 + $0x14] sm:$0xf]
      %v651 = vld [vmem:[%s644 + $0x18] sm:$0xf]
      %v652 = vld [vmem:[%s644 + $0x1c] sm:$0xf]
      %v653 = vld [vmem:[%s644 + $0x20] sm:$0xf]
      %v654 = vld [vmem:[%s644 + $0x24] sm:$0xf]
      %v655 = vld [vmem:[%s644 + $0x28] sm:$0xf]
      %v656 = vld [vmem:[%s644 + $0x2c] sm:$0xf]
      %v657 = vld [vmem:[%s644 + $0x30] sm:$0xf]
      %v658 = vld [vmem:[%s644 + $0x34] sm:$0xf]
      %v659 = vld [vmem:[%s644 + $0x38] sm:$0xf]
      %v660 = vld [vmem:[%s644 + $0x3c] sm:$0xf]
      %v661 = vrot.slane %v456, 1
      %v679 = vunpack.c.l.b16 %v645
      %v680 = vunpack.c.l.b16 %v646
      %v681 = vunpack.c.l.b16 %v647
      %v682 = vunpack.c.l.b16 %v648
      %v683 = vunpack.c.l.b16 %v649
      %v684 = vunpack.c.l.b16 %v650
      %v685 = vunpack.c.l.b16 %v651
      %v686 = vunpack.c.l.b16 %v652
      %v687 = vunpack.c.l.b16 %v653
      %v688 = vunpack.c.l.b16 %v654
      %v689 = vunpack.c.l.b16 %v655
      %v690 = vunpack.c.l.b16 %v656
      %v691 = vunpack.c.l.b16 %v657
      %v692 = vunpack.c.l.b16 %v658
      %v693 = vunpack.c.l.b16 %v659
      %v694 = vunpack.c.l.b16 %v660
      %v695 = vpack.c.b16 %v680, %v679
      %v696 = vpack.c.b16 %v682, %v681
      %v697 = vpack.c.b16 %v684, %v683
      %v698 = vpack.c.b16 %v686, %v685
      %v699 = vpack.c.b16 %v688, %v687
      %v700 = vpack.c.b16 %v690, %v689
      %v701 = vpack.c.b16 %v692, %v691
      %v702 = vpack.c.b16 %v694, %v693
      %711 = vmatprep.subr.bf16.mxu0 0
      %712 = vmatpush1.bf16.msra.mxu0 %v702
      %713 = vmatprep.subr.bf16.mxu0 0
      %714 = vmatpush1.bf16.msra.mxu0 %v701
      %715 = vmatprep.subr.bf16.mxu0 0
      %716 = vmatpush1.bf16.msra.mxu0 %v700
      %717 = vmatprep.subr.bf16.mxu0 0
      %718 = vmatpush1.bf16.msra.mxu0 %v699
      %719 = vmatprep.subr.bf16.mxu0 0
      %720 = vmatpush1.bf16.msra.mxu0 %v698
      %721 = vmatprep.subr.bf16.mxu0 0
      %722 = vmatpush1.bf16.msra.mxu0 %v697
      %723 = vmatprep.subr.bf16.mxu0 0
      %724 = vmatpush1.bf16.msra.mxu0 %v696
      %725 = vmatprep.subr.bf16.mxu0 0
      %726 = vmatpush1.bf16.msra.mxu0 %v695
      %727 = vmatprep.subr.bf16.mxu0 0
      %728 = vmatpush2.bf16.msra.mxu0 0
      %729 = vmatprep.subr.bf16.mxu0 0
      %730 = vmatpush2.bf16.msra.mxu0 0
      %731 = vmatprep.subr.bf16.mxu0 0
      %732 = vmatpush2.bf16.msra.mxu0 0
      %733 = vmatprep.subr.bf16.mxu0 0
      %734 = vmatpush2.bf16.msra.mxu0 0
      %735 = vmatprep.subr.bf16.mxu0 0
      %736 = vmatpush2.bf16.msra.mxu0 0
      %737 = vmatprep.subr.bf16.mxu0 0
      %738 = vmatpush2.bf16.msra.mxu0 0
      %739 = vmatprep.subr.bf16.mxu0 0
      %740 = vmatpush2.bf16.msra.mxu0 0
      %741 = vmatprep.subr.bf16.mxu0 0
      %742 = vmatpush2.bf16.msra.mxu0 0
      %743 = vmatprep.mubr.bf16.mxu0 0
      %744 = vmatmul.mubr.bf16.gmra.mxu0 %v661
      %v745 = vpop.f32.mrf.mxu0
      %v746 = vadd.f32 0.0, %v745
      %v747 = vpop.f32.mrf.mxu0
      %v748 = vpop.f32.mrf.mxu0
      %v749 = vadd.f32 0.0, %v748
      %v750 = vpop.f32.mrf.mxu0
      %751 = vdwg.mxu0
      %v752 = vadd.f32 %v638, %v746
      %v753 = vadd.f32 %v641, %v749
      %s754 = scalar_lea.vmem %s4, 192
      %v755 = vld [vmem:[%s754] sm:$0xf]
      %v756 = vld [vmem:[%s754 + $0x4] sm:$0xf]
      %v757 = vld [vmem:[%s754 + $0x8] sm:$0xf]
      %v758 = vld [vmem:[%s754 + $0xc] sm:$0xf]
      %v759 = vld [vmem:[%s754 + $0x10] sm:$0xf]
      %v760 = vld [vmem:[%s754 + $0x14] sm:$0xf]
      %v761 = vld [vmem:[%s754 + $0x18] sm:$0xf]
      %v762 = vld [vmem:[%s754 + $0x1c] sm:$0xf]
      %v763 = vld [vmem:[%s754 + $0x20] sm:$0xf]
      %v764 = vld [vmem:[%s754 + $0x24] sm:$0xf]
      %v765 = vld [vmem:[%s754 + $0x28] sm:$0xf]
      %v766 = vld [vmem:[%s754 + $0x2c] sm:$0xf]
      %v767 = vld [vmem:[%s754 + $0x30] sm:$0xf]
      %v768 = vld [vmem:[%s754 + $0x34] sm:$0xf]
      %v769 = vld [vmem:[%s754 + $0x38] sm:$0xf]
      %v770 = vld [vmem:[%s754 + $0x3c] sm:$0xf]
      %v773 = vunpack.c.l.b16 %v413
      %v774 = vunpack.c.l.b16 %v414
      %v775 = vpack.c.b16 %v774, %v773
      %v793 = vunpack.c.l.b16 %v755
      %v794 = vunpack.c.l.b16 %v756
      %v795 = vunpack.c.l.b16 %v757
      %v796 = vunpack.c.l.b16 %v758
      %v797 = vunpack.c.l.b16 %v759
      %v798 = vunpack.c.l.b16 %v760
      %v799 = vunpack.c.l.b16 %v761
      %v800 = vunpack.c.l.b16 %v762
      %v801 = vunpack.c.l.b16 %v763
      %v802 = vunpack.c.l.b16 %v764
      %v803 = vunpack.c.l.b16 %v765
      %v804 = vunpack.c.l.b16 %v766
      %v805 = vunpack.c.l.b16 %v767
      %v806 = vunpack.c.l.b16 %v768
      %v807 = vunpack.c.l.b16 %v769
      %v808 = vunpack.c.l.b16 %v770
      %v809 = vpack.c.b16 %v794, %v793
      %v810 = vpack.c.b16 %v796, %v795
      %v811 = vpack.c.b16 %v798, %v797
      %v812 = vpack.c.b16 %v800, %v799
      %v813 = vpack.c.b16 %v802, %v801
      %v814 = vpack.c.b16 %v804, %v803
      %v815 = vpack.c.b16 %v806, %v805
      %v816 = vpack.c.b16 %v808, %v807
      %825 = vmatprep.subr.bf16.mxu0 0
      %826 = vmatpush1.bf16.msra.mxu0 %v816
      %827 = vmatprep.subr.bf16.mxu0 0
      %828 = vmatpush1.bf16.msra.mxu0 %v815
      %829 = vmatprep.subr.bf16.mxu0 0
      %830 = vmatpush1.bf16.msra.mxu0 %v814
      %831 = vmatprep.subr.bf16.mxu0 0
      %832 = vmatpush1.bf16.msra.mxu0 %v813
      %833 = vmatprep.subr.bf16.mxu0 0
      %834 = vmatpush1.bf16.msra.mxu0 %v812
      %835 = vmatprep.subr.bf16.mxu0 0
      %836 = vmatpush1.bf16.msra.mxu0 %v811
      %837 = vmatprep.subr.bf16.mxu0 0
      %838 = vmatpush1.bf16.msra.mxu0 %v810
      %839 = vmatprep.subr.bf16.mxu0 0
      %840 = vmatpush1.bf16.msra.mxu0 %v809
      %841 = vmatprep.subr.bf16.mxu0 0
      %842 = vmatpush2.bf16.msra.mxu0 0
      %843 = vmatprep.subr.bf16.mxu0 0
      %844 = vmatpush2.bf16.msra.mxu0 0
      %845 = vmatprep.subr.bf16.mxu0 0
      %846 = vmatpush2.bf16.msra.mxu0 0
      %847 = vmatprep.subr.bf16.mxu0 0
      %848 = vmatpush2.bf16.msra.mxu0 0
      %849 = vmatprep.subr.bf16.mxu0 0
      %850 = vmatpush2.bf16.msra.mxu0 0
      %851 = vmatprep.subr.bf16.mxu0 0
      %852 = vmatpush2.bf16.msra.mxu0 0
      %853 = vmatprep.subr.bf16.mxu0 0
      %854 = vmatpush2.bf16.msra.mxu0 0
      %855 = vmatprep.subr.bf16.mxu0 0
      %856 = vmatpush2.bf16.msra.mxu0 0
      %857 = vmatprep.mubr.bf16.mxu0 0
      %858 = vmatmul.mubr.bf16.gmra.mxu0 %v775
      %v859 = vpop.f32.mrf.mxu0
      %v860 = vadd.f32 0.0, %v859
      %v861 = vpop.f32.mrf.mxu0
      %v862 = vpop.f32.mrf.mxu0
      %v863 = vadd.f32 0.0, %v862
      %v864 = vpop.f32.mrf.mxu0
      %865 = vdwg.mxu0
      %v866 = vadd.f32 %v752, %v860
      %v867 = vadd.f32 %v753, %v863
      %s868 = scalar_lea.vmem %s4, 256
      %v869 = vld [vmem:[%s868] sm:$0xf]
      %v870 = vld [vmem:[%s868 + $0x4] sm:$0xf]
      %v871 = vld [vmem:[%s868 + $0x8] sm:$0xf]
      %v872 = vld [vmem:[%s868 + $0xc] sm:$0xf]
      %v873 = vld [vmem:[%s868 + $0x10] sm:$0xf]
      %v874 = vld [vmem:[%s868 + $0x14] sm:$0xf]
      %v875 = vld [vmem:[%s868 + $0x18] sm:$0xf]
      %v876 = vld [vmem:[%s868 + $0x1c] sm:$0xf]
      %v877 = vld [vmem:[%s868 + $0x20] sm:$0xf]
      %v878 = vld [vmem:[%s868 + $0x24] sm:$0xf]
      %v879 = vld [vmem:[%s868 + $0x28] sm:$0xf]
      %v880 = vld [vmem:[%s868 + $0x2c] sm:$0xf]
      %v881 = vld [vmem:[%s868 + $0x30] sm:$0xf]
      %v882 = vld [vmem:[%s868 + $0x34] sm:$0xf]
      %v883 = vld [vmem:[%s868 + $0x38] sm:$0xf]
      %v884 = vld [vmem:[%s868 + $0x3c] sm:$0xf]
      %v886 = vshrl.u32 %v775, 16
      %v888 = vshll.u32 %v775, 16
      %v890 = vrot.slane %v888, 1
      %v891 = vor.u32 %v886, %v890
      %v909 = vunpack.c.l.b16 %v869
      %v910 = vunpack.c.l.b16 %v870
      %v911 = vunpack.c.l.b16 %v871
      %v912 = vunpack.c.l.b16 %v872
      %v913 = vunpack.c.l.b16 %v873
      %v914 = vunpack.c.l.b16 %v874
      %v915 = vunpack.c.l.b16 %v875
      %v916 = vunpack.c.l.b16 %v876
      %v917 = vunpack.c.l.b16 %v877
      %v918 = vunpack.c.l.b16 %v878
      %v919 = vunpack.c.l.b16 %v879
      %v920 = vunpack.c.l.b16 %v880
      %v921 = vunpack.c.l.b16 %v881
      %v922 = vunpack.c.l.b16 %v882
      %v923 = vunpack.c.l.b16 %v883
      %v924 = vunpack.c.l.b16 %v884
      %v925 = vpack.c.b16 %v910, %v909
      %v926 = vpack.c.b16 %v912, %v911
      %v927 = vpack.c.b16 %v914, %v913
      %v928 = vpack.c.b16 %v916, %v915
      %v929 = vpack.c.b16 %v918, %v917
      %v930 = vpack.c.b16 %v920, %v919
      %v931 = vpack.c.b16 %v922, %v921
      %v932 = vpack.c.b16 %v924, %v923
      %941 = vmatprep.subr.bf16.mxu0 0
      %942 = vmatpush1.bf16.msra.mxu0 %v932
      %943 = vmatprep.subr.bf16.mxu0 0
      %944 = vmatpush1.bf16.msra.mxu0 %v931
      %945 = vmatprep.subr.bf16.mxu0 0
      %946 = vmatpush1.bf16.msra.mxu0 %v930
      %947 = vmatprep.subr.bf16.mxu0 0
      %948 = vmatpush1.bf16.msra.mxu0 %v929
      %949 = vmatprep.subr.bf16.mxu0 0
      %950 = vmatpush1.bf16.msra.mxu0 %v928
      %951 = vmatprep.subr.bf16.mxu0 0
      %952 = vmatpush1.bf16.msra.mxu0 %v927
      %953 = vmatprep.subr.bf16.mxu0 0
      %954 = vmatpush1.bf16.msra.mxu0 %v926
      %955 = vmatprep.subr.bf16.mxu0 0
      %956 = vmatpush1.bf16.msra.mxu0 %v925
      %957 = vmatprep.subr.bf16.mxu0 0
      %958 = vmatpush2.bf16.msra.mxu0 0
      %959 = vmatprep.subr.bf16.mxu0 0
      %960 = vmatpush2.bf16.msra.mxu0 0
      %961 = vmatprep.subr.bf16.mxu0 0
      %962 = vmatpush2.bf16.msra.mxu0 0
      %963 = vmatprep.subr.bf16.mxu0 0
      %964 = vmatpush2.bf16.msra.mxu0 0
      %965 = vmatprep.subr.bf16.mxu0 0
      %966 = vmatpush2.bf16.msra.mxu0 0
      %967 = vmatprep.subr.bf16.mxu0 0
      %968 = vmatpush2.bf16.msra.mxu0 0
      %969 = vmatprep.subr.bf16.mxu0 0
      %970 = vmatpush2.bf16.msra.mxu0 0
      %971 = vmatprep.subr.bf16.mxu0 0
      %972 = vmatpush2.bf16.msra.mxu0 0
      %973 = vmatprep.mubr.bf16.mxu0 0
      %974 = vmatmul.mubr.bf16.gmra.mxu0 %v891
      %v975 = vpop.f32.mrf.mxu0
      %v976 = vadd.f32 0.0, %v975
      %v977 = vpop.f32.mrf.mxu0
      %v978 = vpop.f32.mrf.mxu0
      %v979 = vadd.f32 0.0, %v978
      %v980 = vpop.f32.mrf.mxu0
      %981 = vdwg.mxu0
      %v982 = vadd.f32 %v866, %v976
      %v983 = vadd.f32 %v867, %v979
      %s984 = scalar_lea.vmem %s4, 320
      %v985 = vld [vmem:[%s984] sm:$0xf]
      %v986 = vld [vmem:[%s984 + $0x4] sm:$0xf]
      %v987 = vld [vmem:[%s984 + $0x8] sm:$0xf]
      %v988 = vld [vmem:[%s984 + $0xc] sm:$0xf]
      %v989 = vld [vmem:[%s984 + $0x10] sm:$0xf]
      %v990 = vld [vmem:[%s984 + $0x14] sm:$0xf]
      %v991 = vld [vmem:[%s984 + $0x18] sm:$0xf]
      %v992 = vld [vmem:[%s984 + $0x1c] sm:$0xf]
      %v993 = vld [vmem:[%s984 + $0x20] sm:$0xf]
      %v994 = vld [vmem:[%s984 + $0x24] sm:$0xf]
      %v995 = vld [vmem:[%s984 + $0x28] sm:$0xf]
      %v996 = vld [vmem:[%s984 + $0x2c] sm:$0xf]
      %v997 = vld [vmem:[%s984 + $0x30] sm:$0xf]
      %v998 = vld [vmem:[%s984 + $0x34] sm:$0xf]
      %v999 = vld [vmem:[%s984 + $0x38] sm:$0xf]
      %v1000 = vld [vmem:[%s984 + $0x3c] sm:$0xf]
      %v1001 = vrot.slane %v775, 1
      %v1019 = vunpack.c.l.b16 %v985
      %v1020 = vunpack.c.l.b16 %v986
      %v1021 = vunpack.c.l.b16 %v987
      %v1022 = vunpack.c.l.b16 %v988
      %v1023 = vunpack.c.l.b16 %v989
      %v1024 = vunpack.c.l.b16 %v990
      %v1025 = vunpack.c.l.b16 %v991
      %v1026 = vunpack.c.l.b16 %v992
      %v1027 = vunpack.c.l.b16 %v993
      %v1028 = vunpack.c.l.b16 %v994
      %v1029 = vunpack.c.l.b16 %v995
      %v1030 = vunpack.c.l.b16 %v996
      %v1031 = vunpack.c.l.b16 %v997
      %v1032 = vunpack.c.l.b16 %v998
      %v1033 = vunpack.c.l.b16 %v999
      %v1034 = vunpack.c.l.b16 %v1000
      %v1035 = vpack.c.b16 %v1020, %v1019
      %v1036 = vpack.c.b16 %v1022, %v1021
      %v1037 = vpack.c.b16 %v1024, %v1023
      %v1038 = vpack.c.b16 %v1026, %v1025
      %v1039 = vpack.c.b16 %v1028, %v1027
      %v1040 = vpack.c.b16 %v1030, %v1029
      %v1041 = vpack.c.b16 %v1032, %v1031
      %v1042 = vpack.c.b16 %v1034, %v1033
      %1051 = vmatprep.subr.bf16.mxu0 0
      %1052 = vmatpush1.bf16.msra.mxu0 %v1042
      %1053 = vmatprep.subr.bf16.mxu0 0
      %1054 = vmatpush1.bf16.msra.mxu0 %v1041
      %1055 = vmatprep.subr.bf16.mxu0 0
      %1056 = vmatpush1.bf16.msra.mxu0 %v1040
      %1057 = vmatprep.subr.bf16.mxu0 0
      %1058 = vmatpush1.bf16.msra.mxu0 %v1039
      %1059 = vmatprep.subr.bf16.mxu0 0
      %1060 = vmatpush1.bf16.msra.mxu0 %v1038
      %1061 = vmatprep.subr.bf16.mxu0 0
      %1062 = vmatpush1.bf16.msra.mxu0 %v1037
      %1063 = vmatprep.subr.bf16.mxu0 0
      %1064 = vmatpush1.bf16.msra.mxu0 %v1036
      %1065 = vmatprep.subr.bf16.mxu0 0
      %1066 = vmatpush1.bf16.msra.mxu0 %v1035
      %1067 = vmatprep.subr.bf16.mxu0 0
      %1068 = vmatpush2.bf16.msra.mxu0 0
      %1069 = vmatprep.subr.bf16.mxu0 0
      %1070 = vmatpush2.bf16.msra.mxu0 0
      %1071 = vmatprep.subr.bf16.mxu0 0
      %1072 = vmatpush2.bf16.msra.mxu0 0
      %1073 = vmatprep.subr.bf16.mxu0 0
      %1074 = vmatpush2.bf16.msra.mxu0 0
      %1075 = vmatprep.subr.bf16.mxu0 0
      %1076 = vmatpush2.bf16.msra.mxu0 0
      %1077 = vmatprep.subr.bf16.mxu0 0
      %1078 = vmatpush2.bf16.msra.mxu0 0
      %1079 = vmatprep.subr.bf16.mxu0 0
      %1080 = vmatpush2.bf16.msra.mxu0 0
      %1081 = vmatprep.subr.bf16.mxu0 0
      %1082 = vmatpush2.bf16.msra.mxu0 0
      %1083 = vmatprep.mubr.bf16.mxu0 0
      %1084 = vmatmul.mubr.bf16.gmra.mxu0 %v1001
      %v1085 = vpop.f32.mrf.mxu0
      %v1086 = vadd.f32 0.0, %v1085
      %v1087 = vpop.f32.mrf.mxu0
      %v1088 = vpop.f32.mrf.mxu0
      %v1089 = vadd.f32 0.0, %v1088
      %v1090 = vpop.f32.mrf.mxu0
      %1091 = vdwg.mxu0
      %v1092 = vadd.f32 %v982, %v1086
      %v1093 = vadd.f32 %v983, %v1089
      %s1094 = scalar_lea.vmem %s4, 384
      %v1095 = vld [vmem:[%s1094] sm:$0xf]
      %v1096 = vld [vmem:[%s1094 + $0x4] sm:$0xf]
      %v1097 = vld [vmem:[%s1094 + $0x8] sm:$0xf]
      %v1098 = vld [vmem:[%s1094 + $0xc] sm:$0xf]
      %v1099 = vld [vmem:[%s1094 + $0x10] sm:$0xf]
      %v1100 = vld [vmem:[%s1094 + $0x14] sm:$0xf]
      %v1101 = vld [vmem:[%s1094 + $0x18] sm:$0xf]
      %v1102 = vld [vmem:[%s1094 + $0x1c] sm:$0xf]
      %v1103 = vld [vmem:[%s1094 + $0x20] sm:$0xf]
      %v1104 = vld [vmem:[%s1094 + $0x24] sm:$0xf]
      %v1105 = vld [vmem:[%s1094 + $0x28] sm:$0xf]
      %v1106 = vld [vmem:[%s1094 + $0x2c] sm:$0xf]
      %v1107 = vld [vmem:[%s1094 + $0x30] sm:$0xf]
      %v1108 = vld [vmem:[%s1094 + $0x34] sm:$0xf]
      %v1109 = vld [vmem:[%s1094 + $0x38] sm:$0xf]
      %v1110 = vld [vmem:[%s1094 + $0x3c] sm:$0xf]
      %v1113 = vunpack.c.l.b16 %v415
      %v1114 = vunpack.c.l.b16 %v416
      %v1115 = vpack.c.b16 %v1114, %v1113
      %v1133 = vunpack.c.l.b16 %v1095
      %v1134 = vunpack.c.l.b16 %v1096
      %v1135 = vunpack.c.l.b16 %v1097
      %v1136 = vunpack.c.l.b16 %v1098
      %v1137 = vunpack.c.l.b16 %v1099
      %v1138 = vunpack.c.l.b16 %v1100
      %v1139 = vunpack.c.l.b16 %v1101
      %v1140 = vunpack.c.l.b16 %v1102
      %v1141 = vunpack.c.l.b16 %v1103
      %v1142 = vunpack.c.l.b16 %v1104
      %v1143 = vunpack.c.l.b16 %v1105
      %v1144 = vunpack.c.l.b16 %v1106
      %v1145 = vunpack.c.l.b16 %v1107
      %v1146 = vunpack.c.l.b16 %v1108
      %v1147 = vunpack.c.l.b16 %v1109
      %v1148 = vunpack.c.l.b16 %v1110
      %v1149 = vpack.c.b16 %v1134, %v1133
      %v1150 = vpack.c.b16 %v1136, %v1135
      %v1151 = vpack.c.b16 %v1138, %v1137
      %v1152 = vpack.c.b16 %v1140, %v1139
      %v1153 = vpack.c.b16 %v1142, %v1141
      %v1154 = vpack.c.b16 %v1144, %v1143
      %v1155 = vpack.c.b16 %v1146, %v1145
      %v1156 = vpack.c.b16 %v1148, %v1147
      %1165 = vmatprep.subr.bf16.mxu0 0
      %1166 = vmatpush1.bf16.msra.mxu0 %v1156
      %1167 = vmatprep.subr.bf16.mxu0 0
      %1168 = vmatpush1.bf16.msra.mxu0 %v1155
      %1169 = vmatprep.subr.bf16.mxu0 0
      %1170 = vmatpush1.bf16.msra.mxu0 %v1154
      %1171 = vmatprep.subr.bf16.mxu0 0
      %1172 = vmatpush1.bf16.msra.mxu0 %v1153
      %1173 = vmatprep.subr.bf16.mxu0 0
      %1174 = vmatpush1.bf16.msra.mxu0 %v1152
      %1175 = vmatprep.subr.bf16.mxu0 0
      %1176 = vmatpush1.bf16.msra.mxu0 %v1151
      %1177 = vmatprep.subr.bf16.mxu0 0
      %1178 = vmatpush1.bf16.msra.mxu0 %v1150
      %1179 = vmatprep.subr.bf16.mxu0 0
      %1180 = vmatpush1.bf16.msra.mxu0 %v1149
      %1181 = vmatprep.subr.bf16.mxu0 0
      %1182 = vmatpush2.bf16.msra.mxu0 0
      %1183 = vmatprep.subr.bf16.mxu0 0
      %1184 = vmatpush2.bf16.msra.mxu0 0
      %1185 = vmatprep.subr.bf16.mxu0 0
      %1186 = vmatpush2.bf16.msra.mxu0 0
      %1187 = vmatprep.subr.bf16.mxu0 0
      %1188 = vmatpush2.bf16.msra.mxu0 0
      %1189 = vmatprep.subr.bf16.mxu0 0
      %1190 = vmatpush2.bf16.msra.mxu0 0
      %1191 = vmatprep.subr.bf16.mxu0 0
      %1192 = vmatpush2.bf16.msra.mxu0 0
      %1193 = vmatprep.subr.bf16.mxu0 0
      %1194 = vmatpush2.bf16.msra.mxu0 0
      %1195 = vmatprep.subr.bf16.mxu0 0
      %1196 = vmatpush2.bf16.msra.mxu0 0
      %1197 = vmatprep.mubr.bf16.mxu0 0
      %1198 = vmatmul.mubr.bf16.gmra.mxu0 %v1115
      %v1199 = vpop.f32.mrf.mxu0
      %v1200 = vadd.f32 0.0, %v1199
      %v1201 = vpop.f32.mrf.mxu0
      %v1202 = vpop.f32.mrf.mxu0
      %v1203 = vadd.f32 0.0, %v1202
      %v1204 = vpop.f32.mrf.mxu0
      %1205 = vdwg.mxu0
      %v1206 = vadd.f32 %v1092, %v1200
      %v1207 = vadd.f32 %v1093, %v1203
      %s1208 = scalar_lea.vmem %s4, 448
      %v1209 = vld [vmem:[%s1208] sm:$0xf]
      %v1210 = vld [vmem:[%s1208 + $0x4] sm:$0xf]
      %v1211 = vld [vmem:[%s1208 + $0x8] sm:$0xf]
      %v1212 = vld [vmem:[%s1208 + $0xc] sm:$0xf]
      %v1213 = vld [vmem:[%s1208 + $0x10] sm:$0xf]
      %v1214 = vld [vmem:[%s1208 + $0x14] sm:$0xf]
      %v1215 = vld [vmem:[%s1208 + $0x18] sm:$0xf]
      %v1216 = vld [vmem:[%s1208 + $0x1c] sm:$0xf]
      %v1217 = vld [vmem:[%s1208 + $0x20] sm:$0xf]
      %v1218 = vld [vmem:[%s1208 + $0x24] sm:$0xf]
      %v1219 = vld [vmem:[%s1208 + $0x28] sm:$0xf]
      %v1220 = vld [vmem:[%s1208 + $0x2c] sm:$0xf]
      %v1221 = vld [vmem:[%s1208 + $0x30] sm:$0xf]
      %v1222 = vld [vmem:[%s1208 + $0x34] sm:$0xf]
      %v1223 = vld [vmem:[%s1208 + $0x38] sm:$0xf]
      %v1224 = vld [vmem:[%s1208 + $0x3c] sm:$0xf]
      %v1226 = vshrl.u32 %v1115, 16
      %v1228 = vshll.u32 %v1115, 16
      %v1230 = vrot.slane %v1228, 1
      %v1231 = vor.u32 %v1226, %v1230
      %v1249 = vunpack.c.l.b16 %v1209
      %v1250 = vunpack.c.l.b16 %v1210
      %v1251 = vunpack.c.l.b16 %v1211
      %v1252 = vunpack.c.l.b16 %v1212
      %v1253 = vunpack.c.l.b16 %v1213
      %v1254 = vunpack.c.l.b16 %v1214
      %v1255 = vunpack.c.l.b16 %v1215
      %v1256 = vunpack.c.l.b16 %v1216
      %v1257 = vunpack.c.l.b16 %v1217
      %v1258 = vunpack.c.l.b16 %v1218
      %v1259 = vunpack.c.l.b16 %v1219
      %v1260 = vunpack.c.l.b16 %v1220
      %v1261 = vunpack.c.l.b16 %v1221
      %v1262 = vunpack.c.l.b16 %v1222
      %v1263 = vunpack.c.l.b16 %v1223
      %v1264 = vunpack.c.l.b16 %v1224
      %v1265 = vpack.c.b16 %v1250, %v1249
      %v1266 = vpack.c.b16 %v1252, %v1251
      %v1267 = vpack.c.b16 %v1254, %v1253
      %v1268 = vpack.c.b16 %v1256, %v1255
      %v1269 = vpack.c.b16 %v1258, %v1257
      %v1270 = vpack.c.b16 %v1260, %v1259
      %v1271 = vpack.c.b16 %v1262, %v1261
      %v1272 = vpack.c.b16 %v1264, %v1263
      %1281 = vmatprep.subr.bf16.mxu0 0
      %1282 = vmatpush1.bf16.msra.mxu0 %v1272
      %1283 = vmatprep.subr.bf16.mxu0 0
      %1284 = vmatpush1.bf16.msra.mxu0 %v1271
      %1285 = vmatprep.subr.bf16.mxu0 0
      %1286 = vmatpush1.bf16.msra.mxu0 %v1270
      %1287 = vmatprep.subr.bf16.mxu0 0
      %1288 = vmatpush1.bf16.msra.mxu0 %v1269
      %1289 = vmatprep.subr.bf16.mxu0 0
      %1290 = vmatpush1.bf16.msra.mxu0 %v1268
      %1291 = vmatprep.subr.bf16.mxu0 0
      %1292 = vmatpush1.bf16.msra.mxu0 %v1267
      %1293 = vmatprep.subr.bf16.mxu0 0
      %1294 = vmatpush1.bf16.msra.mxu0 %v1266
      %1295 = vmatprep.subr.bf16.mxu0 0
      %1296 = vmatpush1.bf16.msra.mxu0 %v1265
      %1297 = vmatprep.subr.bf16.mxu0 0
      %1298 = vmatpush2.bf16.msra.mxu0 0
      %1299 = vmatprep.subr.bf16.mxu0 0
      %1300 = vmatpush2.bf16.msra.mxu0 0
      %1301 = vmatprep.subr.bf16.mxu0 0
      %1302 = vmatpush2.bf16.msra.mxu0 0
      %1303 = vmatprep.subr.bf16.mxu0 0
      %1304 = vmatpush2.bf16.msra.mxu0 0
      %1305 = vmatprep.subr.bf16.mxu0 0
      %1306 = vmatpush2.bf16.msra.mxu0 0
      %1307 = vmatprep.subr.bf16.mxu0 0
      %1308 = vmatpush2.bf16.msra.mxu0 0
      %1309 = vmatprep.subr.bf16.mxu0 0
      %1310 = vmatpush2.bf16.msra.mxu0 0
      %1311 = vmatprep.subr.bf16.mxu0 0
      %1312 = vmatpush2.bf16.msra.mxu0 0
      %1313 = vmatprep.mubr.bf16.mxu0 0
      %1314 = vmatmul.mubr.bf16.gmra.mxu0 %v1231
      %v1315 = vpop.f32.mrf.mxu0
      %v1316 = vadd.f32 0.0, %v1315
      %v1317 = vpop.f32.mrf.mxu0
      %v1318 = vpop.f32.mrf.mxu0
      %v1319 = vadd.f32 0.0, %v1318
      %v1320 = vpop.f32.mrf.mxu0
      %1321 = vdwg.mxu0
      %v1322 = vadd.f32 %v1206, %v1316
      %v1323 = vadd.f32 %v1207, %v1319
      %s1324 = scalar_lea.vmem %s4, 512
      %v1325 = vld [vmem:[%s1324] sm:$0xf]
      %v1326 = vld [vmem:[%s1324 + $0x4] sm:$0xf]
      %v1327 = vld [vmem:[%s1324 + $0x8] sm:$0xf]
      %v1328 = vld [vmem:[%s1324 + $0xc] sm:$0xf]
      %v1329 = vld [vmem:[%s1324 + $0x10] sm:$0xf]
      %v1330 = vld [vmem:[%s1324 + $0x14] sm:$0xf]
      %v1331 = vld [vmem:[%s1324 + $0x18] sm:$0xf]
      %v1332 = vld [vmem:[%s1324 + $0x1c] sm:$0xf]
      %v1333 = vld [vmem:[%s1324 + $0x20] sm:$0xf]
      %v1334 = vld [vmem:[%s1324 + $0x24] sm:$0xf]
      %v1335 = vld [vmem:[%s1324 + $0x28] sm:$0xf]
      %v1336 = vld [vmem:[%s1324 + $0x2c] sm:$0xf]
      %v1337 = vld [vmem:[%s1324 + $0x30] sm:$0xf]
      %v1338 = vld [vmem:[%s1324 + $0x34] sm:$0xf]
      %v1339 = vld [vmem:[%s1324 + $0x38] sm:$0xf]
      %v1340 = vld [vmem:[%s1324 + $0x3c] sm:$0xf]
      %v1341 = vrot.slane %v1115, 1
      %v1359 = vunpack.c.l.b16 %v1325
      %v1360 = vunpack.c.l.b16 %v1326
      %v1361 = vunpack.c.l.b16 %v1327
      %v1362 = vunpack.c.l.b16 %v1328
      %v1363 = vunpack.c.l.b16 %v1329
      %v1364 = vunpack.c.l.b16 %v1330
      %v1365 = vunpack.c.l.b16 %v1331
      %v1366 = vunpack.c.l.b16 %v1332
      %v1367 = vunpack.c.l.b16 %v1333
      %v1368 = vunpack.c.l.b16 %v1334
      %v1369 = vunpack.c.l.b16 %v1335
      %v1370 = vunpack.c.l.b16 %v1336
      %v1371 = vunpack.c.l.b16 %v1337
      %v1372 = vunpack.c.l.b16 %v1338
      %v1373 = vunpack.c.l.b16 %v1339
      %v1374 = vunpack.c.l.b16 %v1340
      %v1375 = vpack.c.b16 %v1360, %v1359
      %v1376 = vpack.c.b16 %v1362, %v1361
      %v1377 = vpack.c.b16 %v1364, %v1363
      %v1378 = vpack.c.b16 %v1366, %v1365
      %v1379 = vpack.c.b16 %v1368, %v1367
      %v1380 = vpack.c.b16 %v1370, %v1369
      %v1381 = vpack.c.b16 %v1372, %v1371
      %v1382 = vpack.c.b16 %v1374, %v1373
      %1391 = vmatprep.subr.bf16.mxu0 0
      %1392 = vmatpush1.bf16.msra.mxu0 %v1382
      %1393 = vmatprep.subr.bf16.mxu0 0
      %1394 = vmatpush1.bf16.msra.mxu0 %v1381
      %1395 = vmatprep.subr.bf16.mxu0 0
      %1396 = vmatpush1.bf16.msra.mxu0 %v1380
      %1397 = vmatprep.subr.bf16.mxu0 0
      %1398 = vmatpush1.bf16.msra.mxu0 %v1379
      %1399 = vmatprep.subr.bf16.mxu0 0
      %1400 = vmatpush1.bf16.msra.mxu0 %v1378
      %1401 = vmatprep.subr.bf16.mxu0 0
      %1402 = vmatpush1.bf16.msra.mxu0 %v1377
      %1403 = vmatprep.subr.bf16.mxu0 0
      %1404 = vmatpush1.bf16.msra.mxu0 %v1376
      %1405 = vmatprep.subr.bf16.mxu0 0
      %1406 = vmatpush1.bf16.msra.mxu0 %v1375
      %1407 = vmatprep.subr.bf16.mxu0 0
      %1408 = vmatpush2.bf16.msra.mxu0 0
      %1409 = vmatprep.subr.bf16.mxu0 0
      %1410 = vmatpush2.bf16.msra.mxu0 0
      %1411 = vmatprep.subr.bf16.mxu0 0
      %1412 = vmatpush2.bf16.msra.mxu0 0
      %1413 = vmatprep.subr.bf16.mxu0 0
      %1414 = vmatpush2.bf16.msra.mxu0 0
      %1415 = vmatprep.subr.bf16.mxu0 0
      %1416 = vmatpush2.bf16.msra.mxu0 0
      %1417 = vmatprep.subr.bf16.mxu0 0
      %1418 = vmatpush2.bf16.msra.mxu0 0
      %1419 = vmatprep.subr.bf16.mxu0 0
      %1420 = vmatpush2.bf16.msra.mxu0 0
      %1421 = vmatprep.subr.bf16.mxu0 0
      %1422 = vmatpush2.bf16.msra.mxu0 0
      %1423 = vmatprep.mubr.bf16.mxu0 0
      %1424 = vmatmul.mubr.bf16.gmra.mxu0 %v1341
      %v1425 = vpop.f32.mrf.mxu0
      %v1426 = vadd.f32 0.0, %v1425
      %v1427 = vpop.f32.mrf.mxu0
      %v1428 = vpop.f32.mrf.mxu0
      %v1429 = vadd.f32 0.0, %v1428
      %v1430 = vpop.f32.mrf.mxu0
      %1431 = vdwg.mxu0
      %v1432 = vadd.f32 %v1322, %v1426
      %v1433 = vadd.f32 %v1323, %v1429
      %v1434 = vmax.f32 %v1432, 0.0
      %v1435 = vmax.f32 %v1433, 0.0
      %1436 = vmatprep.subr.bf16.mxu0 0
      %1437 = vmatpush1.bf16.msra.mxu0 %v504
      %1438 = vmatprep.subr.bf16.mxu0 0
      %1439 = vmatpush1.bf16.msra.mxu0 %v503
      %1440 = vmatprep.subr.bf16.mxu0 0
      %1441 = vmatpush1.bf16.msra.mxu0 %v502
      %1442 = vmatprep.subr.bf16.mxu0 0
      %1443 = vmatpush1.bf16.msra.mxu0 %v501
      %1444 = vmatprep.subr.bf16.mxu0 0
      %1445 = vmatpush1.bf16.msra.mxu0 %v500
      %1446 = vmatprep.subr.bf16.mxu0 0
      %1447 = vmatpush1.bf16.msra.mxu0 %v499
      %1448 = vmatprep.subr.bf16.mxu0 0
      %1449 = vmatpush1.bf16.msra.mxu0 %v498
      %1450 = vmatprep.subr.bf16.mxu0 0
      %1451 = vmatpush1.bf16.msra.mxu0 %v497
      %1452 = vmatprep.subr.bf16.mxu0 0
      %1453 = vmatpush2.bf16.msra.mxu0 0
      %1454 = vmatprep.subr.bf16.mxu0 0
      %1455 = vmatpush2.bf16.msra.mxu0 0
      %1456 = vmatprep.subr.bf16.mxu0 0
      %1457 = vmatpush2.bf16.msra.mxu0 0
      %1458 = vmatprep.subr.bf16.mxu0 0
      %1459 = vmatpush2.bf16.msra.mxu0 0
      %1460 = vmatprep.subr.bf16.mxu0 0
      %1461 = vmatpush2.bf16.msra.mxu0 0
      %1462 = vmatprep.subr.bf16.mxu0 0
      %1463 = vmatpush2.bf16.msra.mxu0 0
      %1464 = vmatprep.subr.bf16.mxu0 0
      %1465 = vmatpush2.bf16.msra.mxu0 0
      %1466 = vmatprep.subr.bf16.mxu0 0
      %1467 = vmatpush2.bf16.msra.mxu0 0
      %1468 = vmatprep.mubr.bf16.mxu0 0
      %1469 = vmatmul.mubr.bf16.gmra.mxu0 %v891
      %v1470 = vpop.f32.mrf.mxu0
      %v1471 = vadd.f32 0.0, %v1470
      %v1472 = vpop.f32.mrf.mxu0
      %v1473 = vpop.f32.mrf.mxu0
      %v1474 = vadd.f32 0.0, %v1473
      %v1475 = vpop.f32.mrf.mxu0
      %1476 = vdwg.mxu0
      %1477 = vmatprep.subr.bf16.mxu0 0
      %1478 = vmatpush1.bf16.msra.mxu0 %v594
      %1479 = vmatprep.subr.bf16.mxu0 0
      %1480 = vmatpush1.bf16.msra.mxu0 %v593
      %1481 = vmatprep.subr.bf16.mxu0 0
      %1482 = vmatpush1.bf16.msra.mxu0 %v592
      %1483 = vmatprep.subr.bf16.mxu0 0
      %1484 = vmatpush1.bf16.msra.mxu0 %v591
      %1485 = vmatprep.subr.bf16.mxu0 0
      %1486 = vmatpush1.bf16.msra.mxu0 %v590
      %1487 = vmatprep.subr.bf16.mxu0 0
      %1488 = vmatpush1.bf16.msra.mxu0 %v589
      %1489 = vmatprep.subr.bf16.mxu0 0
      %1490 = vmatpush1.bf16.msra.mxu0 %v588
      %1491 = vmatprep.subr.bf16.mxu0 0
      %1492 = vmatpush1.bf16.msra.mxu0 %v587
      %1493 = vmatprep.subr.bf16.mxu0 0
      %1494 = vmatpush2.bf16.msra.mxu0 0
      %1495 = vmatprep.subr.bf16.mxu0 0
      %1496 = vmatpush2.bf16.msra.mxu0 0
      %1497 = vmatprep.subr.bf16.mxu0 0
      %1498 = vmatpush2.bf16.msra.mxu0 0
      %1499 = vmatprep.subr.bf16.mxu0 0
      %1500 = vmatpush2.bf16.msra.mxu0 0
      %1501 = vmatprep.subr.bf16.mxu0 0
      %1502 = vmatpush2.bf16.msra.mxu0 0
      %1503 = vmatprep.subr.bf16.mxu0 0
      %1504 = vmatpush2.bf16.msra.mxu0 0
      %1505 = vmatprep.subr.bf16.mxu0 0
      %1506 = vmatpush2.bf16.msra.mxu0 0
      %1507 = vmatprep.subr.bf16.mxu0 0
      %1508 = vmatpush2.bf16.msra.mxu0 0
      %1509 = vmatprep.mubr.bf16.mxu0 0
      %1510 = vmatmul.mubr.bf16.gmra.mxu0 %v775
      %v1511 = vpop.f32.mrf.mxu0
      %v1512 = vadd.f32 %v1471, %v1511
      %v1513 = vpop.f32.mrf.mxu0
      %v1514 = vpop.f32.mrf.mxu0
      %v1515 = vadd.f32 %v1474, %v1514
      %v1516 = vpop.f32.mrf.mxu0
      %1517 = vdwg.mxu0
      %1518 = vmatprep.subr.bf16.mxu0 0
      %1519 = vmatpush1.bf16.msra.mxu0 %v702
      %1520 = vmatprep.subr.bf16.mxu0 0
      %1521 = vmatpush1.bf16.msra.mxu0 %v701
      %1522 = vmatprep.subr.bf16.mxu0 0
      %1523 = vmatpush1.bf16.msra.mxu0 %v700
      %1524 = vmatprep.subr.bf16.mxu0 0
      %1525 = vmatpush1.bf16.msra.mxu0 %v699
      %1526 = vmatprep.subr.bf16.mxu0 0
      %1527 = vmatpush1.bf16.msra.mxu0 %v698
      %1528 = vmatprep.subr.bf16.mxu0 0
      %1529 = vmatpush1.bf16.msra.mxu0 %v697
      %1530 = vmatprep.subr.bf16.mxu0 0
      %1531 = vmatpush1.bf16.msra.mxu0 %v696
      %1532 = vmatprep.subr.bf16.mxu0 0
      %1533 = vmatpush1.bf16.msra.mxu0 %v695
      %1534 = vmatprep.subr.bf16.mxu0 0
      %1535 = vmatpush2.bf16.msra.mxu0 0
      %1536 = vmatprep.subr.bf16.mxu0 0
      %1537 = vmatpush2.bf16.msra.mxu0 0
      %1538 = vmatprep.subr.bf16.mxu0 0
      %1539 = vmatpush2.bf16.msra.mxu0 0
      %1540 = vmatprep.subr.bf16.mxu0 0
      %1541 = vmatpush2.bf16.msra.mxu0 0
      %1542 = vmatprep.subr.bf16.mxu0 0
      %1543 = vmatpush2.bf16.msra.mxu0 0
      %1544 = vmatprep.subr.bf16.mxu0 0
      %1545 = vmatpush2.bf16.msra.mxu0 0
      %1546 = vmatprep.subr.bf16.mxu0 0
      %1547 = vmatpush2.bf16.msra.mxu0 0
      %1548 = vmatprep.subr.bf16.mxu0 0
      %1549 = vmatpush2.bf16.msra.mxu0 0
      %1550 = vmatprep.mubr.bf16.mxu0 0
      %1551 = vmatmul.mubr.bf16.gmra.mxu0 %v1001
      %v1552 = vpop.f32.mrf.mxu0
      %v1553 = vadd.f32 0.0, %v1552
      %v1554 = vpop.f32.mrf.mxu0
      %v1555 = vpop.f32.mrf.mxu0
      %v1556 = vadd.f32 0.0, %v1555
      %v1557 = vpop.f32.mrf.mxu0
      %1558 = vdwg.mxu0
      %v1559 = vadd.f32 %v1512, %v1553
      %v1560 = vadd.f32 %v1515, %v1556
      %1561 = vmatprep.subr.bf16.mxu0 0
      %1562 = vmatpush1.bf16.msra.mxu0 %v816
      %1563 = vmatprep.subr.bf16.mxu0 0
      %1564 = vmatpush1.bf16.msra.mxu0 %v815
      %1565 = vmatprep.subr.bf16.mxu0 0
      %1566 = vmatpush1.bf16.msra.mxu0 %v814
      %1567 = vmatprep.subr.bf16.mxu0 0
      %1568 = vmatpush1.bf16.msra.mxu0 %v813
      %1569 = vmatprep.subr.bf16.mxu0 0
      %1570 = vmatpush1.bf16.msra.mxu0 %v812
      %1571 = vmatprep.subr.bf16.mxu0 0
      %1572 = vmatpush1.bf16.msra.mxu0 %v811
      %1573 = vmatprep.subr.bf16.mxu0 0
      %1574 = vmatpush1.bf16.msra.mxu0 %v810
      %1575 = vmatprep.subr.bf16.mxu0 0
      %1576 = vmatpush1.bf16.msra.mxu0 %v809
      %1577 = vmatprep.subr.bf16.mxu0 0
      %1578 = vmatpush2.bf16.msra.mxu0 0
      %1579 = vmatprep.subr.bf16.mxu0 0
      %1580 = vmatpush2.bf16.msra.mxu0 0
      %1581 = vmatprep.subr.bf16.mxu0 0
      %1582 = vmatpush2.bf16.msra.mxu0 0
      %1583 = vmatprep.subr.bf16.mxu0 0
      %1584 = vmatpush2.bf16.msra.mxu0 0
      %1585 = vmatprep.subr.bf16.mxu0 0
      %1586 = vmatpush2.bf16.msra.mxu0 0
      %1587 = vmatprep.subr.bf16.mxu0 0
      %1588 = vmatpush2.bf16.msra.mxu0 0
      %1589 = vmatprep.subr.bf16.mxu0 0
      %1590 = vmatpush2.bf16.msra.mxu0 0
      %1591 = vmatprep.subr.bf16.mxu0 0
      %1592 = vmatpush2.bf16.msra.mxu0 0
      %1593 = vmatprep.mubr.bf16.mxu0 0
      %1594 = vmatmul.mubr.bf16.gmra.mxu0 %v1115
      %v1595 = vpop.f32.mrf.mxu0
      %v1596 = vadd.f32 0.0, %v1595
      %v1597 = vpop.f32.mrf.mxu0
      %v1598 = vpop.f32.mrf.mxu0
      %v1599 = vadd.f32 0.0, %v1598
      %v1600 = vpop.f32.mrf.mxu0
      %1601 = vdwg.mxu0
      %v1602 = vadd.f32 %v1559, %v1596
      %v1603 = vadd.f32 %v1560, %v1599
      %1604 = vmatprep.subr.bf16.mxu0 0
      %1605 = vmatpush1.bf16.msra.mxu0 %v932
      %1606 = vmatprep.subr.bf16.mxu0 0
      %1607 = vmatpush1.bf16.msra.mxu0 %v931
      %1608 = vmatprep.subr.bf16.mxu0 0
      %1609 = vmatpush1.bf16.msra.mxu0 %v930
      %1610 = vmatprep.subr.bf16.mxu0 0
      %1611 = vmatpush1.bf16.msra.mxu0 %v929
      %1612 = vmatprep.subr.bf16.mxu0 0
      %1613 = vmatpush1.bf16.msra.mxu0 %v928
      %1614 = vmatprep.subr.bf16.mxu0 0
      %1615 = vmatpush1.bf16.msra.mxu0 %v927
      %1616 = vmatprep.subr.bf16.mxu0 0
      %1617 = vmatpush1.bf16.msra.mxu0 %v926
      %1618 = vmatprep.subr.bf16.mxu0 0
      %1619 = vmatpush1.bf16.msra.mxu0 %v925
      %1620 = vmatprep.subr.bf16.mxu0 0
      %1621 = vmatpush2.bf16.msra.mxu0 0
      %1622 = vmatprep.subr.bf16.mxu0 0
      %1623 = vmatpush2.bf16.msra.mxu0 0
      %1624 = vmatprep.subr.bf16.mxu0 0
      %1625 = vmatpush2.bf16.msra.mxu0 0
      %1626 = vmatprep.subr.bf16.mxu0 0
      %1627 = vmatpush2.bf16.msra.mxu0 0
      %1628 = vmatprep.subr.bf16.mxu0 0
      %1629 = vmatpush2.bf16.msra.mxu0 0
      %1630 = vmatprep.subr.bf16.mxu0 0
      %1631 = vmatpush2.bf16.msra.mxu0 0
      %1632 = vmatprep.subr.bf16.mxu0 0
      %1633 = vmatpush2.bf16.msra.mxu0 0
      %1634 = vmatprep.subr.bf16.mxu0 0
      %1635 = vmatpush2.bf16.msra.mxu0 0
      %1636 = vmatprep.mubr.bf16.mxu0 0
      %1637 = vmatmul.mubr.bf16.gmra.mxu0 %v1231
      %v1638 = vpop.f32.mrf.mxu0
      %v1639 = vadd.f32 0.0, %v1638
      %v1640 = vpop.f32.mrf.mxu0
      %v1641 = vpop.f32.mrf.mxu0
      %v1642 = vadd.f32 0.0, %v1641
      %v1643 = vpop.f32.mrf.mxu0
      %1644 = vdwg.mxu0
      %v1645 = vadd.f32 %v1602, %v1639
      %v1646 = vadd.f32 %v1603, %v1642
      %1647 = vmatprep.subr.bf16.mxu0 0
      %1648 = vmatpush1.bf16.msra.mxu0 %v1042
      %1649 = vmatprep.subr.bf16.mxu0 0
      %1650 = vmatpush1.bf16.msra.mxu0 %v1041
      %1651 = vmatprep.subr.bf16.mxu0 0
      %1652 = vmatpush1.bf16.msra.mxu0 %v1040
      %1653 = vmatprep.subr.bf16.mxu0 0
      %1654 = vmatpush1.bf16.msra.mxu0 %v1039
      %1655 = vmatprep.subr.bf16.mxu0 0
      %1656 = vmatpush1.bf16.msra.mxu0 %v1038
      %1657 = vmatprep.subr.bf16.mxu0 0
      %1658 = vmatpush1.bf16.msra.mxu0 %v1037
      %1659 = vmatprep.subr.bf16.mxu0 0
      %1660 = vmatpush1.bf16.msra.mxu0 %v1036
      %1661 = vmatprep.subr.bf16.mxu0 0
      %1662 = vmatpush1.bf16.msra.mxu0 %v1035
      %1663 = vmatprep.subr.bf16.mxu0 0
      %1664 = vmatpush2.bf16.msra.mxu0 0
      %1665 = vmatprep.subr.bf16.mxu0 0
      %1666 = vmatpush2.bf16.msra.mxu0 0
      %1667 = vmatprep.subr.bf16.mxu0 0
      %1668 = vmatpush2.bf16.msra.mxu0 0
      %1669 = vmatprep.subr.bf16.mxu0 0
      %1670 = vmatpush2.bf16.msra.mxu0 0
      %1671 = vmatprep.subr.bf16.mxu0 0
      %1672 = vmatpush2.bf16.msra.mxu0 0
      %1673 = vmatprep.subr.bf16.mxu0 0
      %1674 = vmatpush2.bf16.msra.mxu0 0
      %1675 = vmatprep.subr.bf16.mxu0 0
      %1676 = vmatpush2.bf16.msra.mxu0 0
      %1677 = vmatprep.subr.bf16.mxu0 0
      %1678 = vmatpush2.bf16.msra.mxu0 0
      %1679 = vmatprep.mubr.bf16.mxu0 0
      %1680 = vmatmul.mubr.bf16.gmra.mxu0 %v1341
      %v1681 = vpop.f32.mrf.mxu0
      %v1682 = vadd.f32 0.0, %v1681
      %v1683 = vpop.f32.mrf.mxu0
      %v1684 = vpop.f32.mrf.mxu0
      %v1685 = vadd.f32 0.0, %v1684
      %v1686 = vpop.f32.mrf.mxu0
      %1687 = vdwg.mxu0
      %v1688 = vadd.f32 %v1645, %v1682
      %v1689 = vadd.f32 %v1646, %v1685
      %v1692 = vunpack.c.l.b16 %v417
      %v1693 = vunpack.c.l.b16 %v418
      %v1694 = vpack.c.b16 %v1693, %v1692
      %1696 = vmatprep.subr.bf16.mxu0 0
      %1697 = vmatpush1.bf16.msra.mxu0 %v1156
      %1698 = vmatprep.subr.bf16.mxu0 0
      %1699 = vmatpush1.bf16.msra.mxu0 %v1155
      %1700 = vmatprep.subr.bf16.mxu0 0
      %1701 = vmatpush1.bf16.msra.mxu0 %v1154
      %1702 = vmatprep.subr.bf16.mxu0 0
      %1703 = vmatpush1.bf16.msra.mxu0 %v1153
      %1704 = vmatprep.subr.bf16.mxu0 0
      %1705 = vmatpush1.bf16.msra.mxu0 %v1152
      %1706 = vmatprep.subr.bf16.mxu0 0
      %1707 = vmatpush1.bf16.msra.mxu0 %v1151
      %1708 = vmatprep.subr.bf16.mxu0 0
      %1709 = vmatpush1.bf16.msra.mxu0 %v1150
      %1710 = vmatprep.subr.bf16.mxu0 0
      %1711 = vmatpush1.bf16.msra.mxu0 %v1149
      %1712 = vmatprep.subr.bf16.mxu0 0
      %1713 = vmatpush2.bf16.msra.mxu0 0
      %1714 = vmatprep.subr.bf16.mxu0 0
      %1715 = vmatpush2.bf16.msra.mxu0 0
      %1716 = vmatprep.subr.bf16.mxu0 0
      %1717 = vmatpush2.bf16.msra.mxu0 0
      %1718 = vmatprep.subr.bf16.mxu0 0
      %1719 = vmatpush2.bf16.msra.mxu0 0
      %1720 = vmatprep.subr.bf16.mxu0 0
      %1721 = vmatpush2.bf16.msra.mxu0 0
      %1722 = vmatprep.subr.bf16.mxu0 0
      %1723 = vmatpush2.bf16.msra.mxu0 0
      %1724 = vmatprep.subr.bf16.mxu0 0
      %1725 = vmatpush2.bf16.msra.mxu0 0
      %1726 = vmatprep.subr.bf16.mxu0 0
      %1727 = vmatpush2.bf16.msra.mxu0 0
      %1728 = vmatprep.mubr.bf16.mxu0 0
      %1729 = vmatmul.mubr.bf16.gmra.mxu0 %v1694
      %v1730 = vpop.f32.mrf.mxu0
      %v1731 = vadd.f32 0.0, %v1730
      %v1732 = vpop.f32.mrf.mxu0
      %v1733 = vpop.f32.mrf.mxu0
      %v1734 = vadd.f32 0.0, %v1733
      %v1735 = vpop.f32.mrf.mxu0
      %1736 = vdwg.mxu0
      %v1737 = vadd.f32 %v1688, %v1731
      %v1738 = vadd.f32 %v1689, %v1734
      %v1740 = vshrl.u32 %v1694, 16
      %v1742 = vshll.u32 %v1694, 16
      %v1744 = vrot.slane %v1742, 1
      %v1745 = vor.u32 %v1740, %v1744
      %1747 = vmatprep.subr.bf16.mxu0 0
      %1748 = vmatpush1.bf16.msra.mxu0 %v1272
      %1749 = vmatprep.subr.bf16.mxu0 0
      %1750 = vmatpush1.bf16.msra.mxu0 %v1271
      %1751 = vmatprep.subr.bf16.mxu0 0
      %1752 = vmatpush1.bf16.msra.mxu0 %v1270
      %1753 = vmatprep.subr.bf16.mxu0 0
      %1754 = vmatpush1.bf16.msra.mxu0 %v1269
      %1755 = vmatprep.subr.bf16.mxu0 0
      %1756 = vmatpush1.bf16.msra.mxu0 %v1268
      %1757 = vmatprep.subr.bf16.mxu0 0
      %1758 = vmatpush1.bf16.msra.mxu0 %v1267
      %1759 = vmatprep.subr.bf16.mxu0 0
      %1760 = vmatpush1.bf16.msra.mxu0 %v1266
      %1761 = vmatprep.subr.bf16.mxu0 0
      %1762 = vmatpush1.bf16.msra.mxu0 %v1265
      %1763 = vmatprep.subr.bf16.mxu0 0
      %1764 = vmatpush2.bf16.msra.mxu0 0
      %1765 = vmatprep.subr.bf16.mxu0 0
      %1766 = vmatpush2.bf16.msra.mxu0 0
      %1767 = vmatprep.subr.bf16.mxu0 0
      %1768 = vmatpush2.bf16.msra.mxu0 0
      %1769 = vmatprep.subr.bf16.mxu0 0
      %1770 = vmatpush2.bf16.msra.mxu0 0
      %1771 = vmatprep.subr.bf16.mxu0 0
      %1772 = vmatpush2.bf16.msra.mxu0 0
      %1773 = vmatprep.subr.bf16.mxu0 0
      %1774 = vmatpush2.bf16.msra.mxu0 0
      %1775 = vmatprep.subr.bf16.mxu0 0
      %1776 = vmatpush2.bf16.msra.mxu0 0
      %1777 = vmatprep.subr.bf16.mxu0 0
      %1778 = vmatpush2.bf16.msra.mxu0 0
      %1779 = vmatprep.mubr.bf16.mxu0 0
      %1780 = vmatmul.mubr.bf16.gmra.mxu0 %v1745
      %v1781 = vpop.f32.mrf.mxu0
      %v1782 = vadd.f32 0.0, %v1781
      %v1783 = vpop.f32.mrf.mxu0
      %v1784 = vpop.f32.mrf.mxu0
      %v1785 = vadd.f32 0.0, %v1784
      %v1786 = vpop.f32.mrf.mxu0
      %1787 = vdwg.mxu0
      %v1788 = vadd.f32 %v1737, %v1782
      %v1789 = vadd.f32 %v1738, %v1785
      %v1790 = vrot.slane %v1694, 1
      %1792 = vmatprep.subr.bf16.mxu0 0
      %1793 = vmatpush1.bf16.msra.mxu0 %v1382
      %1794 = vmatprep.subr.bf16.mxu0 0
      %1795 = vmatpush1.bf16.msra.mxu0 %v1381
      %1796 = vmatprep.subr.bf16.mxu0 0
      %1797 = vmatpush1.bf16.msra.mxu0 %v1380
      %1798 = vmatprep.subr.bf16.mxu0 0
      %1799 = vmatpush1.bf16.msra.mxu0 %v1379
      %1800 = vmatprep.subr.bf16.mxu0 0
      %1801 = vmatpush1.bf16.msra.mxu0 %v1378
      %1802 = vmatprep.subr.bf16.mxu0 0
      %1803 = vmatpush1.bf16.msra.mxu0 %v1377
      %1804 = vmatprep.subr.bf16.mxu0 0
      %1805 = vmatpush1.bf16.msra.mxu0 %v1376
      %1806 = vmatprep.subr.bf16.mxu0 0
      %1807 = vmatpush1.bf16.msra.mxu0 %v1375
      %1808 = vmatprep.subr.bf16.mxu0 0
      %1809 = vmatpush2.bf16.msra.mxu0 0
      %1810 = vmatprep.subr.bf16.mxu0 0
      %1811 = vmatpush2.bf16.msra.mxu0 0
      %1812 = vmatprep.subr.bf16.mxu0 0
      %1813 = vmatpush2.bf16.msra.mxu0 0
      %1814 = vmatprep.subr.bf16.mxu0 0
      %1815 = vmatpush2.bf16.msra.mxu0 0
      %1816 = vmatprep.subr.bf16.mxu0 0
      %1817 = vmatpush2.bf16.msra.mxu0 0
      %1818 = vmatprep.subr.bf16.mxu0 0
      %1819 = vmatpush2.bf16.msra.mxu0 0
      %1820 = vmatprep.subr.bf16.mxu0 0
      %1821 = vmatpush2.bf16.msra.mxu0 0
      %1822 = vmatprep.subr.bf16.mxu0 0
      %1823 = vmatpush2.bf16.msra.mxu0 0
      %1824 = vmatprep.mubr.bf16.mxu0 0
      %1825 = vmatmul.mubr.bf16.gmra.mxu0 %v1790
      %v1826 = vpop.f32.mrf.mxu0
      %v1827 = vadd.f32 0.0, %v1826
      %v1828 = vpop.f32.mrf.mxu0
      %v1829 = vpop.f32.mrf.mxu0
      %v1830 = vadd.f32 0.0, %v1829
      %v1831 = vpop.f32.mrf.mxu0
      %1832 = vdwg.mxu0
      %v1833 = vadd.f32 %v1788, %v1827
      %v1834 = vadd.f32 %v1789, %v1830
      %v1835 = vmax.f32 %v1833, 0.0
      %v1836 = vmax.f32 %v1834, 0.0
      %v1837 = vmax.f32 %v1434, %v1835
      %v1838 = vmax.f32 %v1435, %v1836
      %v1840 = vrot.slane %v1837, 1
      %v1842 = vmax.f32 %v1837, %v1840
      %v1843 = vpack.c.bf16 %v1842, %v1842
      %vm1844 = vcmask 1040384
      %vm1845 = vsmask.f32 256
      %vm1846 = vmand %vm1844, %vm1845
      %v1847 = vld [vmem:[%s409] sm:$0x1]
      %v1848 = vsel %vm1846, %v1843, %v1847
      %1849 = vst [vmem:[%s409] sm:$0x1] %v1848
      %v1851 = vunpack.c.l.b16 %v1843
      %v1852 = vpack.c.b16 %v1851, %v1851
      %v1854 = vshll.u32 %v1852, 16
      %v1856 = vrot.slane %v1854, 5
      %v1857 = vrot.slane %v1856, 4
      %vm1859 = vsmask.f32 7938
      %vm1860 = vmand %vm1844, %vm1859
      %v1861 = vld [vmem:[%s409] sm:$0x1]
      %v1862 = vsel %vm1860, %v1857, %v1861
      %1863 = vst [vmem:[%s409] sm:$0x1] %v1862
      %v1864 = vrot.slane %v1852, 5
      %v1865 = vrot.slane %v1864, 4
      %vm1867 = vcmask 1041409
      %vm1868 = vsmask.f32 1280
      %vm1869 = vmand %vm1867, %vm1868
      %v1870 = vld [vmem:[%s409] sm:$0x2]
      %v1871 = vsel %vm1869, %v1865, %v1870
      %1872 = vst [vmem:[%s409] sm:$0x2] %v1871
      %v1873 = vrot.slane %v1854, 6
      %v1874 = vrot.slane %v1873, 4
      %vm1876 = vsmask.f32 7942
      %vm1877 = vmand %vm1867, %vm1876
      %v1878 = vld [vmem:[%s409] sm:$0x2]
      %v1879 = vsel %vm1877, %v1874, %v1878
      %1880 = vst [vmem:[%s409] sm:$0x2] %v1879
      %v1882 = vrot.slane %v1838, 1
      %v1884 = vmax.f32 %v1838, %v1882
      %v1885 = vpack.c.bf16 %v1884, %v1884
      %v1887 = vunpack.c.l.b16 %v1885
      %v1888 = vpack.c.b16 %v1887, %v1887
      %v1889 = vrot.slane %v1888, 6
      %vm1891 = vcmask 1042434
      %vm1892 = vsmask.f32 2304
      %vm1893 = vmand %vm1891, %vm1892
      %v1894 = vld [vmem:[%s409] sm:$0x4]
      %v1895 = vsel %vm1893, %v1889, %v1894
      %1896 = vst [vmem:[%s409] sm:$0x4] %v1895
      %v1898 = vshll.u32 %v1888, 16
      %v1900 = vrot.slane %v1898, 7
      %vm1902 = vsmask.f32 7946
      %vm1903 = vmand %vm1891, %vm1902
      %v1904 = vld [vmem:[%s409] sm:$0x4]
      %v1905 = vsel %vm1903, %v1900, %v1904
      %1906 = vst [vmem:[%s409] sm:$0x4] %v1905
      %p1907 = scmp.lt.s32.totalorder %s20, 1
      %s1908 = scalar_select %p1907, %s20, 1
      %p1909 = scmp.lt.s32.totalorder %s21, 5
      %s1910 = scalar_select %p1909, %s21, 5
      %s1911 = smul.addr %s1908, 6
      %s1912 = sadd.s32 %s1910, %s1911
      %s1913 = smul.addr %s1912, 4
      %s1914 = scalar_lea.vmem %s5, %s1913
      // Predicated region
      $region41: #{cnn_forward.7} parent=39 // pred_check
        %p1915 = pneg %p195
      $region42: #{cnn_forward.7} parent=39 // pred_check_branch
        %1917 = sbr.rel (%p1915) target = $region44
      $region43: #{cnn_forward.7} parent=39 // pred_region
        _
      $region44: #{cnn_forward.7} parent=39 // pred_fallthru
        _
    $region40: #{cnn_forward.7} parent=5 // pred_fallthru
      _
    %p1918 = scmp.le.s32.totalorder 2, %s11
    // Predicated region
    $region45: #{cnn_forward.7} parent=5 // pred_check
      %p1919 = pneg %p1918
    $region46: #{cnn_forward.7} parent=5 // pred_check_branch
      %1921 = sbr.rel (%p1919) target = $region48
    $region47: #{cnn_forward.7} parent=5 // pred_region
      %s1922 = ssub.s32 %s11, 2
      // Predicated region
      $region49: #{cnn_forward.7} parent=47 // pred_check
        %p1923 = pneg %p201
      $region50: #{cnn_forward.7} parent=47 // pred_check_branch
        %1925 = sbr.rel (%p1923) target = $region52
      $region51: #{cnn_forward.7} parent=47 // pred_region
        %p1926 = scmp.lt.s32.totalorder %s22, 1
        %s1927 = scalar_select %p1926, %s22, 1
        %p1928 = scmp.lt.s32.totalorder %s23, 5
        %s1929 = scalar_select %p1928, %s23, 5
        %s1930 = smul.addr %s1927, 6
        %s1931 = sadd.s32 %s1929, %s1930
        %s1932 = smul.addr %s1931, 4
        %s1933 = scalar_lea.vmem %s5, %s1932
      $region52: #{cnn_forward.7} parent=47 // pred_fallthru
        _
    $region48: #{cnn_forward.7} parent=5 // pred_fallthru
      _
  $region6: #{cnn_forward.7} parent=0 // loop_footer
    %s15 = sadd.s32 1, %s11
  $region7: #{cnn_forward.7} parent=0 // loop_footer_branch
    %10 = sbr.rel target = $region3
  $region8: #{cnn_forward.7} parent=0 // loop_exit
    _

// kernel: cnn_forward.8
$region0: #{cnn_forward.8}
  #allocation0 [shape = 'u32[]', space=smem, size = 0x4, offset = 0x4, fixed_abs, tag = 'smem constant byte address 0x4 - core index']
  #allocation1 [shape = 'u32[144,128]{1,0:T(1,128)}', space=vmem, size = 0x12000, scoped, tag = 'internal scratch']
  %s0 = inlined_call_operand.vmem [shape: bf16[2,6,6,128], index: 0, kind: input, shape index: {}, may-alias: {0,1,2,3}]
  %s1 = inlined_call_operand.vmem [shape: bf16[2,6,6,128], index: 1, kind: input, shape index: {}, may-alias: {0,1,2,3}]
  %s2 = inlined_call_operand.vmem [shape: bf16[2,6,6,128], index: 2, kind: input, shape index: {}, may-alias: {0,1,2,3}]
  %s3 = inlined_call_operand.vmem [shape: bf16[2,6,6,128], index: 3, kind: input, shape index: {}, may-alias: {0,1,2,3}]
  %s4 = inlined_call_operand.vmem [shape: bf16[9,128,256], index: 4, kind: input, shape index: {}]
  %s5 = inlined_call_operand.vmem [shape: bf16[2,2,2,256], index: 5, kind: output, shape index: {}]
  %s6 = sld [smem:[#allocation0]]
  $region53: #{cnn_forward.8} parent=0
    _
  %s8 = ssub.s32 1, %s6
  %s9 = scalar_select 0, %s8, %s6
  loop: start=0, step=1, limit=6
  $region2: #{cnn_forward.8} parent=0 // loop_pre_header
    _
  $region3: #{cnn_forward.8} parent=0 // loop_header
    %s11 = sphi 0, %s15
    %p12 = scmp.ge.s32.totalorder %s11, 6
    %s18 = sphi 0, %s30
    %s19 = sphi 0, %s26
    %s20 = sphi 0, %s18
    %s21 = sphi 0, %s19
    %s22 = sphi 0, %s20
    %s23 = sphi 0, %s21
    %s37 = sphi 0, %s39
    %s40 = sphi 0, %s37
    %s41 = sphi 0, %s40
    %s57 = sphi 0, %s41
    %s69 = sphi 0, %s71
    %s72 = sphi 0, %s69
    %s73 = sphi 0, %s72
    %s89 = sphi 0, %s73
    %s101 = sphi 0, %s103
    %s104 = sphi 0, %s101
    %s105 = sphi 0, %s104
    %s121 = sphi 0, %s105
    %s133 = sphi 0, %s135
    %s136 = sphi 0, %s133
    %s137 = sphi 0, %s136
    %s153 = sphi 0, %s137
    %s157 = sphi 0, %s157
    %s159 = sphi 0, %s157
    %s160 = sphi 0, %s159
    %s174 = sphi 0, %s160
    %s182 = sphi 0, %s184
    %s185 = sphi 0, %s182
    %s186 = sphi 0, %s185
    %s202 = sphi 0, %s186
  $region4: #{cnn_forward.8} parent=0 // loop_header_branch
    %14 = sbr.rel (%p12) target = $region8
  $region5: #{cnn_forward.8} parent=0 // loop_body
    %s16 = ssub.s32 %s11, 1
    %s17 = ssub.s32 %s11, 2
    %s24 = sadd.s32 1, %s19
    %p25 = scmp.ge.s32.totalorder %s24, 2
    %s26 = scalar_select %p25, 0, %s24
    %s27 = sadd.s32 1, %s18
    %s28 = scalar_select %p25, %s27, %s18
    %p29 = scmp.ge.s32.totalorder %s28, 2
    %s30 = scalar_select %p29, 0, %s28
    %s31 = smul.u32 %s19, 2
    %s32 = smul.u32 %s26, 2
    %s33 = ssub.s32 %s18, %s30
    %s34 = ssub.s32 %s31, %s32
    %s35 = sor.u32 %s33, %s34
    %p36 = scmp.eq.s32.totalorder %s35, 0
    %s38 = sadd.s32 %s37, 1
    %s39 = scalar_select %p36, %s37, %s38
    %p42 = pneg %p36
    %p43 = scmp.eq.s32.totalorder %s11, 3
    %p44 = por %p42, %p43
    %p45 = scmp.ne.s32.totalorder %s37, %s40
    %p46 = scmp.eq.s32.totalorder %s11, 0
    %p47 = por %p45, %p46
    %p48 = scmp.ne.s32.totalorder %s37, %s40
    %p49 = scmp.eq.s32.totalorder %s16, 3
    %p50 = por %p48, %p49
    %p51 = scmp.ne.s32.totalorder %s40, %s41
    %p52 = scmp.eq.s32.totalorder %s16, 0
    %p53 = por %p51, %p52
    %p54 = scmp.ne.s32.totalorder %s40, %s41
    %p55 = scmp.eq.s32.totalorder %s17, 3
    %p56 = por %p54, %p55
    %p58 = scmp.ne.s32.totalorder %s41, %s57
    %p59 = scmp.eq.s32.totalorder %s17, 0
    %p60 = por %p58, %p59
    %s61 = smul.u32 %s19, 2
    %s62 = sadd.s32 %s61, 1
    %s63 = smul.u32 %s26, 2
    %s64 = sadd.s32 %s63, 1
    %s65 = ssub.s32 %s18, %s30
    %s66 = ssub.s32 %s62, %s64
    %s67 = sor.u32 %s65, %s66
    %p68 = scmp.eq.s32.totalorder %s67, 0
    %s70 = sadd.s32 %s69, 1
    %s71 = scalar_select %p68, %s69, %s70
    %p74 = pneg %p68
    %p75 = scmp.eq.s32.totalorder %s11, 3
    %p76 = por %p74, %p75
    %p77 = scmp.ne.s32.totalorder %s69, %s72
    %p78 = scmp.eq.s32.totalorder %s11, 0
    %p79 = por %p77, %p78
    %p80 = scmp.ne.s32.totalorder %s69, %s72
    %p81 = scmp.eq.s32.totalorder %s16, 3
    %p82 = por %p80, %p81
    %p83 = scmp.ne.s32.totalorder %s72, %s73
    %p84 = scmp.eq.s32.totalorder %s16, 0
    %p85 = por %p83, %p84
    %p86 = scmp.ne.s32.totalorder %s72, %s73
    %p87 = scmp.eq.s32.totalorder %s17, 3
    %p88 = por %p86, %p87
    %p90 = scmp.ne.s32.totalorder %s73, %s89
    %p91 = scmp.eq.s32.totalorder %s17, 0
    %p92 = por %p90, %p91
    %s93 = smul.u32 %s19, 2
    %s94 = sadd.s32 %s93, 2
    %s95 = smul.u32 %s26, 2
    %s96 = sadd.s32 %s95, 2
    %s97 = ssub.s32 %s18, %s30
    %s98 = ssub.s32 %s94, %s96
    %s99 = sor.u32 %s97, %s98
    %p100 = scmp.eq.s32.totalorder %s99, 0
    %s102 = sadd.s32 %s101, 1
    %s103 = scalar_select %p100, %s101, %s102
    %p106 = pneg %p100
    %p107 = scmp.eq.s32.totalorder %s11, 3
    %p108 = por %p106, %p107
    %p109 = scmp.ne.s32.totalorder %s101, %s104
    %p110 = scmp.eq.s32.totalorder %s11, 0
    %p111 = por %p109, %p110
    %p112 = scmp.ne.s32.totalorder %s101, %s104
    %p113 = scmp.eq.s32.totalorder %s16, 3
    %p114 = por %p112, %p113
    %p115 = scmp.ne.s32.totalorder %s104, %s105
    %p116 = scmp.eq.s32.totalorder %s16, 0
    %p117 = por %p115, %p116
    %p118 = scmp.ne.s32.totalorder %s104, %s105
    %p119 = scmp.eq.s32.totalorder %s17, 3
    %p120 = por %p118, %p119
    %p122 = scmp.ne.s32.totalorder %s105, %s121
    %p123 = scmp.eq.s32.totalorder %s17, 0
    %p124 = por %p122, %p123
    %s125 = smul.u32 %s19, 2
    %s126 = sadd.s32 %s125, 3
    %s127 = smul.u32 %s26, 2
    %s128 = sadd.s32 %s127, 3
    %s129 = ssub.s32 %s18, %s30
    %s130 = ssub.s32 %s126, %s128
    %s131 = sor.u32 %s129, %s130
    %p132 = scmp.eq.s32.totalorder %s131, 0
    %s134 = sadd.s32 %s133, 1
    %s135 = scalar_select %p132, %s133, %s134
    %p138 = pneg %p132
    %p139 = scmp.eq.s32.totalorder %s11, 3
    %p140 = por %p138, %p139
    %p141 = scmp.ne.s32.totalorder %s133, %s136
    %p142 = scmp.eq.s32.totalorder %s11, 0
    %p143 = por %p141, %p142
    %p144 = scmp.ne.s32.totalorder %s133, %s136
    %p145 = scmp.eq.s32.totalorder %s16, 3
    %p146 = por %p144, %p145
    %p147 = scmp.ne.s32.totalorder %s136, %s137
    %p148 = scmp.eq.s32.totalorder %s16, 0
    %p149 = por %p147, %p148
    %p150 = scmp.ne.s32.totalorder %s136, %s137
    %p151 = scmp.eq.s32.totalorder %s17, 3
    %p152 = por %p150, %p151
    %p154 = scmp.ne.s32.totalorder %s137, %s153
    %p155 = scmp.eq.s32.totalorder %s17, 0
    %p156 = por %p154, %p155
    %s158 = sadd.s32 %s157, 1
    %p161 = scmp.eq.s32.totalorder %s11, 3
    %p162 = scmp.ne.s32.totalorder %s157, %s159
    %p163 = scmp.eq.s32.totalorder %s11, 0
    %p164 = por %p162, %p163
    %p165 = scmp.ne.s32.totalorder %s157, %s159
    %p166 = scmp.eq.s32.totalorder %s16, 3
    %p167 = por %p165, %p166
    %p168 = scmp.ne.s32.totalorder %s159, %s160
    %p169 = scmp.eq.s32.totalorder %s16, 0
    %p170 = por %p168, %p169
    %p171 = scmp.ne.s32.totalorder %s159, %s160
    %p172 = scmp.eq.s32.totalorder %s17, 3
    %p173 = por %p171, %p172
    %p175 = scmp.ne.s32.totalorder %s160, %s174
    %p176 = scmp.eq.s32.totalorder %s17, 0
    %p177 = por %p175, %p176
    %s178 = ssub.s32 %s18, %s30
    %s179 = ssub.s32 %s19, %s26
    %s180 = sor.u32 %s178, %s179
    %p181 = scmp.eq.s32.totalorder %s180, 0
    %s183 = sadd.s32 %s182, 1
    %s184 = scalar_select %p181, %s182, %s183
    %p187 = pneg %p181
    %p188 = scmp.eq.s32.totalorder %s11, 3
    %p189 = por %p187, %p188
    %p190 = scmp.ne.s32.totalorder %s182, %s185
    %p191 = scmp.eq.s32.totalorder %s11, 0
    %p192 = por %p190, %p191
    %p193 = scmp.ne.s32.totalorder %s182, %s185
    %p194 = scmp.eq.s32.totalorder %s16, 3
    %p195 = por %p193, %p194
    %p196 = scmp.ne.s32.totalorder %s185, %s186
    %p197 = scmp.eq.s32.totalorder %s16, 0
    %p198 = por %p196, %p197
    %p199 = scmp.ne.s32.totalorder %s185, %s186
    %p200 = scmp.eq.s32.totalorder %s17, 3
    %p201 = por %p199, %p200
    %p203 = scmp.ne.s32.totalorder %s186, %s202
    %p204 = scmp.eq.s32.totalorder %s17, 0
    %p205 = por %p203, %p204
    %p206 = scmp.le.s32.totalorder 1, %s11
    %p207 = scmp.lt.s32.totalorder %s11, 5
    %p208 = pnand %p206, %p207
    %p209 = pneg %p208
    // Predicated region
    $region9: #{cnn_forward.8} parent=5 // pred_check
      _
    $region10: #{cnn_forward.8} parent=5 // pred_check_branch
      %211 = sbr.rel (%p208) target = $region12
    $region11: #{cnn_forward.8} parent=5 // pred_region
      %s212 = ssub.s32 %s11, 1
      // Predicated region
      $region13: #{cnn_forward.8} parent=11 // pred_check
        %p213 = pneg %p170
      $region14: #{cnn_forward.8} parent=11 // pred_check_branch
        %215 = sbr.rel (%p213) target = $region16
      $region15: #{cnn_forward.8} parent=11 // pred_region
        _
      $region16: #{cnn_forward.8} parent=11 // pred_fallthru
        _
    $region12: #{cnn_forward.8} parent=5 // pred_fallthru
      _
    %p216 = scmp.lt.s32.totalorder %s11, 4
    // Predicated region
    $region17: #{cnn_forward.8} parent=5 // pred_check
      %p217 = pneg %p216
    $region18: #{cnn_forward.8} parent=5 // pred_check_branch
      %219 = sbr.rel (%p217) target = $region20
    $region19: #{cnn_forward.8} parent=5 // pred_region
      // Predicated region
      $region21: #{cnn_forward.8} parent=19 // pred_check
        %p220 = pneg %p47
      $region22: #{cnn_forward.8} parent=19 // pred_check_branch
        %222 = sbr.rel (%p220) target = $region24
      $region23: #{cnn_forward.8} parent=19 // pred_region
        %s223 = smul.u32 %s19, 2
        %p224 = scmp.lt.s32.totalorder %s18, 1
        %s225 = scalar_select %p224, %s18, 1
        %p226 = scmp.lt.s32.totalorder %s223, 5
        %s227 = scalar_select %p226, %s223, 5
        %s228 = smul.addr %s225, 6
        %s229 = sadd.s32 %s227, %s228
        %s230 = smul.addr %s229, 4
        %s231 = scalar_lea.vmem %s0, %s230
        %s232 = smul.u32 %s19, 2
      $region24: #{cnn_forward.8} parent=19 // pred_fallthru
        _
      // Predicated region
      $region25: #{cnn_forward.8} parent=19 // pred_check
        %p233 = pneg %p79
      $region26: #{cnn_forward.8} parent=19 // pred_check_branch
        %235 = sbr.rel (%p233) target = $region28
      $region27: #{cnn_forward.8} parent=19 // pred_region
        %s236 = smul.u32 %s19, 2
        %s237 = sadd.s32 %s236, 1
        %p238 = scmp.lt.s32.totalorder %s18, 1
        %s239 = scalar_select %p238, %s18, 1
        %p240 = scmp.lt.s32.totalorder %s237, 5
        %s241 = scalar_select %p240, %s237, 5
        %s242 = smul.addr %s239, 6
        %s243 = sadd.s32 %s241, %s242
        %s244 = smul.addr %s243, 4
        %s245 = scalar_lea.vmem %s1, %s244
        %s246 = smul.u32 %s19, 2
        %s247 = sadd.s32 %s246, 1
      $region28: #{cnn_forward.8} parent=19 // pred_fallthru
        _
      // Predicated region
      $region29: #{cnn_forward.8} parent=19 // pred_check
        %p248 = pneg %p111
      $region30: #{cnn_forward.8} parent=19 // pred_check_branch
        %250 = sbr.rel (%p248) target = $region32
      $region31: #{cnn_forward.8} parent=19 // pred_region
        %s251 = smul.u32 %s19, 2
        %s252 = sadd.s32 %s251, 2
        %p253 = scmp.lt.s32.totalorder %s18, 1
        %s254 = scalar_select %p253, %s18, 1
        %p255 = scmp.lt.s32.totalorder %s252, 5
        %s256 = scalar_select %p255, %s252, 5
        %s257 = smul.addr %s254, 6
        %s258 = sadd.s32 %s256, %s257
        %s259 = smul.addr %s258, 4
        %s260 = scalar_lea.vmem %s2, %s259
        %s261 = smul.u32 %s19, 2
        %s262 = sadd.s32 %s261, 2
      $region32: #{cnn_forward.8} parent=19 // pred_fallthru
        _
      // Predicated region
      $region33: #{cnn_forward.8} parent=19 // pred_check
        %p263 = pneg %p143
      $region34: #{cnn_forward.8} parent=19 // pred_check_branch
        %265 = sbr.rel (%p263) target = $region36
      $region35: #{cnn_forward.8} parent=19 // pred_region
        %s266 = smul.u32 %s19, 2
        %s267 = sadd.s32 %s266, 3
        %p268 = scmp.lt.s32.totalorder %s18, 1
        %s269 = scalar_select %p268, %s18, 1
        %p270 = scmp.lt.s32.totalorder %s267, 5
        %s271 = scalar_select %p270, %s267, 5
        %s272 = smul.addr %s269, 6
        %s273 = sadd.s32 %s271, %s272
        %s274 = smul.addr %s273, 4
        %s275 = scalar_lea.vmem %s3, %s274
        %s276 = smul.u32 %s19, 2
        %s277 = sadd.s32 %s276, 3
      $region36: #{cnn_forward.8} parent=19 // pred_fallthru
        _
    $region20: #{cnn_forward.8} parent=5 // pred_fallthru
      _
    %p278 = scmp.le.s32.totalorder 1, %s11
    %p279 = scmp.lt.s32.totalorder %s11, 5
    %p280 = pnand %p278, %p279
    %p281 = pneg %p280
    // Predicated region
    $region37: #{cnn_forward.8} parent=5 // pred_check
      _
    $region38: #{cnn_forward.8} parent=5 // pred_check_branch
      %283 = sbr.rel (%p280) target = $region40
    $region39: #{cnn_forward.8} parent=5 // pred_region
      %s284 = ssub.s32 %s11, 1
      %s285 = smul.u32 %s21, 2
      %p286 = scmp.lt.s32.totalorder %s20, 1
      %s287 = scalar_select %p286, %s20, 1
      %p288 = scmp.lt.s32.totalorder %s285, 5
      %s289 = scalar_select %p288, %s285, 5
      %s290 = smul.addr %s287, 6
      %s291 = sadd.s32 %s289, %s290
      %s292 = smul.addr %s291, 4
      %s293 = scalar_lea.vmem %s0, %s292
      %p294 = pneg %p53
      %p295 = pneg %p50
      %s296 = smul.u32 %s21, 2
      %s297 = sadd.s32 %s296, 1
      %p298 = scmp.lt.s32.totalorder %s20, 1
      %s299 = scalar_select %p298, %s20, 1
      %p300 = scmp.lt.s32.totalorder %s297, 5
      %s301 = scalar_select %p300, %s297, 5
      %s302 = smul.addr %s299, 6
      %s303 = sadd.s32 %s301, %s302
      %s304 = smul.addr %s303, 4
      %s305 = scalar_lea.vmem %s1, %s304
      %p306 = pneg %p85
      %p307 = pneg %p82
      %s308 = smul.u32 %s21, 2
      %s309 = sadd.s32 %s308, 2
      %p310 = scmp.lt.s32.totalorder %s20, 1
      %s311 = scalar_select %p310, %s20, 1
      %p312 = scmp.lt.s32.totalorder %s309, 5
      %s313 = scalar_select %p312, %s309, 5
      %s314 = smul.addr %s311, 6
      %s315 = sadd.s32 %s313, %s314
      %s316 = smul.addr %s315, 4
      %s317 = scalar_lea.vmem %s2, %s316
      %p318 = pneg %p117
      %p319 = pneg %p114
      %s320 = smul.u32 %s21, 2
      %s321 = sadd.s32 %s320, 3
      %p322 = scmp.lt.s32.totalorder %s20, 1
      %s323 = scalar_select %p322, %s20, 1
      %p324 = scmp.lt.s32.totalorder %s321, 5
      %s325 = scalar_select %p324, %s321, 5
      %s326 = smul.addr %s323, 6
      %s327 = sadd.s32 %s325, %s326
      %s328 = smul.addr %s327, 4
      %s329 = scalar_lea.vmem %s3, %s328
      %p330 = pneg %p149
      %p331 = pneg %p146
      %p332 = pneg %p170
      %p333 = pneg %p167
      %p334 = pneg %p198
      %p335 = pneg %p195
      %p336 = scmp.lt.s32.totalorder %s20, 1
      %s337 = scalar_select %p336, %s20, 1
      %p338 = scmp.lt.s32.totalorder %s21, 1
      %s339 = scalar_select %p338, %s21, 1
      %s340 = smul.addr %s339, 2
      %s341 = smul.addr %s337, 4
      %s342 = sadd.s32 %s340, %s341
      %s343 = scalar_lea.vmem %s5, %s342
      %s344 = smul.u32 %s21, 2
      %p345 = scmp.lt.s32.totalorder %s20, 1
      %s346 = scalar_select %p345, %s20, 1
      %p347 = scmp.lt.s32.totalorder %s344, 5
      %s348 = scalar_select %p347, %s344, 5
      %s349 = smul.addr %s346, 6
      %s350 = sadd.s32 %s348, %s349
      %s351 = smul.addr %s350, 4
      %s352 = scalar_lea.vmem %s0, %s351
      %s353 = smul.u32 %s21, 2
      %s354 = smul.u32 %s21, 2
      %s355 = sadd.s32 %s354, 1
      %p356 = scmp.lt.s32.totalorder %s20, 1
      %s357 = scalar_select %p356, %s20, 1
      %p358 = scmp.lt.s32.totalorder %s355, 5
      %s359 = scalar_select %p358, %s355, 5
      %s360 = smul.addr %s357, 6
      %s361 = sadd.s32 %s359, %s360
      %s362 = smul.addr %s361, 4
      %s363 = scalar_lea.vmem %s1, %s362
      %s364 = smul.u32 %s21, 2
      %s365 = sadd.s32 %s364, 1
      %s366 = smul.u32 %s21, 2
      %s367 = sadd.s32 %s366, 2
      %p368 = scmp.lt.s32.totalorder %s20, 1
      %s369 = scalar_select %p368, %s20, 1
      %p370 = scmp.lt.s32.totalorder %s367, 5
      %s371 = scalar_select %p370, %s367, 5
      %s372 = smul.addr %s369, 6
      %s373 = sadd.s32 %s371, %s372
      %s374 = smul.addr %s373, 4
      %s375 = scalar_lea.vmem %s2, %s374
      %s376 = smul.u32 %s21, 2
      %s377 = sadd.s32 %s376, 2
      %s378 = smul.u32 %s21, 2
      %s379 = sadd.s32 %s378, 3
      %p380 = scmp.lt.s32.totalorder %s20, 1
      %s381 = scalar_select %p380, %s20, 1
      %p382 = scmp.lt.s32.totalorder %s379, 5
      %s383 = scalar_select %p382, %s379, 5
      %s384 = smul.addr %s381, 6
      %s385 = sadd.s32 %s383, %s384
      %s386 = smul.addr %s385, 4
      %s387 = scalar_lea.vmem %s3, %s386
      %s388 = smul.u32 %s21, 2
      %s389 = sadd.s32 %s388, 3
      %p390 = scmp.lt.s32.totalorder %s20, 1
      %s391 = scalar_select %p390, %s20, 1
      %p392 = scmp.lt.s32.totalorder %s21, 1
      %s393 = scalar_select %p392, %s21, 1
      %s394 = smul.addr %s393, 2
      %s395 = smul.addr %s391, 4
      %s396 = sadd.s32 %s394, %s395
      %s397 = scalar_lea.vmem %s5, %s396
      %v399 = vld [vmem:[%s352] sm:$0x7]
      %v400 = vld [vmem:[%s363] sm:$0x7]
      %v401 = vld [vmem:[%s375] sm:$0x7]
      %v402 = vld [vmem:[%s387] sm:$0x7]
      %v403 = vld [vmem:[%s4] sm:$0xff]
      %v404 = vld [vmem:[%s4 + $0x8] sm:$0xff]
      %v405 = vld [vmem:[%s4 + $0x10] sm:$0xff]
      %v406 = vld [vmem:[%s4 + $0x18] sm:$0xff]
      %v407 = vld [vmem:[%s4 + $0x20] sm:$0xff]
      %v408 = vld [vmem:[%s4 + $0x28] sm:$0xff]
      %v409 = vld [vmem:[%s4 + $0x30] sm:$0xff]
      %v410 = vld [vmem:[%s4 + $0x38] sm:$0xff]
      %v411 = vld [vmem:[%s4 + $0x40] sm:$0xff]
      %v412 = vld [vmem:[%s4 + $0x48] sm:$0xff]
      %v413 = vld [vmem:[%s4 + $0x50] sm:$0xff]
      %v414 = vld [vmem:[%s4 + $0x58] sm:$0xff]
      %v415 = vld [vmem:[%s4 + $0x60] sm:$0xff]
      %v416 = vld [vmem:[%s4 + $0x68] sm:$0xff]
      %v417 = vld [vmem:[%s4 + $0x70] sm:$0xff]
      %v418 = vld [vmem:[%s4 + $0x78] sm:$0xff]
      %s419 = scalar_lea.vmem %s4, 128
      %v420 = vld [vmem:[%s419] sm:$0xff]
      %v421 = vld [vmem:[%s419 + $0x8] sm:$0xff]
      %v422 = vld [vmem:[%s419 + $0x10] sm:$0xff]
      %v423 = vld [vmem:[%s419 + $0x18] sm:$0xff]
      %v424 = vld [vmem:[%s419 + $0x20] sm:$0xff]
      %v425 = vld [vmem:[%s419 + $0x28] sm:$0xff]
      %v426 = vld [vmem:[%s419 + $0x30] sm:$0xff]
      %v427 = vld [vmem:[%s419 + $0x38] sm:$0xff]
      %v428 = vld [vmem:[%s419 + $0x40] sm:$0xff]
      %v429 = vld [vmem:[%s419 + $0x48] sm:$0xff]
      %v430 = vld [vmem:[%s419 + $0x50] sm:$0xff]
      %v431 = vld [vmem:[%s419 + $0x58] sm:$0xff]
      %v432 = vld [vmem:[%s419 + $0x60] sm:$0xff]
      %v433 = vld [vmem:[%s419 + $0x68] sm:$0xff]
      %v434 = vld [vmem:[%s419 + $0x70] sm:$0xff]
      %v435 = vld [vmem:[%s419 + $0x78] sm:$0xff]
      %v437 = vunpack.c.l.b16 %v399
      %v438 = vpack.c.b16 %v437, %v437
      %v440 = vshrl.u32 %v438, 16
      %v442 = vshll.u32 %v438, 16
      %v444 = vrot.slane %v442, 1
      %v445 = vor.u32 %v440, %v444
      %v463 = vunpack.c.l.b16 %v420
      %v464 = vunpack.c.h.b16 %v420
      %v465 = vunpack.c.l.b16 %v421
      %v466 = vunpack.c.h.b16 %v421
      %v467 = vunpack.c.l.b16 %v422
      %v468 = vunpack.c.h.b16 %v422
      %v469 = vunpack.c.l.b16 %v423
      %v470 = vunpack.c.h.b16 %v423
      %v471 = vunpack.c.l.b16 %v424
      %v472 = vunpack.c.h.b16 %v424
      %v473 = vunpack.c.l.b16 %v425
      %v474 = vunpack.c.h.b16 %v425
      %v475 = vunpack.c.l.b16 %v426
      %v476 = vunpack.c.h.b16 %v426
      %v477 = vunpack.c.l.b16 %v427
      %v478 = vunpack.c.h.b16 %v427
      %v479 = vunpack.c.l.b16 %v428
      %v480 = vunpack.c.h.b16 %v428
      %v481 = vunpack.c.l.b16 %v429
      %v482 = vunpack.c.h.b16 %v429
      %v483 = vunpack.c.l.b16 %v430
      %v484 = vunpack.c.h.b16 %v430
      %v485 = vunpack.c.l.b16 %v431
      %v486 = vunpack.c.h.b16 %v431
      %v487 = vunpack.c.l.b16 %v432
      %v488 = vunpack.c.h.b16 %v432
      %v489 = vunpack.c.l.b16 %v433
      %v490 = vunpack.c.h.b16 %v433
      %v491 = vunpack.c.l.b16 %v434
      %v492 = vunpack.c.h.b16 %v434
      %v493 = vunpack.c.l.b16 %v435
      %v494 = vunpack.c.h.b16 %v435
      %v495 = vpack.c.b16 %v465, %v463
      %v496 = vpack.c.b16 %v466, %v464
      %v497 = vpack.c.b16 %v469, %v467
      %v498 = vpack.c.b16 %v470, %v468
      %v499 = vpack.c.b16 %v473, %v471
      %v500 = vpack.c.b16 %v474, %v472
      %v501 = vpack.c.b16 %v477, %v475
      %v502 = vpack.c.b16 %v478, %v476
      %v503 = vpack.c.b16 %v481, %v479
      %v504 = vpack.c.b16 %v482, %v480
      %v505 = vpack.c.b16 %v485, %v483
      %v506 = vpack.c.b16 %v486, %v484
      %v507 = vpack.c.b16 %v489, %v487
      %v508 = vpack.c.b16 %v490, %v488
      %v509 = vpack.c.b16 %v493, %v491
      %v510 = vpack.c.b16 %v494, %v492
      %527 = vmatprep.subr.bf16.mxu0 %v510
      %528 = vmatpush1.bf16.msra.mxu0 %v509
      %529 = vmatprep.subr.bf16.mxu0 %v508
      %530 = vmatpush1.bf16.msra.mxu0 %v507
      %531 = vmatprep.subr.bf16.mxu0 %v506
      %532 = vmatpush1.bf16.msra.mxu0 %v505
      %533 = vmatprep.subr.bf16.mxu0 %v504
      %534 = vmatpush1.bf16.msra.mxu0 %v503
      %535 = vmatprep.subr.bf16.mxu0 %v502
      %536 = vmatpush1.bf16.msra.mxu0 %v501
      %537 = vmatprep.subr.bf16.mxu0 %v500
      %538 = vmatpush1.bf16.msra.mxu0 %v499
      %539 = vmatprep.subr.bf16.mxu0 %v498
      %540 = vmatpush1.bf16.msra.mxu0 %v497
      %541 = vmatprep.subr.bf16.mxu0 %v496
      %542 = vmatpush1.bf16.msra.mxu0 %v495
      %543 = vmatprep.subr.bf16.mxu0 0
      %544 = vmatpush2.bf16.msra.mxu0 0
      %545 = vmatprep.subr.bf16.mxu0 0
      %546 = vmatpush2.bf16.msra.mxu0 0
      %547 = vmatprep.subr.bf16.mxu0 0
      %548 = vmatpush2.bf16.msra.mxu0 0
      %549 = vmatprep.subr.bf16.mxu0 0
      %550 = vmatpush2.bf16.msra.mxu0 0
      %551 = vmatprep.subr.bf16.mxu0 0
      %552 = vmatpush2.bf16.msra.mxu0 0
      %553 = vmatprep.subr.bf16.mxu0 0
      %554 = vmatpush2.bf16.msra.mxu0 0
      %555 = vmatprep.subr.bf16.mxu0 0
      %556 = vmatpush2.bf16.msra.mxu0 0
      %557 = vmatprep.subr.bf16.mxu0 0
      %558 = vmatpush2.bf16.msra.mxu0 0
      %559 = vmatprep.mubr.bf16.mxu0 0
      %560 = vmatmul.mubr.bf16.gmra.mxu0 %v445
      %v561 = vpop.f32.mrf.mxu0
      %v562 = vadd.f32 0.0, %v561
      %v563 = vpop.f32.mrf.mxu0
      %v564 = vadd.f32 0.0, %v563
      %v565 = vpop.f32.mrf.mxu0
      %v566 = vpop.f32.mrf.mxu0
      %567 = vdwg.mxu0
      %v584 = vunpack.c.l.b16 %v403
      %v585 = vunpack.c.h.b16 %v403
      %v586 = vunpack.c.l.b16 %v404
      %v587 = vunpack.c.h.b16 %v404
      %v588 = vunpack.c.l.b16 %v405
      %v589 = vunpack.c.h.b16 %v405
      %v590 = vunpack.c.l.b16 %v406
      %v591 = vunpack.c.h.b16 %v406
      %v592 = vunpack.c.l.b16 %v407
      %v593 = vunpack.c.h.b16 %v407
      %v594 = vunpack.c.l.b16 %v408
      %v595 = vunpack.c.h.b16 %v408
      %v596 = vunpack.c.l.b16 %v409
      %v597 = vunpack.c.h.b16 %v409
      %v598 = vunpack.c.l.b16 %v410
      %v599 = vunpack.c.h.b16 %v410
      %v600 = vunpack.c.l.b16 %v411
      %v601 = vunpack.c.h.b16 %v411
      %v602 = vunpack.c.l.b16 %v412
      %v603 = vunpack.c.h.b16 %v412
      %v604 = vunpack.c.l.b16 %v413
      %v605 = vunpack.c.h.b16 %v413
      %v606 = vunpack.c.l.b16 %v414
      %v607 = vunpack.c.h.b16 %v414
      %v608 = vunpack.c.l.b16 %v415
      %v609 = vunpack.c.h.b16 %v415
      %v610 = vunpack.c.l.b16 %v416
      %v611 = vunpack.c.h.b16 %v416
      %v612 = vunpack.c.l.b16 %v417
      %v613 = vunpack.c.h.b16 %v417
      %v614 = vunpack.c.l.b16 %v418
      %v615 = vunpack.c.h.b16 %v418
      %v616 = vpack.c.b16 %v586, %v584
      %v617 = vpack.c.b16 %v587, %v585
      %v618 = vpack.c.b16 %v590, %v588
      %v619 = vpack.c.b16 %v591, %v589
      %v620 = vpack.c.b16 %v594, %v592
      %v621 = vpack.c.b16 %v595, %v593
      %v622 = vpack.c.b16 %v598, %v596
      %v623 = vpack.c.b16 %v599, %v597
      %v624 = vpack.c.b16 %v602, %v600
      %v625 = vpack.c.b16 %v603, %v601
      %v626 = vpack.c.b16 %v606, %v604
      %v627 = vpack.c.b16 %v607, %v605
      %v628 = vpack.c.b16 %v610, %v608
      %v629 = vpack.c.b16 %v611, %v609
      %v630 = vpack.c.b16 %v614, %v612
      %v631 = vpack.c.b16 %v615, %v613
      %648 = vmatprep.subr.bf16.mxu0 %v631
      %649 = vmatpush1.bf16.msra.mxu0 %v630
      %650 = vmatprep.subr.bf16.mxu0 %v629
      %651 = vmatpush1.bf16.msra.mxu0 %v628
      %652 = vmatprep.subr.bf16.mxu0 %v627
      %653 = vmatpush1.bf16.msra.mxu0 %v626
      %654 = vmatprep.subr.bf16.mxu0 %v625
      %655 = vmatpush1.bf16.msra.mxu0 %v624
      %656 = vmatprep.subr.bf16.mxu0 %v623
      %657 = vmatpush1.bf16.msra.mxu0 %v622
      %658 = vmatprep.subr.bf16.mxu0 %v621
      %659 = vmatpush1.bf16.msra.mxu0 %v620
      %660 = vmatprep.subr.bf16.mxu0 %v619
      %661 = vmatpush1.bf16.msra.mxu0 %v618
      %662 = vmatprep.subr.bf16.mxu0 %v617
      %663 = vmatpush1.bf16.msra.mxu0 %v616
      %664 = vmatprep.subr.bf16.mxu0 0
      %665 = vmatpush2.bf16.msra.mxu0 0
      %666 = vmatprep.subr.bf16.mxu0 0
      %667 = vmatpush2.bf16.msra.mxu0 0
      %668 = vmatprep.subr.bf16.mxu0 0
      %669 = vmatpush2.bf16.msra.mxu0 0
      %670 = vmatprep.subr.bf16.mxu0 0
      %671 = vmatpush2.bf16.msra.mxu0 0
      %672 = vmatprep.subr.bf16.mxu0 0
      %673 = vmatpush2.bf16.msra.mxu0 0
      %674 = vmatprep.subr.bf16.mxu0 0
      %675 = vmatpush2.bf16.msra.mxu0 0
      %676 = vmatprep.subr.bf16.mxu0 0
      %677 = vmatpush2.bf16.msra.mxu0 0
      %678 = vmatprep.subr.bf16.mxu0 0
      %679 = vmatpush2.bf16.msra.mxu0 0
      %680 = vmatprep.mubr.bf16.mxu0 0
      %681 = vmatmul.mubr.bf16.gmra.mxu0 %v399
      %v682 = vpop.f32.mrf.mxu0
      %v683 = vadd.f32 %v562, %v682
      %v684 = vpop.f32.mrf.mxu0
      %v685 = vadd.f32 %v564, %v684
      %v686 = vpop.f32.mrf.mxu0
      %v687 = vpop.f32.mrf.mxu0
      %688 = vdwg.mxu0
      %s689 = scalar_lea.vmem %s4, 256
      %v690 = vld [vmem:[%s689] sm:$0xff]
      %v691 = vld [vmem:[%s689 + $0x8] sm:$0xff]
      %v692 = vld [vmem:[%s689 + $0x10] sm:$0xff]
      %v693 = vld [vmem:[%s689 + $0x18] sm:$0xff]
      %v694 = vld [vmem:[%s689 + $0x20] sm:$0xff]
      %v695 = vld [vmem:[%s689 + $0x28] sm:$0xff]
      %v696 = vld [vmem:[%s689 + $0x30] sm:$0xff]
      %v697 = vld [vmem:[%s689 + $0x38] sm:$0xff]
      %v698 = vld [vmem:[%s689 + $0x40] sm:$0xff]
      %v699 = vld [vmem:[%s689 + $0x48] sm:$0xff]
      %v700 = vld [vmem:[%s689 + $0x50] sm:$0xff]
      %v701 = vld [vmem:[%s689 + $0x58] sm:$0xff]
      %v702 = vld [vmem:[%s689 + $0x60] sm:$0xff]
      %v703 = vld [vmem:[%s689 + $0x68] sm:$0xff]
      %v704 = vld [vmem:[%s689 + $0x70] sm:$0xff]
      %v705 = vld [vmem:[%s689 + $0x78] sm:$0xff]
      %v706 = vrot.slane %v438, 1
      %v724 = vunpack.c.l.b16 %v690
      %v725 = vunpack.c.h.b16 %v690
      %v726 = vunpack.c.l.b16 %v691
      %v727 = vunpack.c.h.b16 %v691
      %v728 = vunpack.c.l.b16 %v692
      %v729 = vunpack.c.h.b16 %v692
      %v730 = vunpack.c.l.b16 %v693
      %v731 = vunpack.c.h.b16 %v693
      %v732 = vunpack.c.l.b16 %v694
      %v733 = vunpack.c.h.b16 %v694
      %v734 = vunpack.c.l.b16 %v695
      %v735 = vunpack.c.h.b16 %v695
      %v736 = vunpack.c.l.b16 %v696
      %v737 = vunpack.c.h.b16 %v696
      %v738 = vunpack.c.l.b16 %v697
      %v739 = vunpack.c.h.b16 %v697
      %v740 = vunpack.c.l.b16 %v698
      %v741 = vunpack.c.h.b16 %v698
      %v742 = vunpack.c.l.b16 %v699
      %v743 = vunpack.c.h.b16 %v699
      %v744 = vunpack.c.l.b16 %v700
      %v745 = vunpack.c.h.b16 %v700
      %v746 = vunpack.c.l.b16 %v701
      %v747 = vunpack.c.h.b16 %v701
      %v748 = vunpack.c.l.b16 %v702
      %v749 = vunpack.c.h.b16 %v702
      %v750 = vunpack.c.l.b16 %v703
      %v751 = vunpack.c.h.b16 %v703
      %v752 = vunpack.c.l.b16 %v704
      %v753 = vunpack.c.h.b16 %v704
      %v754 = vunpack.c.l.b16 %v705
      %v755 = vunpack.c.h.b16 %v705
      %v756 = vpack.c.b16 %v726, %v724
      %v757 = vpack.c.b16 %v727, %v725
      %v758 = vpack.c.b16 %v730, %v728
      %v759 = vpack.c.b16 %v731, %v729
      %v760 = vpack.c.b16 %v734, %v732
      %v761 = vpack.c.b16 %v735, %v733
      %v762 = vpack.c.b16 %v738, %v736
      %v763 = vpack.c.b16 %v739, %v737
      %v764 = vpack.c.b16 %v742, %v740
      %v765 = vpack.c.b16 %v743, %v741
      %v766 = vpack.c.b16 %v746, %v744
      %v767 = vpack.c.b16 %v747, %v745
      %v768 = vpack.c.b16 %v750, %v748
      %v769 = vpack.c.b16 %v751, %v749
      %v770 = vpack.c.b16 %v754, %v752
      %v771 = vpack.c.b16 %v755, %v753
      %788 = vmatprep.subr.bf16.mxu0 %v771
      %789 = vmatpush1.bf16.msra.mxu0 %v770
      %790 = vmatprep.subr.bf16.mxu0 %v769
      %791 = vmatpush1.bf16.msra.mxu0 %v768
      %792 = vmatprep.subr.bf16.mxu0 %v767
      %793 = vmatpush1.bf16.msra.mxu0 %v766
      %794 = vmatprep.subr.bf16.mxu0 %v765
      %795 = vmatpush1.bf16.msra.mxu0 %v764
      %796 = vmatprep.subr.bf16.mxu0 %v763
      %797 = vmatpush1.bf16.msra.mxu0 %v762
      %798 = vmatprep.subr.bf16.mxu0 %v761
      %799 = vmatpush1.bf16.msra.mxu0 %v760
      %800 = vmatprep.subr.bf16.mxu0 %v759
      %801 = vmatpush1.bf16.msra.mxu0 %v758
      %802 = vmatprep.subr.bf16.mxu0 %v757
      %803 = vmatpush1.bf16.msra.mxu0 %v756
      %804 = vmatprep.subr.bf16.mxu0 0
      %805 = vmatpush2.bf16.msra.mxu0 0
      %806 = vmatprep.subr.bf16.mxu0 0
      %807 = vmatpush2.bf16.msra.mxu0 0
      %808 = vmatprep.subr.bf16.mxu0 0
      %809 = vmatpush2.bf16.msra.mxu0 0
      %810 = vmatprep.subr.bf16.mxu0 0
      %811 = vmatpush2.bf16.msra.mxu0 0
      %812 = vmatprep.subr.bf16.mxu0 0
      %813 = vmatpush2.bf16.msra.mxu0 0
      %814 = vmatprep.subr.bf16.mxu0 0
      %815 = vmatpush2.bf16.msra.mxu0 0
      %816 = vmatprep.subr.bf16.mxu0 0
      %817 = vmatpush2.bf16.msra.mxu0 0
      %818 = vmatprep.subr.bf16.mxu0 0
      %819 = vmatpush2.bf16.msra.mxu0 0
      %820 = vmatprep.mubr.bf16.mxu0 0
      %821 = vmatmul.mubr.bf16.gmra.mxu0 %v706
      %v822 = vpop.f32.mrf.mxu0
      %v823 = vadd.f32 0.0, %v822
      %v824 = vpop.f32.mrf.mxu0
      %v825 = vadd.f32 0.0, %v824
      %v826 = vpop.f32.mrf.mxu0
      %v827 = vpop.f32.mrf.mxu0
      %828 = vdwg.mxu0
      %v829 = vadd.f32 %v683, %v823
      %v830 = vadd.f32 %v685, %v825
      %s831 = scalar_lea.vmem %s4, 384
      %v832 = vld [vmem:[%s831] sm:$0xff]
      %v833 = vld [vmem:[%s831 + $0x8] sm:$0xff]
      %v834 = vld [vmem:[%s831 + $0x10] sm:$0xff]
      %v835 = vld [vmem:[%s831 + $0x18] sm:$0xff]
      %v836 = vld [vmem:[%s831 + $0x20] sm:$0xff]
      %v837 = vld [vmem:[%s831 + $0x28] sm:$0xff]
      %v838 = vld [vmem:[%s831 + $0x30] sm:$0xff]
      %v839 = vld [vmem:[%s831 + $0x38] sm:$0xff]
      %v840 = vld [vmem:[%s831 + $0x40] sm:$0xff]
      %v841 = vld [vmem:[%s831 + $0x48] sm:$0xff]
      %v842 = vld [vmem:[%s831 + $0x50] sm:$0xff]
      %v843 = vld [vmem:[%s831 + $0x58] sm:$0xff]
      %v844 = vld [vmem:[%s831 + $0x60] sm:$0xff]
      %v845 = vld [vmem:[%s831 + $0x68] sm:$0xff]
      %v846 = vld [vmem:[%s831 + $0x70] sm:$0xff]
      %v847 = vld [vmem:[%s831 + $0x78] sm:$0xff]
      %v864 = vunpack.c.l.b16 %v832
      %v865 = vunpack.c.h.b16 %v832
      %v866 = vunpack.c.l.b16 %v833
      %v867 = vunpack.c.h.b16 %v833
      %v868 = vunpack.c.l.b16 %v834
      %v869 = vunpack.c.h.b16 %v834
      %v870 = vunpack.c.l.b16 %v835
      %v871 = vunpack.c.h.b16 %v835
      %v872 = vunpack.c.l.b16 %v836
      %v873 = vunpack.c.h.b16 %v836
      %v874 = vunpack.c.l.b16 %v837
      %v875 = vunpack.c.h.b16 %v837
      %v876 = vunpack.c.l.b16 %v838
      %v877 = vunpack.c.h.b16 %v838
      %v878 = vunpack.c.l.b16 %v839
      %v879 = vunpack.c.h.b16 %v839
      %v880 = vunpack.c.l.b16 %v840
      %v881 = vunpack.c.h.b16 %v840
      %v882 = vunpack.c.l.b16 %v841
      %v883 = vunpack.c.h.b16 %v841
      %v884 = vunpack.c.l.b16 %v842
      %v885 = vunpack.c.h.b16 %v842
      %v886 = vunpack.c.l.b16 %v843
      %v887 = vunpack.c.h.b16 %v843
      %v888 = vunpack.c.l.b16 %v844
      %v889 = vunpack.c.h.b16 %v844
      %v890 = vunpack.c.l.b16 %v845
      %v891 = vunpack.c.h.b16 %v845
      %v892 = vunpack.c.l.b16 %v846
      %v893 = vunpack.c.h.b16 %v846
      %v894 = vunpack.c.l.b16 %v847
      %v895 = vunpack.c.h.b16 %v847
      %v896 = vpack.c.b16 %v866, %v864
      %v897 = vpack.c.b16 %v867, %v865
      %v898 = vpack.c.b16 %v870, %v868
      %v899 = vpack.c.b16 %v871, %v869
      %v900 = vpack.c.b16 %v874, %v872
      %v901 = vpack.c.b16 %v875, %v873
      %v902 = vpack.c.b16 %v878, %v876
      %v903 = vpack.c.b16 %v879, %v877
      %v904 = vpack.c.b16 %v882, %v880
      %v905 = vpack.c.b16 %v883, %v881
      %v906 = vpack.c.b16 %v886, %v884
      %v907 = vpack.c.b16 %v887, %v885
      %v908 = vpack.c.b16 %v890, %v888
      %v909 = vpack.c.b16 %v891, %v889
      %v910 = vpack.c.b16 %v894, %v892
      %v911 = vpack.c.b16 %v895, %v893
      %928 = vmatprep.subr.bf16.mxu0 %v911
      %929 = vmatpush1.bf16.msra.mxu0 %v910
      %930 = vmatprep.subr.bf16.mxu0 %v909
      %931 = vmatpush1.bf16.msra.mxu0 %v908
      %932 = vmatprep.subr.bf16.mxu0 %v907
      %933 = vmatpush1.bf16.msra.mxu0 %v906
      %934 = vmatprep.subr.bf16.mxu0 %v905
      %935 = vmatpush1.bf16.msra.mxu0 %v904
      %936 = vmatprep.subr.bf16.mxu0 %v903
      %937 = vmatpush1.bf16.msra.mxu0 %v902
      %938 = vmatprep.subr.bf16.mxu0 %v901
      %939 = vmatpush1.bf16.msra.mxu0 %v900
      %940 = vmatprep.subr.bf16.mxu0 %v899
      %941 = vmatpush1.bf16.msra.mxu0 %v898
      %942 = vmatprep.subr.bf16.mxu0 %v897
      %943 = vmatpush1.bf16.msra.mxu0 %v896
      %944 = vmatprep.subr.bf16.mxu0 0
      %945 = vmatpush2.bf16.msra.mxu0 0
      %946 = vmatprep.subr.bf16.mxu0 0
      %947 = vmatpush2.bf16.msra.mxu0 0
      %948 = vmatprep.subr.bf16.mxu0 0
      %949 = vmatpush2.bf16.msra.mxu0 0
      %950 = vmatprep.subr.bf16.mxu0 0
      %951 = vmatpush2.bf16.msra.mxu0 0
      %952 = vmatprep.subr.bf16.mxu0 0
      %953 = vmatpush2.bf16.msra.mxu0 0
      %954 = vmatprep.subr.bf16.mxu0 0
      %955 = vmatpush2.bf16.msra.mxu0 0
      %956 = vmatprep.subr.bf16.mxu0 0
      %957 = vmatpush2.bf16.msra.mxu0 0
      %958 = vmatprep.subr.bf16.mxu0 0
      %959 = vmatpush2.bf16.msra.mxu0 0
      %960 = vmatprep.mubr.bf16.mxu0 0
      %961 = vmatmul.mubr.bf16.gmra.mxu0 %v400
      %v962 = vpop.f32.mrf.mxu0
      %v963 = vadd.f32 0.0, %v962
      %v964 = vpop.f32.mrf.mxu0
      %v965 = vadd.f32 0.0, %v964
      %v966 = vpop.f32.mrf.mxu0
      %v967 = vpop.f32.mrf.mxu0
      %968 = vdwg.mxu0
      %v969 = vadd.f32 %v829, %v963
      %v970 = vadd.f32 %v830, %v965
      %s971 = scalar_lea.vmem %s4, 512
      %v972 = vld [vmem:[%s971] sm:$0xff]
      %v973 = vld [vmem:[%s971 + $0x8] sm:$0xff]
      %v974 = vld [vmem:[%s971 + $0x10] sm:$0xff]
      %v975 = vld [vmem:[%s971 + $0x18] sm:$0xff]
      %v976 = vld [vmem:[%s971 + $0x20] sm:$0xff]
      %v977 = vld [vmem:[%s971 + $0x28] sm:$0xff]
      %v978 = vld [vmem:[%s971 + $0x30] sm:$0xff]
      %v979 = vld [vmem:[%s971 + $0x38] sm:$0xff]
      %v980 = vld [vmem:[%s971 + $0x40] sm:$0xff]
      %v981 = vld [vmem:[%s971 + $0x48] sm:$0xff]
      %v982 = vld [vmem:[%s971 + $0x50] sm:$0xff]
      %v983 = vld [vmem:[%s971 + $0x58] sm:$0xff]
      %v984 = vld [vmem:[%s971 + $0x60] sm:$0xff]
      %v985 = vld [vmem:[%s971 + $0x68] sm:$0xff]
      %v986 = vld [vmem:[%s971 + $0x70] sm:$0xff]
      %v987 = vld [vmem:[%s971 + $0x78] sm:$0xff]
      %v989 = vunpack.c.l.b16 %v400
      %v990 = vpack.c.b16 %v989, %v989
      %v992 = vshrl.u32 %v990, 16
      %v994 = vshll.u32 %v990, 16
      %v996 = vrot.slane %v994, 1
      %v997 = vor.u32 %v992, %v996
      %v1015 = vunpack.c.l.b16 %v972
      %v1016 = vunpack.c.h.b16 %v972
      %v1017 = vunpack.c.l.b16 %v973
      %v1018 = vunpack.c.h.b16 %v973
      %v1019 = vunpack.c.l.b16 %v974
      %v1020 = vunpack.c.h.b16 %v974
      %v1021 = vunpack.c.l.b16 %v975
      %v1022 = vunpack.c.h.b16 %v975
      %v1023 = vunpack.c.l.b16 %v976
      %v1024 = vunpack.c.h.b16 %v976
      %v1025 = vunpack.c.l.b16 %v977
      %v1026 = vunpack.c.h.b16 %v977
      %v1027 = vunpack.c.l.b16 %v978
      %v1028 = vunpack.c.h.b16 %v978
      %v1029 = vunpack.c.l.b16 %v979
      %v1030 = vunpack.c.h.b16 %v979
      %v1031 = vunpack.c.l.b16 %v980
      %v1032 = vunpack.c.h.b16 %v980
      %v1033 = vunpack.c.l.b16 %v981
      %v1034 = vunpack.c.h.b16 %v981
      %v1035 = vunpack.c.l.b16 %v982
      %v1036 = vunpack.c.h.b16 %v982
      %v1037 = vunpack.c.l.b16 %v983
      %v1038 = vunpack.c.h.b16 %v983
      %v1039 = vunpack.c.l.b16 %v984
      %v1040 = vunpack.c.h.b16 %v984
      %v1041 = vunpack.c.l.b16 %v985
      %v1042 = vunpack.c.h.b16 %v985
      %v1043 = vunpack.c.l.b16 %v986
      %v1044 = vunpack.c.h.b16 %v986
      %v1045 = vunpack.c.l.b16 %v987
      %v1046 = vunpack.c.h.b16 %v987
      %v1047 = vpack.c.b16 %v1017, %v1015
      %v1048 = vpack.c.b16 %v1018, %v1016
      %v1049 = vpack.c.b16 %v1021, %v1019
      %v1050 = vpack.c.b16 %v1022, %v1020
      %v1051 = vpack.c.b16 %v1025, %v1023
      %v1052 = vpack.c.b16 %v1026, %v1024
      %v1053 = vpack.c.b16 %v1029, %v1027
      %v1054 = vpack.c.b16 %v1030, %v1028
      %v1055 = vpack.c.b16 %v1033, %v1031
      %v1056 = vpack.c.b16 %v1034, %v1032
      %v1057 = vpack.c.b16 %v1037, %v1035
      %v1058 = vpack.c.b16 %v1038, %v1036
      %v1059 = vpack.c.b16 %v1041, %v1039
      %v1060 = vpack.c.b16 %v1042, %v1040
      %v1061 = vpack.c.b16 %v1045, %v1043
      %v1062 = vpack.c.b16 %v1046, %v1044
      %1079 = vmatprep.subr.bf16.mxu0 %v1062
      %1080 = vmatpush1.bf16.msra.mxu0 %v1061
      %1081 = vmatprep.subr.bf16.mxu0 %v1060
      %1082 = vmatpush1.bf16.msra.mxu0 %v1059
      %1083 = vmatprep.subr.bf16.mxu0 %v1058
      %1084 = vmatpush1.bf16.msra.mxu0 %v1057
      %1085 = vmatprep.subr.bf16.mxu0 %v1056
      %1086 = vmatpush1.bf16.msra.mxu0 %v1055
      %1087 = vmatprep.subr.bf16.mxu0 %v1054
      %1088 = vmatpush1.bf16.msra.mxu0 %v1053
      %1089 = vmatprep.subr.bf16.mxu0 %v1052
      %1090 = vmatpush1.bf16.msra.mxu0 %v1051
      %1091 = vmatprep.subr.bf16.mxu0 %v1050
      %1092 = vmatpush1.bf16.msra.mxu0 %v1049
      %1093 = vmatprep.subr.bf16.mxu0 %v1048
      %1094 = vmatpush1.bf16.msra.mxu0 %v1047
      %1095 = vmatprep.subr.bf16.mxu0 0
      %1096 = vmatpush2.bf16.msra.mxu0 0
      %1097 = vmatprep.subr.bf16.mxu0 0
      %1098 = vmatpush2.bf16.msra.mxu0 0
      %1099 = vmatprep.subr.bf16.mxu0 0
      %1100 = vmatpush2.bf16.msra.mxu0 0
      %1101 = vmatprep.subr.bf16.mxu0 0
      %1102 = vmatpush2.bf16.msra.mxu0 0
      %1103 = vmatprep.subr.bf16.mxu0 0
      %1104 = vmatpush2.bf16.msra.mxu0 0
      %1105 = vmatprep.subr.bf16.mxu0 0
      %1106 = vmatpush2.bf16.msra.mxu0 0
      %1107 = vmatprep.subr.bf16.mxu0 0
      %1108 = vmatpush2.bf16.msra.mxu0 0
      %1109 = vmatprep.subr.bf16.mxu0 0
      %1110 = vmatpush2.bf16.msra.mxu0 0
      %1111 = vmatprep.mubr.bf16.mxu0 0
      %1112 = vmatmul.mubr.bf16.gmra.mxu0 %v997
      %v1113 = vpop.f32.mrf.mxu0
      %v1114 = vadd.f32 0.0, %v1113
      %v1115 = vpop.f32.mrf.mxu0
      %v1116 = vadd.f32 0.0, %v1115
      %v1117 = vpop.f32.mrf.mxu0
      %v1118 = vpop.f32.mrf.mxu0
      %1119 = vdwg.mxu0
      %v1120 = vadd.f32 %v969, %v1114
      %v1121 = vadd.f32 %v970, %v1116
      %s1122 = scalar_lea.vmem %s4, 640
      %v1123 = vld [vmem:[%s1122] sm:$0xff]
      %v1124 = vld [vmem:[%s1122 + $0x8] sm:$0xff]
      %v1125 = vld [vmem:[%s1122 + $0x10] sm:$0xff]
      %v1126 = vld [vmem:[%s1122 + $0x18] sm:$0xff]
      %v1127 = vld [vmem:[%s1122 + $0x20] sm:$0xff]
      %v1128 = vld [vmem:[%s1122 + $0x28] sm:$0xff]
      %v1129 = vld [vmem:[%s1122 + $0x30] sm:$0xff]
      %v1130 = vld [vmem:[%s1122 + $0x38] sm:$0xff]
      %v1131 = vld [vmem:[%s1122 + $0x40] sm:$0xff]
      %v1132 = vld [vmem:[%s1122 + $0x48] sm:$0xff]
      %v1133 = vld [vmem:[%s1122 + $0x50] sm:$0xff]
      %v1134 = vld [vmem:[%s1122 + $0x58] sm:$0xff]
      %v1135 = vld [vmem:[%s1122 + $0x60] sm:$0xff]
      %v1136 = vld [vmem:[%s1122 + $0x68] sm:$0xff]
      %v1137 = vld [vmem:[%s1122 + $0x70] sm:$0xff]
      %v1138 = vld [vmem:[%s1122 + $0x78] sm:$0xff]
      %v1139 = vrot.slane %v990, 1
      %v1157 = vunpack.c.l.b16 %v1123
      %v1158 = vunpack.c.h.b16 %v1123
      %v1159 = vunpack.c.l.b16 %v1124
      %v1160 = vunpack.c.h.b16 %v1124
      %v1161 = vunpack.c.l.b16 %v1125
      %v1162 = vunpack.c.h.b16 %v1125
      %v1163 = vunpack.c.l.b16 %v1126
      %v1164 = vunpack.c.h.b16 %v1126
      %v1165 = vunpack.c.l.b16 %v1127
      %v1166 = vunpack.c.h.b16 %v1127
      %v1167 = vunpack.c.l.b16 %v1128
      %v1168 = vunpack.c.h.b16 %v1128
      %v1169 = vunpack.c.l.b16 %v1129
      %v1170 = vunpack.c.h.b16 %v1129
      %v1171 = vunpack.c.l.b16 %v1130
      %v1172 = vunpack.c.h.b16 %v1130
      %v1173 = vunpack.c.l.b16 %v1131
      %v1174 = vunpack.c.h.b16 %v1131
      %v1175 = vunpack.c.l.b16 %v1132
      %v1176 = vunpack.c.h.b16 %v1132
      %v1177 = vunpack.c.l.b16 %v1133
      %v1178 = vunpack.c.h.b16 %v1133
      %v1179 = vunpack.c.l.b16 %v1134
      %v1180 = vunpack.c.h.b16 %v1134
      %v1181 = vunpack.c.l.b16 %v1135
      %v1182 = vunpack.c.h.b16 %v1135
      %v1183 = vunpack.c.l.b16 %v1136
      %v1184 = vunpack.c.h.b16 %v1136
      %v1185 = vunpack.c.l.b16 %v1137
      %v1186 = vunpack.c.h.b16 %v1137
      %v1187 = vunpack.c.l.b16 %v1138
      %v1188 = vunpack.c.h.b16 %v1138
      %v1189 = vpack.c.b16 %v1159, %v1157
      %v1190 = vpack.c.b16 %v1160, %v1158
      %v1191 = vpack.c.b16 %v1163, %v1161
      %v1192 = vpack.c.b16 %v1164, %v1162
      %v1193 = vpack.c.b16 %v1167, %v1165
      %v1194 = vpack.c.b16 %v1168, %v1166
      %v1195 = vpack.c.b16 %v1171, %v1169
      %v1196 = vpack.c.b16 %v1172, %v1170
      %v1197 = vpack.c.b16 %v1175, %v1173
      %v1198 = vpack.c.b16 %v1176, %v1174
      %v1199 = vpack.c.b16 %v1179, %v1177
      %v1200 = vpack.c.b16 %v1180, %v1178
      %v1201 = vpack.c.b16 %v1183, %v1181
      %v1202 = vpack.c.b16 %v1184, %v1182
      %v1203 = vpack.c.b16 %v1187, %v1185
      %v1204 = vpack.c.b16 %v1188, %v1186
      %1221 = vmatprep.subr.bf16.mxu0 %v1204
      %1222 = vmatpush1.bf16.msra.mxu0 %v1203
      %1223 = vmatprep.subr.bf16.mxu0 %v1202
      %1224 = vmatpush1.bf16.msra.mxu0 %v1201
      %1225 = vmatprep.subr.bf16.mxu0 %v1200
      %1226 = vmatpush1.bf16.msra.mxu0 %v1199
      %1227 = vmatprep.subr.bf16.mxu0 %v1198
      %1228 = vmatpush1.bf16.msra.mxu0 %v1197
      %1229 = vmatprep.subr.bf16.mxu0 %v1196
      %1230 = vmatpush1.bf16.msra.mxu0 %v1195
      %1231 = vmatprep.subr.bf16.mxu0 %v1194
      %1232 = vmatpush1.bf16.msra.mxu0 %v1193
      %1233 = vmatprep.subr.bf16.mxu0 %v1192
      %1234 = vmatpush1.bf16.msra.mxu0 %v1191
      %1235 = vmatprep.subr.bf16.mxu0 %v1190
      %1236 = vmatpush1.bf16.msra.mxu0 %v1189
      %1237 = vmatprep.subr.bf16.mxu0 0
      %1238 = vmatpush2.bf16.msra.mxu0 0
      %1239 = vmatprep.subr.bf16.mxu0 0
      %1240 = vmatpush2.bf16.msra.mxu0 0
      %1241 = vmatprep.subr.bf16.mxu0 0
      %1242 = vmatpush2.bf16.msra.mxu0 0
      %1243 = vmatprep.subr.bf16.mxu0 0
      %1244 = vmatpush2.bf16.msra.mxu0 0
      %1245 = vmatprep.subr.bf16.mxu0 0
      %1246 = vmatpush2.bf16.msra.mxu0 0
      %1247 = vmatprep.subr.bf16.mxu0 0
      %1248 = vmatpush2.bf16.msra.mxu0 0
      %1249 = vmatprep.subr.bf16.mxu0 0
      %1250 = vmatpush2.bf16.msra.mxu0 0
      %1251 = vmatprep.subr.bf16.mxu0 0
      %1252 = vmatpush2.bf16.msra.mxu0 0
      %1253 = vmatprep.mubr.bf16.mxu0 0
      %1254 = vmatmul.mubr.bf16.gmra.mxu0 %v1139
      %v1255 = vpop.f32.mrf.mxu0
      %v1256 = vadd.f32 0.0, %v1255
      %v1257 = vpop.f32.mrf.mxu0
      %v1258 = vadd.f32 0.0, %v1257
      %v1259 = vpop.f32.mrf.mxu0
      %v1260 = vpop.f32.mrf.mxu0
      %1261 = vdwg.mxu0
      %v1262 = vadd.f32 %v1120, %v1256
      %v1263 = vadd.f32 %v1121, %v1258
      %s1264 = scalar_lea.vmem %s4, 768
      %v1265 = vld [vmem:[%s1264] sm:$0xff]
      %v1266 = vld [vmem:[%s1264 + $0x8] sm:$0xff]
      %v1267 = vld [vmem:[%s1264 + $0x10] sm:$0xff]
      %v1268 = vld [vmem:[%s1264 + $0x18] sm:$0xff]
      %v1269 = vld [vmem:[%s1264 + $0x20] sm:$0xff]
      %v1270 = vld [vmem:[%s1264 + $0x28] sm:$0xff]
      %v1271 = vld [vmem:[%s1264 + $0x30] sm:$0xff]
      %v1272 = vld [vmem:[%s1264 + $0x38] sm:$0xff]
      %v1273 = vld [vmem:[%s1264 + $0x40] sm:$0xff]
      %v1274 = vld [vmem:[%s1264 + $0x48] sm:$0xff]
      %v1275 = vld [vmem:[%s1264 + $0x50] sm:$0xff]
      %v1276 = vld [vmem:[%s1264 + $0x58] sm:$0xff]
      %v1277 = vld [vmem:[%s1264 + $0x60] sm:$0xff]
      %v1278 = vld [vmem:[%s1264 + $0x68] sm:$0xff]
      %v1279 = vld [vmem:[%s1264 + $0x70] sm:$0xff]
      %v1280 = vld [vmem:[%s1264 + $0x78] sm:$0xff]
      %v1297 = vunpack.c.l.b16 %v1265
      %v1298 = vunpack.c.h.b16 %v1265
      %v1299 = vunpack.c.l.b16 %v1266
      %v1300 = vunpack.c.h.b16 %v1266
      %v1301 = vunpack.c.l.b16 %v1267
      %v1302 = vunpack.c.h.b16 %v1267
      %v1303 = vunpack.c.l.b16 %v1268
      %v1304 = vunpack.c.h.b16 %v1268
      %v1305 = vunpack.c.l.b16 %v1269
      %v1306 = vunpack.c.h.b16 %v1269
      %v1307 = vunpack.c.l.b16 %v1270
      %v1308 = vunpack.c.h.b16 %v1270
      %v1309 = vunpack.c.l.b16 %v1271
      %v1310 = vunpack.c.h.b16 %v1271
      %v1311 = vunpack.c.l.b16 %v1272
      %v1312 = vunpack.c.h.b16 %v1272
      %v1313 = vunpack.c.l.b16 %v1273
      %v1314 = vunpack.c.h.b16 %v1273
      %v1315 = vunpack.c.l.b16 %v1274
      %v1316 = vunpack.c.h.b16 %v1274
      %v1317 = vunpack.c.l.b16 %v1275
      %v1318 = vunpack.c.h.b16 %v1275
      %v1319 = vunpack.c.l.b16 %v1276
      %v1320 = vunpack.c.h.b16 %v1276
      %v1321 = vunpack.c.l.b16 %v1277
      %v1322 = vunpack.c.h.b16 %v1277
      %v1323 = vunpack.c.l.b16 %v1278
      %v1324 = vunpack.c.h.b16 %v1278
      %v1325 = vunpack.c.l.b16 %v1279
      %v1326 = vunpack.c.h.b16 %v1279
      %v1327 = vunpack.c.l.b16 %v1280
      %v1328 = vunpack.c.h.b16 %v1280
      %v1329 = vpack.c.b16 %v1299, %v1297
      %v1330 = vpack.c.b16 %v1300, %v1298
      %v1331 = vpack.c.b16 %v1303, %v1301
      %v1332 = vpack.c.b16 %v1304, %v1302
      %v1333 = vpack.c.b16 %v1307, %v1305
      %v1334 = vpack.c.b16 %v1308, %v1306
      %v1335 = vpack.c.b16 %v1311, %v1309
      %v1336 = vpack.c.b16 %v1312, %v1310
      %v1337 = vpack.c.b16 %v1315, %v1313
      %v1338 = vpack.c.b16 %v1316, %v1314
      %v1339 = vpack.c.b16 %v1319, %v1317
      %v1340 = vpack.c.b16 %v1320, %v1318
      %v1341 = vpack.c.b16 %v1323, %v1321
      %v1342 = vpack.c.b16 %v1324, %v1322
      %v1343 = vpack.c.b16 %v1327, %v1325
      %v1344 = vpack.c.b16 %v1328, %v1326
      %1361 = vmatprep.subr.bf16.mxu0 %v1344
      %1362 = vmatpush1.bf16.msra.mxu0 %v1343
      %1363 = vmatprep.subr.bf16.mxu0 %v1342
      %1364 = vmatpush1.bf16.msra.mxu0 %v1341
      %1365 = vmatprep.subr.bf16.mxu0 %v1340
      %1366 = vmatpush1.bf16.msra.mxu0 %v1339
      %1367 = vmatprep.subr.bf16.mxu0 %v1338
      %1368 = vmatpush1.bf16.msra.mxu0 %v1337
      %1369 = vmatprep.subr.bf16.mxu0 %v1336
      %1370 = vmatpush1.bf16.msra.mxu0 %v1335
      %1371 = vmatprep.subr.bf16.mxu0 %v1334
      %1372 = vmatpush1.bf16.msra.mxu0 %v1333
      %1373 = vmatprep.subr.bf16.mxu0 %v1332
      %1374 = vmatpush1.bf16.msra.mxu0 %v1331
      %1375 = vmatprep.subr.bf16.mxu0 %v1330
      %1376 = vmatpush1.bf16.msra.mxu0 %v1329
      %1377 = vmatprep.subr.bf16.mxu0 0
      %1378 = vmatpush2.bf16.msra.mxu0 0
      %1379 = vmatprep.subr.bf16.mxu0 0
      %1380 = vmatpush2.bf16.msra.mxu0 0
      %1381 = vmatprep.subr.bf16.mxu0 0
      %1382 = vmatpush2.bf16.msra.mxu0 0
      %1383 = vmatprep.subr.bf16.mxu0 0
      %1384 = vmatpush2.bf16.msra.mxu0 0
      %1385 = vmatprep.subr.bf16.mxu0 0
      %1386 = vmatpush2.bf16.msra.mxu0 0
      %1387 = vmatprep.subr.bf16.mxu0 0
      %1388 = vmatpush2.bf16.msra.mxu0 0
      %1389 = vmatprep.subr.bf16.mxu0 0
      %1390 = vmatpush2.bf16.msra.mxu0 0
      %1391 = vmatprep.subr.bf16.mxu0 0
      %1392 = vmatpush2.bf16.msra.mxu0 0
      %1393 = vmatprep.mubr.bf16.mxu0 0
      %1394 = vmatmul.mubr.bf16.gmra.mxu0 %v401
      %v1395 = vpop.f32.mrf.mxu0
      %v1396 = vadd.f32 0.0, %v1395
      %v1397 = vpop.f32.mrf.mxu0
      %v1398 = vadd.f32 0.0, %v1397
      %v1399 = vpop.f32.mrf.mxu0
      %v1400 = vpop.f32.mrf.mxu0
      %1401 = vdwg.mxu0
      %v1402 = vadd.f32 %v1262, %v1396
      %v1403 = vadd.f32 %v1263, %v1398
      %s1404 = scalar_lea.vmem %s4, 896
      %v1405 = vld [vmem:[%s1404] sm:$0xff]
      %v1406 = vld [vmem:[%s1404 + $0x8] sm:$0xff]
      %v1407 = vld [vmem:[%s1404 + $0x10] sm:$0xff]
      %v1408 = vld [vmem:[%s1404 + $0x18] sm:$0xff]
      %v1409 = vld [vmem:[%s1404 + $0x20] sm:$0xff]
      %v1410 = vld [vmem:[%s1404 + $0x28] sm:$0xff]
      %v1411 = vld [vmem:[%s1404 + $0x30] sm:$0xff]
      %v1412 = vld [vmem:[%s1404 + $0x38] sm:$0xff]
      %v1413 = vld [vmem:[%s1404 + $0x40] sm:$0xff]
      %v1414 = vld [vmem:[%s1404 + $0x48] sm:$0xff]
      %v1415 = vld [vmem:[%s1404 + $0x50] sm:$0xff]
      %v1416 = vld [vmem:[%s1404 + $0x58] sm:$0xff]
      %v1417 = vld [vmem:[%s1404 + $0x60] sm:$0xff]
      %v1418 = vld [vmem:[%s1404 + $0x68] sm:$0xff]
      %v1419 = vld [vmem:[%s1404 + $0x70] sm:$0xff]
      %v1420 = vld [vmem:[%s1404 + $0x78] sm:$0xff]
      %v1422 = vunpack.c.l.b16 %v401
      %v1423 = vpack.c.b16 %v1422, %v1422
      %v1425 = vshrl.u32 %v1423, 16
      %v1427 = vshll.u32 %v1423, 16
      %v1429 = vrot.slane %v1427, 1
      %v1430 = vor.u32 %v1425, %v1429
      %v1448 = vunpack.c.l.b16 %v1405
      %v1449 = vunpack.c.h.b16 %v1405
      %v1450 = vunpack.c.l.b16 %v1406
      %v1451 = vunpack.c.h.b16 %v1406
      %v1452 = vunpack.c.l.b16 %v1407
      %v1453 = vunpack.c.h.b16 %v1407
      %v1454 = vunpack.c.l.b16 %v1408
      %v1455 = vunpack.c.h.b16 %v1408
      %v1456 = vunpack.c.l.b16 %v1409
      %v1457 = vunpack.c.h.b16 %v1409
      %v1458 = vunpack.c.l.b16 %v1410
      %v1459 = vunpack.c.h.b16 %v1410
      %v1460 = vunpack.c.l.b16 %v1411
      %v1461 = vunpack.c.h.b16 %v1411
      %v1462 = vunpack.c.l.b16 %v1412
      %v1463 = vunpack.c.h.b16 %v1412
      %v1464 = vunpack.c.l.b16 %v1413
      %v1465 = vunpack.c.h.b16 %v1413
      %v1466 = vunpack.c.l.b16 %v1414
      %v1467 = vunpack.c.h.b16 %v1414
      %v1468 = vunpack.c.l.b16 %v1415
      %v1469 = vunpack.c.h.b16 %v1415
      %v1470 = vunpack.c.l.b16 %v1416
      %v1471 = vunpack.c.h.b16 %v1416
      %v1472 = vunpack.c.l.b16 %v1417
      %v1473 = vunpack.c.h.b16 %v1417
      %v1474 = vunpack.c.l.b16 %v1418
      %v1475 = vunpack.c.h.b16 %v1418
      %v1476 = vunpack.c.l.b16 %v1419
      %v1477 = vunpack.c.h.b16 %v1419
      %v1478 = vunpack.c.l.b16 %v1420
      %v1479 = vunpack.c.h.b16 %v1420
      %v1480 = vpack.c.b16 %v1450, %v1448
      %v1481 = vpack.c.b16 %v1451, %v1449
      %v1482 = vpack.c.b16 %v1454, %v1452
      %v1483 = vpack.c.b16 %v1455, %v1453
      %v1484 = vpack.c.b16 %v1458, %v1456
      %v1485 = vpack.c.b16 %v1459, %v1457
      %v1486 = vpack.c.b16 %v1462, %v1460
      %v1487 = vpack.c.b16 %v1463, %v1461
      %v1488 = vpack.c.b16 %v1466, %v1464
      %v1489 = vpack.c.b16 %v1467, %v1465
      %v1490 = vpack.c.b16 %v1470, %v1468
      %v1491 = vpack.c.b16 %v1471, %v1469
      %v1492 = vpack.c.b16 %v1474, %v1472
      %v1493 = vpack.c.b16 %v1475, %v1473
      %v1494 = vpack.c.b16 %v1478, %v1476
      %v1495 = vpack.c.b16 %v1479, %v1477
      %1512 = vmatprep.subr.bf16.mxu0 %v1495
      %1513 = vmatpush1.bf16.msra.mxu0 %v1494
      %1514 = vmatprep.subr.bf16.mxu0 %v1493
      %1515 = vmatpush1.bf16.msra.mxu0 %v1492
      %1516 = vmatprep.subr.bf16.mxu0 %v1491
      %1517 = vmatpush1.bf16.msra.mxu0 %v1490
      %1518 = vmatprep.subr.bf16.mxu0 %v1489
      %1519 = vmatpush1.bf16.msra.mxu0 %v1488
      %1520 = vmatprep.subr.bf16.mxu0 %v1487
      %1521 = vmatpush1.bf16.msra.mxu0 %v1486
      %1522 = vmatprep.subr.bf16.mxu0 %v1485
      %1523 = vmatpush1.bf16.msra.mxu0 %v1484
      %1524 = vmatprep.subr.bf16.mxu0 %v1483
      %1525 = vmatpush1.bf16.msra.mxu0 %v1482
      %1526 = vmatprep.subr.bf16.mxu0 %v1481
      %1527 = vmatpush1.bf16.msra.mxu0 %v1480
      %1528 = vmatprep.subr.bf16.mxu0 0
      %1529 = vmatpush2.bf16.msra.mxu0 0
      %1530 = vmatprep.subr.bf16.mxu0 0
      %1531 = vmatpush2.bf16.msra.mxu0 0
      %1532 = vmatprep.subr.bf16.mxu0 0
      %1533 = vmatpush2.bf16.msra.mxu0 0
      %1534 = vmatprep.subr.bf16.mxu0 0
      %1535 = vmatpush2.bf16.msra.mxu0 0
      %1536 = vmatprep.subr.bf16.mxu0 0
      %1537 = vmatpush2.bf16.msra.mxu0 0
      %1538 = vmatprep.subr.bf16.mxu0 0
      %1539 = vmatpush2.bf16.msra.mxu0 0
      %1540 = vmatprep.subr.bf16.mxu0 0
      %1541 = vmatpush2.bf16.msra.mxu0 0
      %1542 = vmatprep.subr.bf16.mxu0 0
      %1543 = vmatpush2.bf16.msra.mxu0 0
      %1544 = vmatprep.mubr.bf16.mxu0 0
      %1545 = vmatmul.mubr.bf16.gmra.mxu0 %v1430
      %v1546 = vpop.f32.mrf.mxu0
      %v1547 = vadd.f32 0.0, %v1546
      %v1548 = vpop.f32.mrf.mxu0
      %v1549 = vadd.f32 0.0, %v1548
      %v1550 = vpop.f32.mrf.mxu0
      %v1551 = vpop.f32.mrf.mxu0
      %1552 = vdwg.mxu0
      %v1553 = vadd.f32 %v1402, %v1547
      %v1554 = vadd.f32 %v1403, %v1549
      %s1555 = scalar_lea.vmem %s4, 1024
      %v1556 = vld [vmem:[%s1555] sm:$0xff]
      %v1557 = vld [vmem:[%s1555 + $0x8] sm:$0xff]
      %v1558 = vld [vmem:[%s1555 + $0x10] sm:$0xff]
      %v1559 = vld [vmem:[%s1555 + $0x18] sm:$0xff]
      %v1560 = vld [vmem:[%s1555 + $0x20] sm:$0xff]
      %v1561 = vld [vmem:[%s1555 + $0x28] sm:$0xff]
      %v1562 = vld [vmem:[%s1555 + $0x30] sm:$0xff]
      %v1563 = vld [vmem:[%s1555 + $0x38] sm:$0xff]
      %v1564 = vld [vmem:[%s1555 + $0x40] sm:$0xff]
      %v1565 = vld [vmem:[%s1555 + $0x48] sm:$0xff]
      %v1566 = vld [vmem:[%s1555 + $0x50] sm:$0xff]
      %v1567 = vld [vmem:[%s1555 + $0x58] sm:$0xff]
      %v1568 = vld [vmem:[%s1555 + $0x60] sm:$0xff]
      %v1569 = vld [vmem:[%s1555 + $0x68] sm:$0xff]
      %v1570 = vld [vmem:[%s1555 + $0x70] sm:$0xff]
      %v1571 = vld [vmem:[%s1555 + $0x78] sm:$0xff]
      %v1572 = vrot.slane %v1423, 1
      %v1590 = vunpack.c.l.b16 %v1556
      %v1591 = vunpack.c.h.b16 %v1556
      %v1592 = vunpack.c.l.b16 %v1557
      %v1593 = vunpack.c.h.b16 %v1557
      %v1594 = vunpack.c.l.b16 %v1558
      %v1595 = vunpack.c.h.b16 %v1558
      %v1596 = vunpack.c.l.b16 %v1559
      %v1597 = vunpack.c.h.b16 %v1559
      %v1598 = vunpack.c.l.b16 %v1560
      %v1599 = vunpack.c.h.b16 %v1560
      %v1600 = vunpack.c.l.b16 %v1561
      %v1601 = vunpack.c.h.b16 %v1561
      %v1602 = vunpack.c.l.b16 %v1562
      %v1603 = vunpack.c.h.b16 %v1562
      %v1604 = vunpack.c.l.b16 %v1563
      %v1605 = vunpack.c.h.b16 %v1563
      %v1606 = vunpack.c.l.b16 %v1564
      %v1607 = vunpack.c.h.b16 %v1564
      %v1608 = vunpack.c.l.b16 %v1565
      %v1609 = vunpack.c.h.b16 %v1565
      %v1610 = vunpack.c.l.b16 %v1566
      %v1611 = vunpack.c.h.b16 %v1566
      %v1612 = vunpack.c.l.b16 %v1567
      %v1613 = vunpack.c.h.b16 %v1567
      %v1614 = vunpack.c.l.b16 %v1568
      %v1615 = vunpack.c.h.b16 %v1568
      %v1616 = vunpack.c.l.b16 %v1569
      %v1617 = vunpack.c.h.b16 %v1569
      %v1618 = vunpack.c.l.b16 %v1570
      %v1619 = vunpack.c.h.b16 %v1570
      %v1620 = vunpack.c.l.b16 %v1571
      %v1621 = vunpack.c.h.b16 %v1571
      %v1622 = vpack.c.b16 %v1592, %v1590
      %v1623 = vpack.c.b16 %v1593, %v1591
      %v1624 = vpack.c.b16 %v1596, %v1594
      %v1625 = vpack.c.b16 %v1597, %v1595
      %v1626 = vpack.c.b16 %v1600, %v1598
      %v1627 = vpack.c.b16 %v1601, %v1599
      %v1628 = vpack.c.b16 %v1604, %v1602
      %v1629 = vpack.c.b16 %v1605, %v1603
      %v1630 = vpack.c.b16 %v1608, %v1606
      %v1631 = vpack.c.b16 %v1609, %v1607
      %v1632 = vpack.c.b16 %v1612, %v1610
      %v1633 = vpack.c.b16 %v1613, %v1611
      %v1634 = vpack.c.b16 %v1616, %v1614
      %v1635 = vpack.c.b16 %v1617, %v1615
      %v1636 = vpack.c.b16 %v1620, %v1618
      %v1637 = vpack.c.b16 %v1621, %v1619
      %1654 = vmatprep.subr.bf16.mxu0 %v1637
      %1655 = vmatpush1.bf16.msra.mxu0 %v1636
      %1656 = vmatprep.subr.bf16.mxu0 %v1635
      %1657 = vmatpush1.bf16.msra.mxu0 %v1634
      %1658 = vmatprep.subr.bf16.mxu0 %v1633
      %1659 = vmatpush1.bf16.msra.mxu0 %v1632
      %1660 = vmatprep.subr.bf16.mxu0 %v1631
      %1661 = vmatpush1.bf16.msra.mxu0 %v1630
      %1662 = vmatprep.subr.bf16.mxu0 %v1629
      %1663 = vmatpush1.bf16.msra.mxu0 %v1628
      %1664 = vmatprep.subr.bf16.mxu0 %v1627
      %1665 = vmatpush1.bf16.msra.mxu0 %v1626
      %1666 = vmatprep.subr.bf16.mxu0 %v1625
      %1667 = vmatpush1.bf16.msra.mxu0 %v1624
      %1668 = vmatprep.subr.bf16.mxu0 %v1623
      %1669 = vmatpush1.bf16.msra.mxu0 %v1622
      %1670 = vmatprep.subr.bf16.mxu0 0
      %1671 = vmatpush2.bf16.msra.mxu0 0
      %1672 = vmatprep.subr.bf16.mxu0 0
      %1673 = vmatpush2.bf16.msra.mxu0 0
      %1674 = vmatprep.subr.bf16.mxu0 0
      %1675 = vmatpush2.bf16.msra.mxu0 0
      %1676 = vmatprep.subr.bf16.mxu0 0
      %1677 = vmatpush2.bf16.msra.mxu0 0
      %1678 = vmatprep.subr.bf16.mxu0 0
      %1679 = vmatpush2.bf16.msra.mxu0 0
      %1680 = vmatprep.subr.bf16.mxu0 0
      %1681 = vmatpush2.bf16.msra.mxu0 0
      %1682 = vmatprep.subr.bf16.mxu0 0
      %1683 = vmatpush2.bf16.msra.mxu0 0
      %1684 = vmatprep.subr.bf16.mxu0 0
      %1685 = vmatpush2.bf16.msra.mxu0 0
      %1686 = vmatprep.mubr.bf16.mxu0 0
      %1687 = vmatmul.mubr.bf16.gmra.mxu0 %v1572
      %v1688 = vpop.f32.mrf.mxu0
      %v1689 = vadd.f32 0.0, %v1688
      %v1690 = vpop.f32.mrf.mxu0
      %v1691 = vadd.f32 0.0, %v1690
      %v1692 = vpop.f32.mrf.mxu0
      %v1693 = vpop.f32.mrf.mxu0
      %1694 = vdwg.mxu0
      %v1695 = vadd.f32 %v1553, %v1689
      %v1696 = vadd.f32 %v1554, %v1691
      %v1697 = vmax.f32 %v1695, 0.0
      %v1698 = vmax.f32 %v1696, 0.0
      %1699 = vmatprep.subr.bf16.mxu0 %v510
      %1700 = vmatpush1.bf16.msra.mxu0 %v509
      %1701 = vmatprep.subr.bf16.mxu0 %v508
      %1702 = vmatpush1.bf16.msra.mxu0 %v507
      %1703 = vmatprep.subr.bf16.mxu0 %v506
      %1704 = vmatpush1.bf16.msra.mxu0 %v505
      %1705 = vmatprep.subr.bf16.mxu0 %v504
      %1706 = vmatpush1.bf16.msra.mxu0 %v503
      %1707 = vmatprep.subr.bf16.mxu0 %v502
      %1708 = vmatpush1.bf16.msra.mxu0 %v501
      %1709 = vmatprep.subr.bf16.mxu0 %v500
      %1710 = vmatpush1.bf16.msra.mxu0 %v499
      %1711 = vmatprep.subr.bf16.mxu0 %v498
      %1712 = vmatpush1.bf16.msra.mxu0 %v497
      %1713 = vmatprep.subr.bf16.mxu0 %v496
      %1714 = vmatpush1.bf16.msra.mxu0 %v495
      %1715 = vmatprep.subr.bf16.mxu0 0
      %1716 = vmatpush2.bf16.msra.mxu0 0
      %1717 = vmatprep.subr.bf16.mxu0 0
      %1718 = vmatpush2.bf16.msra.mxu0 0
      %1719 = vmatprep.subr.bf16.mxu0 0
      %1720 = vmatpush2.bf16.msra.mxu0 0
      %1721 = vmatprep.subr.bf16.mxu0 0
      %1722 = vmatpush2.bf16.msra.mxu0 0
      %1723 = vmatprep.subr.bf16.mxu0 0
      %1724 = vmatpush2.bf16.msra.mxu0 0
      %1725 = vmatprep.subr.bf16.mxu0 0
      %1726 = vmatpush2.bf16.msra.mxu0 0
      %1727 = vmatprep.subr.bf16.mxu0 0
      %1728 = vmatpush2.bf16.msra.mxu0 0
      %1729 = vmatprep.subr.bf16.mxu0 0
      %1730 = vmatpush2.bf16.msra.mxu0 0
      %1731 = vmatprep.mubr.bf16.mxu0 0
      %1732 = vmatmul.mubr.bf16.gmra.mxu0 %v997
      %v1733 = vpop.f32.mrf.mxu0
      %v1734 = vadd.f32 0.0, %v1733
      %v1735 = vpop.f32.mrf.mxu0
      %v1736 = vadd.f32 0.0, %v1735
      %v1737 = vpop.f32.mrf.mxu0
      %v1738 = vpop.f32.mrf.mxu0
      %1739 = vdwg.mxu0
      %1740 = vmatprep.subr.bf16.mxu0 %v631
      %1741 = vmatpush1.bf16.msra.mxu0 %v630
      %1742 = vmatprep.subr.bf16.mxu0 %v629
      %1743 = vmatpush1.bf16.msra.mxu0 %v628
      %1744 = vmatprep.subr.bf16.mxu0 %v627
      %1745 = vmatpush1.bf16.msra.mxu0 %v626
      %1746 = vmatprep.subr.bf16.mxu0 %v625
      %1747 = vmatpush1.bf16.msra.mxu0 %v624
      %1748 = vmatprep.subr.bf16.mxu0 %v623
      %1749 = vmatpush1.bf16.msra.mxu0 %v622
      %1750 = vmatprep.subr.bf16.mxu0 %v621
      %1751 = vmatpush1.bf16.msra.mxu0 %v620
      %1752 = vmatprep.subr.bf16.mxu0 %v619
      %1753 = vmatpush1.bf16.msra.mxu0 %v618
      %1754 = vmatprep.subr.bf16.mxu0 %v617
      %1755 = vmatpush1.bf16.msra.mxu0 %v616
      %1756 = vmatprep.subr.bf16.mxu0 0
      %1757 = vmatpush2.bf16.msra.mxu0 0
      %1758 = vmatprep.subr.bf16.mxu0 0
      %1759 = vmatpush2.bf16.msra.mxu0 0
      %1760 = vmatprep.subr.bf16.mxu0 0
      %1761 = vmatpush2.bf16.msra.mxu0 0
      %1762 = vmatprep.subr.bf16.mxu0 0
      %1763 = vmatpush2.bf16.msra.mxu0 0
      %1764 = vmatprep.subr.bf16.mxu0 0
      %1765 = vmatpush2.bf16.msra.mxu0 0
      %1766 = vmatprep.subr.bf16.mxu0 0
      %1767 = vmatpush2.bf16.msra.mxu0 0
      %1768 = vmatprep.subr.bf16.mxu0 0
      %1769 = vmatpush2.bf16.msra.mxu0 0
      %1770 = vmatprep.subr.bf16.mxu0 0
      %1771 = vmatpush2.bf16.msra.mxu0 0
      %1772 = vmatprep.mubr.bf16.mxu0 0
      %1773 = vmatmul.mubr.bf16.gmra.mxu0 %v400
      %v1774 = vpop.f32.mrf.mxu0
      %v1775 = vadd.f32 %v1734, %v1774
      %v1776 = vpop.f32.mrf.mxu0
      %v1777 = vadd.f32 %v1736, %v1776
      %v1778 = vpop.f32.mrf.mxu0
      %v1779 = vpop.f32.mrf.mxu0
      %1780 = vdwg.mxu0
      %1781 = vmatprep.subr.bf16.mxu0 %v771
      %1782 = vmatpush1.bf16.msra.mxu0 %v770
      %1783 = vmatprep.subr.bf16.mxu0 %v769
      %1784 = vmatpush1.bf16.msra.mxu0 %v768
      %1785 = vmatprep.subr.bf16.mxu0 %v767
      %1786 = vmatpush1.bf16.msra.mxu0 %v766
      %1787 = vmatprep.subr.bf16.mxu0 %v765
      %1788 = vmatpush1.bf16.msra.mxu0 %v764
      %1789 = vmatprep.subr.bf16.mxu0 %v763
      %1790 = vmatpush1.bf16.msra.mxu0 %v762
      %1791 = vmatprep.subr.bf16.mxu0 %v761
      %1792 = vmatpush1.bf16.msra.mxu0 %v760
      %1793 = vmatprep.subr.bf16.mxu0 %v759
      %1794 = vmatpush1.bf16.msra.mxu0 %v758
      %1795 = vmatprep.subr.bf16.mxu0 %v757
      %1796 = vmatpush1.bf16.msra.mxu0 %v756
      %1797 = vmatprep.subr.bf16.mxu0 0
      %1798 = vmatpush2.bf16.msra.mxu0 0
      %1799 = vmatprep.subr.bf16.mxu0 0
      %1800 = vmatpush2.bf16.msra.mxu0 0
      %1801 = vmatprep.subr.bf16.mxu0 0
      %1802 = vmatpush2.bf16.msra.mxu0 0
      %1803 = vmatprep.subr.bf16.mxu0 0
      %1804 = vmatpush2.bf16.msra.mxu0 0
      %1805 = vmatprep.subr.bf16.mxu0 0
      %1806 = vmatpush2.bf16.msra.mxu0 0
      %1807 = vmatprep.subr.bf16.mxu0 0
      %1808 = vmatpush2.bf16.msra.mxu0 0
      %1809 = vmatprep.subr.bf16.mxu0 0
      %1810 = vmatpush2.bf16.msra.mxu0 0
      %1811 = vmatprep.subr.bf16.mxu0 0
      %1812 = vmatpush2.bf16.msra.mxu0 0
      %1813 = vmatprep.mubr.bf16.mxu0 0
      %1814 = vmatmul.mubr.bf16.gmra.mxu0 %v1139
      %v1815 = vpop.f32.mrf.mxu0
      %v1816 = vadd.f32 0.0, %v1815
      %v1817 = vpop.f32.mrf.mxu0
      %v1818 = vadd.f32 0.0, %v1817
      %v1819 = vpop.f32.mrf.mxu0
      %v1820 = vpop.f32.mrf.mxu0
      %1821 = vdwg.mxu0
      %v1822 = vadd.f32 %v1775, %v1816
      %v1823 = vadd.f32 %v1777, %v1818
      %1824 = vmatprep.subr.bf16.mxu0 %v911
      %1825 = vmatpush1.bf16.msra.mxu0 %v910
      %1826 = vmatprep.subr.bf16.mxu0 %v909
      %1827 = vmatpush1.bf16.msra.mxu0 %v908
      %1828 = vmatprep.subr.bf16.mxu0 %v907
      %1829 = vmatpush1.bf16.msra.mxu0 %v906
      %1830 = vmatprep.subr.bf16.mxu0 %v905
      %1831 = vmatpush1.bf16.msra.mxu0 %v904
      %1832 = vmatprep.subr.bf16.mxu0 %v903
      %1833 = vmatpush1.bf16.msra.mxu0 %v902
      %1834 = vmatprep.subr.bf16.mxu0 %v901
      %1835 = vmatpush1.bf16.msra.mxu0 %v900
      %1836 = vmatprep.subr.bf16.mxu0 %v899
      %1837 = vmatpush1.bf16.msra.mxu0 %v898
      %1838 = vmatprep.subr.bf16.mxu0 %v897
      %1839 = vmatpush1.bf16.msra.mxu0 %v896
      %1840 = vmatprep.subr.bf16.mxu0 0
      %1841 = vmatpush2.bf16.msra.mxu0 0
      %1842 = vmatprep.subr.bf16.mxu0 0
      %1843 = vmatpush2.bf16.msra.mxu0 0
      %1844 = vmatprep.subr.bf16.mxu0 0
      %1845 = vmatpush2.bf16.msra.mxu0 0
      %1846 = vmatprep.subr.bf16.mxu0 0
      %1847 = vmatpush2.bf16.msra.mxu0 0
      %1848 = vmatprep.subr.bf16.mxu0 0
      %1849 = vmatpush2.bf16.msra.mxu0 0
      %1850 = vmatprep.subr.bf16.mxu0 0
      %1851 = vmatpush2.bf16.msra.mxu0 0
      %1852 = vmatprep.subr.bf16.mxu0 0
      %1853 = vmatpush2.bf16.msra.mxu0 0
      %1854 = vmatprep.subr.bf16.mxu0 0
      %1855 = vmatpush2.bf16.msra.mxu0 0
      %1856 = vmatprep.mubr.bf16.mxu0 0
      %1857 = vmatmul.mubr.bf16.gmra.mxu0 %v401
      %v1858 = vpop.f32.mrf.mxu0
      %v1859 = vadd.f32 0.0, %v1858
      %v1860 = vpop.f32.mrf.mxu0
      %v1861 = vadd.f32 0.0, %v1860
      %v1862 = vpop.f32.mrf.mxu0
      %v1863 = vpop.f32.mrf.mxu0
      %1864 = vdwg.mxu0
      %v1865 = vadd.f32 %v1822, %v1859
      %v1866 = vadd.f32 %v1823, %v1861
      %1867 = vmatprep.subr.bf16.mxu0 %v1062
      %1868 = vmatpush1.bf16.msra.mxu0 %v1061
      %1869 = vmatprep.subr.bf16.mxu0 %v1060
      %1870 = vmatpush1.bf16.msra.mxu0 %v1059
      %1871 = vmatprep.subr.bf16.mxu0 %v1058
      %1872 = vmatpush1.bf16.msra.mxu0 %v1057
      %1873 = vmatprep.subr.bf16.mxu0 %v1056
      %1874 = vmatpush1.bf16.msra.mxu0 %v1055
      %1875 = vmatprep.subr.bf16.mxu0 %v1054
      %1876 = vmatpush1.bf16.msra.mxu0 %v1053
      %1877 = vmatprep.subr.bf16.mxu0 %v1052
      %1878 = vmatpush1.bf16.msra.mxu0 %v1051
      %1879 = vmatprep.subr.bf16.mxu0 %v1050
      %1880 = vmatpush1.bf16.msra.mxu0 %v1049
      %1881 = vmatprep.subr.bf16.mxu0 %v1048
      %1882 = vmatpush1.bf16.msra.mxu0 %v1047
      %1883 = vmatprep.subr.bf16.mxu0 0
      %1884 = vmatpush2.bf16.msra.mxu0 0
      %1885 = vmatprep.subr.bf16.mxu0 0
      %1886 = vmatpush2.bf16.msra.mxu0 0
      %1887 = vmatprep.subr.bf16.mxu0 0
      %1888 = vmatpush2.bf16.msra.mxu0 0
      %1889 = vmatprep.subr.bf16.mxu0 0
      %1890 = vmatpush2.bf16.msra.mxu0 0
      %1891 = vmatprep.subr.bf16.mxu0 0
      %1892 = vmatpush2.bf16.msra.mxu0 0
      %1893 = vmatprep.subr.bf16.mxu0 0
      %1894 = vmatpush2.bf16.msra.mxu0 0
      %1895 = vmatprep.subr.bf16.mxu0 0
      %1896 = vmatpush2.bf16.msra.mxu0 0
      %1897 = vmatprep.subr.bf16.mxu0 0
      %1898 = vmatpush2.bf16.msra.mxu0 0
      %1899 = vmatprep.mubr.bf16.mxu0 0
      %1900 = vmatmul.mubr.bf16.gmra.mxu0 %v1430
      %v1901 = vpop.f32.mrf.mxu0
      %v1902 = vadd.f32 0.0, %v1901
      %v1903 = vpop.f32.mrf.mxu0
      %v1904 = vadd.f32 0.0, %v1903
      %v1905 = vpop.f32.mrf.mxu0
      %v1906 = vpop.f32.mrf.mxu0
      %1907 = vdwg.mxu0
      %v1908 = vadd.f32 %v1865, %v1902
      %v1909 = vadd.f32 %v1866, %v1904
      %1910 = vmatprep.subr.bf16.mxu0 %v1204
      %1911 = vmatpush1.bf16.msra.mxu0 %v1203
      %1912 = vmatprep.subr.bf16.mxu0 %v1202
      %1913 = vmatpush1.bf16.msra.mxu0 %v1201
      %1914 = vmatprep.subr.bf16.mxu0 %v1200
      %1915 = vmatpush1.bf16.msra.mxu0 %v1199
      %1916 = vmatprep.subr.bf16.mxu0 %v1198
      %1917 = vmatpush1.bf16.msra.mxu0 %v1197
      %1918 = vmatprep.subr.bf16.mxu0 %v1196
      %1919 = vmatpush1.bf16.msra.mxu0 %v1195
      %1920 = vmatprep.subr.bf16.mxu0 %v1194
      %1921 = vmatpush1.bf16.msra.mxu0 %v1193
      %1922 = vmatprep.subr.bf16.mxu0 %v1192
      %1923 = vmatpush1.bf16.msra.mxu0 %v1191
      %1924 = vmatprep.subr.bf16.mxu0 %v1190
      %1925 = vmatpush1.bf16.msra.mxu0 %v1189
      %1926 = vmatprep.subr.bf16.mxu0 0
      %1927 = vmatpush2.bf16.msra.mxu0 0
      %1928 = vmatprep.subr.bf16.mxu0 0
      %1929 = vmatpush2.bf16.msra.mxu0 0
      %1930 = vmatprep.subr.bf16.mxu0 0
      %1931 = vmatpush2.bf16.msra.mxu0 0
      %1932 = vmatprep.subr.bf16.mxu0 0
      %1933 = vmatpush2.bf16.msra.mxu0 0
      %1934 = vmatprep.subr.bf16.mxu0 0
      %1935 = vmatpush2.bf16.msra.mxu0 0
      %1936 = vmatprep.subr.bf16.mxu0 0
      %1937 = vmatpush2.bf16.msra.mxu0 0
      %1938 = vmatprep.subr.bf16.mxu0 0
      %1939 = vmatpush2.bf16.msra.mxu0 0
      %1940 = vmatprep.subr.bf16.mxu0 0
      %1941 = vmatpush2.bf16.msra.mxu0 0
      %1942 = vmatprep.mubr.bf16.mxu0 0
      %1943 = vmatmul.mubr.bf16.gmra.mxu0 %v1572
      %v1944 = vpop.f32.mrf.mxu0
      %v1945 = vadd.f32 0.0, %v1944
      %v1946 = vpop.f32.mrf.mxu0
      %v1947 = vadd.f32 0.0, %v1946
      %v1948 = vpop.f32.mrf.mxu0
      %v1949 = vpop.f32.mrf.mxu0
      %1950 = vdwg.mxu0
      %v1951 = vadd.f32 %v1908, %v1945
      %v1952 = vadd.f32 %v1909, %v1947
      %1953 = vmatprep.subr.bf16.mxu0 %v1344
      %1954 = vmatpush1.bf16.msra.mxu0 %v1343
      %1955 = vmatprep.subr.bf16.mxu0 %v1342
      %1956 = vmatpush1.bf16.msra.mxu0 %v1341
      %1957 = vmatprep.subr.bf16.mxu0 %v1340
      %1958 = vmatpush1.bf16.msra.mxu0 %v1339
      %1959 = vmatprep.subr.bf16.mxu0 %v1338
      %1960 = vmatpush1.bf16.msra.mxu0 %v1337
      %1961 = vmatprep.subr.bf16.mxu0 %v1336
      %1962 = vmatpush1.bf16.msra.mxu0 %v1335
      %1963 = vmatprep.subr.bf16.mxu0 %v1334
      %1964 = vmatpush1.bf16.msra.mxu0 %v1333
      %1965 = vmatprep.subr.bf16.mxu0 %v1332
      %1966 = vmatpush1.bf16.msra.mxu0 %v1331
      %1967 = vmatprep.subr.bf16.mxu0 %v1330
      %1968 = vmatpush1.bf16.msra.mxu0 %v1329
      %1969 = vmatprep.subr.bf16.mxu0 0
      %1970 = vmatpush2.bf16.msra.mxu0 0
      %1971 = vmatprep.subr.bf16.mxu0 0
      %1972 = vmatpush2.bf16.msra.mxu0 0
      %1973 = vmatprep.subr.bf16.mxu0 0
      %1974 = vmatpush2.bf16.msra.mxu0 0
      %1975 = vmatprep.subr.bf16.mxu0 0
      %1976 = vmatpush2.bf16.msra.mxu0 0
      %1977 = vmatprep.subr.bf16.mxu0 0
      %1978 = vmatpush2.bf16.msra.mxu0 0
      %1979 = vmatprep.subr.bf16.mxu0 0
      %1980 = vmatpush2.bf16.msra.mxu0 0
      %1981 = vmatprep.subr.bf16.mxu0 0
      %1982 = vmatpush2.bf16.msra.mxu0 0
      %1983 = vmatprep.subr.bf16.mxu0 0
      %1984 = vmatpush2.bf16.msra.mxu0 0
      %1985 = vmatprep.mubr.bf16.mxu0 0
      %1986 = vmatmul.mubr.bf16.gmra.mxu0 %v402
      %v1987 = vpop.f32.mrf.mxu0
      %v1988 = vadd.f32 0.0, %v1987
      %v1989 = vpop.f32.mrf.mxu0
      %v1990 = vadd.f32 0.0, %v1989
      %v1991 = vpop.f32.mrf.mxu0
      %v1992 = vpop.f32.mrf.mxu0
      %1993 = vdwg.mxu0
      %v1994 = vadd.f32 %v1951, %v1988
      %v1995 = vadd.f32 %v1952, %v1990
      %v1997 = vunpack.c.l.b16 %v402
      %v1998 = vpack.c.b16 %v1997, %v1997
      %v2000 = vshrl.u32 %v1998, 16
      %v2002 = vshll.u32 %v1998, 16
      %v2004 = vrot.slane %v2002, 1
      %v2005 = vor.u32 %v2000, %v2004
      %2007 = vmatprep.subr.bf16.mxu0 %v1495
      %2008 = vmatpush1.bf16.msra.mxu0 %v1494
      %2009 = vmatprep.subr.bf16.mxu0 %v1493
      %2010 = vmatpush1.bf16.msra.mxu0 %v1492
      %2011 = vmatprep.subr.bf16.mxu0 %v1491
      %2012 = vmatpush1.bf16.msra.mxu0 %v1490
      %2013 = vmatprep.subr.bf16.mxu0 %v1489
      %2014 = vmatpush1.bf16.msra.mxu0 %v1488
      %2015 = vmatprep.subr.bf16.mxu0 %v1487
      %2016 = vmatpush1.bf16.msra.mxu0 %v1486
      %2017 = vmatprep.subr.bf16.mxu0 %v1485
      %2018 = vmatpush1.bf16.msra.mxu0 %v1484
      %2019 = vmatprep.subr.bf16.mxu0 %v1483
      %2020 = vmatpush1.bf16.msra.mxu0 %v1482
      %2021 = vmatprep.subr.bf16.mxu0 %v1481
      %2022 = vmatpush1.bf16.msra.mxu0 %v1480
      %2023 = vmatprep.subr.bf16.mxu0 0
      %2024 = vmatpush2.bf16.msra.mxu0 0
      %2025 = vmatprep.subr.bf16.mxu0 0
      %2026 = vmatpush2.bf16.msra.mxu0 0
      %2027 = vmatprep.subr.bf16.mxu0 0
      %2028 = vmatpush2.bf16.msra.mxu0 0
      %2029 = vmatprep.subr.bf16.mxu0 0
      %2030 = vmatpush2.bf16.msra.mxu0 0
      %2031 = vmatprep.subr.bf16.mxu0 0
      %2032 = vmatpush2.bf16.msra.mxu0 0
      %2033 = vmatprep.subr.bf16.mxu0 0
      %2034 = vmatpush2.bf16.msra.mxu0 0
      %2035 = vmatprep.subr.bf16.mxu0 0
      %2036 = vmatpush2.bf16.msra.mxu0 0
      %2037 = vmatprep.subr.bf16.mxu0 0
      %2038 = vmatpush2.bf16.msra.mxu0 0
      %2039 = vmatprep.mubr.bf16.mxu0 0
      %2040 = vmatmul.mubr.bf16.gmra.mxu0 %v2005
      %v2041 = vpop.f32.mrf.mxu0
      %v2042 = vadd.f32 0.0, %v2041
      %v2043 = vpop.f32.mrf.mxu0
      %v2044 = vadd.f32 0.0, %v2043
      %v2045 = vpop.f32.mrf.mxu0
      %v2046 = vpop.f32.mrf.mxu0
      %2047 = vdwg.mxu0
      %v2048 = vadd.f32 %v1994, %v2042
      %v2049 = vadd.f32 %v1995, %v2044
      %v2050 = vrot.slane %v1998, 1
      %2052 = vmatprep.subr.bf16.mxu0 %v1637
      %2053 = vmatpush1.bf16.msra.mxu0 %v1636
      %2054 = vmatprep.subr.bf16.mxu0 %v1635
      %2055 = vmatpush1.bf16.msra.mxu0 %v1634
      %2056 = vmatprep.subr.bf16.mxu0 %v1633
      %2057 = vmatpush1.bf16.msra.mxu0 %v1632
      %2058 = vmatprep.subr.bf16.mxu0 %v1631
      %2059 = vmatpush1.bf16.msra.mxu0 %v1630
      %2060 = vmatprep.subr.bf16.mxu0 %v1629
      %2061 = vmatpush1.bf16.msra.mxu0 %v1628
      %2062 = vmatprep.subr.bf16.mxu0 %v1627
      %2063 = vmatpush1.bf16.msra.mxu0 %v1626
      %2064 = vmatprep.subr.bf16.mxu0 %v1625
      %2065 = vmatpush1.bf16.msra.mxu0 %v1624
      %2066 = vmatprep.subr.bf16.mxu0 %v1623
      %2067 = vmatpush1.bf16.msra.mxu0 %v1622
      %2068 = vmatprep.subr.bf16.mxu0 0
      %2069 = vmatpush2.bf16.msra.mxu0 0
      %2070 = vmatprep.subr.bf16.mxu0 0
      %2071 = vmatpush2.bf16.msra.mxu0 0
      %2072 = vmatprep.subr.bf16.mxu0 0
      %2073 = vmatpush2.bf16.msra.mxu0 0
      %2074 = vmatprep.subr.bf16.mxu0 0
      %2075 = vmatpush2.bf16.msra.mxu0 0
      %2076 = vmatprep.subr.bf16.mxu0 0
      %2077 = vmatpush2.bf16.msra.mxu0 0
      %2078 = vmatprep.subr.bf16.mxu0 0
      %2079 = vmatpush2.bf16.msra.mxu0 0
      %2080 = vmatprep.subr.bf16.mxu0 0
      %2081 = vmatpush2.bf16.msra.mxu0 0
      %2082 = vmatprep.subr.bf16.mxu0 0
      %2083 = vmatpush2.bf16.msra.mxu0 0
      %2084 = vmatprep.mubr.bf16.mxu0 0
      %2085 = vmatmul.mubr.bf16.gmra.mxu0 %v2050
      %v2086 = vpop.f32.mrf.mxu0
      %v2087 = vadd.f32 0.0, %v2086
      %v2088 = vpop.f32.mrf.mxu0
      %v2089 = vadd.f32 0.0, %v2088
      %v2090 = vpop.f32.mrf.mxu0
      %v2091 = vpop.f32.mrf.mxu0
      %2092 = vdwg.mxu0
      %v2093 = vadd.f32 %v2048, %v2087
      %v2094 = vadd.f32 %v2049, %v2089
      %v2095 = vmax.f32 %v2093, 0.0
      %v2096 = vmax.f32 %v2094, 0.0
      %v2097 = vmax.f32 %v1697, %v2095
      %v2098 = vmax.f32 %v1698, %v2096
      %v2101 = vrot.slane %v2097, 1
      %v2102 = vrot.slane %v2098, 1
      %v2105 = vmax.f32 %v2097, %v2101
      %v2106 = vmax.f32 %v2098, %v2102
      %v2107 = vpack.c.bf16 %v2105, %v2105
      %v2108 = vpack.c.bf16 %v2106, %v2106
      %v2111 = vcombine.low %v2107, %v2108
      %v2113 = vunpack.c.l.s4 1966171168
      %v2114 = vunpack.c.0.s8 %v2113
      %v2115 = vlaneseq
      %v2116 = vshrl.u32 %v2115, 7
      %v2117 = vsub.s32 %v2114, %v2116
      %v2118 = vrot.slane %v2111, %v2117
      %v2120 = vunpack.c.l.s4 1966171168
      %v2121 = vunpack.c.0.s8 %v2120
      %v2122 = vlaneseq
      %v2123 = vshrl.u32 %v2122, 7
      %v2124 = vsub.s32 %v2121, %v2123
      %v2125 = vrot.slane %v2118, %v2124
      %vm2127 = vcmask 1040384
      %vm2128 = vsmask.f32 256
      %vm2129 = vmand %vm2127, %vm2128
      %vm2130 = vcmask 1041409
      %vm2131 = vsmask.f32 1280
      %vm2132 = vmand %vm2130, %vm2131
      %vm2133 = vmor %vm2132, %vm2129
      %v2134 = vld [vmem:[%s397] sm:$0x3]
      %v2135 = vsel %vm2133, %v2125, %v2134
      %2136 = vst [vmem:[%s397] sm:$0x3] %v2135
      %v2137 = vcombine.high %v2118, %v2118
      %v2139 = vunpack.c.l.s4 1966171168
      %v2140 = vunpack.c.0.s8 %v2139
      %v2141 = vlaneseq
      %v2142 = vshrl.u32 %v2141, 7
      %v2143 = vsub.s32 %v2140, %v2142
      %v2144 = vrot.slane %v2137, %v2143
      %v2146 = vshll.u32 %v2144, 16
      %vm2149 = vsmask.f32 7938
      %vm2150 = vmand %vm2127, %vm2149
      %vm2151 = vsmask.f32 7942
      %vm2152 = vmand %vm2130, %vm2151
      %vm2153 = vmor %vm2152, %vm2150
      %v2154 = vld [vmem:[%s397] sm:$0x3]
      %v2155 = vsel %vm2153, %v2146, %v2154
      %2156 = vst [vmem:[%s397] sm:$0x3] %v2155
      %p2157 = scmp.lt.s32.totalorder %s20, 1
      %s2158 = scalar_select %p2157, %s20, 1
      %p2159 = scmp.lt.s32.totalorder %s21, 1
      %s2160 = scalar_select %p2159, %s21, 1
      %s2161 = smul.addr %s2160, 2
      %s2162 = smul.addr %s2158, 4
      %s2163 = sadd.s32 %s2161, %s2162
      %s2164 = scalar_lea.vmem %s5, %s2163
      // Predicated region
      $region41: #{cnn_forward.8} parent=39 // pred_check
        %p2165 = pneg %p195
      $region42: #{cnn_forward.8} parent=39 // pred_check_branch
        %2167 = sbr.rel (%p2165) target = $region44
      $region43: #{cnn_forward.8} parent=39 // pred_region
        _
      $region44: #{cnn_forward.8} parent=39 // pred_fallthru
        _
    $region40: #{cnn_forward.8} parent=5 // pred_fallthru
      _
    %p2168 = scmp.le.s32.totalorder 2, %s11
    // Predicated region
    $region45: #{cnn_forward.8} parent=5 // pred_check
      %p2169 = pneg %p2168
    $region46: #{cnn_forward.8} parent=5 // pred_check_branch
      %2171 = sbr.rel (%p2169) target = $region48
    $region47: #{cnn_forward.8} parent=5 // pred_region
      %s2172 = ssub.s32 %s11, 2
      // Predicated region
      $region49: #{cnn_forward.8} parent=47 // pred_check
        %p2173 = pneg %p201
      $region50: #{cnn_forward.8} parent=47 // pred_check_branch
        %2175 = sbr.rel (%p2173) target = $region52
      $region51: #{cnn_forward.8} parent=47 // pred_region
        %p2176 = scmp.lt.s32.totalorder %s22, 1
        %s2177 = scalar_select %p2176, %s22, 1
        %p2178 = scmp.lt.s32.totalorder %s23, 1
        %s2179 = scalar_select %p2178, %s23, 1
        %s2180 = smul.addr %s2179, 2
        %s2181 = smul.addr %s2177, 4
        %s2182 = sadd.s32 %s2180, %s2181
        %s2183 = scalar_lea.vmem %s5, %s2182
      $region52: #{cnn_forward.8} parent=47 // pred_fallthru
        _
    $region48: #{cnn_forward.8} parent=5 // pred_fallthru
      _
  $region6: #{cnn_forward.8} parent=0 // loop_footer
    %s15 = sadd.s32 1, %s11
  $region7: #{cnn_forward.8} parent=0 // loop_footer_branch
    %10 = sbr.rel target = $region3
  $region8: #{cnn_forward.8} parent=0 // loop_exit
    _

// kernel: cnn_forward.11
$region0: #{cnn_forward.11}
  #allocation0 [shape = 'u32[]', space=smem, size = 0x4, offset = 0x4, fixed_abs, tag = 'smem constant byte address 0x4 - core index']
  #allocation1 [shape = 'u32[144,128]{1,0:T(1,128)}', space=vmem, size = 0x12000, scoped, tag = 'internal scratch']
  %s0 = inlined_call_operand.vmem [shape: bf16[2,1024], index: 0, kind: input, shape index: {}]
  %s1 = inlined_call_operand.vmem [shape: bf16[1024,128], index: 1, kind: input, shape index: {}]
  %s2 = inlined_call_operand.vmem [shape: f32[1,128], index: 2, kind: input, shape index: {}]
  %s3 = inlined_call_operand.hbm [shape: f32[2,128], index: 3, kind: output, shape index: {}]
  %s4 = sld [smem:[#allocation0]]
  $region22: #{cnn_forward.11} parent=0
    _
  %s6 = ssub.s32 1, %s4
  %s7 = scalar_select 0, %s6, %s4
  $region1: #{cnn_forward.11} parent=0
    #allocation2 [shape = 'u8[1024]{0}', space=vmem, size = 0x400, scoped, tag = 'output window, operand 0, single buffered']
    #allocation3 [shape = 's32[1]{0}', space=sflag, size = 0x4, scoped, tag = 'scoped memory for cnn_forward.11']
    %8 = vsyncpa [#allocation3], 0
    // Predicated region
    $region2: #{cnn_forward.11} parent=1 // pred_check
      _
    $region3: #{cnn_forward.11} parent=1 // pred_check_branch
      %10 = sbr.rel (0) target = $region5
    $region4: #{cnn_forward.11} parent=1 // pred_region
      _
    $region5: #{cnn_forward.11} parent=1 // pred_fallthru
      _
    // Predicated region
    $region6: #{cnn_forward.11} parent=1 // pred_check
      _
    $region7: #{cnn_forward.11} parent=1 // pred_check_branch
      %12 = sbr.rel (0) target = $region9
    $region8: #{cnn_forward.11} parent=1 // pred_region
      _
    $region9: #{cnn_forward.11} parent=1 // pred_fallthru
      _
    // Predicated region
    $region10: #{cnn_forward.11} parent=1 // pred_check
      _
    $region11: #{cnn_forward.11} parent=1 // pred_check_branch
      %14 = sbr.rel (0) target = $region13
    $region12: #{cnn_forward.11} parent=1 // pred_region
      _
    $region13: #{cnn_forward.11} parent=1 // pred_fallthru
      _
    %v16 = vld [vmem:[%s0] sm:$0xff]
    %v17 = vld [vmem:[%s1] sm:$0xf]
    %v18 = vld [vmem:[%s1 + $0x4] sm:$0xf]
    %v19 = vld [vmem:[%s1 + $0x8] sm:$0xf]
    %v20 = vld [vmem:[%s1 + $0xc] sm:$0xf]
    %v21 = vld [vmem:[%s1 + $0x10] sm:$0xf]
    %v22 = vld [vmem:[%s1 + $0x14] sm:$0xf]
    %v23 = vld [vmem:[%s1 + $0x18] sm:$0xf]
    %v24 = vld [vmem:[%s1 + $0x1c] sm:$0xf]
    %v25 = vld [vmem:[%s1 + $0x20] sm:$0xf]
    %v26 = vld [vmem:[%s1 + $0x24] sm:$0xf]
    %v27 = vld [vmem:[%s1 + $0x28] sm:$0xf]
    %v28 = vld [vmem:[%s1 + $0x2c] sm:$0xf]
    %v29 = vld [vmem:[%s1 + $0x30] sm:$0xf]
    %v30 = vld [vmem:[%s1 + $0x34] sm:$0xf]
    %v31 = vld [vmem:[%s1 + $0x38] sm:$0xf]
    %v32 = vld [vmem:[%s1 + $0x3c] sm:$0xf]
    %v33 = vld [vmem:[%s1 + $0x40] sm:$0xf]
    %v34 = vld [vmem:[%s1 + $0x44] sm:$0xf]
    %v35 = vld [vmem:[%s1 + $0x48] sm:$0xf]
    %v36 = vld [vmem:[%s1 + $0x4c] sm:$0xf]
    %v37 = vld [vmem:[%s1 + $0x50] sm:$0xf]
    %v38 = vld [vmem:[%s1 + $0x54] sm:$0xf]
    %v39 = vld [vmem:[%s1 + $0x58] sm:$0xf]
    %v40 = vld [vmem:[%s1 + $0x5c] sm:$0xf]
    %v41 = vld [vmem:[%s1 + $0x60] sm:$0xf]
    %v42 = vld [vmem:[%s1 + $0x64] sm:$0xf]
    %v43 = vld [vmem:[%s1 + $0x68] sm:$0xf]
    %v44 = vld [vmem:[%s1 + $0x6c] sm:$0xf]
    %v45 = vld [vmem:[%s1 + $0x70] sm:$0xf]
    %v46 = vld [vmem:[%s1 + $0x74] sm:$0xf]
    %v47 = vld [vmem:[%s1 + $0x78] sm:$0xf]
    %v48 = vld [vmem:[%s1 + $0x7c] sm:$0xf]
    %v49 = vld [vmem:[%s1 + $0x80] sm:$0xf]
    %v50 = vld [vmem:[%s1 + $0x84] sm:$0xf]
    %v51 = vld [vmem:[%s1 + $0x88] sm:$0xf]
    %v52 = vld [vmem:[%s1 + $0x8c] sm:$0xf]
    %v53 = vld [vmem:[%s1 + $0x90] sm:$0xf]
    %v54 = vld [vmem:[%s1 + $0x94] sm:$0xf]
    %v55 = vld [vmem:[%s1 + $0x98] sm:$0xf]
    %v56 = vld [vmem:[%s1 + $0x9c] sm:$0xf]
    %v57 = vld [vmem:[%s1 + $0xa0] sm:$0xf]
    %v58 = vld [vmem:[%s1 + $0xa4] sm:$0xf]
    %v59 = vld [vmem:[%s1 + $0xa8] sm:$0xf]
    %v60 = vld [vmem:[%s1 + $0xac] sm:$0xf]
    %v61 = vld [vmem:[%s1 + $0xb0] sm:$0xf]
    %v62 = vld [vmem:[%s1 + $0xb4] sm:$0xf]
    %v63 = vld [vmem:[%s1 + $0xb8] sm:$0xf]
    %v64 = vld [vmem:[%s1 + $0xbc] sm:$0xf]
    %v65 = vld [vmem:[%s1 + $0xc0] sm:$0xf]
    %v66 = vld [vmem:[%s1 + $0xc4] sm:$0xf]
    %v67 = vld [vmem:[%s1 + $0xc8] sm:$0xf]
    %v68 = vld [vmem:[%s1 + $0xcc] sm:$0xf]
    %v69 = vld [vmem:[%s1 + $0xd0] sm:$0xf]
    %v70 = vld [vmem:[%s1 + $0xd4] sm:$0xf]
    %v71 = vld [vmem:[%s1 + $0xd8] sm:$0xf]
    %v72 = vld [vmem:[%s1 + $0xdc] sm:$0xf]
    %v73 = vld [vmem:[%s1 + $0xe0] sm:$0xf]
    %v74 = vld [vmem:[%s1 + $0xe4] sm:$0xf]
    %v75 = vld [vmem:[%s1 + $0xe8] sm:$0xf]
    %v76 = vld [vmem:[%s1 + $0xec] sm:$0xf]
    %v77 = vld [vmem:[%s1 + $0xf0] sm:$0xf]
    %v78 = vld [vmem:[%s1 + $0xf4] sm:$0xf]
    %v79 = vld [vmem:[%s1 + $0xf8] sm:$0xf]
    %v80 = vld [vmem:[%s1 + $0xfc] sm:$0xf]
    %v81 = vld [vmem:[%s1 + $0x100] sm:$0xf]
    %v82 = vld [vmem:[%s1 + $0x104] sm:$0xf]
    %v83 = vld [vmem:[%s1 + $0x108] sm:$0xf]
    %v84 = vld [vmem:[%s1 + $0x10c] sm:$0xf]
    %v85 = vld [vmem:[%s1 + $0x110] sm:$0xf]
    %v86 = vld [vmem:[%s1 + $0x114] sm:$0xf]
    %v87 = vld [vmem:[%s1 + $0x118] sm:$0xf]
    %v88 = vld [vmem:[%s1 + $0x11c] sm:$0xf]
    %v89 = vld [vmem:[%s1 + $0x120] sm:$0xf]
    %v90 = vld [vmem:[%s1 + $0x124] sm:$0xf]
    %v91 = vld [vmem:[%s1 + $0x128] sm:$0xf]
    %v92 = vld [vmem:[%s1 + $0x12c] sm:$0xf]
    %v93 = vld [vmem:[%s1 + $0x130] sm:$0xf]
    %v94 = vld [vmem:[%s1 + $0x134] sm:$0xf]
    %v95 = vld [vmem:[%s1 + $0x138] sm:$0xf]
    %v96 = vld [vmem:[%s1 + $0x13c] sm:$0xf]
    %v97 = vld [vmem:[%s1 + $0x140] sm:$0xf]
    %v98 = vld [vmem:[%s1 + $0x144] sm:$0xf]
    %v99 = vld [vmem:[%s1 + $0x148] sm:$0xf]
    %v100 = vld [vmem:[%s1 + $0x14c] sm:$0xf]
    %v101 = vld [vmem:[%s1 + $0x150] sm:$0xf]
    %v102 = vld [vmem:[%s1 + $0x154] sm:$0xf]
    %v103 = vld [vmem:[%s1 + $0x158] sm:$0xf]
    %v104 = vld [vmem:[%s1 + $0x15c] sm:$0xf]
    %v105 = vld [vmem:[%s1 + $0x160] sm:$0xf]
    %v106 = vld [vmem:[%s1 + $0x164] sm:$0xf]
    %v107 = vld [vmem:[%s1 + $0x168] sm:$0xf]
    %v108 = vld [vmem:[%s1 + $0x16c] sm:$0xf]
    %v109 = vld [vmem:[%s1 + $0x170] sm:$0xf]
    %v110 = vld [vmem:[%s1 + $0x174] sm:$0xf]
    %v111 = vld [vmem:[%s1 + $0x178] sm:$0xf]
    %v112 = vld [vmem:[%s1 + $0x17c] sm:$0xf]
    %v113 = vld [vmem:[%s1 + $0x180] sm:$0xf]
    %v114 = vld [vmem:[%s1 + $0x184] sm:$0xf]
    %v115 = vld [vmem:[%s1 + $0x188] sm:$0xf]
    %v116 = vld [vmem:[%s1 + $0x18c] sm:$0xf]
    %v117 = vld [vmem:[%s1 + $0x190] sm:$0xf]
    %v118 = vld [vmem:[%s1 + $0x194] sm:$0xf]
    %v119 = vld [vmem:[%s1 + $0x198] sm:$0xf]
    %v120 = vld [vmem:[%s1 + $0x19c] sm:$0xf]
    %v121 = vld [vmem:[%s1 + $0x1a0] sm:$0xf]
    %v122 = vld [vmem:[%s1 + $0x1a4] sm:$0xf]
    %v123 = vld [vmem:[%s1 + $0x1a8] sm:$0xf]
    %v124 = vld [vmem:[%s1 + $0x1ac] sm:$0xf]
    %v125 = vld [vmem:[%s1 + $0x1b0] sm:$0xf]
    %v126 = vld [vmem:[%s1 + $0x1b4] sm:$0xf]
    %v127 = vld [vmem:[%s1 + $0x1b8] sm:$0xf]
    %v128 = vld [vmem:[%s1 + $0x1bc] sm:$0xf]
    %v129 = vld [vmem:[%s1 + $0x1c0] sm:$0xf]
    %v130 = vld [vmem:[%s1 + $0x1c4] sm:$0xf]
    %v131 = vld [vmem:[%s1 + $0x1c8] sm:$0xf]
    %v132 = vld [vmem:[%s1 + $0x1cc] sm:$0xf]
    %v133 = vld [vmem:[%s1 + $0x1d0] sm:$0xf]
    %v134 = vld [vmem:[%s1 + $0x1d4] sm:$0xf]
    %v135 = vld [vmem:[%s1 + $0x1d8] sm:$0xf]
    %v136 = vld [vmem:[%s1 + $0x1dc] sm:$0xf]
    %v137 = vld [vmem:[%s1 + $0x1e0] sm:$0xf]
    %v138 = vld [vmem:[%s1 + $0x1e4] sm:$0xf]
    %v139 = vld [vmem:[%s1 + $0x1e8] sm:$0xf]
    %v140 = vld [vmem:[%s1 + $0x1ec] sm:$0xf]
    %v141 = vld [vmem:[%s1 + $0x1f0] sm:$0xf]
    %v142 = vld [vmem:[%s1 + $0x1f4] sm:$0xf]
    %v143 = vld [vmem:[%s1 + $0x1f8] sm:$0xf]
    %v144 = vld [vmem:[%s1 + $0x1fc] sm:$0xf]
    %v145 = vld [vmem:[%s2] sm:$0x1]
    %v147 = vlaneseq
    %v148 = vshrl.u32 %v147, 7
    %v149 = vsub.s32 0, %v148
    %v150 = vrot.slane %v145, %v149
    %v153 = vcombine.high %v16, %v16
    %v155 = vunpack.c.l.s4 1966171168
    %v156 = vunpack.c.0.s8 %v155
    %v157 = vlaneseq
    %v158 = vshrl.u32 %v157, 7
    %v159 = vsub.s32 %v156, %v158
    %v160 = vrot.slane %v16, %v159
    %v162 = vunpack.c.l.s4 1966171168
    %v163 = vunpack.c.0.s8 %v162
    %v164 = vlaneseq
    %v165 = vshrl.u32 %v164, 7
    %v166 = vsub.s32 %v163, %v165
    %v167 = vrot.slane %v153, %v166
    %v168 = vcombine.high %v160, %v160
    %v169 = vcombine.high %v167, %v167
    %v171 = vunpack.c.l.s4 1966171168
    %v172 = vunpack.c.0.s8 %v171
    %v173 = vlaneseq
    %v174 = vshrl.u32 %v173, 7
    %v175 = vsub.s32 %v172, %v174
    %v176 = vrot.slane %v160, %v175
    %v178 = vunpack.c.l.s4 1966171168
    %v179 = vunpack.c.0.s8 %v178
    %v180 = vlaneseq
    %v181 = vshrl.u32 %v180, 7
    %v182 = vsub.s32 %v179, %v181
    %v183 = vrot.slane %v167, %v182
    %v185 = vunpack.c.l.s4 1966171168
    %v186 = vunpack.c.0.s8 %v185
    %v187 = vlaneseq
    %v188 = vshrl.u32 %v187, 7
    %v189 = vsub.s32 %v186, %v188
    %v190 = vrot.slane %v168, %v189
    %v192 = vunpack.c.l.s4 1966171168
    %v193 = vunpack.c.0.s8 %v192
    %v194 = vlaneseq
    %v195 = vshrl.u32 %v194, 7
    %v196 = vsub.s32 %v193, %v195
    %v197 = vrot.slane %v169, %v196
    %v198 = vcombine.high %v176, %v176
    %v199 = vcombine.high %v183, %v183
    %v200 = vcombine.high %v190, %v190
    %v201 = vcombine.high %v197, %v197
    %v338 = vunpack.c.l.b16 %v17
    %v339 = vunpack.c.l.b16 %v18
    %v340 = vunpack.c.l.b16 %v19
    %v341 = vunpack.c.l.b16 %v20
    %v342 = vunpack.c.l.b16 %v21
    %v343 = vunpack.c.l.b16 %v22
    %v344 = vunpack.c.l.b16 %v23
    %v345 = vunpack.c.l.b16 %v24
    %v346 = vunpack.c.l.b16 %v25
    %v347 = vunpack.c.l.b16 %v26
    %v348 = vunpack.c.l.b16 %v27
    %v349 = vunpack.c.l.b16 %v28
    %v350 = vunpack.c.l.b16 %v29
    %v351 = vunpack.c.l.b16 %v30
    %v352 = vunpack.c.l.b16 %v31
    %v353 = vunpack.c.l.b16 %v32
    %v354 = vunpack.c.l.b16 %v33
    %v355 = vunpack.c.l.b16 %v34
    %v356 = vunpack.c.l.b16 %v35
    %v357 = vunpack.c.l.b16 %v36
    %v358 = vunpack.c.l.b16 %v37
    %v359 = vunpack.c.l.b16 %v38
    %v360 = vunpack.c.l.b16 %v39
    %v361 = vunpack.c.l.b16 %v40
    %v362 = vunpack.c.l.b16 %v41
    %v363 = vunpack.c.l.b16 %v42
    %v364 = vunpack.c.l.b16 %v43
    %v365 = vunpack.c.l.b16 %v44
    %v366 = vunpack.c.l.b16 %v45
    %v367 = vunpack.c.l.b16 %v46
    %v368 = vunpack.c.l.b16 %v47
    %v369 = vunpack.c.l.b16 %v48
    %v370 = vunpack.c.l.b16 %v49
    %v371 = vunpack.c.l.b16 %v50
    %v372 = vunpack.c.l.b16 %v51
    %v373 = vunpack.c.l.b16 %v52
    %v374 = vunpack.c.l.b16 %v53
    %v375 = vunpack.c.l.b16 %v54
    %v376 = vunpack.c.l.b16 %v55
    %v377 = vunpack.c.l.b16 %v56
    %v378 = vunpack.c.l.b16 %v57
    %v379 = vunpack.c.l.b16 %v58
    %v380 = vunpack.c.l.b16 %v59
    %v381 = vunpack.c.l.b16 %v60
    %v382 = vunpack.c.l.b16 %v61
    %v383 = vunpack.c.l.b16 %v62
    %v384 = vunpack.c.l.b16 %v63
    %v385 = vunpack.c.l.b16 %v64
    %v386 = vunpack.c.l.b16 %v65
    %v387 = vunpack.c.l.b16 %v66
    %v388 = vunpack.c.l.b16 %v67
    %v389 = vunpack.c.l.b16 %v68
    %v390 = vunpack.c.l.b16 %v69
    %v391 = vunpack.c.l.b16 %v70
    %v392 = vunpack.c.l.b16 %v71
    %v393 = vunpack.c.l.b16 %v72
    %v394 = vunpack.c.l.b16 %v73
    %v395 = vunpack.c.l.b16 %v74
    %v396 = vunpack.c.l.b16 %v75
    %v397 = vunpack.c.l.b16 %v76
    %v398 = vunpack.c.l.b16 %v77
    %v399 = vunpack.c.l.b16 %v78
    %v400 = vunpack.c.l.b16 %v79
    %v401 = vunpack.c.l.b16 %v80
    %v402 = vunpack.c.l.b16 %v81
    %v403 = vunpack.c.l.b16 %v82
    %v404 = vunpack.c.l.b16 %v83
    %v405 = vunpack.c.l.b16 %v84
    %v406 = vunpack.c.l.b16 %v85
    %v407 = vunpack.c.l.b16 %v86
    %v408 = vunpack.c.l.b16 %v87
    %v409 = vunpack.c.l.b16 %v88
    %v410 = vunpack.c.l.b16 %v89
    %v411 = vunpack.c.l.b16 %v90
    %v412 = vunpack.c.l.b16 %v91
    %v413 = vunpack.c.l.b16 %v92
    %v414 = vunpack.c.l.b16 %v93
    %v415 = vunpack.c.l.b16 %v94
    %v416 = vunpack.c.l.b16 %v95
    %v417 = vunpack.c.l.b16 %v96
    %v418 = vunpack.c.l.b16 %v97
    %v419 = vunpack.c.l.b16 %v98
    %v420 = vunpack.c.l.b16 %v99
    %v421 = vunpack.c.l.b16 %v100
    %v422 = vunpack.c.l.b16 %v101
    %v423 = vunpack.c.l.b16 %v102
    %v424 = vunpack.c.l.b16 %v103
    %v425 = vunpack.c.l.b16 %v104
    %v426 = vunpack.c.l.b16 %v105
    %v427 = vunpack.c.l.b16 %v106
    %v428 = vunpack.c.l.b16 %v107
    %v429 = vunpack.c.l.b16 %v108
    %v430 = vunpack.c.l.b16 %v109
    %v431 = vunpack.c.l.b16 %v110
    %v432 = vunpack.c.l.b16 %v111
    %v433 = vunpack.c.l.b16 %v112
    %v434 = vunpack.c.l.b16 %v113
    %v435 = vunpack.c.l.b16 %v114
    %v436 = vunpack.c.l.b16 %v115
    %v437 = vunpack.c.l.b16 %v116
    %v438 = vunpack.c.l.b16 %v117
    %v439 = vunpack.c.l.b16 %v118
    %v440 = vunpack.c.l.b16 %v119
    %v441 = vunpack.c.l.b16 %v120
    %v442 = vunpack.c.l.b16 %v121
    %v443 = vunpack.c.l.b16 %v122
    %v444 = vunpack.c.l.b16 %v123
    %v445 = vunpack.c.l.b16 %v124
    %v446 = vunpack.c.l.b16 %v125
    %v447 = vunpack.c.l.b16 %v126
    %v448 = vunpack.c.l.b16 %v127
    %v449 = vunpack.c.l.b16 %v128
    %v450 = vunpack.c.l.b16 %v129
    %v451 = vunpack.c.l.b16 %v130
    %v452 = vunpack.c.l.b16 %v131
    %v453 = vunpack.c.l.b16 %v132
    %v454 = vunpack.c.l.b16 %v133
    %v455 = vunpack.c.l.b16 %v134
    %v456 = vunpack.c.l.b16 %v135
    %v457 = vunpack.c.l.b16 %v136
    %v458 = vunpack.c.l.b16 %v137
    %v459 = vunpack.c.l.b16 %v138
    %v460 = vunpack.c.l.b16 %v139
    %v461 = vunpack.c.l.b16 %v140
    %v462 = vunpack.c.l.b16 %v141
    %v463 = vunpack.c.l.b16 %v142
    %v464 = vunpack.c.l.b16 %v143
    %v465 = vunpack.c.l.b16 %v144
    %v466 = vpack.c.b16 %v339, %v338
    %v467 = vpack.c.b16 %v341, %v340
    %v468 = vpack.c.b16 %v343, %v342
    %v469 = vpack.c.b16 %v345, %v344
    %v470 = vpack.c.b16 %v347, %v346
    %v471 = vpack.c.b16 %v349, %v348
    %v472 = vpack.c.b16 %v351, %v350
    %v473 = vpack.c.b16 %v353, %v352
    %v474 = vpack.c.b16 %v355, %v354
    %v475 = vpack.c.b16 %v357, %v356
    %v476 = vpack.c.b16 %v359, %v358
    %v477 = vpack.c.b16 %v361, %v360
    %v478 = vpack.c.b16 %v363, %v362
    %v479 = vpack.c.b16 %v365, %v364
    %v480 = vpack.c.b16 %v367, %v366
    %v481 = vpack.c.b16 %v369, %v368
    %v482 = vpack.c.b16 %v371, %v370
    %v483 = vpack.c.b16 %v373, %v372
    %v484 = vpack.c.b16 %v375, %v374
    %v485 = vpack.c.b16 %v377, %v376
    %v486 = vpack.c.b16 %v379, %v378
    %v487 = vpack.c.b16 %v381, %v380
    %v488 = vpack.c.b16 %v383, %v382
    %v489 = vpack.c.b16 %v385, %v384
    %v490 = vpack.c.b16 %v387, %v386
    %v491 = vpack.c.b16 %v389, %v388
    %v492 = vpack.c.b16 %v391, %v390
    %v493 = vpack.c.b16 %v393, %v392
    %v494 = vpack.c.b16 %v395, %v394
    %v495 = vpack.c.b16 %v397, %v396
    %v496 = vpack.c.b16 %v399, %v398
    %v497 = vpack.c.b16 %v401, %v400
    %v498 = vpack.c.b16 %v403, %v402
    %v499 = vpack.c.b16 %v405, %v404
    %v500 = vpack.c.b16 %v407, %v406
    %v501 = vpack.c.b16 %v409, %v408
    %v502 = vpack.c.b16 %v411, %v410
    %v503 = vpack.c.b16 %v413, %v412
    %v504 = vpack.c.b16 %v415, %v414
    %v505 = vpack.c.b16 %v417, %v416
    %v506 = vpack.c.b16 %v419, %v418
    %v507 = vpack.c.b16 %v421, %v420
    %v508 = vpack.c.b16 %v423, %v422
    %v509 = vpack.c.b16 %v425, %v424
    %v510 = vpack.c.b16 %v427, %v426
    %v511 = vpack.c.b16 %v429, %v428
    %v512 = vpack.c.b16 %v431, %v430
    %v513 = vpack.c.b16 %v433, %v432
    %v514 = vpack.c.b16 %v435, %v434
    %v515 = vpack.c.b16 %v437, %v436
    %v516 = vpack.c.b16 %v439, %v438
    %v517 = vpack.c.b16 %v441, %v440
    %v518 = vpack.c.b16 %v443, %v442
    %v519 = vpack.c.b16 %v445, %v444
    %v520 = vpack.c.b16 %v447, %v446
    %v521 = vpack.c.b16 %v449, %v448
    %v522 = vpack.c.b16 %v451, %v450
    %v523 = vpack.c.b16 %v453, %v452
    %v524 = vpack.c.b16 %v455, %v454
    %v525 = vpack.c.b16 %v457, %v456
    %v526 = vpack.c.b16 %v459, %v458
    %v527 = vpack.c.b16 %v461, %v460
    %v528 = vpack.c.b16 %v463, %v462
    %v529 = vpack.c.b16 %v465, %v464
    %594 = vmatprep.subr.bf16.mxu0 0
    %595 = vmatpush1.bf16.msra.mxu0 %v473
    %596 = vmatprep.subr.bf16.mxu0 0
    %597 = vmatpush1.bf16.msra.mxu0 %v472
    %598 = vmatprep.subr.bf16.mxu0 0
    %599 = vmatpush1.bf16.msra.mxu0 %v471
    %600 = vmatprep.subr.bf16.mxu0 0
    %601 = vmatpush1.bf16.msra.mxu0 %v470
    %602 = vmatprep.subr.bf16.mxu0 0
    %603 = vmatpush1.bf16.msra.mxu0 %v469
    %604 = vmatprep.subr.bf16.mxu0 0
    %605 = vmatpush1.bf16.msra.mxu0 %v468
    %606 = vmatprep.subr.bf16.mxu0 0
    %607 = vmatpush1.bf16.msra.mxu0 %v467
    %608 = vmatprep.subr.bf16.mxu0 0
    %609 = vmatpush1.bf16.msra.mxu0 %v466
    %610 = vmatprep.subr.bf16.mxu0 0
    %611 = vmatpush2.bf16.msra.mxu0 %v481
    %612 = vmatprep.subr.bf16.mxu0 0
    %613 = vmatpush2.bf16.msra.mxu0 %v480
    %614 = vmatprep.subr.bf16.mxu0 0
    %615 = vmatpush2.bf16.msra.mxu0 %v479
    %616 = vmatprep.subr.bf16.mxu0 0
    %617 = vmatpush2.bf16.msra.mxu0 %v478
    %618 = vmatprep.subr.bf16.mxu0 0
    %619 = vmatpush2.bf16.msra.mxu0 %v477
    %620 = vmatprep.subr.bf16.mxu0 0
    %621 = vmatpush2.bf16.msra.mxu0 %v476
    %622 = vmatprep.subr.bf16.mxu0 0
    %623 = vmatpush2.bf16.msra.mxu0 %v475
    %624 = vmatprep.subr.bf16.mxu0 0
    %625 = vmatpush2.bf16.msra.mxu0 %v474
    %626 = vmatprep.mubr.bf16.mxu0 %v190
    %627 = vmatmul.mubr.bf16.gmra.mxu0 %v176
    %v628 = vpop.f32.mrf.mxu0
    %v629 = vadd.f32 %v150, %v628
    %v630 = vpop.f32.mrf.mxu0
    %v631 = vpop.f32.mrf.mxu0
    %v632 = vpop.f32.mrf.mxu0
    %633 = vdwg.mxu0
    %634 = vmatprep.subr.bf16.mxu0 0
    %635 = vmatpush1.bf16.msra.mxu0 %v489
    %636 = vmatprep.subr.bf16.mxu0 0
    %637 = vmatpush1.bf16.msra.mxu0 %v488
    %638 = vmatprep.subr.bf16.mxu0 0
    %639 = vmatpush1.bf16.msra.mxu0 %v487
    %640 = vmatprep.subr.bf16.mxu0 0
    %641 = vmatpush1.bf16.msra.mxu0 %v486
    %642 = vmatprep.subr.bf16.mxu0 0
    %643 = vmatpush1.bf16.msra.mxu0 %v485
    %644 = vmatprep.subr.bf16.mxu0 0
    %645 = vmatpush1.bf16.msra.mxu0 %v484
    %646 = vmatprep.subr.bf16.mxu0 0
    %647 = vmatpush1.bf16.msra.mxu0 %v483
    %648 = vmatprep.subr.bf16.mxu0 0
    %649 = vmatpush1.bf16.msra.mxu0 %v482
    %650 = vmatprep.subr.bf16.mxu0 0
    %651 = vmatpush2.bf16.msra.mxu0 %v497
    %652 = vmatprep.subr.bf16.mxu0 0
    %653 = vmatpush2.bf16.msra.mxu0 %v496
    %654 = vmatprep.subr.bf16.mxu0 0
    %655 = vmatpush2.bf16.msra.mxu0 %v495
    %656 = vmatprep.subr.bf16.mxu0 0
    %657 = vmatpush2.bf16.msra.mxu0 %v494
    %658 = vmatprep.subr.bf16.mxu0 0
    %659 = vmatpush2.bf16.msra.mxu0 %v493
    %660 = vmatprep.subr.bf16.mxu0 0
    %661 = vmatpush2.bf16.msra.mxu0 %v492
    %662 = vmatprep.subr.bf16.mxu0 0
    %663 = vmatpush2.bf16.msra.mxu0 %v491
    %664 = vmatprep.subr.bf16.mxu0 0
    %665 = vmatpush2.bf16.msra.mxu0 %v490
    %666 = vmatprep.mubr.bf16.mxu0 %v200
    %667 = vmatmul.mubr.bf16.gmra.mxu0 %v198
    %v668 = vpop.f32.mrf.mxu0
    %v669 = vadd.f32 %v629, %v668
    %v670 = vpop.f32.mrf.mxu0
    %v671 = vpop.f32.mrf.mxu0
    %v672 = vpop.f32.mrf.mxu0
    %673 = vdwg.mxu0
    %674 = vmatprep.subr.bf16.mxu0 0
    %675 = vmatpush1.bf16.msra.mxu0 %v505
    %676 = vmatprep.subr.bf16.mxu0 0
    %677 = vmatpush1.bf16.msra.mxu0 %v504
    %678 = vmatprep.subr.bf16.mxu0 0
    %679 = vmatpush1.bf16.msra.mxu0 %v503
    %680 = vmatprep.subr.bf16.mxu0 0
    %681 = vmatpush1.bf16.msra.mxu0 %v502
    %682 = vmatprep.subr.bf16.mxu0 0
    %683 = vmatpush1.bf16.msra.mxu0 %v501
    %684 = vmatprep.subr.bf16.mxu0 0
    %685 = vmatpush1.bf16.msra.mxu0 %v500
    %686 = vmatprep.subr.bf16.mxu0 0
    %687 = vmatpush1.bf16.msra.mxu0 %v499
    %688 = vmatprep.subr.bf16.mxu0 0
    %689 = vmatpush1.bf16.msra.mxu0 %v498
    %690 = vmatprep.subr.bf16.mxu0 0
    %691 = vmatpush2.bf16.msra.mxu0 %v513
    %692 = vmatprep.subr.bf16.mxu0 0
    %693 = vmatpush2.bf16.msra.mxu0 %v512
    %694 = vmatprep.subr.bf16.mxu0 0
    %695 = vmatpush2.bf16.msra.mxu0 %v511
    %696 = vmatprep.subr.bf16.mxu0 0
    %697 = vmatpush2.bf16.msra.mxu0 %v510
    %698 = vmatprep.subr.bf16.mxu0 0
    %699 = vmatpush2.bf16.msra.mxu0 %v509
    %700 = vmatprep.subr.bf16.mxu0 0
    %701 = vmatpush2.bf16.msra.mxu0 %v508
    %702 = vmatprep.subr.bf16.mxu0 0
    %703 = vmatpush2.bf16.msra.mxu0 %v507
    %704 = vmatprep.subr.bf16.mxu0 0
    %705 = vmatpush2.bf16.msra.mxu0 %v506
    %706 = vmatprep.mubr.bf16.mxu0 %v197
    %707 = vmatmul.mubr.bf16.gmra.mxu0 %v183
    %v708 = vpop.f32.mrf.mxu0
    %v709 = vadd.f32 %v669, %v708
    %v710 = vpop.f32.mrf.mxu0
    %v711 = vpop.f32.mrf.mxu0
    %v712 = vpop.f32.mrf.mxu0
    %713 = vdwg.mxu0
    %714 = vmatprep.subr.bf16.mxu0 0
    %715 = vmatpush1.bf16.msra.mxu0 %v521
    %716 = vmatprep.subr.bf16.mxu0 0
    %717 = vmatpush1.bf16.msra.mxu0 %v520
    %718 = vmatprep.subr.bf16.mxu0 0
    %719 = vmatpush1.bf16.msra.mxu0 %v519
    %720 = vmatprep.subr.bf16.mxu0 0
    %721 = vmatpush1.bf16.msra.mxu0 %v518
    %722 = vmatprep.subr.bf16.mxu0 0
    %723 = vmatpush1.bf16.msra.mxu0 %v517
    %724 = vmatprep.subr.bf16.mxu0 0
    %725 = vmatpush1.bf16.msra.mxu0 %v516
    %726 = vmatprep.subr.bf16.mxu0 0
    %727 = vmatpush1.bf16.msra.mxu0 %v515
    %728 = vmatprep.subr.bf16.mxu0 0
    %729 = vmatpush1.bf16.msra.mxu0 %v514
    %730 = vmatprep.subr.bf16.mxu0 0
    %731 = vmatpush2.bf16.msra.mxu0 %v529
    %732 = vmatprep.subr.bf16.mxu0 0
    %733 = vmatpush2.bf16.msra.mxu0 %v528
    %734 = vmatprep.subr.bf16.mxu0 0
    %735 = vmatpush2.bf16.msra.mxu0 %v527
    %736 = vmatprep.subr.bf16.mxu0 0
    %737 = vmatpush2.bf16.msra.mxu0 %v526
    %738 = vmatprep.subr.bf16.mxu0 0
    %739 = vmatpush2.bf16.msra.mxu0 %v525
    %740 = vmatprep.subr.bf16.mxu0 0
    %741 = vmatpush2.bf16.msra.mxu0 %v524
    %742 = vmatprep.subr.bf16.mxu0 0
    %743 = vmatpush2.bf16.msra.mxu0 %v523
    %744 = vmatprep.subr.bf16.mxu0 0
    %745 = vmatpush2.bf16.msra.mxu0 %v522
    %746 = vmatprep.mubr.bf16.mxu0 %v201
    %747 = vmatmul.mubr.bf16.gmra.mxu0 %v199
    %v748 = vpop.f32.mrf.mxu0
    %v749 = vadd.f32 %v709, %v748
    %v750 = vpop.f32.mrf.mxu0
    %v751 = vpop.f32.mrf.mxu0
    %v752 = vpop.f32.mrf.mxu0
    %753 = vdwg.mxu0
    %754 = vst [vmem:[#allocation2] sm:$0x3] %v749
    // Predicated region
    $region14: #{cnn_forward.11} parent=1 // pred_check
      _
    $region15: #{cnn_forward.11} parent=1 // pred_check_branch
      %756 = sbr.rel (0) target = $region17
    $region16: #{cnn_forward.11} parent=1 // pred_region
      %s758 = ssub.s32 32, 32
      %759 = vsyncadd [#allocation3], %s758
      %s761 = sshll.u32 [#allocation2], 4
      %s762 = int_to_ptr.vmem [resolvable:$true] %s761
      %764 = dma.vmem_to_hbm [thread:$0]  %s762, 32, %s3, [#allocation3]
    $region17: #{cnn_forward.11} parent=1 // pred_fallthru
      _
    // Predicated region
    $region18: #{cnn_forward.11} parent=1 // pred_check
      _
    $region19: #{cnn_forward.11} parent=1 // pred_check_branch
      %766 = sbr.rel (0) target = $region21
    $region20: #{cnn_forward.11} parent=1 // pred_region
      %767 = dma.done [#allocation3], 32
    $region21: #{cnn_forward.11} parent=1 // pred_fallthru
      _
    %768 = vsyncpa [#allocation3], 1

// kernel: cnn_forward.9
$region0: #{cnn_forward.9}
  #allocation0 [shape = 'u32[]', space=smem, size = 0x4, offset = 0x4, fixed_abs, tag = 'smem constant byte address 0x4 - core index']
  #allocation1 [shape = 'u32[144,128]{1,0:T(1,128)}', space=vmem, size = 0x12000, scoped, tag = 'internal scratch']
  %s0 = inlined_call_operand.vmem [shape: bf16[2,1024], index: 0, kind: input, shape index: {}]
  %s1 = inlined_call_operand.vmem [shape: bf16[1024,1024], index: 1, kind: input, shape index: {}]
  %s2 = inlined_call_operand.vmem [shape: bf16[2,1024], index: 2, kind: output, shape index: {}]
  %s3 = sld [smem:[#allocation0]]
  $region79: #{cnn_forward.9} parent=0
    _
  %s5 = ssub.s32 1, %s3
  %s6 = scalar_select 0, %s5, %s3
  $region1: #{cnn_forward.9} parent=0
    #allocation2 [shape = 'u8[1048576]{0}', space=vmem, size = 0x100000, scoped, tag = 'input window, operand 1']
    loop: start=0, step=1, limit=6
    $region2: #{cnn_forward.9} parent=1 // loop_pre_header
      _
    $region3: #{cnn_forward.9} parent=1 // loop_header
      %s8 = sphi 0, %s12
      %p9 = scmp.ge.s32.totalorder %s8, 6
      %s16 = sphi 0, %s16
      %s18 = sphi 0, %s16
      %s19 = sphi 0, %s18
      %s33 = sphi 0, %s19
      %s39 = sphi 0, %s41
      %s42 = sphi 0, %s39
      %s43 = sphi 0, %s42
      %s59 = sphi 0, %s43
      %s65 = sphi 0, %s67
      %s68 = sphi 0, %s65
      %s69 = sphi 0, %s68
      %s85 = sphi 0, %s69
    $region4: #{cnn_forward.9} parent=1 // loop_header_branch
      %11 = sbr.rel (%p9) target = $region8
    $region5: #{cnn_forward.9} parent=1 // loop_body
      %s13 = ssub.s32 %s8, 1
      %s14 = ssub.s32 %s8, 2
      %s15 = sadd.s32 %s8, 1
      %s17 = sadd.s32 %s16, 1
      %p20 = scmp.eq.s32.totalorder %s8, 3
      %p21 = scmp.ne.s32.totalorder %s16, %s18
      %p22 = scmp.eq.s32.totalorder %s8, 0
      %p23 = por %p21, %p22
      %p24 = scmp.ne.s32.totalorder %s16, %s18
      %p25 = scmp.eq.s32.totalorder %s13, 3
      %p26 = por %p24, %p25
      %p27 = scmp.ne.s32.totalorder %s18, %s19
      %p28 = scmp.eq.s32.totalorder %s13, 0
      %p29 = por %p27, %p28
      %p30 = scmp.ne.s32.totalorder %s18, %s19
      %p31 = scmp.eq.s32.totalorder %s14, 3
      %p32 = por %p30, %p31
      %p34 = scmp.ne.s32.totalorder %s19, %s33
      %p35 = scmp.eq.s32.totalorder %s14, 0
      %p36 = por %p34, %p35
      %s37 = ssub.s32 %s8, %s15
      %p38 = scmp.eq.s32.totalorder %s37, 0
      %s40 = sadd.s32 %s39, 1
      %s41 = scalar_select %p38, %s39, %s40
      %p44 = pneg %p38
      %p45 = scmp.eq.s32.totalorder %s8, 3
      %p46 = por %p44, %p45
      %p47 = scmp.ne.s32.totalorder %s39, %s42
      %p48 = scmp.eq.s32.totalorder %s8, 0
      %p49 = por %p47, %p48
      %p50 = scmp.ne.s32.totalorder %s39, %s42
      %p51 = scmp.eq.s32.totalorder %s13, 3
      %p52 = por %p50, %p51
      %p53 = scmp.ne.s32.totalorder %s42, %s43
      %p54 = scmp.eq.s32.totalorder %s13, 0
      %p55 = por %p53, %p54
      %p56 = scmp.ne.s32.totalorder %s42, %s43
      %p57 = scmp.eq.s32.totalorder %s14, 3
      %p58 = por %p56, %p57
      %p60 = scmp.ne.s32.totalorder %s43, %s59
      %p61 = scmp.eq.s32.totalorder %s14, 0
      %p62 = por %p60, %p61
      %s63 = ssub.s32 %s8, %s15
      %p64 = scmp.eq.s32.totalorder %s63, 0
      %s66 = sadd.s32 %s65, 1
      %s67 = scalar_select %p64, %s65, %s66
      %p70 = pneg %p64
      %p71 = scmp.eq.s32.totalorder %s8, 3
      %p72 = por %p70, %p71
      %p73 = scmp.ne.s32.totalorder %s65, %s68
      %p74 = scmp.eq.s32.totalorder %s8, 0
      %p75 = por %p73, %p74
      %p76 = scmp.ne.s32.totalorder %s65, %s68
      %p77 = scmp.eq.s32.totalorder %s13, 3
      %p78 = por %p76, %p77
      %p79 = scmp.ne.s32.totalorder %s68, %s69
      %p80 = scmp.eq.s32.totalorder %s13, 0
      %p81 = por %p79, %p80
      %p82 = scmp.ne.s32.totalorder %s68, %s69
      %p83 = scmp.eq.s32.totalorder %s14, 3
      %p84 = por %p82, %p83
      %p86 = scmp.ne.s32.totalorder %s69, %s85
      %p87 = scmp.eq.s32.totalorder %s14, 0
      %p88 = por %p86, %p87
      %p89 = scmp.le.s32.totalorder 1, %s8
      %p90 = scmp.lt.s32.totalorder %s8, 5
      %p91 = pnand %p89, %p90
      %p92 = pneg %p91
      // Predicated region
      $region9: #{cnn_forward.9} parent=5 // pred_check
        _
      $region10: #{cnn_forward.9} parent=5 // pred_check_branch
        %94 = sbr.rel (%p91) target = $region12
      $region11: #{cnn_forward.9} parent=5 // pred_region
        %s95 = ssub.s32 %s8, 1
        // Predicated region
        $region13: #{cnn_forward.9} parent=11 // pred_check
          %p96 = pneg %p29
        $region14: #{cnn_forward.9} parent=11 // pred_check_branch
          %98 = sbr.rel (%p96) target = $region16
        $region15: #{cnn_forward.9} parent=11 // pred_region
          _
        $region16: #{cnn_forward.9} parent=11 // pred_fallthru
          _
      $region12: #{cnn_forward.9} parent=5 // pred_fallthru
        _
      %p99 = scmp.lt.s32.totalorder %s8, 4
      // Predicated region
      $region17: #{cnn_forward.9} parent=5 // pred_check
        %p100 = pneg %p99
      $region18: #{cnn_forward.9} parent=5 // pred_check_branch
        %102 = sbr.rel (%p100) target = $region20
      $region19: #{cnn_forward.9} parent=5 // pred_region
        // Predicated region
        $region21: #{cnn_forward.9} parent=19 // pred_check
          %p103 = pneg %p49
        $region22: #{cnn_forward.9} parent=19 // pred_check_branch
          %105 = sbr.rel (%p103) target = $region24
        $region23: #{cnn_forward.9} parent=19 // pred_region
          %s106 = sand.u32 %s39, 1
          %s107 = sand.u32 %s39, 1
          %s108 = smul.addr %s107, 1024
          %s109 = scalar_lea.vmem [#allocation2], %s108
          %s110 = smul.u32 2, %s8
          %s111 = smul.addr %s110, 4
          %s112 = scalar_lea.vmem %s1, %s111
          // Predicated region
          $region25: #{cnn_forward.9} parent=23 // pred_check
            _
          $region26: #{cnn_forward.9} parent=23 // pred_check_branch
            %114 = sbr.rel (0) target = $region28
          $region27: #{cnn_forward.9} parent=23 // pred_region
            // Predicated region
            $region29: #{cnn_forward.9} parent=27 // pred_check
              _
            $region30: #{cnn_forward.9} parent=27 // pred_check_branch
              %116 = sbr.rel (0) target = $region32
            $region31: #{cnn_forward.9} parent=27 // pred_region
              // Predicated region
              $region44: #{cnn_forward.9} parent=31 // pred_check
                _
              $region45: #{cnn_forward.9} parent=31 // pred_check_branch
                %386 = sbr.rel (0) target = $region47
              $region46: #{cnn_forward.9} parent=31 // pred_region
                loop: start=0, step=1, limit=1
                $region48: #{cnn_forward.9} parent=46 // loop_pre_header
                  _
                $region49: #{cnn_forward.9} parent=46 // loop_header
                  %s388 = sphi 0, %s392
                  %p389 = scmp.ge.s32.totalorder %s388, 1
                  %s393 = sphi %s112, %s112
                  %s394 = sphi %s109, %s109
                $region50: #{cnn_forward.9} parent=46 // loop_header_branch
                  %391 = sbr.rel (%p389) target = $region54
                $region51: #{cnn_forward.9} parent=46 // loop_body
                  %v395 = vld [vmem:[%s393] sm:$0xff]
                  %396 = vst [vmem:[%s394] sm:$0xff] %v395
                  %v397 = vld [vmem:[%s393 + $0x20] sm:$0xff]
                  %398 = vst [vmem:[%s394 + $0x8] sm:$0xff] %v397
                  %v399 = vld [vmem:[%s393 + $0x40] sm:$0xff]
                  %400 = vst [vmem:[%s394 + $0x10] sm:$0xff] %v399
                  %v401 = vld [vmem:[%s393 + $0x60] sm:$0xff]
                  %402 = vst [vmem:[%s394 + $0x18] sm:$0xff] %v401
                  %v403 = vld [vmem:[%s393 + $0x80] sm:$0xff]
                  %404 = vst [vmem:[%s394 + $0x20] sm:$0xff] %v403
                  %v405 = vld [vmem:[%s393 + $0xa0] sm:$0xff]
                  %406 = vst [vmem:[%s394 + $0x28] sm:$0xff] %v405
                  %v407 = vld [vmem:[%s393 + $0xc0] sm:$0xff]
                  %408 = vst [vmem:[%s394 + $0x30] sm:$0xff] %v407
                  %v409 = vld [vmem:[%s393 + $0xe0] sm:$0xff]
                  %410 = vst [vmem:[%s394 + $0x38] sm:$0xff] %v409
                  %v411 = vld [vmem:[%s393 + $0x100] sm:$0xff]
                  %412 = vst [vmem:[%s394 + $0x40] sm:$0xff] %v411
                  %v413 = vld [vmem:[%s393 + $0x120] sm:$0xff]
                  %414 = vst [vmem:[%s394 + $0x48] sm:$0xff] %v413
                  %v415 = vld [vmem:[%s393 + $0x140] sm:$0xff]
                  %416 = vst [vmem:[%s394 + $0x50] sm:$0xff] %v415
                  %v417 = vld [vmem:[%s393 + $0x160] sm:$0xff]
                  %418 = vst [vmem:[%s394 + $0x58] sm:$0xff] %v417
                  %v419 = vld [vmem:[%s393 + $0x180] sm:$0xff]
                  %420 = vst [vmem:[%s394 + $0x60] sm:$0xff] %v419
                  %v421 = vld [vmem:[%s393 + $0x1a0] sm:$0xff]
                  %422 = vst [vmem:[%s394 + $0x68] sm:$0xff] %v421
                  %v423 = vld [vmem:[%s393 + $0x1c0] sm:$0xff]
                  %424 = vst [vmem:[%s394 + $0x70] sm:$0xff] %v423
                  %v425 = vld [vmem:[%s393 + $0x1e0] sm:$0xff]
                  %426 = vst [vmem:[%s394 + $0x78] sm:$0xff] %v425
                  %v427 = vld [vmem:[%s393 + $0x200] sm:$0xff]
                  %428 = vst [vmem:[%s394 + $0x80] sm:$0xff] %v427
                  %v429 = vld [vmem:[%s393 + $0x220] sm:$0xff]
                  %430 = vst [vmem:[%s394 + $0x88] sm:$0xff] %v429
                  %v431 = vld [vmem:[%s393 + $0x240] sm:$0xff]
                  %432 = vst [vmem:[%s394 + $0x90] sm:$0xff] %v431
                  %v433 = vld [vmem:[%s393 + $0x260] sm:$0xff]
                  %434 = vst [vmem:[%s394 + $0x98] sm:$0xff] %v433
                  %v435 = vld [vmem:[%s393 + $0x280] sm:$0xff]
                  %436 = vst [vmem:[%s394 + $0xa0] sm:$0xff] %v435
                  %v437 = vld [vmem:[%s393 + $0x2a0] sm:$0xff]
                  %438 = vst [vmem:[%s394 + $0xa8] sm:$0xff] %v437
                  %v439 = vld [vmem:[%s393 + $0x2c0] sm:$0xff]
                  %440 = vst [vmem:[%s394 + $0xb0] sm:$0xff] %v439
                  %v441 = vld [vmem:[%s393 + $0x2e0] sm:$0xff]
                  %442 = vst [vmem:[%s394 + $0xb8] sm:$0xff] %v441
                  %v443 = vld [vmem:[%s393 + $0x300] sm:$0xff]
                  %444 = vst [vmem:[%s394 + $0xc0] sm:$0xff] %v443
                  %v445 = vld [vmem:[%s393 + $0x320] sm:$0xff]
                  %446 = vst [vmem:[%s394 + $0xc8] sm:$0xff] %v445
                  %v447 = vld [vmem:[%s393 + $0x340] sm:$0xff]
                  %448 = vst [vmem:[%s394 + $0xd0] sm:$0xff] %v447
                  %v449 = vld [vmem:[%s393 + $0x360] sm:$0xff]
                  %450 = vst [vmem:[%s394 + $0xd8] sm:$0xff] %v449
                  %v451 = vld [vmem:[%s393 + $0x380] sm:$0xff]
                  %452 = vst [vmem:[%s394 + $0xe0] sm:$0xff] %v451
                  %v453 = vld [vmem:[%s393 + $0x3a0] sm:$0xff]
                  %454 = vst [vmem:[%s394 + $0xe8] sm:$0xff] %v453
                  %v455 = vld [vmem:[%s393 + $0x3c0] sm:$0xff]
                  %456 = vst [vmem:[%s394 + $0xf0] sm:$0xff] %v455
                  %v457 = vld [vmem:[%s393 + $0x3e0] sm:$0xff]
                  %458 = vst [vmem:[%s394 + $0xf8] sm:$0xff] %v457
                  %v459 = vld [vmem:[%s393 + $0x400] sm:$0xff]
                  %460 = vst [vmem:[%s394 + $0x100] sm:$0xff] %v459
                  %v461 = vld [vmem:[%s393 + $0x420] sm:$0xff]
                  %462 = vst [vmem:[%s394 + $0x108] sm:$0xff] %v461
                  %v463 = vld [vmem:[%s393 + $0x440] sm:$0xff]
                  %464 = vst [vmem:[%s394 + $0x110] sm:$0xff] %v463
                  %v465 = vld [vmem:[%s393 + $0x460] sm:$0xff]
                  %466 = vst [vmem:[%s394 + $0x118] sm:$0xff] %v465
                  %v467 = vld [vmem:[%s393 + $0x480] sm:$0xff]
                  %468 = vst [vmem:[%s394 + $0x120] sm:$0xff] %v467
                  %v469 = vld [vmem:[%s393 + $0x4a0] sm:$0xff]
                  %470 = vst [vmem:[%s394 + $0x128] sm:$0xff] %v469
                  %v471 = vld [vmem:[%s393 + $0x4c0] sm:$0xff]
                  %472 = vst [vmem:[%s394 + $0x130] sm:$0xff] %v471
                  %v473 = vld [vmem:[%s393 + $0x4e0] sm:$0xff]
                  %474 = vst [vmem:[%s394 + $0x138] sm:$0xff] %v473
                  %v475 = vld [vmem:[%s393 + $0x500] sm:$0xff]
                  %476 = vst [vmem:[%s394 + $0x140] sm:$0xff] %v475
                  %v477 = vld [vmem:[%s393 + $0x520] sm:$0xff]
                  %478 = vst [vmem:[%s394 + $0x148] sm:$0xff] %v477
                  %v479 = vld [vmem:[%s393 + $0x540] sm:$0xff]
                  %480 = vst [vmem:[%s394 + $0x150] sm:$0xff] %v479
                  %v481 = vld [vmem:[%s393 + $0x560] sm:$0xff]
                  %482 = vst [vmem:[%s394 + $0x158] sm:$0xff] %v481
                  %v483 = vld [vmem:[%s393 + $0x580] sm:$0xff]
                  %484 = vst [vmem:[%s394 + $0x160] sm:$0xff] %v483
                  %v485 = vld [vmem:[%s393 + $0x5a0] sm:$0xff]
                  %486 = vst [vmem:[%s394 + $0x168] sm:$0xff] %v485
                  %v487 = vld [vmem:[%s393 + $0x5c0] sm:$0xff]
                  %488 = vst [vmem:[%s394 + $0x170] sm:$0xff] %v487
                  %v489 = vld [vmem:[%s393 + $0x5e0] sm:$0xff]
                  %490 = vst [vmem:[%s394 + $0x178] sm:$0xff] %v489
                  %v491 = vld [vmem:[%s393 + $0x600] sm:$0xff]
                  %492 = vst [vmem:[%s394 + $0x180] sm:$0xff] %v491
                  %v493 = vld [vmem:[%s393 + $0x620] sm:$0xff]
                  %494 = vst [vmem:[%s394 + $0x188] sm:$0xff] %v493
                  %v495 = vld [vmem:[%s393 + $0x640] sm:$0xff]
                  %496 = vst [vmem:[%s394 + $0x190] sm:$0xff] %v495
                  %v497 = vld [vmem:[%s393 + $0x660] sm:$0xff]
                  %498 = vst [vmem:[%s394 + $0x198] sm:$0xff] %v497
                  %v499 = vld [vmem:[%s393 + $0x680] sm:$0xff]
                  %500 = vst [vmem:[%s394 + $0x1a0] sm:$0xff] %v499
                  %v501 = vld [vmem:[%s393 + $0x6a0] sm:$0xff]
                  %502 = vst [vmem:[%s394 + $0x1a8] sm:$0xff] %v501
                  %v503 = vld [vmem:[%s393 + $0x6c0] sm:$0xff]
                  %504 = vst [vmem:[%s394 + $0x1b0] sm:$0xff] %v503
                  %v505 = vld [vmem:[%s393 + $0x6e0] sm:$0xff]
                  %506 = vst [vmem:[%s394 + $0x1b8] sm:$0xff] %v505
                  %v507 = vld [vmem:[%s393 + $0x700] sm:$0xff]
                  %508 = vst [vmem:[%s394 + $0x1c0] sm:$0xff] %v507
                  %v509 = vld [vmem:[%s393 + $0x720] sm:$0xff]
                  %510 = vst [vmem:[%s394 + $0x1c8] sm:$0xff] %v509
                  %v511 = vld [vmem:[%s393 + $0x740] sm:$0xff]
                  %512 = vst [vmem:[%s394 + $0x1d0] sm:$0xff] %v511
                  %v513 = vld [vmem:[%s393 + $0x760] sm:$0xff]
                  %514 = vst [vmem:[%s394 + $0x1d8] sm:$0xff] %v513
                  %v515 = vld [vmem:[%s393 + $0x780] sm:$0xff]
                  %516 = vst [vmem:[%s394 + $0x1e0] sm:$0xff] %v515
                  %v517 = vld [vmem:[%s393 + $0x7a0] sm:$0xff]
                  %518 = vst [vmem:[%s394 + $0x1e8] sm:$0xff] %v517
                  %v519 = vld [vmem:[%s393 + $0x7c0] sm:$0xff]
                  %520 = vst [vmem:[%s394 + $0x1f0] sm:$0xff] %v519
                  %v521 = vld [vmem:[%s393 + $0x7e0] sm:$0xff]
                  %522 = vst [vmem:[%s394 + $0x1f8] sm:$0xff] %v521
                  %v523 = vld [vmem:[%s393 + $0x800] sm:$0xff]
                  %524 = vst [vmem:[%s394 + $0x200] sm:$0xff] %v523
                  %v525 = vld [vmem:[%s393 + $0x820] sm:$0xff]
                  %526 = vst [vmem:[%s394 + $0x208] sm:$0xff] %v525
                  %v527 = vld [vmem:[%s393 + $0x840] sm:$0xff]
                  %528 = vst [vmem:[%s394 + $0x210] sm:$0xff] %v527
                  %v529 = vld [vmem:[%s393 + $0x860] sm:$0xff]
                  %530 = vst [vmem:[%s394 + $0x218] sm:$0xff] %v529
                  %v531 = vld [vmem:[%s393 + $0x880] sm:$0xff]
                  %532 = vst [vmem:[%s394 + $0x220] sm:$0xff] %v531
                  %v533 = vld [vmem:[%s393 + $0x8a0] sm:$0xff]
                  %534 = vst [vmem:[%s394 + $0x228] sm:$0xff] %v533
                  %v535 = vld [vmem:[%s393 + $0x8c0] sm:$0xff]
                  %536 = vst [vmem:[%s394 + $0x230] sm:$0xff] %v535
                  %v537 = vld [vmem:[%s393 + $0x8e0] sm:$0xff]
                  %538 = vst [vmem:[%s394 + $0x238] sm:$0xff] %v537
                  %v539 = vld [vmem:[%s393 + $0x900] sm:$0xff]
                  %540 = vst [vmem:[%s394 + $0x240] sm:$0xff] %v539
                  %v541 = vld [vmem:[%s393 + $0x920] sm:$0xff]
                  %542 = vst [vmem:[%s394 + $0x248] sm:$0xff] %v541
                  %v543 = vld [vmem:[%s393 + $0x940] sm:$0xff]
                  %544 = vst [vmem:[%s394 + $0x250] sm:$0xff] %v543
                  %v545 = vld [vmem:[%s393 + $0x960] sm:$0xff]
                  %546 = vst [vmem:[%s394 + $0x258] sm:$0xff] %v545
                  %v547 = vld [vmem:[%s393 + $0x980] sm:$0xff]
                  %548 = vst [vmem:[%s394 + $0x260] sm:$0xff] %v547
                  %v549 = vld [vmem:[%s393 + $0x9a0] sm:$0xff]
                  %550 = vst [vmem:[%s394 + $0x268] sm:$0xff] %v549
                  %v551 = vld [vmem:[%s393 + $0x9c0] sm:$0xff]
                  %552 = vst [vmem:[%s394 + $0x270] sm:$0xff] %v551
                  %v553 = vld [vmem:[%s393 + $0x9e0] sm:$0xff]
                  %554 = vst [vmem:[%s394 + $0x278] sm:$0xff] %v553
                  %v555 = vld [vmem:[%s393 + $0xa00] sm:$0xff]
                  %556 = vst [vmem:[%s394 + $0x280] sm:$0xff] %v555
                  %v557 = vld [vmem:[%s393 + $0xa20] sm:$0xff]
                  %558 = vst [vmem:[%s394 + $0x288] sm:$0xff] %v557
                  %v559 = vld [vmem:[%s393 + $0xa40] sm:$0xff]
                  %560 = vst [vmem:[%s394 + $0x290] sm:$0xff] %v559
                  %v561 = vld [vmem:[%s393 + $0xa60] sm:$0xff]
                  %562 = vst [vmem:[%s394 + $0x298] sm:$0xff] %v561
                  %v563 = vld [vmem:[%s393 + $0xa80] sm:$0xff]
                  %564 = vst [vmem:[%s394 + $0x2a0] sm:$0xff] %v563
                  %v565 = vld [vmem:[%s393 + $0xaa0] sm:$0xff]
                  %566 = vst [vmem:[%s394 + $0x2a8] sm:$0xff] %v565
                  %v567 = vld [vmem:[%s393 + $0xac0] sm:$0xff]
                  %568 = vst [vmem:[%s394 + $0x2b0] sm:$0xff] %v567
                  %v569 = vld [vmem:[%s393 + $0xae0] sm:$0xff]
                  %570 = vst [vmem:[%s394 + $0x2b8] sm:$0xff] %v569
                  %v571 = vld [vmem:[%s393 + $0xb00] sm:$0xff]
                  %572 = vst [vmem:[%s394 + $0x2c0] sm:$0xff] %v571
                  %v573 = vld [vmem:[%s393 + $0xb20] sm:$0xff]
                  %574 = vst [vmem:[%s394 + $0x2c8] sm:$0xff] %v573
                  %v575 = vld [vmem:[%s393 + $0xb40] sm:$0xff]
                  %576 = vst [vmem:[%s394 + $0x2d0] sm:$0xff] %v575
                  %v577 = vld [vmem:[%s393 + $0xb60] sm:$0xff]
                  %578 = vst [vmem:[%s394 + $0x2d8] sm:$0xff] %v577
                  %v579 = vld [vmem:[%s393 + $0xb80] sm:$0xff]
                  %580 = vst [vmem:[%s394 + $0x2e0] sm:$0xff] %v579
                  %v581 = vld [vmem:[%s393 + $0xba0] sm:$0xff]
                  %582 = vst [vmem:[%s394 + $0x2e8] sm:$0xff] %v581
                  %v583 = vld [vmem:[%s393 + $0xbc0] sm:$0xff]
                  %584 = vst [vmem:[%s394 + $0x2f0] sm:$0xff] %v583
                  %v585 = vld [vmem:[%s393 + $0xbe0] sm:$0xff]
                  %586 = vst [vmem:[%s394 + $0x2f8] sm:$0xff] %v585
                  %v587 = vld [vmem:[%s393 + $0xc00] sm:$0xff]
                  %588 = vst [vmem:[%s394 + $0x300] sm:$0xff] %v587
                  %v589 = vld [vmem:[%s393 + $0xc20] sm:$0xff]
                  %590 = vst [vmem:[%s394 + $0x308] sm:$0xff] %v589
                  %v591 = vld [vmem:[%s393 + $0xc40] sm:$0xff]
                  %592 = vst [vmem:[%s394 + $0x310] sm:$0xff] %v591
                  %v593 = vld [vmem:[%s393 + $0xc60] sm:$0xff]
                  %594 = vst [vmem:[%s394 + $0x318] sm:$0xff] %v593
                  %v595 = vld [vmem:[%s393 + $0xc80] sm:$0xff]
                  %596 = vst [vmem:[%s394 + $0x320] sm:$0xff] %v595
                  %v597 = vld [vmem:[%s393 + $0xca0] sm:$0xff]
                  %598 = vst [vmem:[%s394 + $0x328] sm:$0xff] %v597
                  %v599 = vld [vmem:[%s393 + $0xcc0] sm:$0xff]
                  %600 = vst [vmem:[%s394 + $0x330] sm:$0xff] %v599
                  %v601 = vld [vmem:[%s393 + $0xce0] sm:$0xff]
                  %602 = vst [vmem:[%s394 + $0x338] sm:$0xff] %v601
                  %v603 = vld [vmem:[%s393 + $0xd00] sm:$0xff]
                  %604 = vst [vmem:[%s394 + $0x340] sm:$0xff] %v603
                  %v605 = vld [vmem:[%s393 + $0xd20] sm:$0xff]
                  %606 = vst [vmem:[%s394 + $0x348] sm:$0xff] %v605
                  %v607 = vld [vmem:[%s393 + $0xd40] sm:$0xff]
                  %608 = vst [vmem:[%s394 + $0x350] sm:$0xff] %v607
                  %v609 = vld [vmem:[%s393 + $0xd60] sm:$0xff]
                  %610 = vst [vmem:[%s394 + $0x358] sm:$0xff] %v609
                  %v611 = vld [vmem:[%s393 + $0xd80] sm:$0xff]
                  %612 = vst [vmem:[%s394 + $0x360] sm:$0xff] %v611
                  %v613 = vld [vmem:[%s393 + $0xda0] sm:$0xff]
                  %614 = vst [vmem:[%s394 + $0x368] sm:$0xff] %v613
                  %v615 = vld [vmem:[%s393 + $0xdc0] sm:$0xff]
                  %616 = vst [vmem:[%s394 + $0x370] sm:$0xff] %v615
                  %v617 = vld [vmem:[%s393 + $0xde0] sm:$0xff]
                  %618 = vst [vmem:[%s394 + $0x378] sm:$0xff] %v617
                  %v619 = vld [vmem:[%s393 + $0xe00] sm:$0xff]
                  %620 = vst [vmem:[%s394 + $0x380] sm:$0xff] %v619
                  %v621 = vld [vmem:[%s393 + $0xe20] sm:$0xff]
                  %622 = vst [vmem:[%s394 + $0x388] sm:$0xff] %v621
                  %v623 = vld [vmem:[%s393 + $0xe40] sm:$0xff]
                  %624 = vst [vmem:[%s394 + $0x390] sm:$0xff] %v623
                  %v625 = vld [vmem:[%s393 + $0xe60] sm:$0xff]
                  %626 = vst [vmem:[%s394 + $0x398] sm:$0xff] %v625
                  %v627 = vld [vmem:[%s393 + $0xe80] sm:$0xff]
                  %628 = vst [vmem:[%s394 + $0x3a0] sm:$0xff] %v627
                  %v629 = vld [vmem:[%s393 + $0xea0] sm:$0xff]
                  %630 = vst [vmem:[%s394 + $0x3a8] sm:$0xff] %v629
                  %v631 = vld [vmem:[%s393 + $0xec0] sm:$0xff]
                  %632 = vst [vmem:[%s394 + $0x3b0] sm:$0xff] %v631
                  %v633 = vld [vmem:[%s393 + $0xee0] sm:$0xff]
                  %634 = vst [vmem:[%s394 + $0x3b8] sm:$0xff] %v633
                  %v635 = vld [vmem:[%s393 + $0xf00] sm:$0xff]
                  %636 = vst [vmem:[%s394 + $0x3c0] sm:$0xff] %v635
                  %v637 = vld [vmem:[%s393 + $0xf20] sm:$0xff]
                  %638 = vst [vmem:[%s394 + $0x3c8] sm:$0xff] %v637
                  %v639 = vld [vmem:[%s393 + $0xf40] sm:$0xff]
                  %640 = vst [vmem:[%s394 + $0x3d0] sm:$0xff] %v639
                  %v641 = vld [vmem:[%s393 + $0xf60] sm:$0xff]
                  %642 = vst [vmem:[%s394 + $0x3d8] sm:$0xff] %v641
                  %v643 = vld [vmem:[%s393 + $0xf80] sm:$0xff]
                  %644 = vst [vmem:[%s394 + $0x3e0] sm:$0xff] %v643
                  %v645 = vld [vmem:[%s393 + $0xfa0] sm:$0xff]
                  %646 = vst [vmem:[%s394 + $0x3e8] sm:$0xff] %v645
                  %v647 = vld [vmem:[%s393 + $0xfc0] sm:$0xff]
                  %648 = vst [vmem:[%s394 + $0x3f0] sm:$0xff] %v647
                  %v649 = vld [vmem:[%s393 + $0xfe0] sm:$0xff]
                  %650 = vst [vmem:[%s394 + $0x3f8] sm:$0xff] %v649
                $region52: #{cnn_forward.9} parent=46 // loop_footer
                  %s392 = sadd.s32 1, %s388
                $region53: #{cnn_forward.9} parent=46 // loop_footer_branch
                  %387 = sbr.rel target = $region49
                $region54: #{cnn_forward.9} parent=46 // loop_exit
                  _
              $region47: #{cnn_forward.9} parent=31 // pred_fallthru
                _
              // Predicated region
              $region55: #{cnn_forward.9} parent=31 // pred_check
                _
              $region56: #{cnn_forward.9} parent=31 // pred_check_branch
                %652 = sbr.rel target = $region58
              $region57: #{cnn_forward.9} parent=31 // pred_region
                _
              $region58: #{cnn_forward.9} parent=31 // pred_fallthru
                _
            $region32: #{cnn_forward.9} parent=27 // pred_fallthru
              _
            // Predicated region
            $region33: #{cnn_forward.9} parent=27 // pred_check
              _
            $region34: #{cnn_forward.9} parent=27 // pred_check_branch
              %118 = sbr.rel target = $region36
            $region35: #{cnn_forward.9} parent=27 // pred_region
              %s120 = ssub.s32 256, 1
              loop: start=0, step=1, limit=1
              $region37: #{cnn_forward.9} parent=35 // loop_pre_header
                _
              $region38: #{cnn_forward.9} parent=35 // loop_header
                %s122 = sphi 0, %s126
                %p123 = scmp.ge.s32.totalorder %s122, 1
                %s127 = sphi %s112, %s112
                %s128 = sphi %s109, %s109
              $region39: #{cnn_forward.9} parent=35 // loop_header_branch
                %125 = sbr.rel (%p123) target = $region43
              $region40: #{cnn_forward.9} parent=35 // loop_body
                %v129 = vld [vmem:[%s127] sm:%s120]
                %130 = vst [vmem:[%s128] sm:%s120] %v129
                %v131 = vld [vmem:[%s127 + $0x20] sm:%s120]
                %132 = vst [vmem:[%s128 + $0x8] sm:%s120] %v131
                %v133 = vld [vmem:[%s127 + $0x40] sm:%s120]
                %134 = vst [vmem:[%s128 + $0x10] sm:%s120] %v133
                %v135 = vld [vmem:[%s127 + $0x60] sm:%s120]
                %136 = vst [vmem:[%s128 + $0x18] sm:%s120] %v135
                %v137 = vld [vmem:[%s127 + $0x80] sm:%s120]
                %138 = vst [vmem:[%s128 + $0x20] sm:%s120] %v137
                %v139 = vld [vmem:[%s127 + $0xa0] sm:%s120]
                %140 = vst [vmem:[%s128 + $0x28] sm:%s120] %v139
                %v141 = vld [vmem:[%s127 + $0xc0] sm:%s120]
                %142 = vst [vmem:[%s128 + $0x30] sm:%s120] %v141
                %v143 = vld [vmem:[%s127 + $0xe0] sm:%s120]
                %144 = vst [vmem:[%s128 + $0x38] sm:%s120] %v143
                %v145 = vld [vmem:[%s127 + $0x100] sm:%s120]
                %146 = vst [vmem:[%s128 + $0x40] sm:%s120] %v145
                %v147 = vld [vmem:[%s127 + $0x120] sm:%s120]
                %148 = vst [vmem:[%s128 + $0x48] sm:%s120] %v147
                %v149 = vld [vmem:[%s127 + $0x140] sm:%s120]
                %150 = vst [vmem:[%s128 + $0x50] sm:%s120] %v149
                %v151 = vld [vmem:[%s127 + $0x160] sm:%s120]
                %152 = vst [vmem:[%s128 + $0x58] sm:%s120] %v151
                %v153 = vld [vmem:[%s127 + $0x180] sm:%s120]
                %154 = vst [vmem:[%s128 + $0x60] sm:%s120] %v153
                %v155 = vld [vmem:[%s127 + $0x1a0] sm:%s120]
                %156 = vst [vmem:[%s128 + $0x68] sm:%s120] %v155
                %v157 = vld [vmem:[%s127 + $0x1c0] sm:%s120]
                %158 = vst [vmem:[%s128 + $0x70] sm:%s120] %v157
                %v159 = vld [vmem:[%s127 + $0x1e0] sm:%s120]
                %160 = vst [vmem:[%s128 + $0x78] sm:%s120] %v159
                %v161 = vld [vmem:[%s127 + $0x200] sm:%s120]
                %162 = vst [vmem:[%s128 + $0x80] sm:%s120] %v161
                %v163 = vld [vmem:[%s127 + $0x220] sm:%s120]
                %164 = vst [vmem:[%s128 + $0x88] sm:%s120] %v163
                %v165 = vld [vmem:[%s127 + $0x240] sm:%s120]
                %166 = vst [vmem:[%s128 + $0x90] sm:%s120] %v165
                %v167 = vld [vmem:[%s127 + $0x260] sm:%s120]
                %168 = vst [vmem:[%s128 + $0x98] sm:%s120] %v167
                %v169 = vld [vmem:[%s127 + $0x280] sm:%s120]
                %170 = vst [vmem:[%s128 + $0xa0] sm:%s120] %v169
                %v171 = vld [vmem:[%s127 + $0x2a0] sm:%s120]
                %172 = vst [vmem:[%s128 + $0xa8] sm:%s120] %v171
                %v173 = vld [vmem:[%s127 + $0x2c0] sm:%s120]
                %174 = vst [vmem:[%s128 + $0xb0] sm:%s120] %v173
                %v175 = vld [vmem:[%s127 + $0x2e0] sm:%s120]
                %176 = vst [vmem:[%s128 + $0xb8] sm:%s120] %v175
                %v177 = vld [vmem:[%s127 + $0x300] sm:%s120]
                %178 = vst [vmem:[%s128 + $0xc0] sm:%s120] %v177
                %v179 = vld [vmem:[%s127 + $0x320] sm:%s120]
                %180 = vst [vmem:[%s128 + $0xc8] sm:%s120] %v179
                %v181 = vld [vmem:[%s127 + $0x340] sm:%s120]
                %182 = vst [vmem:[%s128 + $0xd0] sm:%s120] %v181
                %v183 = vld [vmem:[%s127 + $0x360] sm:%s120]
                %184 = vst [vmem:[%s128 + $0xd8] sm:%s120] %v183
                %v185 = vld [vmem:[%s127 + $0x380] sm:%s120]
                %186 = vst [vmem:[%s128 + $0xe0] sm:%s120] %v185
                %v187 = vld [vmem:[%s127 + $0x3a0] sm:%s120]
                %188 = vst [vmem:[%s128 + $0xe8] sm:%s120] %v187
                %v189 = vld [vmem:[%s127 + $0x3c0] sm:%s120]
                %190 = vst [vmem:[%s128 + $0xf0] sm:%s120] %v189
                %v191 = vld [vmem:[%s127 + $0x3e0] sm:%s120]
                %192 = vst [vmem:[%s128 + $0xf8] sm:%s120] %v191
                %v193 = vld [vmem:[%s127 + $0x400] sm:%s120]
                %194 = vst [vmem:[%s128 + $0x100] sm:%s120] %v193
                %v195 = vld [vmem:[%s127 + $0x420] sm:%s120]
                %196 = vst [vmem:[%s128 + $0x108] sm:%s120] %v195
                %v197 = vld [vmem:[%s127 + $0x440] sm:%s120]
                %198 = vst [vmem:[%s128 + $0x110] sm:%s120] %v197
                %v199 = vld [vmem:[%s127 + $0x460] sm:%s120]
                %200 = vst [vmem:[%s128 + $0x118] sm:%s120] %v199
                %v201 = vld [vmem:[%s127 + $0x480] sm:%s120]
                %202 = vst [vmem:[%s128 + $0x120] sm:%s120] %v201
                %v203 = vld [vmem:[%s127 + $0x4a0] sm:%s120]
                %204 = vst [vmem:[%s128 + $0x128] sm:%s120] %v203
                %v205 = vld [vmem:[%s127 + $0x4c0] sm:%s120]
                %206 = vst [vmem:[%s128 + $0x130] sm:%s120] %v205
                %v207 = vld [vmem:[%s127 + $0x4e0] sm:%s120]
                %208 = vst [vmem:[%s128 + $0x138] sm:%s120] %v207
                %v209 = vld [vmem:[%s127 + $0x500] sm:%s120]
                %210 = vst [vmem:[%s128 + $0x140] sm:%s120] %v209
                %v211 = vld [vmem:[%s127 + $0x520] sm:%s120]
                %212 = vst [vmem:[%s128 + $0x148] sm:%s120] %v211
                %v213 = vld [vmem:[%s127 + $0x540] sm:%s120]
                %214 = vst [vmem:[%s128 + $0x150] sm:%s120] %v213
                %v215 = vld [vmem:[%s127 + $0x560] sm:%s120]
                %216 = vst [vmem:[%s128 + $0x158] sm:%s120] %v215
                %v217 = vld [vmem:[%s127 + $0x580] sm:%s120]
                %218 = vst [vmem:[%s128 + $0x160] sm:%s120] %v217
                %v219 = vld [vmem:[%s127 + $0x5a0] sm:%s120]
                %220 = vst [vmem:[%s128 + $0x168] sm:%s120] %v219
                %v221 = vld [vmem:[%s127 + $0x5c0] sm:%s120]
                %222 = vst [vmem:[%s128 + $0x170] sm:%s120] %v221
                %v223 = vld [vmem:[%s127 + $0x5e0] sm:%s120]
                %224 = vst [vmem:[%s128 + $0x178] sm:%s120] %v223
                %v225 = vld [vmem:[%s127 + $0x600] sm:%s120]
                %226 = vst [vmem:[%s128 + $0x180] sm:%s120] %v225
                %v227 = vld [vmem:[%s127 + $0x620] sm:%s120]
                %228 = vst [vmem:[%s128 + $0x188] sm:%s120] %v227
                %v229 = vld [vmem:[%s127 + $0x640] sm:%s120]
                %230 = vst [vmem:[%s128 + $0x190] sm:%s120] %v229
                %v231 = vld [vmem:[%s127 + $0x660] sm:%s120]
                %232 = vst [vmem:[%s128 + $0x198] sm:%s120] %v231
                %v233 = vld [vmem:[%s127 + $0x680] sm:%s120]
                %234 = vst [vmem:[%s128 + $0x1a0] sm:%s120] %v233
                %v235 = vld [vmem:[%s127 + $0x6a0] sm:%s120]
                %236 = vst [vmem:[%s128 + $0x1a8] sm:%s120] %v235
                %v237 = vld [vmem:[%s127 + $0x6c0] sm:%s120]
                %238 = vst [vmem:[%s128 + $0x1b0] sm:%s120] %v237
                %v239 = vld [vmem:[%s127 + $0x6e0] sm:%s120]
                %240 = vst [vmem:[%s128 + $0x1b8] sm:%s120] %v239
                %v241 = vld [vmem:[%s127 + $0x700] sm:%s120]
                %242 = vst [vmem:[%s128 + $0x1c0] sm:%s120] %v241
                %v243 = vld [vmem:[%s127 + $0x720] sm:%s120]
                %244 = vst [vmem:[%s128 + $0x1c8] sm:%s120] %v243
                %v245 = vld [vmem:[%s127 + $0x740] sm:%s120]
                %246 = vst [vmem:[%s128 + $0x1d0] sm:%s120] %v245
                %v247 = vld [vmem:[%s127 + $0x760] sm:%s120]
                %248 = vst [vmem:[%s128 + $0x1d8] sm:%s120] %v247
                %v249 = vld [vmem:[%s127 + $0x780] sm:%s120]
                %250 = vst [vmem:[%s128 + $0x1e0] sm:%s120] %v249
                %v251 = vld [vmem:[%s127 + $0x7a0] sm:%s120]
                %252 = vst [vmem:[%s128 + $0x1e8] sm:%s120] %v251
                %v253 = vld [vmem:[%s127 + $0x7c0] sm:%s120]
                %254 = vst [vmem:[%s128 + $0x1f0] sm:%s120] %v253
                %v255 = vld [vmem:[%s127 + $0x7e0] sm:%s120]
                %256 = vst [vmem:[%s128 + $0x1f8] sm:%s120] %v255
                %v257 = vld [vmem:[%s127 + $0x800] sm:%s120]
                %258 = vst [vmem:[%s128 + $0x200] sm:%s120] %v257
                %v259 = vld [vmem:[%s127 + $0x820] sm:%s120]
                %260 = vst [vmem:[%s128 + $0x208] sm:%s120] %v259
                %v261 = vld [vmem:[%s127 + $0x840] sm:%s120]
                %262 = vst [vmem:[%s128 + $0x210] sm:%s120] %v261
                %v263 = vld [vmem:[%s127 + $0x860] sm:%s120]
                %264 = vst [vmem:[%s128 + $0x218] sm:%s120] %v263
                %v265 = vld [vmem:[%s127 + $0x880] sm:%s120]
                %266 = vst [vmem:[%s128 + $0x220] sm:%s120] %v265
                %v267 = vld [vmem:[%s127 + $0x8a0] sm:%s120]
                %268 = vst [vmem:[%s128 + $0x228] sm:%s120] %v267
                %v269 = vld [vmem:[%s127 + $0x8c0] sm:%s120]
                %270 = vst [vmem:[%s128 + $0x230] sm:%s120] %v269
                %v271 = vld [vmem:[%s127 + $0x8e0] sm:%s120]
                %272 = vst [vmem:[%s128 + $0x238] sm:%s120] %v271
                %v273 = vld [vmem:[%s127 + $0x900] sm:%s120]
                %274 = vst [vmem:[%s128 + $0x240] sm:%s120] %v273
                %v275 = vld [vmem:[%s127 + $0x920] sm:%s120]
                %276 = vst [vmem:[%s128 + $0x248] sm:%s120] %v275
                %v277 = vld [vmem:[%s127 + $0x940] sm:%s120]
                %278 = vst [vmem:[%s128 + $0x250] sm:%s120] %v277
                %v279 = vld [vmem:[%s127 + $0x960] sm:%s120]
                %280 = vst [vmem:[%s128 + $0x258] sm:%s120] %v279
                %v281 = vld [vmem:[%s127 + $0x980] sm:%s120]
                %282 = vst [vmem:[%s128 + $0x260] sm:%s120] %v281
                %v283 = vld [vmem:[%s127 + $0x9a0] sm:%s120]
                %284 = vst [vmem:[%s128 + $0x268] sm:%s120] %v283
                %v285 = vld [vmem:[%s127 + $0x9c0] sm:%s120]
                %286 = vst [vmem:[%s128 + $0x270] sm:%s120] %v285
                %v287 = vld [vmem:[%s127 + $0x9e0] sm:%s120]
                %288 = vst [vmem:[%s128 + $0x278] sm:%s120] %v287
                %v289 = vld [vmem:[%s127 + $0xa00] sm:%s120]
                %290 = vst [vmem:[%s128 + $0x280] sm:%s120] %v289
                %v291 = vld [vmem:[%s127 + $0xa20] sm:%s120]
                %292 = vst [vmem:[%s128 + $0x288] sm:%s120] %v291
                %v293 = vld [vmem:[%s127 + $0xa40] sm:%s120]
                %294 = vst [vmem:[%s128 + $0x290] sm:%s120] %v293
                %v295 = vld [vmem:[%s127 + $0xa60] sm:%s120]
                %296 = vst [vmem:[%s128 + $0x298] sm:%s120] %v295
                %v297 = vld [vmem:[%s127 + $0xa80] sm:%s120]
                %298 = vst [vmem:[%s128 + $0x2a0] sm:%s120] %v297
                %v299 = vld [vmem:[%s127 + $0xaa0] sm:%s120]
                %300 = vst [vmem:[%s128 + $0x2a8] sm:%s120] %v299
                %v301 = vld [vmem:[%s127 + $0xac0] sm:%s120]
                %302 = vst [vmem:[%s128 + $0x2b0] sm:%s120] %v301
                %v303 = vld [vmem:[%s127 + $0xae0] sm:%s120]
                %304 = vst [vmem:[%s128 + $0x2b8] sm:%s120] %v303
                %v305 = vld [vmem:[%s127 + $0xb00] sm:%s120]
                %306 = vst [vmem:[%s128 + $0x2c0] sm:%s120] %v305
                %v307 = vld [vmem:[%s127 + $0xb20] sm:%s120]
                %308 = vst [vmem:[%s128 + $0x2c8] sm:%s120] %v307
                %v309 = vld [vmem:[%s127 + $0xb40] sm:%s120]
                %310 = vst [vmem:[%s128 + $0x2d0] sm:%s120] %v309
                %v311 = vld [vmem:[%s127 + $0xb60] sm:%s120]
                %312 = vst [vmem:[%s128 + $0x2d8] sm:%s120] %v311
                %v313 = vld [vmem:[%s127 + $0xb80] sm:%s120]
                %314 = vst [vmem:[%s128 + $0x2e0] sm:%s120] %v313
                %v315 = vld [vmem:[%s127 + $0xba0] sm:%s120]
                %316 = vst [vmem:[%s128 + $0x2e8] sm:%s120] %v315
                %v317 = vld [vmem:[%s127 + $0xbc0] sm:%s120]
                %318 = vst [vmem:[%s128 + $0x2f0] sm:%s120] %v317
                %v319 = vld [vmem:[%s127 + $0xbe0] sm:%s120]
                %320 = vst [vmem:[%s128 + $0x2f8] sm:%s120] %v319
                %v321 = vld [vmem:[%s127 + $0xc00] sm:%s120]
                %322 = vst [vmem:[%s128 + $0x300] sm:%s120] %v321
                %v323 = vld [vmem:[%s127 + $0xc20] sm:%s120]
                %324 = vst [vmem:[%s128 + $0x308] sm:%s120] %v323
                %v325 = vld [vmem:[%s127 + $0xc40] sm:%s120]
                %326 = vst [vmem:[%s128 + $0x310] sm:%s120] %v325
                %v327 = vld [vmem:[%s127 + $0xc60] sm:%s120]
                %328 = vst [vmem:[%s128 + $0x318] sm:%s120] %v327
                %v329 = vld [vmem:[%s127 + $0xc80] sm:%s120]
                %330 = vst [vmem:[%s128 + $0x320] sm:%s120] %v329
                %v331 = vld [vmem:[%s127 + $0xca0] sm:%s120]
                %332 = vst [vmem:[%s128 + $0x328] sm:%s120] %v331
                %v333 = vld [vmem:[%s127 + $0xcc0] sm:%s120]
                %334 = vst [vmem:[%s128 + $0x330] sm:%s120] %v333
                %v335 = vld [vmem:[%s127 + $0xce0] sm:%s120]
                %336 = vst [vmem:[%s128 + $0x338] sm:%s120] %v335
                %v337 = vld [vmem:[%s127 + $0xd00] sm:%s120]
                %338 = vst [vmem:[%s128 + $0x340] sm:%s120] %v337
                %v339 = vld [vmem:[%s127 + $0xd20] sm:%s120]
                %340 = vst [vmem:[%s128 + $0x348] sm:%s120] %v339
                %v341 = vld [vmem:[%s127 + $0xd40] sm:%s120]
                %342 = vst [vmem:[%s128 + $0x350] sm:%s120] %v341
                %v343 = vld [vmem:[%s127 + $0xd60] sm:%s120]
                %344 = vst [vmem:[%s128 + $0x358] sm:%s120] %v343
                %v345 = vld [vmem:[%s127 + $0xd80] sm:%s120]
                %346 = vst [vmem:[%s128 + $0x360] sm:%s120] %v345
                %v347 = vld [vmem:[%s127 + $0xda0] sm:%s120]
                %348 = vst [vmem:[%s128 + $0x368] sm:%s120] %v347
                %v349 = vld [vmem:[%s127 + $0xdc0] sm:%s120]
                %350 = vst [vmem:[%s128 + $0x370] sm:%s120] %v349
                %v351 = vld [vmem:[%s127 + $0xde0] sm:%s120]
                %352 = vst [vmem:[%s128 + $0x378] sm:%s120] %v351
                %v353 = vld [vmem:[%s127 + $0xe00] sm:%s120]
                %354 = vst [vmem:[%s128 + $0x380] sm:%s120] %v353
                %v355 = vld [vmem:[%s127 + $0xe20] sm:%s120]
                %356 = vst [vmem:[%s128 + $0x388] sm:%s120] %v355
                %v357 = vld [vmem:[%s127 + $0xe40] sm:%s120]
                %358 = vst [vmem:[%s128 + $0x390] sm:%s120] %v357
                %v359 = vld [vmem:[%s127 + $0xe60] sm:%s120]
                %360 = vst [vmem:[%s128 + $0x398] sm:%s120] %v359
                %v361 = vld [vmem:[%s127 + $0xe80] sm:%s120]
                %362 = vst [vmem:[%s128 + $0x3a0] sm:%s120] %v361
                %v363 = vld [vmem:[%s127 + $0xea0] sm:%s120]
                %364 = vst [vmem:[%s128 + $0x3a8] sm:%s120] %v363
                %v365 = vld [vmem:[%s127 + $0xec0] sm:%s120]
                %366 = vst [vmem:[%s128 + $0x3b0] sm:%s120] %v365
                %v367 = vld [vmem:[%s127 + $0xee0] sm:%s120]
                %368 = vst [vmem:[%s128 + $0x3b8] sm:%s120] %v367
                %v369 = vld [vmem:[%s127 + $0xf00] sm:%s120]
                %370 = vst [vmem:[%s128 + $0x3c0] sm:%s120] %v369
                %v371 = vld [vmem:[%s127 + $0xf20] sm:%s120]
                %372 = vst [vmem:[%s128 + $0x3c8] sm:%s120] %v371
                %v373 = vld [vmem:[%s127 + $0xf40] sm:%s120]
                %374 = vst [vmem:[%s128 + $0x3d0] sm:%s120] %v373
                %v375 = vld [vmem:[%s127 + $0xf60] sm:%s120]
                %376 = vst [vmem:[%s128 + $0x3d8] sm:%s120] %v375
                %v377 = vld [vmem:[%s127 + $0xf80] sm:%s120]
                %378 = vst [vmem:[%s128 + $0x3e0] sm:%s120] %v377
                %v379 = vld [vmem:[%s127 + $0xfa0] sm:%s120]
                %380 = vst [vmem:[%s128 + $0x3e8] sm:%s120] %v379
                %v381 = vld [vmem:[%s127 + $0xfc0] sm:%s120]
                %382 = vst [vmem:[%s128 + $0x3f0] sm:%s120] %v381
                %v383 = vld [vmem:[%s127 + $0xfe0] sm:%s120]
                %384 = vst [vmem:[%s128 + $0x3f8] sm:%s120] %v383
              $region41: #{cnn_forward.9} parent=35 // loop_footer
                %s126 = sadd.s32 1, %s122
              $region42: #{cnn_forward.9} parent=35 // loop_footer_branch
                %121 = sbr.rel target = $region38
              $region43: #{cnn_forward.9} parent=35 // loop_exit
                _
            $region36: #{cnn_forward.9} parent=27 // pred_fallthru
              _
          $region28: #{cnn_forward.9} parent=23 // pred_fallthru
            _
          %653 = vnop
        $region24: #{cnn_forward.9} parent=19 // pred_fallthru
          _
      $region20: #{cnn_forward.9} parent=5 // pred_fallthru
        _
      %p654 = scmp.le.s32.totalorder 1, %s8
      %p655 = scmp.lt.s32.totalorder %s8, 5
      %p656 = pnand %p654, %p655
      %p657 = pneg %p656
      // Predicated region
      $region59: #{cnn_forward.9} parent=5 // pred_check
        _
      $region60: #{cnn_forward.9} parent=5 // pred_check_branch
        %659 = sbr.rel (%p656) target = $region62
      $region61: #{cnn_forward.9} parent=5 // pred_region
        %s660 = ssub.s32 %s8, 1
        %s661 = sand.u32 %s42, 1
        %s662 = sand.u32 %s42, 1
        %s663 = smul.addr %s662, 1024
        %s664 = scalar_lea.vmem [#allocation2], %s663
        // Predicated region
        $region63: #{cnn_forward.9} parent=61 // pred_check
          %p665 = pneg %p55
        $region64: #{cnn_forward.9} parent=61 // pred_check_branch
          %667 = sbr.rel (%p665) target = $region66
        $region65: #{cnn_forward.9} parent=61 // pred_region
          _
        $region66: #{cnn_forward.9} parent=61 // pred_fallthru
          _
        %p668 = pneg %p29
        %p669 = pneg %p26
        %s670 = sand.u32 %s42, 1
        %s671 = sand.u32 %s42, 1
        %s672 = smul.addr %s671, 1024
        %s673 = scalar_lea.vmem [#allocation2], %s672
        %p674 = pneg %p55
        %p675 = pneg %p52
        %p676 = pneg %p81
        %p677 = pneg %p78
        %s678 = smul.u32 2, %s13
        %p679 = scmp.lt.s32.totalorder %s678, 7
        %s680 = scalar_select %p679, %s678, 7
        %s681 = scalar_lea.vmem %s2, %s680
        %s682 = smul.u32 2, %s13
        %s683 = smul.u32 2, %s13
        %p684 = scmp.lt.s32.totalorder %s683, 7
        %s685 = scalar_select %p684, %s683, 7
        %s686 = scalar_lea.vmem %s2, %s685
        %s687 = smul.u32 2, %s13
        %v688 = vld [vmem:[%s0] sm:$0xff]
        %v689 = vld [vmem:[%s664] sm:$0xff]
        %v690 = vld [vmem:[%s664 + $0x8] sm:$0xff]
        %v691 = vld [vmem:[%s664 + $0x10] sm:$0xff]
        %v692 = vld [vmem:[%s664 + $0x18] sm:$0xff]
        %v693 = vld [vmem:[%s664 + $0x20] sm:$0xff]
        %v694 = vld [vmem:[%s664 + $0x28] sm:$0xff]
        %v695 = vld [vmem:[%s664 + $0x30] sm:$0xff]
        %v696 = vld [vmem:[%s664 + $0x38] sm:$0xff]
        %v697 = vld [vmem:[%s664 + $0x40] sm:$0xff]
        %v698 = vld [vmem:[%s664 + $0x48] sm:$0xff]
        %v699 = vld [vmem:[%s664 + $0x50] sm:$0xff]
        %v700 = vld [vmem:[%s664 + $0x58] sm:$0xff]
        %v701 = vld [vmem:[%s664 + $0x60] sm:$0xff]
        %v702 = vld [vmem:[%s664 + $0x68] sm:$0xff]
        %v703 = vld [vmem:[%s664 + $0x70] sm:$0xff]
        %v704 = vld [vmem:[%s664 + $0x78] sm:$0xff]
        %v705 = vld [vmem:[%s664 + $0x80] sm:$0xff]
        %v706 = vld [vmem:[%s664 + $0x88] sm:$0xff]
        %v707 = vld [vmem:[%s664 + $0x90] sm:$0xff]
        %v708 = vld [vmem:[%s664 + $0x98] sm:$0xff]
        %v709 = vld [vmem:[%s664 + $0xa0] sm:$0xff]
        %v710 = vld [vmem:[%s664 + $0xa8] sm:$0xff]
        %v711 = vld [vmem:[%s664 + $0xb0] sm:$0xff]
        %v712 = vld [vmem:[%s664 + $0xb8] sm:$0xff]
        %v713 = vld [vmem:[%s664 + $0xc0] sm:$0xff]
        %v714 = vld [vmem:[%s664 + $0xc8] sm:$0xff]
        %v715 = vld [vmem:[%s664 + $0xd0] sm:$0xff]
        %v716 = vld [vmem:[%s664 + $0xd8] sm:$0xff]
        %v717 = vld [vmem:[%s664 + $0xe0] sm:$0xff]
        %v718 = vld [vmem:[%s664 + $0xe8] sm:$0xff]
        %v719 = vld [vmem:[%s664 + $0xf0] sm:$0xff]
        %v720 = vld [vmem:[%s664 + $0xf8] sm:$0xff]
        %v721 = vld [vmem:[%s664 + $0x100] sm:$0xff]
        %v722 = vld [vmem:[%s664 + $0x108] sm:$0xff]
        %v723 = vld [vmem:[%s664 + $0x110] sm:$0xff]
        %v724 = vld [vmem:[%s664 + $0x118] sm:$0xff]
        %v725 = vld [vmem:[%s664 + $0x120] sm:$0xff]
        %v726 = vld [vmem:[%s664 + $0x128] sm:$0xff]
        %v727 = vld [vmem:[%s664 + $0x130] sm:$0xff]
        %v728 = vld [vmem:[%s664 + $0x138] sm:$0xff]
        %v729 = vld [vmem:[%s664 + $0x140] sm:$0xff]
        %v730 = vld [vmem:[%s664 + $0x148] sm:$0xff]
        %v731 = vld [vmem:[%s664 + $0x150] sm:$0xff]
        %v732 = vld [vmem:[%s664 + $0x158] sm:$0xff]
        %v733 = vld [vmem:[%s664 + $0x160] sm:$0xff]
        %v734 = vld [vmem:[%s664 + $0x168] sm:$0xff]
        %v735 = vld [vmem:[%s664 + $0x170] sm:$0xff]
        %v736 = vld [vmem:[%s664 + $0x178] sm:$0xff]
        %v737 = vld [vmem:[%s664 + $0x180] sm:$0xff]
        %v738 = vld [vmem:[%s664 + $0x188] sm:$0xff]
        %v739 = vld [vmem:[%s664 + $0x190] sm:$0xff]
        %v740 = vld [vmem:[%s664 + $0x198] sm:$0xff]
        %v741 = vld [vmem:[%s664 + $0x1a0] sm:$0xff]
        %v742 = vld [vmem:[%s664 + $0x1a8] sm:$0xff]
        %v743 = vld [vmem:[%s664 + $0x1b0] sm:$0xff]
        %v744 = vld [vmem:[%s664 + $0x1b8] sm:$0xff]
        %v745 = vld [vmem:[%s664 + $0x1c0] sm:$0xff]
        %v746 = vld [vmem:[%s664 + $0x1c8] sm:$0xff]
        %v747 = vld [vmem:[%s664 + $0x1d0] sm:$0xff]
        %v748 = vld [vmem:[%s664 + $0x1d8] sm:$0xff]
        %v749 = vld [vmem:[%s664 + $0x1e0] sm:$0xff]
        %v750 = vld [vmem:[%s664 + $0x1e8] sm:$0xff]
        %v751 = vld [vmem:[%s664 + $0x1f0] sm:$0xff]
        %v752 = vld [vmem:[%s664 + $0x1f8] sm:$0xff]
        %v753 = vld [vmem:[%s664 + $0x200] sm:$0xff]
        %v754 = vld [vmem:[%s664 + $0x208] sm:$0xff]
        %v755 = vld [vmem:[%s664 + $0x210] sm:$0xff]
        %v756 = vld [vmem:[%s664 + $0x218] sm:$0xff]
        %v757 = vld [vmem:[%s664 + $0x220] sm:$0xff]
        %v758 = vld [vmem:[%s664 + $0x228] sm:$0xff]
        %v759 = vld [vmem:[%s664 + $0x230] sm:$0xff]
        %v760 = vld [vmem:[%s664 + $0x238] sm:$0xff]
        %v761 = vld [vmem:[%s664 + $0x240] sm:$0xff]
        %v762 = vld [vmem:[%s664 + $0x248] sm:$0xff]
        %v763 = vld [vmem:[%s664 + $0x250] sm:$0xff]
        %v764 = vld [vmem:[%s664 + $0x258] sm:$0xff]
        %v765 = vld [vmem:[%s664 + $0x260] sm:$0xff]
        %v766 = vld [vmem:[%s664 + $0x268] sm:$0xff]
        %v767 = vld [vmem:[%s664 + $0x270] sm:$0xff]
        %v768 = vld [vmem:[%s664 + $0x278] sm:$0xff]
        %v769 = vld [vmem:[%s664 + $0x280] sm:$0xff]
        %v770 = vld [vmem:[%s664 + $0x288] sm:$0xff]
        %v771 = vld [vmem:[%s664 + $0x290] sm:$0xff]
        %v772 = vld [vmem:[%s664 + $0x298] sm:$0xff]
        %v773 = vld [vmem:[%s664 + $0x2a0] sm:$0xff]
        %v774 = vld [vmem:[%s664 + $0x2a8] sm:$0xff]
        %v775 = vld [vmem:[%s664 + $0x2b0] sm:$0xff]
        %v776 = vld [vmem:[%s664 + $0x2b8] sm:$0xff]
        %v777 = vld [vmem:[%s664 + $0x2c0] sm:$0xff]
        %v778 = vld [vmem:[%s664 + $0x2c8] sm:$0xff]
        %v779 = vld [vmem:[%s664 + $0x2d0] sm:$0xff]
        %v780 = vld [vmem:[%s664 + $0x2d8] sm:$0xff]
        %v781 = vld [vmem:[%s664 + $0x2e0] sm:$0xff]
        %v782 = vld [vmem:[%s664 + $0x2e8] sm:$0xff]
        %v783 = vld [vmem:[%s664 + $0x2f0] sm:$0xff]
        %v784 = vld [vmem:[%s664 + $0x2f8] sm:$0xff]
        %v785 = vld [vmem:[%s664 + $0x300] sm:$0xff]
        %v786 = vld [vmem:[%s664 + $0x308] sm:$0xff]
        %v787 = vld [vmem:[%s664 + $0x310] sm:$0xff]
        %v788 = vld [vmem:[%s664 + $0x318] sm:$0xff]
        %v789 = vld [vmem:[%s664 + $0x320] sm:$0xff]
        %v790 = vld [vmem:[%s664 + $0x328] sm:$0xff]
        %v791 = vld [vmem:[%s664 + $0x330] sm:$0xff]
        %v792 = vld [vmem:[%s664 + $0x338] sm:$0xff]
        %v793 = vld [vmem:[%s664 + $0x340] sm:$0xff]
        %v794 = vld [vmem:[%s664 + $0x348] sm:$0xff]
        %v795 = vld [vmem:[%s664 + $0x350] sm:$0xff]
        %v796 = vld [vmem:[%s664 + $0x358] sm:$0xff]
        %v797 = vld [vmem:[%s664 + $0x360] sm:$0xff]
        %v798 = vld [vmem:[%s664 + $0x368] sm:$0xff]
        %v799 = vld [vmem:[%s664 + $0x370] sm:$0xff]
        %v800 = vld [vmem:[%s664 + $0x378] sm:$0xff]
        %v801 = vld [vmem:[%s664 + $0x380] sm:$0xff]
        %v802 = vld [vmem:[%s664 + $0x388] sm:$0xff]
        %v803 = vld [vmem:[%s664 + $0x390] sm:$0xff]
        %v804 = vld [vmem:[%s664 + $0x398] sm:$0xff]
        %v805 = vld [vmem:[%s664 + $0x3a0] sm:$0xff]
        %v806 = vld [vmem:[%s664 + $0x3a8] sm:$0xff]
        %v807 = vld [vmem:[%s664 + $0x3b0] sm:$0xff]
        %v808 = vld [vmem:[%s664 + $0x3b8] sm:$0xff]
        %v809 = vld [vmem:[%s664 + $0x3c0] sm:$0xff]
        %v810 = vld [vmem:[%s664 + $0x3c8] sm:$0xff]
        %v811 = vld [vmem:[%s664 + $0x3d0] sm:$0xff]
        %v812 = vld [vmem:[%s664 + $0x3d8] sm:$0xff]
        %v813 = vld [vmem:[%s664 + $0x3e0] sm:$0xff]
        %v814 = vld [vmem:[%s664 + $0x3e8] sm:$0xff]
        %v815 = vld [vmem:[%s664 + $0x3f0] sm:$0xff]
        %v816 = vld [vmem:[%s664 + $0x3f8] sm:$0xff]
        %v818 = vcombine.high %v688, %v688
        %v820 = vunpack.c.l.s4 1966171168
        %v821 = vunpack.c.0.s8 %v820
        %v822 = vlaneseq
        %v823 = vshrl.u32 %v822, 7
        %v824 = vsub.s32 %v821, %v823
        %v825 = vrot.slane %v688, %v824
        %v827 = vunpack.c.l.s4 1966171168
        %v828 = vunpack.c.0.s8 %v827
        %v829 = vlaneseq
        %v830 = vshrl.u32 %v829, 7
        %v831 = vsub.s32 %v828, %v830
        %v832 = vrot.slane %v818, %v831
        %v833 = vcombine.high %v825, %v825
        %v834 = vcombine.high %v832, %v832
        %v836 = vunpack.c.l.s4 1966171168
        %v837 = vunpack.c.0.s8 %v836
        %v838 = vlaneseq
        %v839 = vshrl.u32 %v838, 7
        %v840 = vsub.s32 %v837, %v839
        %v841 = vrot.slane %v825, %v840
        %v843 = vunpack.c.l.s4 1966171168
        %v844 = vunpack.c.0.s8 %v843
        %v845 = vlaneseq
        %v846 = vshrl.u32 %v845, 7
        %v847 = vsub.s32 %v844, %v846
        %v848 = vrot.slane %v832, %v847
        %v850 = vunpack.c.l.s4 1966171168
        %v851 = vunpack.c.0.s8 %v850
        %v852 = vlaneseq
        %v853 = vshrl.u32 %v852, 7
        %v854 = vsub.s32 %v851, %v853
        %v855 = vrot.slane %v833, %v854
        %v857 = vunpack.c.l.s4 1966171168
        %v858 = vunpack.c.0.s8 %v857
        %v859 = vlaneseq
        %v860 = vshrl.u32 %v859, 7
        %v861 = vsub.s32 %v858, %v860
        %v862 = vrot.slane %v834, %v861
        %v863 = vcombine.high %v841, %v841
        %v864 = vcombine.high %v848, %v848
        %v865 = vcombine.high %v855, %v855
        %v866 = vcombine.high %v862, %v862
        %v1003 = vunpack.c.l.b16 %v689
        %v1004 = vunpack.c.h.b16 %v689
        %v1005 = vunpack.c.l.b16 %v690
        %v1006 = vunpack.c.h.b16 %v690
        %v1007 = vunpack.c.l.b16 %v691
        %v1008 = vunpack.c.h.b16 %v691
        %v1009 = vunpack.c.l.b16 %v692
        %v1010 = vunpack.c.h.b16 %v692
        %v1011 = vunpack.c.l.b16 %v693
        %v1012 = vunpack.c.h.b16 %v693
        %v1013 = vunpack.c.l.b16 %v694
        %v1014 = vunpack.c.h.b16 %v694
        %v1015 = vunpack.c.l.b16 %v695
        %v1016 = vunpack.c.h.b16 %v695
        %v1017 = vunpack.c.l.b16 %v696
        %v1018 = vunpack.c.h.b16 %v696
        %v1019 = vunpack.c.l.b16 %v697
        %v1020 = vunpack.c.h.b16 %v697
        %v1021 = vunpack.c.l.b16 %v698
        %v1022 = vunpack.c.h.b16 %v698
        %v1023 = vunpack.c.l.b16 %v699
        %v1024 = vunpack.c.h.b16 %v699
        %v1025 = vunpack.c.l.b16 %v700
        %v1026 = vunpack.c.h.b16 %v700
        %v1027 = vunpack.c.l.b16 %v701
        %v1028 = vunpack.c.h.b16 %v701
        %v1029 = vunpack.c.l.b16 %v702
        %v1030 = vunpack.c.h.b16 %v702
        %v1031 = vunpack.c.l.b16 %v703
        %v1032 = vunpack.c.h.b16 %v703
        %v1033 = vunpack.c.l.b16 %v704
        %v1034 = vunpack.c.h.b16 %v704
        %v1035 = vunpack.c.l.b16 %v705
        %v1036 = vunpack.c.h.b16 %v705
        %v1037 = vunpack.c.l.b16 %v706
        %v1038 = vunpack.c.h.b16 %v706
        %v1039 = vunpack.c.l.b16 %v707
        %v1040 = vunpack.c.h.b16 %v707
        %v1041 = vunpack.c.l.b16 %v708
        %v1042 = vunpack.c.h.b16 %v708
        %v1043 = vunpack.c.l.b16 %v709
        %v1044 = vunpack.c.h.b16 %v709
        %v1045 = vunpack.c.l.b16 %v710
        %v1046 = vunpack.c.h.b16 %v710
        %v1047 = vunpack.c.l.b16 %v711
        %v1048 = vunpack.c.h.b16 %v711
        %v1049 = vunpack.c.l.b16 %v712
        %v1050 = vunpack.c.h.b16 %v712
        %v1051 = vunpack.c.l.b16 %v713
        %v1052 = vunpack.c.h.b16 %v713
        %v1053 = vunpack.c.l.b16 %v714
        %v1054 = vunpack.c.h.b16 %v714
        %v1055 = vunpack.c.l.b16 %v715
        %v1056 = vunpack.c.h.b16 %v715
        %v1057 = vunpack.c.l.b16 %v716
        %v1058 = vunpack.c.h.b16 %v716
        %v1059 = vunpack.c.l.b16 %v717
        %v1060 = vunpack.c.h.b16 %v717
        %v1061 = vunpack.c.l.b16 %v718
        %v1062 = vunpack.c.h.b16 %v718
        %v1063 = vunpack.c.l.b16 %v719
        %v1064 = vunpack.c.h.b16 %v719
        %v1065 = vunpack.c.l.b16 %v720
        %v1066 = vunpack.c.h.b16 %v720
        %v1067 = vunpack.c.l.b16 %v721
        %v1068 = vunpack.c.h.b16 %v721
        %v1069 = vunpack.c.l.b16 %v722
        %v1070 = vunpack.c.h.b16 %v722
        %v1071 = vunpack.c.l.b16 %v723
        %v1072 = vunpack.c.h.b16 %v723
        %v1073 = vunpack.c.l.b16 %v724
        %v1074 = vunpack.c.h.b16 %v724
        %v1075 = vunpack.c.l.b16 %v725
        %v1076 = vunpack.c.h.b16 %v725
        %v1077 = vunpack.c.l.b16 %v726
        %v1078 = vunpack.c.h.b16 %v726
        %v1079 = vunpack.c.l.b16 %v727
        %v1080 = vunpack.c.h.b16 %v727
        %v1081 = vunpack.c.l.b16 %v728
        %v1082 = vunpack.c.h.b16 %v728
        %v1083 = vunpack.c.l.b16 %v729
        %v1084 = vunpack.c.h.b16 %v729
        %v1085 = vunpack.c.l.b16 %v730
        %v1086 = vunpack.c.h.b16 %v730
        %v1087 = vunpack.c.l.b16 %v731
        %v1088 = vunpack.c.h.b16 %v731
        %v1089 = vunpack.c.l.b16 %v732
        %v1090 = vunpack.c.h.b16 %v732
        %v1091 = vunpack.c.l.b16 %v733
        %v1092 = vunpack.c.h.b16 %v733
        %v1093 = vunpack.c.l.b16 %v734
        %v1094 = vunpack.c.h.b16 %v734
        %v1095 = vunpack.c.l.b16 %v735
        %v1096 = vunpack.c.h.b16 %v735
        %v1097 = vunpack.c.l.b16 %v736
        %v1098 = vunpack.c.h.b16 %v736
        %v1099 = vunpack.c.l.b16 %v737
        %v1100 = vunpack.c.h.b16 %v737
        %v1101 = vunpack.c.l.b16 %v738
        %v1102 = vunpack.c.h.b16 %v738
        %v1103 = vunpack.c.l.b16 %v739
        %v1104 = vunpack.c.h.b16 %v739
        %v1105 = vunpack.c.l.b16 %v740
        %v1106 = vunpack.c.h.b16 %v740
        %v1107 = vunpack.c.l.b16 %v741
        %v1108 = vunpack.c.h.b16 %v741
        %v1109 = vunpack.c.l.b16 %v742
        %v1110 = vunpack.c.h.b16 %v742
        %v1111 = vunpack.c.l.b16 %v743
        %v1112 = vunpack.c.h.b16 %v743
        %v1113 = vunpack.c.l.b16 %v744
        %v1114 = vunpack.c.h.b16 %v744
        %v1115 = vunpack.c.l.b16 %v745
        %v1116 = vunpack.c.h.b16 %v745
        %v1117 = vunpack.c.l.b16 %v746
        %v1118 = vunpack.c.h.b16 %v746
        %v1119 = vunpack.c.l.b16 %v747
        %v1120 = vunpack.c.h.b16 %v747
        %v1121 = vunpack.c.l.b16 %v748
        %v1122 = vunpack.c.h.b16 %v748
        %v1123 = vunpack.c.l.b16 %v749
        %v1124 = vunpack.c.h.b16 %v749
        %v1125 = vunpack.c.l.b16 %v750
        %v1126 = vunpack.c.h.b16 %v750
        %v1127 = vunpack.c.l.b16 %v751
        %v1128 = vunpack.c.h.b16 %v751
        %v1129 = vunpack.c.l.b16 %v752
        %v1130 = vunpack.c.h.b16 %v752
        %v1131 = vunpack.c.l.b16 %v753
        %v1132 = vunpack.c.h.b16 %v753
        %v1133 = vunpack.c.l.b16 %v754
        %v1134 = vunpack.c.h.b16 %v754
        %v1135 = vunpack.c.l.b16 %v755
        %v1136 = vunpack.c.h.b16 %v755
        %v1137 = vunpack.c.l.b16 %v756
        %v1138 = vunpack.c.h.b16 %v756
        %v1139 = vunpack.c.l.b16 %v757
        %v1140 = vunpack.c.h.b16 %v757
        %v1141 = vunpack.c.l.b16 %v758
        %v1142 = vunpack.c.h.b16 %v758
        %v1143 = vunpack.c.l.b16 %v759
        %v1144 = vunpack.c.h.b16 %v759
        %v1145 = vunpack.c.l.b16 %v760
        %v1146 = vunpack.c.h.b16 %v760
        %v1147 = vunpack.c.l.b16 %v761
        %v1148 = vunpack.c.h.b16 %v761
        %v1149 = vunpack.c.l.b16 %v762
        %v1150 = vunpack.c.h.b16 %v762
        %v1151 = vunpack.c.l.b16 %v763
        %v1152 = vunpack.c.h.b16 %v763
        %v1153 = vunpack.c.l.b16 %v764
        %v1154 = vunpack.c.h.b16 %v764
        %v1155 = vunpack.c.l.b16 %v765
        %v1156 = vunpack.c.h.b16 %v765
        %v1157 = vunpack.c.l.b16 %v766
        %v1158 = vunpack.c.h.b16 %v766
        %v1159 = vunpack.c.l.b16 %v767
        %v1160 = vunpack.c.h.b16 %v767
        %v1161 = vunpack.c.l.b16 %v768
        %v1162 = vunpack.c.h.b16 %v768
        %v1163 = vunpack.c.l.b16 %v769
        %v1164 = vunpack.c.h.b16 %v769
        %v1165 = vunpack.c.l.b16 %v770
        %v1166 = vunpack.c.h.b16 %v770
        %v1167 = vunpack.c.l.b16 %v771
        %v1168 = vunpack.c.h.b16 %v771
        %v1169 = vunpack.c.l.b16 %v772
        %v1170 = vunpack.c.h.b16 %v772
        %v1171 = vunpack.c.l.b16 %v773
        %v1172 = vunpack.c.h.b16 %v773
        %v1173 = vunpack.c.l.b16 %v774
        %v1174 = vunpack.c.h.b16 %v774
        %v1175 = vunpack.c.l.b16 %v775
        %v1176 = vunpack.c.h.b16 %v775
        %v1177 = vunpack.c.l.b16 %v776
        %v1178 = vunpack.c.h.b16 %v776
        %v1179 = vunpack.c.l.b16 %v777
        %v1180 = vunpack.c.h.b16 %v777
        %v1181 = vunpack.c.l.b16 %v778
        %v1182 = vunpack.c.h.b16 %v778
        %v1183 = vunpack.c.l.b16 %v779
        %v1184 = vunpack.c.h.b16 %v779
        %v1185 = vunpack.c.l.b16 %v780
        %v1186 = vunpack.c.h.b16 %v780
        %v1187 = vunpack.c.l.b16 %v781
        %v1188 = vunpack.c.h.b16 %v781
        %v1189 = vunpack.c.l.b16 %v782
        %v1190 = vunpack.c.h.b16 %v782
        %v1191 = vunpack.c.l.b16 %v783
        %v1192 = vunpack.c.h.b16 %v783
        %v1193 = vunpack.c.l.b16 %v784
        %v1194 = vunpack.c.h.b16 %v784
        %v1195 = vunpack.c.l.b16 %v785
        %v1196 = vunpack.c.h.b16 %v785
        %v1197 = vunpack.c.l.b16 %v786
        %v1198 = vunpack.c.h.b16 %v786
        %v1199 = vunpack.c.l.b16 %v787
        %v1200 = vunpack.c.h.b16 %v787
        %v1201 = vunpack.c.l.b16 %v788
        %v1202 = vunpack.c.h.b16 %v788
        %v1203 = vunpack.c.l.b16 %v789
        %v1204 = vunpack.c.h.b16 %v789
        %v1205 = vunpack.c.l.b16 %v790
        %v1206 = vunpack.c.h.b16 %v790
        %v1207 = vunpack.c.l.b16 %v791
        %v1208 = vunpack.c.h.b16 %v791
        %v1209 = vunpack.c.l.b16 %v792
        %v1210 = vunpack.c.h.b16 %v792
        %v1211 = vunpack.c.l.b16 %v793
        %v1212 = vunpack.c.h.b16 %v793
        %v1213 = vunpack.c.l.b16 %v794
        %v1214 = vunpack.c.h.b16 %v794
        %v1215 = vunpack.c.l.b16 %v795
        %v1216 = vunpack.c.h.b16 %v795
        %v1217 = vunpack.c.l.b16 %v796
        %v1218 = vunpack.c.h.b16 %v796
        %v1219 = vunpack.c.l.b16 %v797
        %v1220 = vunpack.c.h.b16 %v797
        %v1221 = vunpack.c.l.b16 %v798
        %v1222 = vunpack.c.h.b16 %v798
        %v1223 = vunpack.c.l.b16 %v799
        %v1224 = vunpack.c.h.b16 %v799
        %v1225 = vunpack.c.l.b16 %v800
        %v1226 = vunpack.c.h.b16 %v800
        %v1227 = vunpack.c.l.b16 %v801
        %v1228 = vunpack.c.h.b16 %v801
        %v1229 = vunpack.c.l.b16 %v802
        %v1230 = vunpack.c.h.b16 %v802
        %v1231 = vunpack.c.l.b16 %v803
        %v1232 = vunpack.c.h.b16 %v803
        %v1233 = vunpack.c.l.b16 %v804
        %v1234 = vunpack.c.h.b16 %v804
        %v1235 = vunpack.c.l.b16 %v805
        %v1236 = vunpack.c.h.b16 %v805
        %v1237 = vunpack.c.l.b16 %v806
        %v1238 = vunpack.c.h.b16 %v806
        %v1239 = vunpack.c.l.b16 %v807
        %v1240 = vunpack.c.h.b16 %v807
        %v1241 = vunpack.c.l.b16 %v808
        %v1242 = vunpack.c.h.b16 %v808
        %v1243 = vunpack.c.l.b16 %v809
        %v1244 = vunpack.c.h.b16 %v809
        %v1245 = vunpack.c.l.b16 %v810
        %v1246 = vunpack.c.h.b16 %v810
        %v1247 = vunpack.c.l.b16 %v811
        %v1248 = vunpack.c.h.b16 %v811
        %v1249 = vunpack.c.l.b16 %v812
        %v1250 = vunpack.c.h.b16 %v812
        %v1251 = vunpack.c.l.b16 %v813
        %v1252 = vunpack.c.h.b16 %v813
        %v1253 = vunpack.c.l.b16 %v814
        %v1254 = vunpack.c.h.b16 %v814
        %v1255 = vunpack.c.l.b16 %v815
        %v1256 = vunpack.c.h.b16 %v815
        %v1257 = vunpack.c.l.b16 %v816
        %v1258 = vunpack.c.h.b16 %v816
        %v1259 = vpack.c.b16 %v1005, %v1003
        %v1260 = vpack.c.b16 %v1006, %v1004
        %v1261 = vpack.c.b16 %v1009, %v1007
        %v1262 = vpack.c.b16 %v1010, %v1008
        %v1263 = vpack.c.b16 %v1013, %v1011
        %v1264 = vpack.c.b16 %v1014, %v1012
        %v1265 = vpack.c.b16 %v1017, %v1015
        %v1266 = vpack.c.b16 %v1018, %v1016
        %v1267 = vpack.c.b16 %v1021, %v1019
        %v1268 = vpack.c.b16 %v1022, %v1020
        %v1269 = vpack.c.b16 %v1025, %v1023
        %v1270 = vpack.c.b16 %v1026, %v1024
        %v1271 = vpack.c.b16 %v1029, %v1027
        %v1272 = vpack.c.b16 %v1030, %v1028
        %v1273 = vpack.c.b16 %v1033, %v1031
        %v1274 = vpack.c.b16 %v1034, %v1032
        %v1275 = vpack.c.b16 %v1037, %v1035
        %v1276 = vpack.c.b16 %v1038, %v1036
        %v1277 = vpack.c.b16 %v1041, %v1039
        %v1278 = vpack.c.b16 %v1042, %v1040
        %v1279 = vpack.c.b16 %v1045, %v1043
        %v1280 = vpack.c.b16 %v1046, %v1044
        %v1281 = vpack.c.b16 %v1049, %v1047
        %v1282 = vpack.c.b16 %v1050, %v1048
        %v1283 = vpack.c.b16 %v1053, %v1051
        %v1284 = vpack.c.b16 %v1054, %v1052
        %v1285 = vpack.c.b16 %v1057, %v1055
        %v1286 = vpack.c.b16 %v1058, %v1056
        %v1287 = vpack.c.b16 %v1061, %v1059
        %v1288 = vpack.c.b16 %v1062, %v1060
        %v1289 = vpack.c.b16 %v1065, %v1063
        %v1290 = vpack.c.b16 %v1066, %v1064
        %v1291 = vpack.c.b16 %v1069, %v1067
        %v1292 = vpack.c.b16 %v1070, %v1068
        %v1293 = vpack.c.b16 %v1073, %v1071
        %v1294 = vpack.c.b16 %v1074, %v1072
        %v1295 = vpack.c.b16 %v1077, %v1075
        %v1296 = vpack.c.b16 %v1078, %v1076
        %v1297 = vpack.c.b16 %v1081, %v1079
        %v1298 = vpack.c.b16 %v1082, %v1080
        %v1299 = vpack.c.b16 %v1085, %v1083
        %v1300 = vpack.c.b16 %v1086, %v1084
        %v1301 = vpack.c.b16 %v1089, %v1087
        %v1302 = vpack.c.b16 %v1090, %v1088
        %v1303 = vpack.c.b16 %v1093, %v1091
        %v1304 = vpack.c.b16 %v1094, %v1092
        %v1305 = vpack.c.b16 %v1097, %v1095
        %v1306 = vpack.c.b16 %v1098, %v1096
        %v1307 = vpack.c.b16 %v1101, %v1099
        %v1308 = vpack.c.b16 %v1102, %v1100
        %v1309 = vpack.c.b16 %v1105, %v1103
        %v1310 = vpack.c.b16 %v1106, %v1104
        %v1311 = vpack.c.b16 %v1109, %v1107
        %v1312 = vpack.c.b16 %v1110, %v1108
        %v1313 = vpack.c.b16 %v1113, %v1111
        %v1314 = vpack.c.b16 %v1114, %v1112
        %v1315 = vpack.c.b16 %v1117, %v1115
        %v1316 = vpack.c.b16 %v1118, %v1116
        %v1317 = vpack.c.b16 %v1121, %v1119
        %v1318 = vpack.c.b16 %v1122, %v1120
        %v1319 = vpack.c.b16 %v1125, %v1123
        %v1320 = vpack.c.b16 %v1126, %v1124
        %v1321 = vpack.c.b16 %v1129, %v1127
        %v1322 = vpack.c.b16 %v1130, %v1128
        %v1323 = vpack.c.b16 %v1133, %v1131
        %v1324 = vpack.c.b16 %v1134, %v1132
        %v1325 = vpack.c.b16 %v1137, %v1135
        %v1326 = vpack.c.b16 %v1138, %v1136
        %v1327 = vpack.c.b16 %v1141, %v1139
        %v1328 = vpack.c.b16 %v1142, %v1140
        %v1329 = vpack.c.b16 %v1145, %v1143
        %v1330 = vpack.c.b16 %v1146, %v1144
        %v1331 = vpack.c.b16 %v1149, %v1147
        %v1332 = vpack.c.b16 %v1150, %v1148
        %v1333 = vpack.c.b16 %v1153, %v1151
        %v1334 = vpack.c.b16 %v1154, %v1152
        %v1335 = vpack.c.b16 %v1157, %v1155
        %v1336 = vpack.c.b16 %v1158, %v1156
        %v1337 = vpack.c.b16 %v1161, %v1159
        %v1338 = vpack.c.b16 %v1162, %v1160
        %v1339 = vpack.c.b16 %v1165, %v1163
        %v1340 = vpack.c.b16 %v1166, %v1164
        %v1341 = vpack.c.b16 %v1169, %v1167
        %v1342 = vpack.c.b16 %v1170, %v1168
        %v1343 = vpack.c.b16 %v1173, %v1171
        %v1344 = vpack.c.b16 %v1174, %v1172
        %v1345 = vpack.c.b16 %v1177, %v1175
        %v1346 = vpack.c.b16 %v1178, %v1176
        %v1347 = vpack.c.b16 %v1181, %v1179
        %v1348 = vpack.c.b16 %v1182, %v1180
        %v1349 = vpack.c.b16 %v1185, %v1183
        %v1350 = vpack.c.b16 %v1186, %v1184
        %v1351 = vpack.c.b16 %v1189, %v1187
        %v1352 = vpack.c.b16 %v1190, %v1188
        %v1353 = vpack.c.b16 %v1193, %v1191
        %v1354 = vpack.c.b16 %v1194, %v1192
        %v1355 = vpack.c.b16 %v1197, %v1195
        %v1356 = vpack.c.b16 %v1198, %v1196
        %v1357 = vpack.c.b16 %v1201, %v1199
        %v1358 = vpack.c.b16 %v1202, %v1200
        %v1359 = vpack.c.b16 %v1205, %v1203
        %v1360 = vpack.c.b16 %v1206, %v1204
        %v1361 = vpack.c.b16 %v1209, %v1207
        %v1362 = vpack.c.b16 %v1210, %v1208
        %v1363 = vpack.c.b16 %v1213, %v1211
        %v1364 = vpack.c.b16 %v1214, %v1212
        %v1365 = vpack.c.b16 %v1217, %v1215
        %v1366 = vpack.c.b16 %v1218, %v1216
        %v1367 = vpack.c.b16 %v1221, %v1219
        %v1368 = vpack.c.b16 %v1222, %v1220
        %v1369 = vpack.c.b16 %v1225, %v1223
        %v1370 = vpack.c.b16 %v1226, %v1224
        %v1371 = vpack.c.b16 %v1229, %v1227
        %v1372 = vpack.c.b16 %v1230, %v1228
        %v1373 = vpack.c.b16 %v1233, %v1231
        %v1374 = vpack.c.b16 %v1234, %v1232
        %v1375 = vpack.c.b16 %v1237, %v1235
        %v1376 = vpack.c.b16 %v1238, %v1236
        %v1377 = vpack.c.b16 %v1241, %v1239
        %v1378 = vpack.c.b16 %v1242, %v1240
        %v1379 = vpack.c.b16 %v1245, %v1243
        %v1380 = vpack.c.b16 %v1246, %v1244
        %v1381 = vpack.c.b16 %v1249, %v1247
        %v1382 = vpack.c.b16 %v1250, %v1248
        %v1383 = vpack.c.b16 %v1253, %v1251
        %v1384 = vpack.c.b16 %v1254, %v1252
        %v1385 = vpack.c.b16 %v1257, %v1255
        %v1386 = vpack.c.b16 %v1258, %v1256
        %1515 = vmatprep.subr.bf16.mxu0 %v1274
        %1516 = vmatpush1.bf16.msra.mxu0 %v1273
        %1517 = vmatprep.subr.bf16.mxu0 %v1272
        %1518 = vmatpush1.bf16.msra.mxu0 %v1271
        %1519 = vmatprep.subr.bf16.mxu0 %v1270
        %1520 = vmatpush1.bf16.msra.mxu0 %v1269
        %1521 = vmatprep.subr.bf16.mxu0 %v1268
        %1522 = vmatpush1.bf16.msra.mxu0 %v1267
        %1523 = vmatprep.subr.bf16.mxu0 %v1266
        %1524 = vmatpush1.bf16.msra.mxu0 %v1265
        %1525 = vmatprep.subr.bf16.mxu0 %v1264
        %1526 = vmatpush1.bf16.msra.mxu0 %v1263
        %1527 = vmatprep.subr.bf16.mxu0 %v1262
        %1528 = vmatpush1.bf16.msra.mxu0 %v1261
        %1529 = vmatprep.subr.bf16.mxu0 %v1260
        %1530 = vmatpush1.bf16.msra.mxu0 %v1259
        %1531 = vmatprep.subr.bf16.mxu0 %v1290
        %1532 = vmatpush2.bf16.msra.mxu0 %v1289
        %1533 = vmatprep.subr.bf16.mxu0 %v1288
        %1534 = vmatpush2.bf16.msra.mxu0 %v1287
        %1535 = vmatprep.subr.bf16.mxu0 %v1286
        %1536 = vmatpush2.bf16.msra.mxu0 %v1285
        %1537 = vmatprep.subr.bf16.mxu0 %v1284
        %1538 = vmatpush2.bf16.msra.mxu0 %v1283
        %1539 = vmatprep.subr.bf16.mxu0 %v1282
        %1540 = vmatpush2.bf16.msra.mxu0 %v1281
        %1541 = vmatprep.subr.bf16.mxu0 %v1280
        %1542 = vmatpush2.bf16.msra.mxu0 %v1279
        %1543 = vmatprep.subr.bf16.mxu0 %v1278
        %1544 = vmatpush2.bf16.msra.mxu0 %v1277
        %1545 = vmatprep.subr.bf16.mxu0 %v1276
        %1546 = vmatpush2.bf16.msra.mxu0 %v1275
        %1547 = vmatprep.mubr.bf16.mxu0 %v855
        %1548 = vmatmul.mubr.bf16.gmra.mxu0 %v841
        %v1549 = vpop.f32.mrf.mxu0
        %v1550 = vadd.f32 0.0, %v1549
        %v1551 = vpop.f32.mrf.mxu0
        %v1552 = vadd.f32 0.0, %v1551
        %v1553 = vpop.f32.mrf.mxu0
        %v1554 = vpop.f32.mrf.mxu0
        %1555 = vdwg.mxu0
        %1556 = vmatprep.subr.bf16.mxu0 %v1306
        %1557 = vmatpush1.bf16.msra.mxu0 %v1305
        %1558 = vmatprep.subr.bf16.mxu0 %v1304
        %1559 = vmatpush1.bf16.msra.mxu0 %v1303
        %1560 = vmatprep.subr.bf16.mxu0 %v1302
        %1561 = vmatpush1.bf16.msra.mxu0 %v1301
        %1562 = vmatprep.subr.bf16.mxu0 %v1300
        %1563 = vmatpush1.bf16.msra.mxu0 %v1299
        %1564 = vmatprep.subr.bf16.mxu0 %v1298
        %1565 = vmatpush1.bf16.msra.mxu0 %v1297
        %1566 = vmatprep.subr.bf16.mxu0 %v1296
        %1567 = vmatpush1.bf16.msra.mxu0 %v1295
        %1568 = vmatprep.subr.bf16.mxu0 %v1294
        %1569 = vmatpush1.bf16.msra.mxu0 %v1293
        %1570 = vmatprep.subr.bf16.mxu0 %v1292
        %1571 = vmatpush1.bf16.msra.mxu0 %v1291
        %1572 = vmatprep.subr.bf16.mxu0 %v1322
        %1573 = vmatpush2.bf16.msra.mxu0 %v1321
        %1574 = vmatprep.subr.bf16.mxu0 %v1320
        %1575 = vmatpush2.bf16.msra.mxu0 %v1319
        %1576 = vmatprep.subr.bf16.mxu0 %v1318
        %1577 = vmatpush2.bf16.msra.mxu0 %v1317
        %1578 = vmatprep.subr.bf16.mxu0 %v1316
        %1579 = vmatpush2.bf16.msra.mxu0 %v1315
        %1580 = vmatprep.subr.bf16.mxu0 %v1314
        %1581 = vmatpush2.bf16.msra.mxu0 %v1313
        %1582 = vmatprep.subr.bf16.mxu0 %v1312
        %1583 = vmatpush2.bf16.msra.mxu0 %v1311
        %1584 = vmatprep.subr.bf16.mxu0 %v1310
        %1585 = vmatpush2.bf16.msra.mxu0 %v1309
        %1586 = vmatprep.subr.bf16.mxu0 %v1308
        %1587 = vmatpush2.bf16.msra.mxu0 %v1307
        %1588 = vmatprep.mubr.bf16.mxu0 %v865
        %1589 = vmatmul.mubr.bf16.gmra.mxu0 %v863
        %v1590 = vpop.f32.mrf.mxu0
        %v1591 = vadd.f32 %v1550, %v1590
        %v1592 = vpop.f32.mrf.mxu0
        %v1593 = vadd.f32 %v1552, %v1592
        %v1594 = vpop.f32.mrf.mxu0
        %v1595 = vpop.f32.mrf.mxu0
        %1596 = vdwg.mxu0
        %1597 = vmatprep.subr.bf16.mxu0 %v1338
        %1598 = vmatpush1.bf16.msra.mxu0 %v1337
        %1599 = vmatprep.subr.bf16.mxu0 %v1336
        %1600 = vmatpush1.bf16.msra.mxu0 %v1335
        %1601 = vmatprep.subr.bf16.mxu0 %v1334
        %1602 = vmatpush1.bf16.msra.mxu0 %v1333
        %1603 = vmatprep.subr.bf16.mxu0 %v1332
        %1604 = vmatpush1.bf16.msra.mxu0 %v1331
        %1605 = vmatprep.subr.bf16.mxu0 %v1330
        %1606 = vmatpush1.bf16.msra.mxu0 %v1329
        %1607 = vmatprep.subr.bf16.mxu0 %v1328
        %1608 = vmatpush1.bf16.msra.mxu0 %v1327
        %1609 = vmatprep.subr.bf16.mxu0 %v1326
        %1610 = vmatpush1.bf16.msra.mxu0 %v1325
        %1611 = vmatprep.subr.bf16.mxu0 %v1324
        %1612 = vmatpush1.bf16.msra.mxu0 %v1323
        %1613 = vmatprep.subr.bf16.mxu0 %v1354
        %1614 = vmatpush2.bf16.msra.mxu0 %v1353
        %1615 = vmatprep.subr.bf16.mxu0 %v1352
        %1616 = vmatpush2.bf16.msra.mxu0 %v1351
        %1617 = vmatprep.subr.bf16.mxu0 %v1350
        %1618 = vmatpush2.bf16.msra.mxu0 %v1349
        %1619 = vmatprep.subr.bf16.mxu0 %v1348
        %1620 = vmatpush2.bf16.msra.mxu0 %v1347
        %1621 = vmatprep.subr.bf16.mxu0 %v1346
        %1622 = vmatpush2.bf16.msra.mxu0 %v1345
        %1623 = vmatprep.subr.bf16.mxu0 %v1344
        %1624 = vmatpush2.bf16.msra.mxu0 %v1343
        %1625 = vmatprep.subr.bf16.mxu0 %v1342
        %1626 = vmatpush2.bf16.msra.mxu0 %v1341
        %1627 = vmatprep.subr.bf16.mxu0 %v1340
        %1628 = vmatpush2.bf16.msra.mxu0 %v1339
        %1629 = vmatprep.mubr.bf16.mxu0 %v862
        %1630 = vmatmul.mubr.bf16.gmra.mxu0 %v848
        %v1631 = vpop.f32.mrf.mxu0
        %v1632 = vadd.f32 %v1591, %v1631
        %v1633 = vpop.f32.mrf.mxu0
        %v1634 = vadd.f32 %v1593, %v1633
        %v1635 = vpop.f32.mrf.mxu0
        %v1636 = vpop.f32.mrf.mxu0
        %1637 = vdwg.mxu0
        %1638 = vmatprep.subr.bf16.mxu0 %v1370
        %1639 = vmatpush1.bf16.msra.mxu0 %v1369
        %1640 = vmatprep.subr.bf16.mxu0 %v1368
        %1641 = vmatpush1.bf16.msra.mxu0 %v1367
        %1642 = vmatprep.subr.bf16.mxu0 %v1366
        %1643 = vmatpush1.bf16.msra.mxu0 %v1365
        %1644 = vmatprep.subr.bf16.mxu0 %v1364
        %1645 = vmatpush1.bf16.msra.mxu0 %v1363
        %1646 = vmatprep.subr.bf16.mxu0 %v1362
        %1647 = vmatpush1.bf16.msra.mxu0 %v1361
        %1648 = vmatprep.subr.bf16.mxu0 %v1360
        %1649 = vmatpush1.bf16.msra.mxu0 %v1359
        %1650 = vmatprep.subr.bf16.mxu0 %v1358
        %1651 = vmatpush1.bf16.msra.mxu0 %v1357
        %1652 = vmatprep.subr.bf16.mxu0 %v1356
        %1653 = vmatpush1.bf16.msra.mxu0 %v1355
        %1654 = vmatprep.subr.bf16.mxu0 %v1386
        %1655 = vmatpush2.bf16.msra.mxu0 %v1385
        %1656 = vmatprep.subr.bf16.mxu0 %v1384
        %1657 = vmatpush2.bf16.msra.mxu0 %v1383
        %1658 = vmatprep.subr.bf16.mxu0 %v1382
        %1659 = vmatpush2.bf16.msra.mxu0 %v1381
        %1660 = vmatprep.subr.bf16.mxu0 %v1380
        %1661 = vmatpush2.bf16.msra.mxu0 %v1379
        %1662 = vmatprep.subr.bf16.mxu0 %v1378
        %1663 = vmatpush2.bf16.msra.mxu0 %v1377
        %1664 = vmatprep.subr.bf16.mxu0 %v1376
        %1665 = vmatpush2.bf16.msra.mxu0 %v1375
        %1666 = vmatprep.subr.bf16.mxu0 %v1374
        %1667 = vmatpush2.bf16.msra.mxu0 %v1373
        %1668 = vmatprep.subr.bf16.mxu0 %v1372
        %1669 = vmatpush2.bf16.msra.mxu0 %v1371
        %1670 = vmatprep.mubr.bf16.mxu0 %v866
        %1671 = vmatmul.mubr.bf16.gmra.mxu0 %v864
        %v1672 = vpop.f32.mrf.mxu0
        %v1673 = vadd.f32 %v1632, %v1672
        %v1674 = vpop.f32.mrf.mxu0
        %v1675 = vadd.f32 %v1634, %v1674
        %v1676 = vpop.f32.mrf.mxu0
        %v1677 = vpop.f32.mrf.mxu0
        %1678 = vdwg.mxu0
        %v1679 = vmax.f32 %v1673, 0.0
        %v1680 = vmax.f32 %v1675, 0.0
        %v1681 = vpack.c.bf16 %v1679, %v1679
        %v1682 = vpack.c.bf16 %v1680, %v1680
        %v1685 = vcombine.low %v1681, %v1682
        %v1687 = vunpack.c.l.s4 1966171168
        %v1688 = vunpack.c.0.s8 %v1687
        %v1689 = vlaneseq
        %v1690 = vshrl.u32 %v1689, 7
        %v1691 = vsub.s32 %v1688, %v1690
        %v1692 = vrot.slane %v1685, %v1691
        %v1694 = vunpack.c.l.s4 1966171168
        %v1695 = vunpack.c.0.s8 %v1694
        %v1696 = vlaneseq
        %v1697 = vshrl.u32 %v1696, 7
        %v1698 = vsub.s32 %v1695, %v1697
        %v1699 = vrot.slane %v1692, %v1698
        %1701 = vst [vmem:[%s686] sm:$0x3] %v1699
        %s1702 = smul.u32 2, %s13
        %p1703 = scmp.lt.s32.totalorder %s1702, 7
        %s1704 = scalar_select %p1703, %s1702, 7
        %s1705 = scalar_lea.vmem %s2, %s1704
        // Predicated region
        $region67: #{cnn_forward.9} parent=61 // pred_check
          %p1706 = pneg %p78
        $region68: #{cnn_forward.9} parent=61 // pred_check_branch
          %1708 = sbr.rel (%p1706) target = $region70
        $region69: #{cnn_forward.9} parent=61 // pred_region
          %s1709 = smul.u32 2, %s13
        $region70: #{cnn_forward.9} parent=61 // pred_fallthru
          _
      $region62: #{cnn_forward.9} parent=5 // pred_fallthru
        _
      %p1710 = scmp.le.s32.totalorder 2, %s8
      // Predicated region
      $region71: #{cnn_forward.9} parent=5 // pred_check
        %p1711 = pneg %p1710
      $region72: #{cnn_forward.9} parent=5 // pred_check_branch
        %1713 = sbr.rel (%p1711) target = $region74
      $region73: #{cnn_forward.9} parent=5 // pred_region
        %s1714 = ssub.s32 %s8, 2
        // Predicated region
        $region75: #{cnn_forward.9} parent=73 // pred_check
          %p1715 = pneg %p84
        $region76: #{cnn_forward.9} parent=73 // pred_check_branch
          %1717 = sbr.rel (%p1715) target = $region78
        $region77: #{cnn_forward.9} parent=73 // pred_region
          %s1718 = smul.u32 2, %s14
          %p1719 = scmp.lt.s32.totalorder %s1718, 7
          %s1720 = scalar_select %p1719, %s1718, 7
          %s1721 = scalar_lea.vmem %s2, %s1720
        $region78: #{cnn_forward.9} parent=73 // pred_fallthru
          _
      $region74: #{cnn_forward.9} parent=5 // pred_fallthru
        _
    $region6: #{cnn_forward.9} parent=1 // loop_footer
      %s12 = sadd.s32 1, %s8
    $region7: #{cnn_forward.9} parent=1 // loop_footer_branch
      %7 = sbr.rel target = $region3
    $region8: #{cnn_forward.9} parent=1 // loop_exit
      _

</llo_original>
